<compile_context>
chip_gen: v6e
topology: v6e:2x2x1
jax: 0.10.0
libtpu: 0.0.40
codegen_flags: <defaults>
</compile_context>

<pallas_src>
import functools

import jax
import jax.numpy as jnp
from jax import lax
from jax.experimental import pallas as pl
from jax.experimental.pallas import tpu as pltpu


LANE = 128  # TPU lane width.


# --------------------------------------------------------------------------------------
# Pallas kernels
# --------------------------------------------------------------------------------------

def _swish(z):
    # Swish = z * sigmoid(z); sigmoid via a single tanh transcendental (EUP) rather than
    # exp(-z) + reciprocal (two pushes + an inf edge case for very negative z).
    return z * (0.5 * (jnp.tanh(0.5 * z) + 1.0))


def _conv1_swish_pool_kernel(x_ref, w_ref, b_ref, o_ref, *, n_pool, m_out):
    """Fused Conv3d(3->64,(3,7,7),pad(1,3,3),stride(1,2,2)) + bias + Swish + MaxPool(1,2,2).

    One batch element per grid step.
      x_ref: (n_pool * m_out, K)  im2col rows, pool-phase-major
                                  (rows [p*m_out,(p+1)*m_out) = phase p, raster over pooled pos)
      w_ref: (K, 64)              packed conv weights
      b_ref: (1, 64)              bias
      o_ref: (m_out, 64)          pooled activations
    """
    z = jnp.dot(x_ref[...], w_ref[...], preferred_element_type=jnp.float32) + b_ref[...]
    act = _swish(z)
    # MaxPool3d((1,2,2)): elementwise max over phases = contiguous 128-row blocks (aligned).
    pooled = act[0:m_out, :]
    for p in range(1, n_pool):
        pooled = jnp.maximum(pooled, act[p * m_out:(p + 1) * m_out, :])
    o_ref[...] = pooled.astype(o_ref.dtype)


def _conv2_swish_pool_head_kernel(x_ref, w_ref, b_ref, wh_ref, bh_ref, o_ref, *,
                                  n_pool, rows, n_batch, t_pool):
    """Fused Conv3d(64->32) + bias + Swish + MaxPool(2,2,2) + head; whole batch in one step.

      x_ref : (n_pool * rows, K)  im2col rows, phase-major; within a phase row = t*n_batch + n
      w_ref : (K, 128)            packed conv weights (Cout=32 zero-padded to 128 lanes)
      b_ref : (1, 128)            bias (zero-padded)
      wh_ref: (128, NC)           1x1x1 logit conv weights (rows >= 32 are zero)
      bh_ref: (1, NC)             logit bias
      o_ref : (n_batch, NC)       final logits
    """
    z = jnp.dot(x_ref[...], w_ref[...], preferred_element_type=jnp.float32) + b_ref[...]
    act = _swish(z)
    # MaxPool3d(2,2): elementwise max over 8 phases = contiguous 8-row (sublane-aligned) blocks.
    pooled = act[0:rows, :]
    for p in range(1, n_pool):
        pooled = jnp.maximum(pooled, act[p * rows:(p + 1) * rows, :])
    # Head. AvgPool3d((2,1,1), stride 1) over the temporal axis (rows are t-major, n fastest).
    n_avg = t_pool - 1
    y = (pooled[0:n_avg * n_batch, :] + pooled[n_batch:t_pool * n_batch, :]) * 0.5
    # TODO(synk): nn.Dropout is identity at inference; training-mode RNG dropout omitted.
    logits = jnp.dot(y.astype(jnp.bfloat16), wh_ref[...],
                     preferred_element_type=jnp.float32) + bh_ref[...]      # 1x1x1 conv
    out = logits[0:n_batch, :]
    for t in range(1, n_avg):
        out = jnp.maximum(out, logits[t * n_batch:(t + 1) * n_batch, :])    # torch.max(.., 2)[0]
    o_ref[...] = out.astype(o_ref.dtype)


# --------------------------------------------------------------------------------------
# Glue (padding, window extraction, re-layout; compute stays in the kernels)
# --------------------------------------------------------------------------------------

def _im2col(x_cl, kshape, pad, stride):
    """Channels-last (N,T,H,W,C) -> (N,To,Ho,Wo, KT*KH*KW*C); column order (kt,kh,kw,c).

    TODO(synk): this still materializes a kernel-footprint-replicated copy of the
    activations in HBM; a fully in-kernel gather (pl.ANY + manual DMA) would remove it.
    """
    _, T, H, W, _ = x_cl.shape
    KT, KH, KW = kshape
    st, sh, sw = stride
    To = (T + 2 * pad[0] - KT) // st + 1
    Ho = (H + 2 * pad[1] - KH) // sh + 1
    Wo = (W + 2 * pad[2] - KW) // sw + 1
    xp = jnp.pad(x_cl, ((0, 0), (pad[0], pad[0]), (pad[1], pad[1]), (pad[2], pad[2]), (0, 0)))
    cols = []
    for kt in range(KT):
        for kh in range(KH):
            for kw in range(KW):
                cols.append(xp[:, kt::st, kh::sh, kw::sw, :][:, :To, :Ho, :Wo, :])
    return jnp.concatenate(cols, axis=-1), (To, Ho, Wo)


def _pack_conv_weight(w, k_pad, c_pad):
    """Torch (Cout,Cin,KT,KH,KW) -> (k_pad, c_pad) bf16; K order (kt,kh,kw,cin)."""
    cout, cin, kt, kh, kw = w.shape
    k0 = kt * kh * kw * cin
    wk = jnp.transpose(w.astype(jnp.float32), (2, 3, 4, 1, 0)).reshape(k0, cout)
    return jnp.pad(wk, ((0, k_pad - k0), (0, c_pad - cout))).astype(jnp.bfloat16)


def conv1_swish_maxpool(x_cl, weight, bias):
    """Layer 1: Conv3d(3->64,(3,7,7),pad(1,3,3),stride(1,2,2)) + Swish + MaxPool3d((1,2,2)).

    x_cl: (N,T,H,W,3) channels-last.  Returns (N,Tp,Hp,Wp,64) bf16 with REAL channels only,
    so the downstream layer-2 K carries no dead zero-padded lanes.
    """
    N = x_cl.shape[0]
    cout = weight.shape[0]                                              # 64
    patches, (to, ho, wo) = _im2col(x_cl.astype(jnp.bfloat16), (3, 7, 7), (1, 3, 3), (1, 2, 2))
    k0 = patches.shape[-1]                                              # 441
    kp = ((k0 + LANE - 1) // LANE) * LANE                               # 512
    pt, ph, pw = 1, 2, 2
    assert to % pt == 0 and ho % ph == 0 and wo % pw == 0
    tp_, hp_, wp_ = to // pt, ho // ph, wo // pw                        # 8, 4, 4
    n_pool, m_out = pt * ph * pw, tp_ * hp_ * wp_                       # 4, 128
    if kp != k0:
        patches = jnp.pad(patches, ((0, 0), (0, 0), (0, 0), (0, 0), (0, kp - k0)))
    # Pool-phase-major rows: [p*m_out,(p+1)*m_out) = phase p, raster over pooled positions.
    patches = patches.reshape(N, tp_, pt, hp_, ph, wp_, pw, kp)
    patches = jnp.transpose(patches, (0, 2, 4, 6, 1, 3, 5, 7)).reshape(N, n_pool * m_out, kp)

    w = _pack_conv_weight(weight, kp, cout)                             # (512, 64)
    b = bias.astype(jnp.float32).reshape(1, cout)

    out = pl.pallas_call(
        functools.partial(_conv1_swish_pool_kernel, n_pool=n_pool, m_out=m_out),
        out_shape=jax.ShapeDtypeStruct((N, m_out, cout), jnp.bfloat16),
        grid=(N,),
        in_specs=[
            pl.BlockSpec((pl.Squeezed(), n_pool * m_out, kp), lambda n: (n, 0, 0)),
            pl.BlockSpec((kp, cout), lambda n: (0, 0)),     # constant block: stays resident
            pl.BlockSpec((1, cout), lambda n: (0, 0)),
        ],
        out_specs=pl.BlockSpec((pl.Squeezed(), m_out, cout), lambda n: (n, 0, 0)),
        compiler_params=pltpu.CompilerParams(
            dimension_semantics=("parallel",),              # batch grid -> both TCs on v7x
            vmem_limit_bytes=16 * 1024 * 1024),
    )(patches, w, b)
    return out.reshape(N, tp_, hp_, wp_, cout)


def conv2_swish_maxpool_head(feat, weight, bias, w_logit, b_logit):
    """Layer 2 (Conv3d 64->32 + Swish + MaxPool(2,2,2)) fused with the head
    (AvgPool3d((2,1,1),1) + Dropout(eval) + 1x1x1 Conv3d + squeeze + max over T).

    The whole batch is folded into one grid step so the MXU M is n_pool*N*Tp = 64 and every
    pooling-phase row block is N*Tp = 8 rows (exactly one sublane group).
    feat: (N, T1, H1, W1, 64) bf16 channels-last.
    """
    N = feat.shape[0]
    cout = weight.shape[0]                                              # 32
    nc = w_logit.shape[0]                                               # 10
    c_pad = LANE                                                        # lane-dense matmul out
    patches, (to, ho, wo) = _im2col(feat, (3, 7, 7), (1, 3, 3), (1, 2, 2))
    k0 = patches.shape[-1]                                              # 147*64 = 9408 (real Cin)
    kp = ((k0 + LANE - 1) // LANE) * LANE                               # 9472
    pt, ph, pw = 2, 2, 2
    assert to % pt == 0 and ho % ph == 0 and wo % pw == 0
    tp_, hp_, wp_ = to // pt, ho // ph, wo // pw                        # 4, 1, 1
    assert hp_ == 1 and wp_ == 1, "squeeze(3).squeeze(3) path requires 1x1 spatial features"
    n_pool = pt * ph * pw                                               # 8
    rows = N * tp_ * hp_ * wp_                                          # 8 rows per phase block
    if kp != k0:
        patches = jnp.pad(patches, ((0, 0), (0, 0), (0, 0), (0, 0), (0, kp - k0)))
    # Row layout: row = phase * rows + t * N + n   (phase-major; t-major, batch fastest).
    patches = patches.reshape(N, tp_, pt, hp_, ph, wp_, pw, kp)
    patches = jnp.transpose(patches, (2, 4, 6, 1, 3, 5, 0, 7)).reshape(n_pool * rows, kp)

    w = _pack_conv_weight(weight, kp, c_pad)                            # (9472, 128)
    b = jnp.pad(bias.astype(jnp.float32), (0, c_pad - cout)).reshape(1, c_pad)
    wh = w_logit.reshape(nc, cout).T.astype(jnp.float32)                # (32, NC)
    wh = jnp.pad(wh, ((0, c_pad - cout), (0, 0))).astype(jnp.bfloat16)  # (128, NC)
    bh = b_logit.astype(jnp.float32).reshape(1, nc)

    return pl.pallas_call(
        functools.partial(_conv2_swish_pool_head_kernel,
                          n_pool=n_pool, rows=rows, n_batch=N, t_pool=tp_),
        out_shape=jax.ShapeDtypeStruct((N, nc), jnp.float32),
        grid=(1,),
        in_specs=[
            pl.BlockSpec((n_pool * rows, kp), lambda i: (0, 0)),
            pl.BlockSpec((kp, c_pad), lambda i: (0, 0)),
            pl.BlockSpec((1, c_pad), lambda i: (0, 0)),
            pl.BlockSpec((c_pad, nc), lambda i: (0, 0)),
            pl.BlockSpec((1, nc), lambda i: (0, 0)),
        ],
        out_specs=pl.BlockSpec((N, nc), lambda i: (0, 0)),
        compiler_params=pltpu.CompilerParams(
            dimension_semantics=("arbitrary",),
            vmem_limit_bytes=24 * 1024 * 1024),
    )(patches, w, b, wh, bh)


def convnet3d_forward(x_ntchw, params):
    """ConvNet3D.forward.  x_ntchw: (N, T, C, H, W) exactly as given to forward()."""
    # forward() does x.permute(0,2,1,3,4) -> NCDHW; we go channels-last NDHWC instead.
    x = jnp.transpose(x_ntchw, (0, 1, 3, 4, 2))                         # (N, T, H, W, C)
    x = conv1_swish_maxpool(x, params["w0"], params["b0"])
    # TODO(synk): layer 2 still consumes an XLA-built im2col blob; fully fusing both conv
    # layers into one pallas_call with in-VMEM column gathering would remove that expansion.
    return conv2_swish_maxpool_head(x, params["w1"], params["b1"], params["wl"], params["bl"])


# --------------------------------------------------------------------------------------
# Pure-JAX reference (f32, HIGHEST precision) for a correctness sanity check
# --------------------------------------------------------------------------------------

def reference_forward(x_ntchw, params):
    x = jnp.transpose(x_ntchw, (0, 2, 1, 3, 4)).astype(jnp.float32)     # NCDHW
    dn = ("NCDHW", "OIDHW", "NCDHW")

    def conv(x, w, b, strides, padding):
        y = lax.conv_general_dilated(x, w, window_strides=strides, padding=padding,
                                     dimension_numbers=dn,
                                     precision=lax.Precision.HIGHEST)
        return y + b.reshape(1, -1, 1, 1, 1)

    def swish(v):
        return v * jax.nn.sigmoid(v)

    def maxpool(v, win):
        init = jnp.array(-jnp.inf, dtype=v.dtype)
        return lax.reduce_window(v, init, lax.max, (1, 1) + win, (1, 1) + win, "VALID")

    x = swish(conv(x, params["w0"], params["b0"], (1, 2, 2), ((1, 1), (3, 3), (3, 3))))
    x = maxpool(x, (1, 2, 2))
    x = swish(conv(x, params["w1"], params["b1"], (1, 2, 2), ((1, 1), (3, 3), (3, 3))))
    x = maxpool(x, (2, 2, 2))
    x = lax.reduce_window(x, jnp.array(0.0, x.dtype), lax.add,
                          (1, 1, 2, 1, 1), (1, 1, 1, 1, 1), "VALID") * 0.5
    x = conv(x, params["wl"], params["bl"], (1, 1, 1), ((0, 0), (0, 0), (0, 0)))
    x = jnp.squeeze(x, axis=(3, 4))
    return jnp.max(x, axis=2)


# --------------------------------------------------------------------------------------
# Main
# --------------------------------------------------------------------------------------

if __name__ == "__main__":
    channel, num_classes, net_width, frames, imsz = 3, 10, 32, 8, 16
    N = 2

    key = jax.random.PRNGKey(0)
    k0, k1, k2, k3, k4, k5, kx = jax.random.split(key, 7)
    params = {
        # Conv3d weights in PyTorch layout (Cout, Cin, KT, KH, KW); deterministic init.
        "w0": jax.random.normal(k0, (64, channel, 3, 7, 7), jnp.float32) * 0.05,
        "b0": jax.random.normal(k1, (64,), jnp.float32) * 0.05,
        "w1": jax.random.normal(k2, (net_width, 64, 3, 7, 7), jnp.float32) * 0.02,
        "b1": jax.random.normal(k3, (net_width,), jnp.float32) * 0.02,
        "wl": jax.random.normal(k4, (num_classes, net_width, 1, 1, 1), jnp.float32) * 0.1,
        "bl": jax.random.normal(k5, (num_classes,), jnp.float32) * 0.1,
    }
    x = jax.random.normal(kx, (N, frames, channel, imsz, imsz), jnp.float32)

    out = jax.jit(convnet3d_forward)(x, params)
    out = jax.block_until_ready(out)

    assert out.shape == (N, num_classes), out.shape
    ref = reference_forward(x, params)
    max_err = float(jnp.max(jnp.abs(out - ref)))
    # bf16 MXU operands everywhere (convs + fused head) vs an f32 HIGHEST-precision
    # reference; expected error ~1e-2, so 1e-1 still cleanly flags structural bugs (~O(0.5)).
    if not (max_err < 1e-1) or not bool(jnp.all(jnp.isfinite(out))):
        raise AssertionError(f"Pallas output mismatch vs reference, max_err={max_err}")

    print("KERNEL_OK")
</pallas_src>

<mosaic_0001>
module attributes {stable_mosaic.version = 11 : i64} {
  func.func @_conv1_swish_pool_kernel(%arg0: i32, %arg1: memref<1x512x512xbf16, #tpu.memory_space<vmem>>, %arg2: memref<512x64xbf16, #tpu.memory_space<vmem>>, %arg3: memref<1x64xf32, #tpu.memory_space<vmem>>, %arg4: memref<1x128x64xbf16, #tpu.memory_space<vmem>>) attributes {dimension_semantics = [#tpu.dimension_semantics<parallel>], iteration_bounds = array<i64: 2>, scalar_prefetch = 0 : i64, scratch_operands = 0 : i64, tpu.core_type = #tpu.core_type<tc>, window_params = [{transform_indices = @transform_0, window_bounds = array<i64: 1, 512, 512>}, {pipeline_mode = #tpu.pipeline_mode<synchronous>, transform_indices = @transform_1, window_bounds = array<i64: 512, 64>}, {pipeline_mode = #tpu.pipeline_mode<synchronous>, transform_indices = @transform_2, window_bounds = array<i64: 1, 64>}, {transform_indices = @transform_3, window_bounds = array<i64: 1, 128, 64>}]} {
    %c0 = arith.constant 0 : index
    %c0_0 = arith.constant 0 : index
    %c0_1 = arith.constant 0 : index
    %0 = vector.load %arg1[%c0, %c0_0, %c0_1] : memref<1x512x512xbf16, #tpu.memory_space<vmem>>, vector<1x512x512xbf16>
    %1 = vector.shape_cast %0 : vector<1x512x512xbf16> to vector<512x512xbf16>
    %c0_2 = arith.constant 0 : index
    %c0_3 = arith.constant 0 : index
    %2 = vector.load %arg2[%c0_2, %c0_3] : memref<512x64xbf16, #tpu.memory_space<vmem>>, vector<512x64xbf16>
    %cst = arith.constant dense<0.000000e+00> : vector<512x64xf32>
    %3 = tpu.matmul %1, %2, %cst {dimension_numbers = #tpu.dot_dimension_numbers<[1], [0], [0], [1], [0, 0, 1, 1], [], []>} : vector<512x512xbf16>, vector<512x64xbf16>, vector<512x64xf32> -> vector<512x64xf32>
    %c0_4 = arith.constant 0 : index
    %c0_5 = arith.constant 0 : index
    %4 = vector.load %arg3[%c0_4, %c0_5] : memref<1x64xf32, #tpu.memory_space<vmem>>, vector<1x64xf32>
    %5 = vector.broadcast %4 : vector<1x64xf32> to vector<512x64xf32>
    %6 = arith.addf %3, %5 : vector<512x64xf32>
    %cst_6 = arith.constant 5.000000e-01 : f32
    %7 = vector.broadcast %cst_6 : f32 to vector<512x64xf32>
    %8 = arith.mulf %7, %6 : vector<512x64xf32>
    %9 = math.tanh %8 : vector<512x64xf32>
    %cst_7 = arith.constant 1.000000e+00 : f32
    %10 = vector.broadcast %cst_7 : f32 to vector<512x64xf32>
    %11 = arith.addf %9, %10 : vector<512x64xf32>
    %cst_8 = arith.constant 5.000000e-01 : f32
    %12 = vector.broadcast %cst_8 : f32 to vector<512x64xf32>
    %13 = arith.mulf %12, %11 : vector<512x64xf32>
    %14 = arith.mulf %6, %13 : vector<512x64xf32>
    %15 = vector.extract_strided_slice %14 {offsets = [0, 0], sizes = [128, 64], strides = [1, 1]} : vector<512x64xf32> to vector<128x64xf32>
    %16 = vector.extract_strided_slice %14 {offsets = [128, 0], sizes = [128, 64], strides = [1, 1]} : vector<512x64xf32> to vector<128x64xf32>
    %17 = arith.maximumf %15, %16 : vector<128x64xf32>
    %18 = vector.extract_strided_slice %14 {offsets = [256, 0], sizes = [128, 64], strides = [1, 1]} : vector<512x64xf32> to vector<128x64xf32>
    %19 = arith.maximumf %17, %18 : vector<128x64xf32>
    %20 = vector.extract_strided_slice %14 {offsets = [384, 0], sizes = [128, 64], strides = [1, 1]} : vector<512x64xf32> to vector<128x64xf32>
    %21 = arith.maximumf %19, %20 : vector<128x64xf32>
    %22 = arith.truncf %21 : vector<128x64xf32> to vector<128x64xbf16>
    %c0_9 = arith.constant 0 : index
    %c0_10 = arith.constant 0 : index
    %c0_11 = arith.constant 0 : index
    %23 = vector.load %arg4[%c0_9, %c0_10, %c0_11] : memref<1x128x64xbf16, #tpu.memory_space<vmem>>, vector<1x128x64xbf16>
    %24 = vector.shape_cast %23 : vector<1x128x64xbf16> to vector<128x64xbf16>
    %25 = vector.shape_cast %22 : vector<128x64xbf16> to vector<1x128x64xbf16>
    tpu.vector_store %arg4[%c0_9, %c0_10, %c0_11], %25 {strides = array<i32>} : memref<1x128x64xbf16, #tpu.memory_space<vmem>>, vector<1x128x64xbf16>,
    return
  }
  func.func @transform_0(%arg0: i32) -> (i32, i32, i32) {
    %c0_i32 = arith.constant 0 : i32
    %c0_i32_0 = arith.constant 0 : i32
    %c0_i32_1 = arith.constant 0 : i32
    return %arg0, %c0_i32, %c0_i32_0 : i32, i32, i32
  }
  func.func @transform_1(%arg0: i32) -> (i32, i32) {
    %c0_i32 = arith.constant 0 : i32
    %c0_i32_0 = arith.constant 0 : i32
    %c0_i32_1 = arith.constant 0 : i32
    return %c0_i32, %c0_i32_0 : i32, i32
  }
  func.func @transform_2(%arg0: i32) -> (i32, i32) {
    %c0_i32 = arith.constant 0 : i32
    %c0_i32_0 = arith.constant 0 : i32
    %c0_i32_1 = arith.constant 0 : i32
    return %c0_i32, %c0_i32_0 : i32, i32
  }
  func.func @transform_3(%arg0: i32) -> (i32, i32, i32) {
    %c0_i32 = arith.constant 0 : i32
    %c0_i32_0 = arith.constant 0 : i32
    %c0_i32_1 = arith.constant 0 : i32
    return %arg0, %c0_i32, %c0_i32_0 : i32, i32, i32
  }
}

module attributes {stable_mosaic.version = 11 : i64} {
  func.func @_conv2_swish_pool_head_kernel(%arg0: i32, %arg1: memref<64x9472xbf16, #tpu.memory_space<vmem>>, %arg2: memref<9472x128xbf16, #tpu.memory_space<vmem>>, %arg3: memref<1x128xf32, #tpu.memory_space<vmem>>, %arg4: memref<128x10xbf16, #tpu.memory_space<vmem>>, %arg5: memref<1x10xf32, #tpu.memory_space<vmem>>, %arg6: memref<2x10xf32, #tpu.memory_space<vmem>>) attributes {dimension_semantics = [#tpu.dimension_semantics<arbitrary>], iteration_bounds = array<i64: 1>, scalar_prefetch = 0 : i64, scratch_operands = 0 : i64, tpu.core_type = #tpu.core_type<tc>, window_params = [{pipeline_mode = #tpu.pipeline_mode<synchronous>, transform_indices = @transform_0, window_bounds = array<i64: 64, 9472>}, {pipeline_mode = #tpu.pipeline_mode<synchronous>, transform_indices = @transform_1, window_bounds = array<i64: 9472, 128>}, {pipeline_mode = #tpu.pipeline_mode<synchronous>, transform_indices = @transform_2, window_bounds = array<i64: 1, 128>}, {pipeline_mode = #tpu.pipeline_mode<synchronous>, transform_indices = @transform_3, window_bounds = array<i64: 128, 10>}, {pipeline_mode = #tpu.pipeline_mode<synchronous>, transform_indices = @transform_4, window_bounds = array<i64: 1, 10>}, {pipeline_mode = #tpu.pipeline_mode<synchronous>, transform_indices = @transform_5, window_bounds = array<i64: 2, 10>}]} {
    %c0 = arith.constant 0 : index
    %c0_0 = arith.constant 0 : index
    %0 = vector.load %arg1[%c0, %c0_0] : memref<64x9472xbf16, #tpu.memory_space<vmem>>, vector<64x9472xbf16>
    %c0_1 = arith.constant 0 : index
    %c0_2 = arith.constant 0 : index
    %1 = vector.load %arg2[%c0_1, %c0_2] : memref<9472x128xbf16, #tpu.memory_space<vmem>>, vector<9472x128xbf16>
    %cst = arith.constant dense<0.000000e+00> : vector<64x128xf32>
    %2 = tpu.matmul %0, %1, %cst {dimension_numbers = #tpu.dot_dimension_numbers<[1], [0], [0], [1], [0, 0, 1, 1], [], []>} : vector<64x9472xbf16>, vector<9472x128xbf16>, vector<64x128xf32> -> vector<64x128xf32>
    %c0_3 = arith.constant 0 : index
    %c0_4 = arith.constant 0 : index
    %3 = vector.load %arg3[%c0_3, %c0_4] : memref<1x128xf32, #tpu.memory_space<vmem>>, vector<1x128xf32>
    %4 = vector.broadcast %3 : vector<1x128xf32> to vector<64x128xf32>
    %5 = arith.addf %2, %4 : vector<64x128xf32>
    %cst_5 = arith.constant 5.000000e-01 : f32
    %6 = vector.broadcast %cst_5 : f32 to vector<64x128xf32>
    %7 = arith.mulf %6, %5 : vector<64x128xf32>
    %8 = math.tanh %7 : vector<64x128xf32>
    %cst_6 = arith.constant 1.000000e+00 : f32
    %9 = vector.broadcast %cst_6 : f32 to vector<64x128xf32>
    %10 = arith.addf %8, %9 : vector<64x128xf32>
    %cst_7 = arith.constant 5.000000e-01 : f32
    %11 = vector.broadcast %cst_7 : f32 to vector<64x128xf32>
    %12 = arith.mulf %11, %10 : vector<64x128xf32>
    %13 = arith.mulf %5, %12 : vector<64x128xf32>
    %14 = vector.extract_strided_slice %13 {offsets = [0, 0], sizes = [8, 128], strides = [1, 1]} : vector<64x128xf32> to vector<8x128xf32>
    %15 = vector.extract_strided_slice %13 {offsets = [8, 0], sizes = [8, 128], strides = [1, 1]} : vector<64x128xf32> to vector<8x128xf32>
    %16 = arith.maximumf %14, %15 : vector<8x128xf32>
    %17 = vector.extract_strided_slice %13 {offsets = [16, 0], sizes = [8, 128], strides = [1, 1]} : vector<64x128xf32> to vector<8x128xf32>
    %18 = arith.maximumf %16, %17 : vector<8x128xf32>
    %19 = vector.extract_strided_slice %13 {offsets = [24, 0], sizes = [8, 128], strides = [1, 1]} : vector<64x128xf32> to vector<8x128xf32>
    %20 = arith.maximumf %18, %19 : vector<8x128xf32>
    %21 = vector.extract_strided_slice %13 {offsets = [32, 0], sizes = [8, 128], strides = [1, 1]} : vector<64x128xf32> to vector<8x128xf32>
    %22 = arith.maximumf %20, %21 : vector<8x128xf32>
    %23 = vector.extract_strided_slice %13 {offsets = [40, 0], sizes = [8, 128], strides = [1, 1]} : vector<64x128xf32> to vector<8x128xf32>
    %24 = arith.maximumf %22, %23 : vector<8x128xf32>
    %25 = vector.extract_strided_slice %13 {offsets = [48, 0], sizes = [8, 128], strides = [1, 1]} : vector<64x128xf32> to vector<8x128xf32>
    %26 = arith.maximumf %24, %25 : vector<8x128xf32>
    %27 = vector.extract_strided_slice %13 {offsets = [56, 0], sizes = [8, 128], strides = [1, 1]} : vector<64x128xf32> to vector<8x128xf32>
    %28 = arith.maximumf %26, %27 : vector<8x128xf32>
    %29 = vector.extract_strided_slice %28 {offsets = [0, 0], sizes = [6, 128], strides = [1, 1]} : vector<8x128xf32> to vector<6x128xf32>
    %30 = vector.extract_strided_slice %28 {offsets = [2, 0], sizes = [6, 128], strides = [1, 1]} : vector<8x128xf32> to vector<6x128xf32>
    %31 = arith.addf %29, %30 : vector<6x128xf32>
    %cst_8 = arith.constant 5.000000e-01 : f32
    %32 = vector.broadcast %cst_8 : f32 to vector<6x128xf32>
    %33 = arith.mulf %31, %32 : vector<6x128xf32>
    %34 = arith.truncf %33 : vector<6x128xf32> to vector<6x128xbf16>
    %c0_9 = arith.constant 0 : index
    %c0_10 = arith.constant 0 : index
    %35 = vector.load %arg4[%c0_9, %c0_10] : memref<128x10xbf16, #tpu.memory_space<vmem>>, vector<128x10xbf16>
    %cst_11 = arith.constant dense<0.000000e+00> : vector<6x10xf32>
    %36 = tpu.matmul %34, %35, %cst_11 {dimension_numbers = #tpu.dot_dimension_numbers<[1], [0], [0], [1], [0, 0, 1, 1], [], []>} : vector<6x128xbf16>, vector<128x10xbf16>, vector<6x10xf32> -> vector<6x10xf32>
    %c0_12 = arith.constant 0 : index
    %c0_13 = arith.constant 0 : index
    %37 = vector.load %arg5[%c0_12, %c0_13] : memref<1x10xf32, #tpu.memory_space<vmem>>, vector<1x10xf32>
    %38 = vector.broadcast %37 : vector<1x10xf32> to vector<6x10xf32>
    %39 = arith.addf %36, %38 : vector<6x10xf32>
    %40 = vector.extract_strided_slice %39 {offsets = [0, 0], sizes = [2, 10], strides = [1, 1]} : vector<6x10xf32> to vector<2x10xf32>
    %41 = vector.extract_strided_slice %39 {offsets = [2, 0], sizes = [2, 10], strides = [1, 1]} : vector<6x10xf32> to vector<2x10xf32>
    %42 = arith.maximumf %40, %41 : vector<2x10xf32>
    %43 = vector.extract_strided_slice %39 {offsets = [4, 0], sizes = [2, 10], strides = [1, 1]} : vector<6x10xf32> to vector<2x10xf32>
    %44 = arith.maximumf %42, %43 : vector<2x10xf32>
    %c0_14 = arith.constant 0 : index
    %c0_15 = arith.constant 0 : index
    %45 = vector.load %arg6[%c0_14, %c0_15] : memref<2x10xf32, #tpu.memory_space<vmem>>, vector<2x10xf32>
    tpu.vector_store %arg6[%c0_14, %c0_15], %44 {strides = array<i32>} : memref<2x10xf32, #tpu.memory_space<vmem>>, vector<2x10xf32>,
    return
  }
  func.func @transform_0(%arg0: i32) -> (i32, i32) {
    %c0_i32 = arith.constant 0 : i32
    %c0_i32_0 = arith.constant 0 : i32
    %c0_i32_1 = arith.constant 0 : i32
    return %c0_i32, %c0_i32_0 : i32, i32
  }
  func.func @transform_1(%arg0: i32) -> (i32, i32) {
    %c0_i32 = arith.constant 0 : i32
    %c0_i32_0 = arith.constant 0 : i32
    %c0_i32_1 = arith.constant 0 : i32
    return %c0_i32, %c0_i32_0 : i32, i32
  }
  func.func @transform_2(%arg0: i32) -> (i32, i32) {
    %c0_i32 = arith.constant 0 : i32
    %c0_i32_0 = arith.constant 0 : i32
    %c0_i32_1 = arith.constant 0 : i32
    return %c0_i32, %c0_i32_0 : i32, i32
  }
  func.func @transform_3(%arg0: i32) -> (i32, i32) {
    %c0_i32 = arith.constant 0 : i32
    %c0_i32_0 = arith.constant 0 : i32
    %c0_i32_1 = arith.constant 0 : i32
    return %c0_i32, %c0_i32_0 : i32, i32
  }
  func.func @transform_4(%arg0: i32) -> (i32, i32) {
    %c0_i32 = arith.constant 0 : i32
    %c0_i32_0 = arith.constant 0 : i32
    %c0_i32_1 = arith.constant 0 : i32
    return %c0_i32, %c0_i32_0 : i32, i32
  }
  func.func @transform_5(%arg0: i32) -> (i32, i32) {
    %c0_i32 = arith.constant 0 : i32
    %c0_i32_0 = arith.constant 0 : i32
    %c0_i32_1 = arith.constant 0 : i32
    return %c0_i32, %c0_i32_0 : i32, i32
  }
}

</mosaic_0001>

<llo_original>
// kernel: convnet3d_forward.2
$region0: #{convnet3d_forward.2}
  #allocation0 [shape = 'u32[]', space=smem, size = 0x4, offset = 0x4, fixed_abs, tag = 'smem constant byte address 0x4 - core index']
  #allocation1 [shape = 'u32[144,128]{1,0:T(1,128)}', space=vmem, size = 0x12000, scoped, tag = 'internal scratch']
  %s0 = inlined_call_operand.vmem [shape: bf16[2,512,512], index: 0, kind: input, shape index: {}]
  %s1 = inlined_call_operand.vmem [shape: bf16[512,64], index: 1, kind: input, shape index: {}]
  %s2 = inlined_call_operand.vmem [shape: f32[1,64], index: 2, kind: input, shape index: {}]
  %s3 = inlined_call_operand.vmem [shape: bf16[2,128,64], index: 3, kind: output, shape index: {}]
  %s4 = sld [smem:[#allocation0]]
  $region45: #{convnet3d_forward.2} parent=0
    _
  %s6 = ssub.s32 1, %s4
  %s7 = scalar_select 0, %s6, %s4
  loop: start=0, step=1, limit=4
  $region2: #{convnet3d_forward.2} parent=0 // loop_pre_header
    _
  $region3: #{convnet3d_forward.2} parent=0 // loop_header
    %s9 = sphi 0, %s13
    %p10 = scmp.ge.s32.totalorder %s9, 4
    %s19 = sphi 0, %s21
    %s22 = sphi 0, %s19
    %s23 = sphi 0, %s22
    %s39 = sphi 0, %s23
    %s43 = sphi 0, %s43
    %s45 = sphi 0, %s43
    %s46 = sphi 0, %s45
    %s60 = sphi 0, %s46
    %s64 = sphi 0, %s64
    %s66 = sphi 0, %s64
    %s67 = sphi 0, %s66
    %s81 = sphi 0, %s67
    %s87 = sphi 0, %s89
    %s90 = sphi 0, %s87
    %s91 = sphi 0, %s90
    %s107 = sphi 0, %s91
  $region4: #{convnet3d_forward.2} parent=0 // loop_header_branch
    %12 = sbr.rel (%p10) target = $region8
  $region5: #{convnet3d_forward.2} parent=0 // loop_body
    %s14 = ssub.s32 %s9, 1
    %s15 = ssub.s32 %s9, 2
    %s16 = sadd.s32 %s9, 1
    %s17 = ssub.s32 %s9, %s16
    %p18 = scmp.eq.s32.totalorder %s17, 0
    %s20 = sadd.s32 %s19, 1
    %s21 = scalar_select %p18, %s19, %s20
    %p24 = pneg %p18
    %p25 = scmp.eq.s32.totalorder %s9, 1
    %p26 = por %p24, %p25
    %p27 = scmp.ne.s32.totalorder %s19, %s22
    %p28 = scmp.eq.s32.totalorder %s9, 0
    %p29 = por %p27, %p28
    %p30 = scmp.ne.s32.totalorder %s19, %s22
    %p31 = scmp.eq.s32.totalorder %s14, 1
    %p32 = por %p30, %p31
    %p33 = scmp.ne.s32.totalorder %s22, %s23
    %p34 = scmp.eq.s32.totalorder %s14, 0
    %p35 = por %p33, %p34
    %p36 = scmp.ne.s32.totalorder %s22, %s23
    %p37 = scmp.eq.s32.totalorder %s15, 1
    %p38 = por %p36, %p37
    %p40 = scmp.ne.s32.totalorder %s23, %s39
    %p41 = scmp.eq.s32.totalorder %s15, 0
    %p42 = por %p40, %p41
    %s44 = sadd.s32 %s43, 1
    %p47 = scmp.eq.s32.totalorder %s9, 1
    %p48 = scmp.ne.s32.totalorder %s43, %s45
    %p49 = scmp.eq.s32.totalorder %s9, 0
    %p50 = por %p48, %p49
    %p51 = scmp.ne.s32.totalorder %s43, %s45
    %p52 = scmp.eq.s32.totalorder %s14, 1
    %p53 = por %p51, %p52
    %p54 = scmp.ne.s32.totalorder %s45, %s46
    %p55 = scmp.eq.s32.totalorder %s14, 0
    %p56 = por %p54, %p55
    %p57 = scmp.ne.s32.totalorder %s45, %s46
    %p58 = scmp.eq.s32.totalorder %s15, 1
    %p59 = por %p57, %p58
    %p61 = scmp.ne.s32.totalorder %s46, %s60
    %p62 = scmp.eq.s32.totalorder %s15, 0
    %p63 = por %p61, %p62
    %s65 = sadd.s32 %s64, 1
    %p68 = scmp.eq.s32.totalorder %s9, 1
    %p69 = scmp.ne.s32.totalorder %s64, %s66
    %p70 = scmp.eq.s32.totalorder %s9, 0
    %p71 = por %p69, %p70
    %p72 = scmp.ne.s32.totalorder %s64, %s66
    %p73 = scmp.eq.s32.totalorder %s14, 1
    %p74 = por %p72, %p73
    %p75 = scmp.ne.s32.totalorder %s66, %s67
    %p76 = scmp.eq.s32.totalorder %s14, 0
    %p77 = por %p75, %p76
    %p78 = scmp.ne.s32.totalorder %s66, %s67
    %p79 = scmp.eq.s32.totalorder %s15, 1
    %p80 = por %p78, %p79
    %p82 = scmp.ne.s32.totalorder %s67, %s81
    %p83 = scmp.eq.s32.totalorder %s15, 0
    %p84 = por %p82, %p83
    %s85 = ssub.s32 %s9, %s16
    %p86 = scmp.eq.s32.totalorder %s85, 0
    %s88 = sadd.s32 %s87, 1
    %s89 = scalar_select %p86, %s87, %s88
    %p92 = pneg %p86
    %p93 = scmp.eq.s32.totalorder %s9, 1
    %p94 = por %p92, %p93
    %p95 = scmp.ne.s32.totalorder %s87, %s90
    %p96 = scmp.eq.s32.totalorder %s9, 0
    %p97 = por %p95, %p96
    %p98 = scmp.ne.s32.totalorder %s87, %s90
    %p99 = scmp.eq.s32.totalorder %s14, 1
    %p100 = por %p98, %p99
    %p101 = scmp.ne.s32.totalorder %s90, %s91
    %p102 = scmp.eq.s32.totalorder %s14, 0
    %p103 = por %p101, %p102
    %p104 = scmp.ne.s32.totalorder %s90, %s91
    %p105 = scmp.eq.s32.totalorder %s15, 1
    %p106 = por %p104, %p105
    %p108 = scmp.ne.s32.totalorder %s91, %s107
    %p109 = scmp.eq.s32.totalorder %s15, 0
    %p110 = por %p108, %p109
    %p111 = scmp.le.s32.totalorder 1, %s9
    %p112 = scmp.lt.s32.totalorder %s9, 3
    %p113 = pnand %p111, %p112
    %p114 = pneg %p113
    // Predicated region
    $region9: #{convnet3d_forward.2} parent=5 // pred_check
      _
    $region10: #{convnet3d_forward.2} parent=5 // pred_check_branch
      %116 = sbr.rel (%p113) target = $region12
    $region11: #{convnet3d_forward.2} parent=5 // pred_region
      %s117 = ssub.s32 %s9, 1
      // Predicated region
      $region13: #{convnet3d_forward.2} parent=11 // pred_check
        %p118 = pneg %p56
      $region14: #{convnet3d_forward.2} parent=11 // pred_check_branch
        %120 = sbr.rel (%p118) target = $region16
      $region15: #{convnet3d_forward.2} parent=11 // pred_region
        _
      $region16: #{convnet3d_forward.2} parent=11 // pred_fallthru
        _
      // Predicated region
      $region17: #{convnet3d_forward.2} parent=11 // pred_check
        %p121 = pneg %p77
      $region18: #{convnet3d_forward.2} parent=11 // pred_check_branch
        %123 = sbr.rel (%p121) target = $region20
      $region19: #{convnet3d_forward.2} parent=11 // pred_region
        _
      $region20: #{convnet3d_forward.2} parent=11 // pred_fallthru
        _
    $region12: #{convnet3d_forward.2} parent=5 // pred_fallthru
      _
    %p124 = scmp.lt.s32.totalorder %s9, 2
    // Predicated region
    $region21: #{convnet3d_forward.2} parent=5 // pred_check
      %p125 = pneg %p124
    $region22: #{convnet3d_forward.2} parent=5 // pred_check_branch
      %127 = sbr.rel (%p125) target = $region24
    $region23: #{convnet3d_forward.2} parent=5 // pred_region
      // Predicated region
      $region25: #{convnet3d_forward.2} parent=23 // pred_check
        %p128 = pneg %p29
      $region26: #{convnet3d_forward.2} parent=23 // pred_check_branch
        %130 = sbr.rel (%p128) target = $region28
      $region27: #{convnet3d_forward.2} parent=23 // pred_region
        %p131 = scmp.lt.s32.totalorder %s9, 1
        %s132 = scalar_select %p131, %s9, 1
        %s133 = smul.addr %s132, 256
        %s134 = smul.addr %s133, 4
        %s135 = scalar_lea.vmem %s0, %s134
      $region28: #{convnet3d_forward.2} parent=23 // pred_fallthru
        _
    $region24: #{convnet3d_forward.2} parent=5 // pred_fallthru
      _
    %p136 = scmp.le.s32.totalorder 1, %s9
    %p137 = scmp.lt.s32.totalorder %s9, 3
    %p138 = pnand %p136, %p137
    %p139 = pneg %p138
    // Predicated region
    $region29: #{convnet3d_forward.2} parent=5 // pred_check
      _
    $region30: #{convnet3d_forward.2} parent=5 // pred_check_branch
      %141 = sbr.rel (%p138) target = $region32
    $region31: #{convnet3d_forward.2} parent=5 // pred_region
      %s142 = ssub.s32 %s9, 1
      %p143 = scmp.lt.s32.totalorder %s14, 1
      %s144 = scalar_select %p143, %s14, 1
      %s145 = smul.addr %s144, 256
      %s146 = smul.addr %s145, 4
      %s147 = scalar_lea.vmem %s0, %s146
      %p148 = pneg %p35
      %p149 = pneg %p32
      %p150 = pneg %p56
      %p151 = pneg %p53
      %p152 = pneg %p77
      %p153 = pneg %p74
      %p154 = pneg %p103
      %p155 = pneg %p100
      %p156 = scmp.lt.s32.totalorder %s14, 1
      %s157 = scalar_select %p156, %s14, 1
      %s158 = smul.addr %s157, 16
      %s159 = smul.addr %s158, 4
      %s160 = scalar_lea.vmem %s3, %s159
      %p161 = scmp.lt.s32.totalorder %s14, 1
      %s162 = scalar_select %p161, %s14, 1
      %s163 = smul.addr %s162, 256
      %s164 = smul.addr %s163, 4
      %s165 = scalar_lea.vmem %s0, %s164
      %p166 = scmp.lt.s32.totalorder %s14, 1
      %s167 = scalar_select %p166, %s14, 1
      %s168 = smul.addr %s167, 16
      %s169 = smul.addr %s168, 4
      %s170 = scalar_lea.vmem %s3, %s169
      %v172 = vld [vmem:[%s165] sm:$0xff]
      %v173 = vld [vmem:[%s165 + $0x8] sm:$0xff]
      %v174 = vld [vmem:[%s165 + $0x10] sm:$0xff]
      %v175 = vld [vmem:[%s165 + $0x18] sm:$0xff]
      %v176 = vld [vmem:[%s165 + $0x20] sm:$0xff]
      %v177 = vld [vmem:[%s165 + $0x28] sm:$0xff]
      %v178 = vld [vmem:[%s165 + $0x30] sm:$0xff]
      %v179 = vld [vmem:[%s165 + $0x38] sm:$0xff]
      %v180 = vld [vmem:[%s165 + $0x40] sm:$0xff]
      %v181 = vld [vmem:[%s165 + $0x48] sm:$0xff]
      %v182 = vld [vmem:[%s165 + $0x50] sm:$0xff]
      %v183 = vld [vmem:[%s165 + $0x58] sm:$0xff]
      %v184 = vld [vmem:[%s165 + $0x60] sm:$0xff]
      %v185 = vld [vmem:[%s165 + $0x68] sm:$0xff]
      %v186 = vld [vmem:[%s165 + $0x70] sm:$0xff]
      %v187 = vld [vmem:[%s165 + $0x78] sm:$0xff]
      %v188 = vld [vmem:[%s165 + $0x80] sm:$0xff]
      %v189 = vld [vmem:[%s165 + $0x88] sm:$0xff]
      %v190 = vld [vmem:[%s165 + $0x90] sm:$0xff]
      %v191 = vld [vmem:[%s165 + $0x98] sm:$0xff]
      %v192 = vld [vmem:[%s165 + $0xa0] sm:$0xff]
      %v193 = vld [vmem:[%s165 + $0xa8] sm:$0xff]
      %v194 = vld [vmem:[%s165 + $0xb0] sm:$0xff]
      %v195 = vld [vmem:[%s165 + $0xb8] sm:$0xff]
      %v196 = vld [vmem:[%s165 + $0xc0] sm:$0xff]
      %v197 = vld [vmem:[%s165 + $0xc8] sm:$0xff]
      %v198 = vld [vmem:[%s165 + $0xd0] sm:$0xff]
      %v199 = vld [vmem:[%s165 + $0xd8] sm:$0xff]
      %v200 = vld [vmem:[%s165 + $0xe0] sm:$0xff]
      %v201 = vld [vmem:[%s165 + $0xe8] sm:$0xff]
      %v202 = vld [vmem:[%s165 + $0xf0] sm:$0xff]
      %v203 = vld [vmem:[%s165 + $0xf8] sm:$0xff]
      %v204 = vld [vmem:[%s165 + $0x100] sm:$0xff]
      %v205 = vld [vmem:[%s165 + $0x108] sm:$0xff]
      %v206 = vld [vmem:[%s165 + $0x110] sm:$0xff]
      %v207 = vld [vmem:[%s165 + $0x118] sm:$0xff]
      %v208 = vld [vmem:[%s165 + $0x120] sm:$0xff]
      %v209 = vld [vmem:[%s165 + $0x128] sm:$0xff]
      %v210 = vld [vmem:[%s165 + $0x130] sm:$0xff]
      %v211 = vld [vmem:[%s165 + $0x138] sm:$0xff]
      %v212 = vld [vmem:[%s165 + $0x140] sm:$0xff]
      %v213 = vld [vmem:[%s165 + $0x148] sm:$0xff]
      %v214 = vld [vmem:[%s165 + $0x150] sm:$0xff]
      %v215 = vld [vmem:[%s165 + $0x158] sm:$0xff]
      %v216 = vld [vmem:[%s165 + $0x160] sm:$0xff]
      %v217 = vld [vmem:[%s165 + $0x168] sm:$0xff]
      %v218 = vld [vmem:[%s165 + $0x170] sm:$0xff]
      %v219 = vld [vmem:[%s165 + $0x178] sm:$0xff]
      %v220 = vld [vmem:[%s165 + $0x180] sm:$0xff]
      %v221 = vld [vmem:[%s165 + $0x188] sm:$0xff]
      %v222 = vld [vmem:[%s165 + $0x190] sm:$0xff]
      %v223 = vld [vmem:[%s165 + $0x198] sm:$0xff]
      %v224 = vld [vmem:[%s165 + $0x1a0] sm:$0xff]
      %v225 = vld [vmem:[%s165 + $0x1a8] sm:$0xff]
      %v226 = vld [vmem:[%s165 + $0x1b0] sm:$0xff]
      %v227 = vld [vmem:[%s165 + $0x1b8] sm:$0xff]
      %v228 = vld [vmem:[%s165 + $0x1c0] sm:$0xff]
      %v229 = vld [vmem:[%s165 + $0x1c8] sm:$0xff]
      %v230 = vld [vmem:[%s165 + $0x1d0] sm:$0xff]
      %v231 = vld [vmem:[%s165 + $0x1d8] sm:$0xff]
      %v232 = vld [vmem:[%s165 + $0x1e0] sm:$0xff]
      %v233 = vld [vmem:[%s165 + $0x1e8] sm:$0xff]
      %v234 = vld [vmem:[%s165 + $0x1f0] sm:$0xff]
      %v235 = vld [vmem:[%s165 + $0x1f8] sm:$0xff]
      %v236 = vld [vmem:[%s165 + $0x200] sm:$0xff]
      %v237 = vld [vmem:[%s165 + $0x208] sm:$0xff]
      %v238 = vld [vmem:[%s165 + $0x210] sm:$0xff]
      %v239 = vld [vmem:[%s165 + $0x218] sm:$0xff]
      %v240 = vld [vmem:[%s165 + $0x220] sm:$0xff]
      %v241 = vld [vmem:[%s165 + $0x228] sm:$0xff]
      %v242 = vld [vmem:[%s165 + $0x230] sm:$0xff]
      %v243 = vld [vmem:[%s165 + $0x238] sm:$0xff]
      %v244 = vld [vmem:[%s165 + $0x240] sm:$0xff]
      %v245 = vld [vmem:[%s165 + $0x248] sm:$0xff]
      %v246 = vld [vmem:[%s165 + $0x250] sm:$0xff]
      %v247 = vld [vmem:[%s165 + $0x258] sm:$0xff]
      %v248 = vld [vmem:[%s165 + $0x260] sm:$0xff]
      %v249 = vld [vmem:[%s165 + $0x268] sm:$0xff]
      %v250 = vld [vmem:[%s165 + $0x270] sm:$0xff]
      %v251 = vld [vmem:[%s165 + $0x278] sm:$0xff]
      %v252 = vld [vmem:[%s165 + $0x280] sm:$0xff]
      %v253 = vld [vmem:[%s165 + $0x288] sm:$0xff]
      %v254 = vld [vmem:[%s165 + $0x290] sm:$0xff]
      %v255 = vld [vmem:[%s165 + $0x298] sm:$0xff]
      %v256 = vld [vmem:[%s165 + $0x2a0] sm:$0xff]
      %v257 = vld [vmem:[%s165 + $0x2a8] sm:$0xff]
      %v258 = vld [vmem:[%s165 + $0x2b0] sm:$0xff]
      %v259 = vld [vmem:[%s165 + $0x2b8] sm:$0xff]
      %v260 = vld [vmem:[%s165 + $0x2c0] sm:$0xff]
      %v261 = vld [vmem:[%s165 + $0x2c8] sm:$0xff]
      %v262 = vld [vmem:[%s165 + $0x2d0] sm:$0xff]
      %v263 = vld [vmem:[%s165 + $0x2d8] sm:$0xff]
      %v264 = vld [vmem:[%s165 + $0x2e0] sm:$0xff]
      %v265 = vld [vmem:[%s165 + $0x2e8] sm:$0xff]
      %v266 = vld [vmem:[%s165 + $0x2f0] sm:$0xff]
      %v267 = vld [vmem:[%s165 + $0x2f8] sm:$0xff]
      %v268 = vld [vmem:[%s165 + $0x300] sm:$0xff]
      %v269 = vld [vmem:[%s165 + $0x308] sm:$0xff]
      %v270 = vld [vmem:[%s165 + $0x310] sm:$0xff]
      %v271 = vld [vmem:[%s165 + $0x318] sm:$0xff]
      %v272 = vld [vmem:[%s165 + $0x320] sm:$0xff]
      %v273 = vld [vmem:[%s165 + $0x328] sm:$0xff]
      %v274 = vld [vmem:[%s165 + $0x330] sm:$0xff]
      %v275 = vld [vmem:[%s165 + $0x338] sm:$0xff]
      %v276 = vld [vmem:[%s165 + $0x340] sm:$0xff]
      %v277 = vld [vmem:[%s165 + $0x348] sm:$0xff]
      %v278 = vld [vmem:[%s165 + $0x350] sm:$0xff]
      %v279 = vld [vmem:[%s165 + $0x358] sm:$0xff]
      %v280 = vld [vmem:[%s165 + $0x360] sm:$0xff]
      %v281 = vld [vmem:[%s165 + $0x368] sm:$0xff]
      %v282 = vld [vmem:[%s165 + $0x370] sm:$0xff]
      %v283 = vld [vmem:[%s165 + $0x378] sm:$0xff]
      %v284 = vld [vmem:[%s165 + $0x380] sm:$0xff]
      %v285 = vld [vmem:[%s165 + $0x388] sm:$0xff]
      %v286 = vld [vmem:[%s165 + $0x390] sm:$0xff]
      %v287 = vld [vmem:[%s165 + $0x398] sm:$0xff]
      %v288 = vld [vmem:[%s165 + $0x3a0] sm:$0xff]
      %v289 = vld [vmem:[%s165 + $0x3a8] sm:$0xff]
      %v290 = vld [vmem:[%s165 + $0x3b0] sm:$0xff]
      %v291 = vld [vmem:[%s165 + $0x3b8] sm:$0xff]
      %v292 = vld [vmem:[%s165 + $0x3c0] sm:$0xff]
      %v293 = vld [vmem:[%s165 + $0x3c8] sm:$0xff]
      %v294 = vld [vmem:[%s165 + $0x3d0] sm:$0xff]
      %v295 = vld [vmem:[%s165 + $0x3d8] sm:$0xff]
      %v296 = vld [vmem:[%s165 + $0x3e0] sm:$0xff]
      %v297 = vld [vmem:[%s165 + $0x3e8] sm:$0xff]
      %v298 = vld [vmem:[%s165 + $0x3f0] sm:$0xff]
      %v299 = vld [vmem:[%s165 + $0x3f8] sm:$0xff]
      %v300 = vld [vmem:[%s1] sm:$0xf]
      %v301 = vld [vmem:[%s1 + $0x4] sm:$0xf]
      %v302 = vld [vmem:[%s1 + $0x8] sm:$0xf]
      %v303 = vld [vmem:[%s1 + $0xc] sm:$0xf]
      %v304 = vld [vmem:[%s1 + $0x10] sm:$0xf]
      %v305 = vld [vmem:[%s1 + $0x14] sm:$0xf]
      %v306 = vld [vmem:[%s1 + $0x18] sm:$0xf]
      %v307 = vld [vmem:[%s1 + $0x1c] sm:$0xf]
      %v308 = vld [vmem:[%s1 + $0x20] sm:$0xf]
      %v309 = vld [vmem:[%s1 + $0x24] sm:$0xf]
      %v310 = vld [vmem:[%s1 + $0x28] sm:$0xf]
      %v311 = vld [vmem:[%s1 + $0x2c] sm:$0xf]
      %v312 = vld [vmem:[%s1 + $0x30] sm:$0xf]
      %v313 = vld [vmem:[%s1 + $0x34] sm:$0xf]
      %v314 = vld [vmem:[%s1 + $0x38] sm:$0xf]
      %v315 = vld [vmem:[%s1 + $0x3c] sm:$0xf]
      %v316 = vld [vmem:[%s1 + $0x40] sm:$0xf]
      %v317 = vld [vmem:[%s1 + $0x44] sm:$0xf]
      %v318 = vld [vmem:[%s1 + $0x48] sm:$0xf]
      %v319 = vld [vmem:[%s1 + $0x4c] sm:$0xf]
      %v320 = vld [vmem:[%s1 + $0x50] sm:$0xf]
      %v321 = vld [vmem:[%s1 + $0x54] sm:$0xf]
      %v322 = vld [vmem:[%s1 + $0x58] sm:$0xf]
      %v323 = vld [vmem:[%s1 + $0x5c] sm:$0xf]
      %v324 = vld [vmem:[%s1 + $0x60] sm:$0xf]
      %v325 = vld [vmem:[%s1 + $0x64] sm:$0xf]
      %v326 = vld [vmem:[%s1 + $0x68] sm:$0xf]
      %v327 = vld [vmem:[%s1 + $0x6c] sm:$0xf]
      %v328 = vld [vmem:[%s1 + $0x70] sm:$0xf]
      %v329 = vld [vmem:[%s1 + $0x74] sm:$0xf]
      %v330 = vld [vmem:[%s1 + $0x78] sm:$0xf]
      %v331 = vld [vmem:[%s1 + $0x7c] sm:$0xf]
      %v332 = vld [vmem:[%s1 + $0x80] sm:$0xf]
      %v333 = vld [vmem:[%s1 + $0x84] sm:$0xf]
      %v334 = vld [vmem:[%s1 + $0x88] sm:$0xf]
      %v335 = vld [vmem:[%s1 + $0x8c] sm:$0xf]
      %v336 = vld [vmem:[%s1 + $0x90] sm:$0xf]
      %v337 = vld [vmem:[%s1 + $0x94] sm:$0xf]
      %v338 = vld [vmem:[%s1 + $0x98] sm:$0xf]
      %v339 = vld [vmem:[%s1 + $0x9c] sm:$0xf]
      %v340 = vld [vmem:[%s1 + $0xa0] sm:$0xf]
      %v341 = vld [vmem:[%s1 + $0xa4] sm:$0xf]
      %v342 = vld [vmem:[%s1 + $0xa8] sm:$0xf]
      %v343 = vld [vmem:[%s1 + $0xac] sm:$0xf]
      %v344 = vld [vmem:[%s1 + $0xb0] sm:$0xf]
      %v345 = vld [vmem:[%s1 + $0xb4] sm:$0xf]
      %v346 = vld [vmem:[%s1 + $0xb8] sm:$0xf]
      %v347 = vld [vmem:[%s1 + $0xbc] sm:$0xf]
      %v348 = vld [vmem:[%s1 + $0xc0] sm:$0xf]
      %v349 = vld [vmem:[%s1 + $0xc4] sm:$0xf]
      %v350 = vld [vmem:[%s1 + $0xc8] sm:$0xf]
      %v351 = vld [vmem:[%s1 + $0xcc] sm:$0xf]
      %v352 = vld [vmem:[%s1 + $0xd0] sm:$0xf]
      %v353 = vld [vmem:[%s1 + $0xd4] sm:$0xf]
      %v354 = vld [vmem:[%s1 + $0xd8] sm:$0xf]
      %v355 = vld [vmem:[%s1 + $0xdc] sm:$0xf]
      %v356 = vld [vmem:[%s1 + $0xe0] sm:$0xf]
      %v357 = vld [vmem:[%s1 + $0xe4] sm:$0xf]
      %v358 = vld [vmem:[%s1 + $0xe8] sm:$0xf]
      %v359 = vld [vmem:[%s1 + $0xec] sm:$0xf]
      %v360 = vld [vmem:[%s1 + $0xf0] sm:$0xf]
      %v361 = vld [vmem:[%s1 + $0xf4] sm:$0xf]
      %v362 = vld [vmem:[%s1 + $0xf8] sm:$0xf]
      %v363 = vld [vmem:[%s1 + $0xfc] sm:$0xf]
      %v364 = vld [vmem:[%s2] sm:$0x1]
      %v366 = vlaneseq
      %v367 = vshrl.u32 %v366, 7
      %v368 = vsub.s32 0, %v367
      %v369 = vrot.slane %v364, %v368
      %v499 = vunpack.c.l.b16 %v172
      %v500 = vunpack.c.h.b16 %v172
      %v501 = vunpack.c.l.b16 %v173
      %v502 = vunpack.c.h.b16 %v173
      %v503 = vunpack.c.l.b16 %v174
      %v504 = vunpack.c.h.b16 %v174
      %v505 = vunpack.c.l.b16 %v175
      %v506 = vunpack.c.h.b16 %v175
      %v507 = vunpack.c.l.b16 %v176
      %v508 = vunpack.c.h.b16 %v176
      %v509 = vunpack.c.l.b16 %v177
      %v510 = vunpack.c.h.b16 %v177
      %v511 = vunpack.c.l.b16 %v178
      %v512 = vunpack.c.h.b16 %v178
      %v513 = vunpack.c.l.b16 %v179
      %v514 = vunpack.c.h.b16 %v179
      %v515 = vunpack.c.l.b16 %v180
      %v516 = vunpack.c.h.b16 %v180
      %v517 = vunpack.c.l.b16 %v181
      %v518 = vunpack.c.h.b16 %v181
      %v519 = vunpack.c.l.b16 %v182
      %v520 = vunpack.c.h.b16 %v182
      %v521 = vunpack.c.l.b16 %v183
      %v522 = vunpack.c.h.b16 %v183
      %v523 = vunpack.c.l.b16 %v184
      %v524 = vunpack.c.h.b16 %v184
      %v525 = vunpack.c.l.b16 %v185
      %v526 = vunpack.c.h.b16 %v185
      %v527 = vunpack.c.l.b16 %v186
      %v528 = vunpack.c.h.b16 %v186
      %v529 = vunpack.c.l.b16 %v187
      %v530 = vunpack.c.h.b16 %v187
      %v531 = vunpack.c.l.b16 %v188
      %v532 = vunpack.c.h.b16 %v188
      %v533 = vunpack.c.l.b16 %v189
      %v534 = vunpack.c.h.b16 %v189
      %v535 = vunpack.c.l.b16 %v190
      %v536 = vunpack.c.h.b16 %v190
      %v537 = vunpack.c.l.b16 %v191
      %v538 = vunpack.c.h.b16 %v191
      %v539 = vunpack.c.l.b16 %v192
      %v540 = vunpack.c.h.b16 %v192
      %v541 = vunpack.c.l.b16 %v193
      %v542 = vunpack.c.h.b16 %v193
      %v543 = vunpack.c.l.b16 %v194
      %v544 = vunpack.c.h.b16 %v194
      %v545 = vunpack.c.l.b16 %v195
      %v546 = vunpack.c.h.b16 %v195
      %v547 = vunpack.c.l.b16 %v196
      %v548 = vunpack.c.h.b16 %v196
      %v549 = vunpack.c.l.b16 %v197
      %v550 = vunpack.c.h.b16 %v197
      %v551 = vunpack.c.l.b16 %v198
      %v552 = vunpack.c.h.b16 %v198
      %v553 = vunpack.c.l.b16 %v199
      %v554 = vunpack.c.h.b16 %v199
      %v555 = vunpack.c.l.b16 %v200
      %v556 = vunpack.c.h.b16 %v200
      %v557 = vunpack.c.l.b16 %v201
      %v558 = vunpack.c.h.b16 %v201
      %v559 = vunpack.c.l.b16 %v202
      %v560 = vunpack.c.h.b16 %v202
      %v561 = vunpack.c.l.b16 %v203
      %v562 = vunpack.c.h.b16 %v203
      %v563 = vunpack.c.l.b16 %v204
      %v564 = vunpack.c.h.b16 %v204
      %v565 = vunpack.c.l.b16 %v205
      %v566 = vunpack.c.h.b16 %v205
      %v567 = vunpack.c.l.b16 %v206
      %v568 = vunpack.c.h.b16 %v206
      %v569 = vunpack.c.l.b16 %v207
      %v570 = vunpack.c.h.b16 %v207
      %v571 = vunpack.c.l.b16 %v208
      %v572 = vunpack.c.h.b16 %v208
      %v573 = vunpack.c.l.b16 %v209
      %v574 = vunpack.c.h.b16 %v209
      %v575 = vunpack.c.l.b16 %v210
      %v576 = vunpack.c.h.b16 %v210
      %v577 = vunpack.c.l.b16 %v211
      %v578 = vunpack.c.h.b16 %v211
      %v579 = vunpack.c.l.b16 %v212
      %v580 = vunpack.c.h.b16 %v212
      %v581 = vunpack.c.l.b16 %v213
      %v582 = vunpack.c.h.b16 %v213
      %v583 = vunpack.c.l.b16 %v214
      %v584 = vunpack.c.h.b16 %v214
      %v585 = vunpack.c.l.b16 %v215
      %v586 = vunpack.c.h.b16 %v215
      %v587 = vunpack.c.l.b16 %v216
      %v588 = vunpack.c.h.b16 %v216
      %v589 = vunpack.c.l.b16 %v217
      %v590 = vunpack.c.h.b16 %v217
      %v591 = vunpack.c.l.b16 %v218
      %v592 = vunpack.c.h.b16 %v218
      %v593 = vunpack.c.l.b16 %v219
      %v594 = vunpack.c.h.b16 %v219
      %v595 = vunpack.c.l.b16 %v220
      %v596 = vunpack.c.h.b16 %v220
      %v597 = vunpack.c.l.b16 %v221
      %v598 = vunpack.c.h.b16 %v221
      %v599 = vunpack.c.l.b16 %v222
      %v600 = vunpack.c.h.b16 %v222
      %v601 = vunpack.c.l.b16 %v223
      %v602 = vunpack.c.h.b16 %v223
      %v603 = vunpack.c.l.b16 %v224
      %v604 = vunpack.c.h.b16 %v224
      %v605 = vunpack.c.l.b16 %v225
      %v606 = vunpack.c.h.b16 %v225
      %v607 = vunpack.c.l.b16 %v226
      %v608 = vunpack.c.h.b16 %v226
      %v609 = vunpack.c.l.b16 %v227
      %v610 = vunpack.c.h.b16 %v227
      %v611 = vunpack.c.l.b16 %v228
      %v612 = vunpack.c.h.b16 %v228
      %v613 = vunpack.c.l.b16 %v229
      %v614 = vunpack.c.h.b16 %v229
      %v615 = vunpack.c.l.b16 %v230
      %v616 = vunpack.c.h.b16 %v230
      %v617 = vunpack.c.l.b16 %v231
      %v618 = vunpack.c.h.b16 %v231
      %v619 = vunpack.c.l.b16 %v232
      %v620 = vunpack.c.h.b16 %v232
      %v621 = vunpack.c.l.b16 %v233
      %v622 = vunpack.c.h.b16 %v233
      %v623 = vunpack.c.l.b16 %v234
      %v624 = vunpack.c.h.b16 %v234
      %v625 = vunpack.c.l.b16 %v235
      %v626 = vunpack.c.h.b16 %v235
      %v627 = vunpack.c.l.b16 %v236
      %v628 = vunpack.c.h.b16 %v236
      %v629 = vunpack.c.l.b16 %v237
      %v630 = vunpack.c.h.b16 %v237
      %v631 = vunpack.c.l.b16 %v238
      %v632 = vunpack.c.h.b16 %v238
      %v633 = vunpack.c.l.b16 %v239
      %v634 = vunpack.c.h.b16 %v239
      %v635 = vunpack.c.l.b16 %v240
      %v636 = vunpack.c.h.b16 %v240
      %v637 = vunpack.c.l.b16 %v241
      %v638 = vunpack.c.h.b16 %v241
      %v639 = vunpack.c.l.b16 %v242
      %v640 = vunpack.c.h.b16 %v242
      %v641 = vunpack.c.l.b16 %v243
      %v642 = vunpack.c.h.b16 %v243
      %v643 = vunpack.c.l.b16 %v244
      %v644 = vunpack.c.h.b16 %v244
      %v645 = vunpack.c.l.b16 %v245
      %v646 = vunpack.c.h.b16 %v245
      %v647 = vunpack.c.l.b16 %v246
      %v648 = vunpack.c.h.b16 %v246
      %v649 = vunpack.c.l.b16 %v247
      %v650 = vunpack.c.h.b16 %v247
      %v651 = vunpack.c.l.b16 %v248
      %v652 = vunpack.c.h.b16 %v248
      %v653 = vunpack.c.l.b16 %v249
      %v654 = vunpack.c.h.b16 %v249
      %v655 = vunpack.c.l.b16 %v250
      %v656 = vunpack.c.h.b16 %v250
      %v657 = vunpack.c.l.b16 %v251
      %v658 = vunpack.c.h.b16 %v251
      %v659 = vunpack.c.l.b16 %v252
      %v660 = vunpack.c.h.b16 %v252
      %v661 = vunpack.c.l.b16 %v253
      %v662 = vunpack.c.h.b16 %v253
      %v663 = vunpack.c.l.b16 %v254
      %v664 = vunpack.c.h.b16 %v254
      %v665 = vunpack.c.l.b16 %v255
      %v666 = vunpack.c.h.b16 %v255
      %v667 = vunpack.c.l.b16 %v256
      %v668 = vunpack.c.h.b16 %v256
      %v669 = vunpack.c.l.b16 %v257
      %v670 = vunpack.c.h.b16 %v257
      %v671 = vunpack.c.l.b16 %v258
      %v672 = vunpack.c.h.b16 %v258
      %v673 = vunpack.c.l.b16 %v259
      %v674 = vunpack.c.h.b16 %v259
      %v675 = vunpack.c.l.b16 %v260
      %v676 = vunpack.c.h.b16 %v260
      %v677 = vunpack.c.l.b16 %v261
      %v678 = vunpack.c.h.b16 %v261
      %v679 = vunpack.c.l.b16 %v262
      %v680 = vunpack.c.h.b16 %v262
      %v681 = vunpack.c.l.b16 %v263
      %v682 = vunpack.c.h.b16 %v263
      %v683 = vunpack.c.l.b16 %v264
      %v684 = vunpack.c.h.b16 %v264
      %v685 = vunpack.c.l.b16 %v265
      %v686 = vunpack.c.h.b16 %v265
      %v687 = vunpack.c.l.b16 %v266
      %v688 = vunpack.c.h.b16 %v266
      %v689 = vunpack.c.l.b16 %v267
      %v690 = vunpack.c.h.b16 %v267
      %v691 = vunpack.c.l.b16 %v268
      %v692 = vunpack.c.h.b16 %v268
      %v693 = vunpack.c.l.b16 %v269
      %v694 = vunpack.c.h.b16 %v269
      %v695 = vunpack.c.l.b16 %v270
      %v696 = vunpack.c.h.b16 %v270
      %v697 = vunpack.c.l.b16 %v271
      %v698 = vunpack.c.h.b16 %v271
      %v699 = vunpack.c.l.b16 %v272
      %v700 = vunpack.c.h.b16 %v272
      %v701 = vunpack.c.l.b16 %v273
      %v702 = vunpack.c.h.b16 %v273
      %v703 = vunpack.c.l.b16 %v274
      %v704 = vunpack.c.h.b16 %v274
      %v705 = vunpack.c.l.b16 %v275
      %v706 = vunpack.c.h.b16 %v275
      %v707 = vunpack.c.l.b16 %v276
      %v708 = vunpack.c.h.b16 %v276
      %v709 = vunpack.c.l.b16 %v277
      %v710 = vunpack.c.h.b16 %v277
      %v711 = vunpack.c.l.b16 %v278
      %v712 = vunpack.c.h.b16 %v278
      %v713 = vunpack.c.l.b16 %v279
      %v714 = vunpack.c.h.b16 %v279
      %v715 = vunpack.c.l.b16 %v280
      %v716 = vunpack.c.h.b16 %v280
      %v717 = vunpack.c.l.b16 %v281
      %v718 = vunpack.c.h.b16 %v281
      %v719 = vunpack.c.l.b16 %v282
      %v720 = vunpack.c.h.b16 %v282
      %v721 = vunpack.c.l.b16 %v283
      %v722 = vunpack.c.h.b16 %v283
      %v723 = vunpack.c.l.b16 %v284
      %v724 = vunpack.c.h.b16 %v284
      %v725 = vunpack.c.l.b16 %v285
      %v726 = vunpack.c.h.b16 %v285
      %v727 = vunpack.c.l.b16 %v286
      %v728 = vunpack.c.h.b16 %v286
      %v729 = vunpack.c.l.b16 %v287
      %v730 = vunpack.c.h.b16 %v287
      %v731 = vunpack.c.l.b16 %v288
      %v732 = vunpack.c.h.b16 %v288
      %v733 = vunpack.c.l.b16 %v289
      %v734 = vunpack.c.h.b16 %v289
      %v735 = vunpack.c.l.b16 %v290
      %v736 = vunpack.c.h.b16 %v290
      %v737 = vunpack.c.l.b16 %v291
      %v738 = vunpack.c.h.b16 %v291
      %v739 = vunpack.c.l.b16 %v292
      %v740 = vunpack.c.h.b16 %v292
      %v741 = vunpack.c.l.b16 %v293
      %v742 = vunpack.c.h.b16 %v293
      %v743 = vunpack.c.l.b16 %v294
      %v744 = vunpack.c.h.b16 %v294
      %v745 = vunpack.c.l.b16 %v295
      %v746 = vunpack.c.h.b16 %v295
      %v747 = vunpack.c.l.b16 %v296
      %v748 = vunpack.c.h.b16 %v296
      %v749 = vunpack.c.l.b16 %v297
      %v750 = vunpack.c.h.b16 %v297
      %v751 = vunpack.c.l.b16 %v298
      %v752 = vunpack.c.h.b16 %v298
      %v753 = vunpack.c.l.b16 %v299
      %v754 = vunpack.c.h.b16 %v299
      %v755 = vpack.c.b16 %v503, %v499
      %v756 = vpack.c.b16 %v504, %v500
      %v757 = vpack.c.b16 %v505, %v501
      %v758 = vpack.c.b16 %v506, %v502
      %v759 = vpack.c.b16 %v511, %v507
      %v760 = vpack.c.b16 %v512, %v508
      %v761 = vpack.c.b16 %v513, %v509
      %v762 = vpack.c.b16 %v514, %v510
      %v763 = vpack.c.b16 %v519, %v515
      %v764 = vpack.c.b16 %v520, %v516
      %v765 = vpack.c.b16 %v521, %v517
      %v766 = vpack.c.b16 %v522, %v518
      %v767 = vpack.c.b16 %v527, %v523
      %v768 = vpack.c.b16 %v528, %v524
      %v769 = vpack.c.b16 %v529, %v525
      %v770 = vpack.c.b16 %v530, %v526
      %v771 = vpack.c.b16 %v535, %v531
      %v772 = vpack.c.b16 %v536, %v532
      %v773 = vpack.c.b16 %v537, %v533
      %v774 = vpack.c.b16 %v538, %v534
      %v775 = vpack.c.b16 %v543, %v539
      %v776 = vpack.c.b16 %v544, %v540
      %v777 = vpack.c.b16 %v545, %v541
      %v778 = vpack.c.b16 %v546, %v542
      %v779 = vpack.c.b16 %v551, %v547
      %v780 = vpack.c.b16 %v552, %v548
      %v781 = vpack.c.b16 %v553, %v549
      %v782 = vpack.c.b16 %v554, %v550
      %v783 = vpack.c.b16 %v559, %v555
      %v784 = vpack.c.b16 %v560, %v556
      %v785 = vpack.c.b16 %v561, %v557
      %v786 = vpack.c.b16 %v562, %v558
      %v787 = vpack.c.b16 %v567, %v563
      %v788 = vpack.c.b16 %v568, %v564
      %v789 = vpack.c.b16 %v569, %v565
      %v790 = vpack.c.b16 %v570, %v566
      %v791 = vpack.c.b16 %v575, %v571
      %v792 = vpack.c.b16 %v576, %v572
      %v793 = vpack.c.b16 %v577, %v573
      %v794 = vpack.c.b16 %v578, %v574
      %v795 = vpack.c.b16 %v583, %v579
      %v796 = vpack.c.b16 %v584, %v580
      %v797 = vpack.c.b16 %v585, %v581
      %v798 = vpack.c.b16 %v586, %v582
      %v799 = vpack.c.b16 %v591, %v587
      %v800 = vpack.c.b16 %v592, %v588
      %v801 = vpack.c.b16 %v593, %v589
      %v802 = vpack.c.b16 %v594, %v590
      %v803 = vpack.c.b16 %v599, %v595
      %v804 = vpack.c.b16 %v600, %v596
      %v805 = vpack.c.b16 %v601, %v597
      %v806 = vpack.c.b16 %v602, %v598
      %v807 = vpack.c.b16 %v607, %v603
      %v808 = vpack.c.b16 %v608, %v604
      %v809 = vpack.c.b16 %v609, %v605
      %v810 = vpack.c.b16 %v610, %v606
      %v811 = vpack.c.b16 %v615, %v611
      %v812 = vpack.c.b16 %v616, %v612
      %v813 = vpack.c.b16 %v617, %v613
      %v814 = vpack.c.b16 %v618, %v614
      %v815 = vpack.c.b16 %v623, %v619
      %v816 = vpack.c.b16 %v624, %v620
      %v817 = vpack.c.b16 %v625, %v621
      %v818 = vpack.c.b16 %v626, %v622
      %v819 = vpack.c.b16 %v631, %v627
      %v820 = vpack.c.b16 %v632, %v628
      %v821 = vpack.c.b16 %v633, %v629
      %v822 = vpack.c.b16 %v634, %v630
      %v823 = vpack.c.b16 %v639, %v635
      %v824 = vpack.c.b16 %v640, %v636
      %v825 = vpack.c.b16 %v641, %v637
      %v826 = vpack.c.b16 %v642, %v638
      %v827 = vpack.c.b16 %v647, %v643
      %v828 = vpack.c.b16 %v648, %v644
      %v829 = vpack.c.b16 %v649, %v645
      %v830 = vpack.c.b16 %v650, %v646
      %v831 = vpack.c.b16 %v655, %v651
      %v832 = vpack.c.b16 %v656, %v652
      %v833 = vpack.c.b16 %v657, %v653
      %v834 = vpack.c.b16 %v658, %v654
      %v835 = vpack.c.b16 %v663, %v659
      %v836 = vpack.c.b16 %v664, %v660
      %v837 = vpack.c.b16 %v665, %v661
      %v838 = vpack.c.b16 %v666, %v662
      %v839 = vpack.c.b16 %v671, %v667
      %v840 = vpack.c.b16 %v672, %v668
      %v841 = vpack.c.b16 %v673, %v669
      %v842 = vpack.c.b16 %v674, %v670
      %v843 = vpack.c.b16 %v679, %v675
      %v844 = vpack.c.b16 %v680, %v676
      %v845 = vpack.c.b16 %v681, %v677
      %v846 = vpack.c.b16 %v682, %v678
      %v847 = vpack.c.b16 %v687, %v683
      %v848 = vpack.c.b16 %v688, %v684
      %v849 = vpack.c.b16 %v689, %v685
      %v850 = vpack.c.b16 %v690, %v686
      %v851 = vpack.c.b16 %v695, %v691
      %v852 = vpack.c.b16 %v696, %v692
      %v853 = vpack.c.b16 %v697, %v693
      %v854 = vpack.c.b16 %v698, %v694
      %v855 = vpack.c.b16 %v703, %v699
      %v856 = vpack.c.b16 %v704, %v700
      %v857 = vpack.c.b16 %v705, %v701
      %v858 = vpack.c.b16 %v706, %v702
      %v859 = vpack.c.b16 %v711, %v707
      %v860 = vpack.c.b16 %v712, %v708
      %v861 = vpack.c.b16 %v713, %v709
      %v862 = vpack.c.b16 %v714, %v710
      %v863 = vpack.c.b16 %v719, %v715
      %v864 = vpack.c.b16 %v720, %v716
      %v865 = vpack.c.b16 %v721, %v717
      %v866 = vpack.c.b16 %v722, %v718
      %v867 = vpack.c.b16 %v727, %v723
      %v868 = vpack.c.b16 %v728, %v724
      %v869 = vpack.c.b16 %v729, %v725
      %v870 = vpack.c.b16 %v730, %v726
      %v871 = vpack.c.b16 %v735, %v731
      %v872 = vpack.c.b16 %v736, %v732
      %v873 = vpack.c.b16 %v737, %v733
      %v874 = vpack.c.b16 %v738, %v734
      %v875 = vpack.c.b16 %v743, %v739
      %v876 = vpack.c.b16 %v744, %v740
      %v877 = vpack.c.b16 %v745, %v741
      %v878 = vpack.c.b16 %v746, %v742
      %v879 = vpack.c.b16 %v751, %v747
      %v880 = vpack.c.b16 %v752, %v748
      %v881 = vpack.c.b16 %v753, %v749
      %v882 = vpack.c.b16 %v754, %v750
      %v1075 = vunpack.c.l.b16 %v300
      %v1076 = vunpack.c.l.b16 %v301
      %v1077 = vunpack.c.l.b16 %v302
      %v1078 = vunpack.c.l.b16 %v303
      %v1079 = vunpack.c.l.b16 %v304
      %v1080 = vunpack.c.l.b16 %v305
      %v1081 = vunpack.c.l.b16 %v306
      %v1082 = vunpack.c.l.b16 %v307
      %v1083 = vunpack.c.l.b16 %v308
      %v1084 = vunpack.c.l.b16 %v309
      %v1085 = vunpack.c.l.b16 %v310
      %v1086 = vunpack.c.l.b16 %v311
      %v1087 = vunpack.c.l.b16 %v312
      %v1088 = vunpack.c.l.b16 %v313
      %v1089 = vunpack.c.l.b16 %v314
      %v1090 = vunpack.c.l.b16 %v315
      %v1091 = vunpack.c.l.b16 %v316
      %v1092 = vunpack.c.l.b16 %v317
      %v1093 = vunpack.c.l.b16 %v318
      %v1094 = vunpack.c.l.b16 %v319
      %v1095 = vunpack.c.l.b16 %v320
      %v1096 = vunpack.c.l.b16 %v321
      %v1097 = vunpack.c.l.b16 %v322
      %v1098 = vunpack.c.l.b16 %v323
      %v1099 = vunpack.c.l.b16 %v324
      %v1100 = vunpack.c.l.b16 %v325
      %v1101 = vunpack.c.l.b16 %v326
      %v1102 = vunpack.c.l.b16 %v327
      %v1103 = vunpack.c.l.b16 %v328
      %v1104 = vunpack.c.l.b16 %v329
      %v1105 = vunpack.c.l.b16 %v330
      %v1106 = vunpack.c.l.b16 %v331
      %v1107 = vunpack.c.l.b16 %v332
      %v1108 = vunpack.c.l.b16 %v333
      %v1109 = vunpack.c.l.b16 %v334
      %v1110 = vunpack.c.l.b16 %v335
      %v1111 = vunpack.c.l.b16 %v336
      %v1112 = vunpack.c.l.b16 %v337
      %v1113 = vunpack.c.l.b16 %v338
      %v1114 = vunpack.c.l.b16 %v339
      %v1115 = vunpack.c.l.b16 %v340
      %v1116 = vunpack.c.l.b16 %v341
      %v1117 = vunpack.c.l.b16 %v342
      %v1118 = vunpack.c.l.b16 %v343
      %v1119 = vunpack.c.l.b16 %v344
      %v1120 = vunpack.c.l.b16 %v345
      %v1121 = vunpack.c.l.b16 %v346
      %v1122 = vunpack.c.l.b16 %v347
      %v1123 = vunpack.c.l.b16 %v348
      %v1124 = vunpack.c.l.b16 %v349
      %v1125 = vunpack.c.l.b16 %v350
      %v1126 = vunpack.c.l.b16 %v351
      %v1127 = vunpack.c.l.b16 %v352
      %v1128 = vunpack.c.l.b16 %v353
      %v1129 = vunpack.c.l.b16 %v354
      %v1130 = vunpack.c.l.b16 %v355
      %v1131 = vunpack.c.l.b16 %v356
      %v1132 = vunpack.c.l.b16 %v357
      %v1133 = vunpack.c.l.b16 %v358
      %v1134 = vunpack.c.l.b16 %v359
      %v1135 = vunpack.c.l.b16 %v360
      %v1136 = vunpack.c.l.b16 %v361
      %v1137 = vunpack.c.l.b16 %v362
      %v1138 = vunpack.c.l.b16 %v363
      %v1139 = vpack.c.b16 %v1076, %v1075
      %v1140 = vpack.c.b16 %v1078, %v1077
      %v1141 = vpack.c.b16 %v1080, %v1079
      %v1142 = vpack.c.b16 %v1082, %v1081
      %v1143 = vpack.c.b16 %v1084, %v1083
      %v1144 = vpack.c.b16 %v1086, %v1085
      %v1145 = vpack.c.b16 %v1088, %v1087
      %v1146 = vpack.c.b16 %v1090, %v1089
      %v1147 = vpack.c.b16 %v1092, %v1091
      %v1148 = vpack.c.b16 %v1094, %v1093
      %v1149 = vpack.c.b16 %v1096, %v1095
      %v1150 = vpack.c.b16 %v1098, %v1097
      %v1151 = vpack.c.b16 %v1100, %v1099
      %v1152 = vpack.c.b16 %v1102, %v1101
      %v1153 = vpack.c.b16 %v1104, %v1103
      %v1154 = vpack.c.b16 %v1106, %v1105
      %v1155 = vpack.c.b16 %v1108, %v1107
      %v1156 = vpack.c.b16 %v1110, %v1109
      %v1157 = vpack.c.b16 %v1112, %v1111
      %v1158 = vpack.c.b16 %v1114, %v1113
      %v1159 = vpack.c.b16 %v1116, %v1115
      %v1160 = vpack.c.b16 %v1118, %v1117
      %v1161 = vpack.c.b16 %v1120, %v1119
      %v1162 = vpack.c.b16 %v1122, %v1121
      %v1163 = vpack.c.b16 %v1124, %v1123
      %v1164 = vpack.c.b16 %v1126, %v1125
      %v1165 = vpack.c.b16 %v1128, %v1127
      %v1166 = vpack.c.b16 %v1130, %v1129
      %v1167 = vpack.c.b16 %v1132, %v1131
      %v1168 = vpack.c.b16 %v1134, %v1133
      %v1169 = vpack.c.b16 %v1136, %v1135
      %v1170 = vpack.c.b16 %v1138, %v1137
      %1203 = vmatprep.subr.bf16.mxu0 0
      %1204 = vmatpush1.bf16.msra.mxu0 %v1146
      %1205 = vmatprep.subr.bf16.mxu0 0
      %1206 = vmatpush1.bf16.msra.mxu0 %v1145
      %1207 = vmatprep.subr.bf16.mxu0 0
      %1208 = vmatpush1.bf16.msra.mxu0 %v1144
      %1209 = vmatprep.subr.bf16.mxu0 0
      %1210 = vmatpush1.bf16.msra.mxu0 %v1143
      %1211 = vmatprep.subr.bf16.mxu0 0
      %1212 = vmatpush1.bf16.msra.mxu0 %v1142
      %1213 = vmatprep.subr.bf16.mxu0 0
      %1214 = vmatpush1.bf16.msra.mxu0 %v1141
      %1215 = vmatprep.subr.bf16.mxu0 0
      %1216 = vmatpush1.bf16.msra.mxu0 %v1140
      %1217 = vmatprep.subr.bf16.mxu0 0
      %1218 = vmatpush1.bf16.msra.mxu0 %v1139
      %1219 = vmatprep.subr.bf16.mxu0 0
      %1220 = vmatpush2.bf16.msra.mxu0 %v1154
      %1221 = vmatprep.subr.bf16.mxu0 0
      %1222 = vmatpush2.bf16.msra.mxu0 %v1153
      %1223 = vmatprep.subr.bf16.mxu0 0
      %1224 = vmatpush2.bf16.msra.mxu0 %v1152
      %1225 = vmatprep.subr.bf16.mxu0 0
      %1226 = vmatpush2.bf16.msra.mxu0 %v1151
      %1227 = vmatprep.subr.bf16.mxu0 0
      %1228 = vmatpush2.bf16.msra.mxu0 %v1150
      %1229 = vmatprep.subr.bf16.mxu0 0
      %1230 = vmatpush2.bf16.msra.mxu0 %v1149
      %1231 = vmatprep.subr.bf16.mxu0 0
      %1232 = vmatpush2.bf16.msra.mxu0 %v1148
      %1233 = vmatprep.subr.bf16.mxu0 0
      %1234 = vmatpush2.bf16.msra.mxu0 %v1147
      %1235 = vmatprep.mubr.bf16.mxu0 %v756
      %1236 = vmatmul.mubr.bf16.gmra.mxu0 %v755
      %v1237 = vpop.f32.mrf.mxu0
      %v1238 = vadd.f32 %v369, %v1237
      %v1239 = vpop.f32.mrf.mxu0
      %v1240 = vpop.f32.mrf.mxu0
      %v1241 = vadd.f32 %v369, %v1240
      %v1242 = vpop.f32.mrf.mxu0
      %1243 = vmatprep.mubr.bf16.mxu0 %v760
      %1244 = vmatmul.mubr.bf16.gmra.mxu0 %v759
      %v1245 = vpop.f32.mrf.mxu0
      %v1246 = vadd.f32 %v369, %v1245
      %v1247 = vpop.f32.mrf.mxu0
      %v1248 = vpop.f32.mrf.mxu0
      %v1249 = vadd.f32 %v369, %v1248
      %v1250 = vpop.f32.mrf.mxu0
      %1251 = vmatprep.mubr.bf16.mxu0 %v764
      %1252 = vmatmul.mubr.bf16.gmra.mxu0 %v763
      %v1253 = vpop.f32.mrf.mxu0
      %v1254 = vadd.f32 %v369, %v1253
      %v1255 = vpop.f32.mrf.mxu0
      %v1256 = vpop.f32.mrf.mxu0
      %v1257 = vadd.f32 %v369, %v1256
      %v1258 = vpop.f32.mrf.mxu0
      %1259 = vmatprep.mubr.bf16.mxu0 %v768
      %1260 = vmatmul.mubr.bf16.gmra.mxu0 %v767
      %v1261 = vpop.f32.mrf.mxu0
      %v1262 = vadd.f32 %v369, %v1261
      %v1263 = vpop.f32.mrf.mxu0
      %v1264 = vpop.f32.mrf.mxu0
      %v1265 = vadd.f32 %v369, %v1264
      %v1266 = vpop.f32.mrf.mxu0
      %1267 = vmatprep.mubr.bf16.mxu0 %v772
      %1268 = vmatmul.mubr.bf16.gmra.mxu0 %v771
      %v1269 = vpop.f32.mrf.mxu0
      %v1270 = vadd.f32 %v369, %v1269
      %v1271 = vpop.f32.mrf.mxu0
      %v1272 = vpop.f32.mrf.mxu0
      %v1273 = vadd.f32 %v369, %v1272
      %v1274 = vpop.f32.mrf.mxu0
      %1275 = vmatprep.mubr.bf16.mxu0 %v776
      %1276 = vmatmul.mubr.bf16.gmra.mxu0 %v775
      %v1277 = vpop.f32.mrf.mxu0
      %v1278 = vadd.f32 %v369, %v1277
      %v1279 = vpop.f32.mrf.mxu0
      %v1280 = vpop.f32.mrf.mxu0
      %v1281 = vadd.f32 %v369, %v1280
      %v1282 = vpop.f32.mrf.mxu0
      %1283 = vmatprep.mubr.bf16.mxu0 %v780
      %1284 = vmatmul.mubr.bf16.gmra.mxu0 %v779
      %v1285 = vpop.f32.mrf.mxu0
      %v1286 = vadd.f32 %v369, %v1285
      %v1287 = vpop.f32.mrf.mxu0
      %v1288 = vpop.f32.mrf.mxu0
      %v1289 = vadd.f32 %v369, %v1288
      %v1290 = vpop.f32.mrf.mxu0
      %1291 = vmatprep.mubr.bf16.mxu0 %v784
      %1292 = vmatmul.mubr.bf16.gmra.mxu0 %v783
      %v1293 = vpop.f32.mrf.mxu0
      %v1294 = vadd.f32 %v369, %v1293
      %v1295 = vpop.f32.mrf.mxu0
      %v1296 = vpop.f32.mrf.mxu0
      %v1297 = vadd.f32 %v369, %v1296
      %v1298 = vpop.f32.mrf.mxu0
      %1299 = vmatprep.mubr.bf16.mxu0 %v788
      %1300 = vmatmul.mubr.bf16.gmra.mxu0 %v787
      %v1301 = vpop.f32.mrf.mxu0
      %v1302 = vadd.f32 %v369, %v1301
      %v1303 = vpop.f32.mrf.mxu0
      %v1304 = vpop.f32.mrf.mxu0
      %v1305 = vadd.f32 %v369, %v1304
      %v1306 = vpop.f32.mrf.mxu0
      %1307 = vmatprep.mubr.bf16.mxu0 %v792
      %1308 = vmatmul.mubr.bf16.gmra.mxu0 %v791
      %v1309 = vpop.f32.mrf.mxu0
      %v1310 = vadd.f32 %v369, %v1309
      %v1311 = vpop.f32.mrf.mxu0
      %v1312 = vpop.f32.mrf.mxu0
      %v1313 = vadd.f32 %v369, %v1312
      %v1314 = vpop.f32.mrf.mxu0
      %1315 = vmatprep.mubr.bf16.mxu0 %v796
      %1316 = vmatmul.mubr.bf16.gmra.mxu0 %v795
      %v1317 = vpop.f32.mrf.mxu0
      %v1318 = vadd.f32 %v369, %v1317
      %v1319 = vpop.f32.mrf.mxu0
      %v1320 = vpop.f32.mrf.mxu0
      %v1321 = vadd.f32 %v369, %v1320
      %v1322 = vpop.f32.mrf.mxu0
      %1323 = vmatprep.mubr.bf16.mxu0 %v800
      %1324 = vmatmul.mubr.bf16.gmra.mxu0 %v799
      %v1325 = vpop.f32.mrf.mxu0
      %v1326 = vadd.f32 %v369, %v1325
      %v1327 = vpop.f32.mrf.mxu0
      %v1328 = vpop.f32.mrf.mxu0
      %v1329 = vadd.f32 %v369, %v1328
      %v1330 = vpop.f32.mrf.mxu0
      %1331 = vmatprep.mubr.bf16.mxu0 %v804
      %1332 = vmatmul.mubr.bf16.gmra.mxu0 %v803
      %v1333 = vpop.f32.mrf.mxu0
      %v1334 = vadd.f32 %v369, %v1333
      %v1335 = vpop.f32.mrf.mxu0
      %v1336 = vpop.f32.mrf.mxu0
      %v1337 = vadd.f32 %v369, %v1336
      %v1338 = vpop.f32.mrf.mxu0
      %1339 = vmatprep.mubr.bf16.mxu0 %v808
      %1340 = vmatmul.mubr.bf16.gmra.mxu0 %v807
      %v1341 = vpop.f32.mrf.mxu0
      %v1342 = vadd.f32 %v369, %v1341
      %v1343 = vpop.f32.mrf.mxu0
      %v1344 = vpop.f32.mrf.mxu0
      %v1345 = vadd.f32 %v369, %v1344
      %v1346 = vpop.f32.mrf.mxu0
      %1347 = vmatprep.mubr.bf16.mxu0 %v812
      %1348 = vmatmul.mubr.bf16.gmra.mxu0 %v811
      %v1349 = vpop.f32.mrf.mxu0
      %v1350 = vadd.f32 %v369, %v1349
      %v1351 = vpop.f32.mrf.mxu0
      %v1352 = vpop.f32.mrf.mxu0
      %v1353 = vadd.f32 %v369, %v1352
      %v1354 = vpop.f32.mrf.mxu0
      %1355 = vmatprep.mubr.bf16.mxu0 %v816
      %1356 = vmatmul.mubr.bf16.gmra.mxu0 %v815
      %v1357 = vpop.f32.mrf.mxu0
      %v1358 = vadd.f32 %v369, %v1357
      %v1359 = vpop.f32.mrf.mxu0
      %v1360 = vpop.f32.mrf.mxu0
      %v1361 = vadd.f32 %v369, %v1360
      %v1362 = vpop.f32.mrf.mxu0
      %1363 = vmatprep.mubr.bf16.mxu0 %v820
      %1364 = vmatmul.mubr.bf16.gmra.mxu0 %v819
      %v1365 = vpop.f32.mrf.mxu0
      %v1366 = vadd.f32 %v369, %v1365
      %v1367 = vpop.f32.mrf.mxu0
      %v1368 = vpop.f32.mrf.mxu0
      %v1369 = vadd.f32 %v369, %v1368
      %v1370 = vpop.f32.mrf.mxu0
      %1371 = vmatprep.mubr.bf16.mxu0 %v824
      %1372 = vmatmul.mubr.bf16.gmra.mxu0 %v823
      %v1373 = vpop.f32.mrf.mxu0
      %v1374 = vadd.f32 %v369, %v1373
      %v1375 = vpop.f32.mrf.mxu0
      %v1376 = vpop.f32.mrf.mxu0
      %v1377 = vadd.f32 %v369, %v1376
      %v1378 = vpop.f32.mrf.mxu0
      %1379 = vmatprep.mubr.bf16.mxu0 %v828
      %1380 = vmatmul.mubr.bf16.gmra.mxu0 %v827
      %v1381 = vpop.f32.mrf.mxu0
      %v1382 = vadd.f32 %v369, %v1381
      %v1383 = vpop.f32.mrf.mxu0
      %v1384 = vpop.f32.mrf.mxu0
      %v1385 = vadd.f32 %v369, %v1384
      %v1386 = vpop.f32.mrf.mxu0
      %1387 = vmatprep.mubr.bf16.mxu0 %v832
      %1388 = vmatmul.mubr.bf16.gmra.mxu0 %v831
      %v1389 = vpop.f32.mrf.mxu0
      %v1390 = vadd.f32 %v369, %v1389
      %v1391 = vpop.f32.mrf.mxu0
      %v1392 = vpop.f32.mrf.mxu0
      %v1393 = vadd.f32 %v369, %v1392
      %v1394 = vpop.f32.mrf.mxu0
      %1395 = vmatprep.mubr.bf16.mxu0 %v836
      %1396 = vmatmul.mubr.bf16.gmra.mxu0 %v835
      %v1397 = vpop.f32.mrf.mxu0
      %v1398 = vadd.f32 %v369, %v1397
      %v1399 = vpop.f32.mrf.mxu0
      %v1400 = vpop.f32.mrf.mxu0
      %v1401 = vadd.f32 %v369, %v1400
      %v1402 = vpop.f32.mrf.mxu0
      %1403 = vmatprep.mubr.bf16.mxu0 %v840
      %1404 = vmatmul.mubr.bf16.gmra.mxu0 %v839
      %v1405 = vpop.f32.mrf.mxu0
      %v1406 = vadd.f32 %v369, %v1405
      %v1407 = vpop.f32.mrf.mxu0
      %v1408 = vpop.f32.mrf.mxu0
      %v1409 = vadd.f32 %v369, %v1408
      %v1410 = vpop.f32.mrf.mxu0
      %1411 = vmatprep.mubr.bf16.mxu0 %v844
      %1412 = vmatmul.mubr.bf16.gmra.mxu0 %v843
      %v1413 = vpop.f32.mrf.mxu0
      %v1414 = vadd.f32 %v369, %v1413
      %v1415 = vpop.f32.mrf.mxu0
      %v1416 = vpop.f32.mrf.mxu0
      %v1417 = vadd.f32 %v369, %v1416
      %v1418 = vpop.f32.mrf.mxu0
      %1419 = vmatprep.mubr.bf16.mxu0 %v848
      %1420 = vmatmul.mubr.bf16.gmra.mxu0 %v847
      %v1421 = vpop.f32.mrf.mxu0
      %v1422 = vadd.f32 %v369, %v1421
      %v1423 = vpop.f32.mrf.mxu0
      %v1424 = vpop.f32.mrf.mxu0
      %v1425 = vadd.f32 %v369, %v1424
      %v1426 = vpop.f32.mrf.mxu0
      %1427 = vmatprep.mubr.bf16.mxu0 %v852
      %1428 = vmatmul.mubr.bf16.gmra.mxu0 %v851
      %v1429 = vpop.f32.mrf.mxu0
      %v1430 = vadd.f32 %v369, %v1429
      %v1431 = vpop.f32.mrf.mxu0
      %v1432 = vpop.f32.mrf.mxu0
      %v1433 = vadd.f32 %v369, %v1432
      %v1434 = vpop.f32.mrf.mxu0
      %1435 = vmatprep.mubr.bf16.mxu0 %v856
      %1436 = vmatmul.mubr.bf16.gmra.mxu0 %v855
      %v1437 = vpop.f32.mrf.mxu0
      %v1438 = vadd.f32 %v369, %v1437
      %v1439 = vpop.f32.mrf.mxu0
      %v1440 = vpop.f32.mrf.mxu0
      %v1441 = vadd.f32 %v369, %v1440
      %v1442 = vpop.f32.mrf.mxu0
      %1443 = vmatprep.mubr.bf16.mxu0 %v860
      %1444 = vmatmul.mubr.bf16.gmra.mxu0 %v859
      %v1445 = vpop.f32.mrf.mxu0
      %v1446 = vadd.f32 %v369, %v1445
      %v1447 = vpop.f32.mrf.mxu0
      %v1448 = vpop.f32.mrf.mxu0
      %v1449 = vadd.f32 %v369, %v1448
      %v1450 = vpop.f32.mrf.mxu0
      %1451 = vmatprep.mubr.bf16.mxu0 %v864
      %1452 = vmatmul.mubr.bf16.gmra.mxu0 %v863
      %v1453 = vpop.f32.mrf.mxu0
      %v1454 = vadd.f32 %v369, %v1453
      %v1455 = vpop.f32.mrf.mxu0
      %v1456 = vpop.f32.mrf.mxu0
      %v1457 = vadd.f32 %v369, %v1456
      %v1458 = vpop.f32.mrf.mxu0
      %1459 = vmatprep.mubr.bf16.mxu0 %v868
      %1460 = vmatmul.mubr.bf16.gmra.mxu0 %v867
      %v1461 = vpop.f32.mrf.mxu0
      %v1462 = vadd.f32 %v369, %v1461
      %v1463 = vpop.f32.mrf.mxu0
      %v1464 = vpop.f32.mrf.mxu0
      %v1465 = vadd.f32 %v369, %v1464
      %v1466 = vpop.f32.mrf.mxu0
      %1467 = vmatprep.mubr.bf16.mxu0 %v872
      %1468 = vmatmul.mubr.bf16.gmra.mxu0 %v871
      %v1469 = vpop.f32.mrf.mxu0
      %v1470 = vadd.f32 %v369, %v1469
      %v1471 = vpop.f32.mrf.mxu0
      %v1472 = vpop.f32.mrf.mxu0
      %v1473 = vadd.f32 %v369, %v1472
      %v1474 = vpop.f32.mrf.mxu0
      %1475 = vmatprep.mubr.bf16.mxu0 %v876
      %1476 = vmatmul.mubr.bf16.gmra.mxu0 %v875
      %v1477 = vpop.f32.mrf.mxu0
      %v1478 = vadd.f32 %v369, %v1477
      %v1479 = vpop.f32.mrf.mxu0
      %v1480 = vpop.f32.mrf.mxu0
      %v1481 = vadd.f32 %v369, %v1480
      %v1482 = vpop.f32.mrf.mxu0
      %1483 = vmatprep.mubr.bf16.mxu0 %v880
      %1484 = vmatmul.mubr.bf16.gmra.mxu0 %v879
      %v1485 = vpop.f32.mrf.mxu0
      %v1486 = vadd.f32 %v369, %v1485
      %v1487 = vpop.f32.mrf.mxu0
      %v1488 = vpop.f32.mrf.mxu0
      %v1489 = vadd.f32 %v369, %v1488
      %v1490 = vpop.f32.mrf.mxu0
      %1491 = vdwg.mxu0
      %1492 = vmatprep.subr.bf16.mxu0 0
      %1493 = vmatpush1.bf16.msra.mxu0 %v1162
      %1494 = vmatprep.subr.bf16.mxu0 0
      %1495 = vmatpush1.bf16.msra.mxu0 %v1161
      %1496 = vmatprep.subr.bf16.mxu0 0
      %1497 = vmatpush1.bf16.msra.mxu0 %v1160
      %1498 = vmatprep.subr.bf16.mxu0 0
      %1499 = vmatpush1.bf16.msra.mxu0 %v1159
      %1500 = vmatprep.subr.bf16.mxu0 0
      %1501 = vmatpush1.bf16.msra.mxu0 %v1158
      %1502 = vmatprep.subr.bf16.mxu0 0
      %1503 = vmatpush1.bf16.msra.mxu0 %v1157
      %1504 = vmatprep.subr.bf16.mxu0 0
      %1505 = vmatpush1.bf16.msra.mxu0 %v1156
      %1506 = vmatprep.subr.bf16.mxu0 0
      %1507 = vmatpush1.bf16.msra.mxu0 %v1155
      %1508 = vmatprep.subr.bf16.mxu0 0
      %1509 = vmatpush2.bf16.msra.mxu0 %v1170
      %1510 = vmatprep.subr.bf16.mxu0 0
      %1511 = vmatpush2.bf16.msra.mxu0 %v1169
      %1512 = vmatprep.subr.bf16.mxu0 0
      %1513 = vmatpush2.bf16.msra.mxu0 %v1168
      %1514 = vmatprep.subr.bf16.mxu0 0
      %1515 = vmatpush2.bf16.msra.mxu0 %v1167
      %1516 = vmatprep.subr.bf16.mxu0 0
      %1517 = vmatpush2.bf16.msra.mxu0 %v1166
      %1518 = vmatprep.subr.bf16.mxu0 0
      %1519 = vmatpush2.bf16.msra.mxu0 %v1165
      %1520 = vmatprep.subr.bf16.mxu0 0
      %1521 = vmatpush2.bf16.msra.mxu0 %v1164
      %1522 = vmatprep.subr.bf16.mxu0 0
      %1523 = vmatpush2.bf16.msra.mxu0 %v1163
      %1524 = vmatprep.mubr.bf16.mxu0 %v758
      %1525 = vmatmul.mubr.bf16.gmra.mxu0 %v757
      %v1526 = vpop.f32.mrf.mxu0
      %v1527 = vadd.f32 %v1238, %v1526
      %v1528 = vpop.f32.mrf.mxu0
      %v1529 = vpop.f32.mrf.mxu0
      %v1530 = vadd.f32 %v1241, %v1529
      %v1531 = vpop.f32.mrf.mxu0
      %1532 = vmatprep.mubr.bf16.mxu0 %v762
      %1533 = vmatmul.mubr.bf16.gmra.mxu0 %v761
      %v1534 = vpop.f32.mrf.mxu0
      %v1535 = vadd.f32 %v1246, %v1534
      %v1536 = vpop.f32.mrf.mxu0
      %v1537 = vpop.f32.mrf.mxu0
      %v1538 = vadd.f32 %v1249, %v1537
      %v1539 = vpop.f32.mrf.mxu0
      %1540 = vmatprep.mubr.bf16.mxu0 %v766
      %1541 = vmatmul.mubr.bf16.gmra.mxu0 %v765
      %v1542 = vpop.f32.mrf.mxu0
      %v1543 = vadd.f32 %v1254, %v1542
      %v1544 = vpop.f32.mrf.mxu0
      %v1545 = vpop.f32.mrf.mxu0
      %v1546 = vadd.f32 %v1257, %v1545
      %v1547 = vpop.f32.mrf.mxu0
      %1548 = vmatprep.mubr.bf16.mxu0 %v770
      %1549 = vmatmul.mubr.bf16.gmra.mxu0 %v769
      %v1550 = vpop.f32.mrf.mxu0
      %v1551 = vadd.f32 %v1262, %v1550
      %v1552 = vpop.f32.mrf.mxu0
      %v1553 = vpop.f32.mrf.mxu0
      %v1554 = vadd.f32 %v1265, %v1553
      %v1555 = vpop.f32.mrf.mxu0
      %1556 = vmatprep.mubr.bf16.mxu0 %v774
      %1557 = vmatmul.mubr.bf16.gmra.mxu0 %v773
      %v1558 = vpop.f32.mrf.mxu0
      %v1559 = vadd.f32 %v1270, %v1558
      %v1560 = vpop.f32.mrf.mxu0
      %v1561 = vpop.f32.mrf.mxu0
      %v1562 = vadd.f32 %v1273, %v1561
      %v1563 = vpop.f32.mrf.mxu0
      %1564 = vmatprep.mubr.bf16.mxu0 %v778
      %1565 = vmatmul.mubr.bf16.gmra.mxu0 %v777
      %v1566 = vpop.f32.mrf.mxu0
      %v1567 = vadd.f32 %v1278, %v1566
      %v1568 = vpop.f32.mrf.mxu0
      %v1569 = vpop.f32.mrf.mxu0
      %v1570 = vadd.f32 %v1281, %v1569
      %v1571 = vpop.f32.mrf.mxu0
      %1572 = vmatprep.mubr.bf16.mxu0 %v782
      %1573 = vmatmul.mubr.bf16.gmra.mxu0 %v781
      %v1574 = vpop.f32.mrf.mxu0
      %v1575 = vadd.f32 %v1286, %v1574
      %v1576 = vpop.f32.mrf.mxu0
      %v1577 = vpop.f32.mrf.mxu0
      %v1578 = vadd.f32 %v1289, %v1577
      %v1579 = vpop.f32.mrf.mxu0
      %1580 = vmatprep.mubr.bf16.mxu0 %v786
      %1581 = vmatmul.mubr.bf16.gmra.mxu0 %v785
      %v1582 = vpop.f32.mrf.mxu0
      %v1583 = vadd.f32 %v1294, %v1582
      %v1584 = vpop.f32.mrf.mxu0
      %v1585 = vpop.f32.mrf.mxu0
      %v1586 = vadd.f32 %v1297, %v1585
      %v1587 = vpop.f32.mrf.mxu0
      %1588 = vmatprep.mubr.bf16.mxu0 %v790
      %1589 = vmatmul.mubr.bf16.gmra.mxu0 %v789
      %v1590 = vpop.f32.mrf.mxu0
      %v1591 = vadd.f32 %v1302, %v1590
      %v1592 = vpop.f32.mrf.mxu0
      %v1593 = vpop.f32.mrf.mxu0
      %v1594 = vadd.f32 %v1305, %v1593
      %v1595 = vpop.f32.mrf.mxu0
      %1596 = vmatprep.mubr.bf16.mxu0 %v794
      %1597 = vmatmul.mubr.bf16.gmra.mxu0 %v793
      %v1598 = vpop.f32.mrf.mxu0
      %v1599 = vadd.f32 %v1310, %v1598
      %v1600 = vpop.f32.mrf.mxu0
      %v1601 = vpop.f32.mrf.mxu0
      %v1602 = vadd.f32 %v1313, %v1601
      %v1603 = vpop.f32.mrf.mxu0
      %1604 = vmatprep.mubr.bf16.mxu0 %v798
      %1605 = vmatmul.mubr.bf16.gmra.mxu0 %v797
      %v1606 = vpop.f32.mrf.mxu0
      %v1607 = vadd.f32 %v1318, %v1606
      %v1608 = vpop.f32.mrf.mxu0
      %v1609 = vpop.f32.mrf.mxu0
      %v1610 = vadd.f32 %v1321, %v1609
      %v1611 = vpop.f32.mrf.mxu0
      %1612 = vmatprep.mubr.bf16.mxu0 %v802
      %1613 = vmatmul.mubr.bf16.gmra.mxu0 %v801
      %v1614 = vpop.f32.mrf.mxu0
      %v1615 = vadd.f32 %v1326, %v1614
      %v1616 = vpop.f32.mrf.mxu0
      %v1617 = vpop.f32.mrf.mxu0
      %v1618 = vadd.f32 %v1329, %v1617
      %v1619 = vpop.f32.mrf.mxu0
      %1620 = vmatprep.mubr.bf16.mxu0 %v806
      %1621 = vmatmul.mubr.bf16.gmra.mxu0 %v805
      %v1622 = vpop.f32.mrf.mxu0
      %v1623 = vadd.f32 %v1334, %v1622
      %v1624 = vpop.f32.mrf.mxu0
      %v1625 = vpop.f32.mrf.mxu0
      %v1626 = vadd.f32 %v1337, %v1625
      %v1627 = vpop.f32.mrf.mxu0
      %1628 = vmatprep.mubr.bf16.mxu0 %v810
      %1629 = vmatmul.mubr.bf16.gmra.mxu0 %v809
      %v1630 = vpop.f32.mrf.mxu0
      %v1631 = vadd.f32 %v1342, %v1630
      %v1632 = vpop.f32.mrf.mxu0
      %v1633 = vpop.f32.mrf.mxu0
      %v1634 = vadd.f32 %v1345, %v1633
      %v1635 = vpop.f32.mrf.mxu0
      %1636 = vmatprep.mubr.bf16.mxu0 %v814
      %1637 = vmatmul.mubr.bf16.gmra.mxu0 %v813
      %v1638 = vpop.f32.mrf.mxu0
      %v1639 = vadd.f32 %v1350, %v1638
      %v1640 = vpop.f32.mrf.mxu0
      %v1641 = vpop.f32.mrf.mxu0
      %v1642 = vadd.f32 %v1353, %v1641
      %v1643 = vpop.f32.mrf.mxu0
      %1644 = vmatprep.mubr.bf16.mxu0 %v818
      %1645 = vmatmul.mubr.bf16.gmra.mxu0 %v817
      %v1646 = vpop.f32.mrf.mxu0
      %v1647 = vadd.f32 %v1358, %v1646
      %v1648 = vpop.f32.mrf.mxu0
      %v1649 = vpop.f32.mrf.mxu0
      %v1650 = vadd.f32 %v1361, %v1649
      %v1651 = vpop.f32.mrf.mxu0
      %1652 = vmatprep.mubr.bf16.mxu0 %v822
      %1653 = vmatmul.mubr.bf16.gmra.mxu0 %v821
      %v1654 = vpop.f32.mrf.mxu0
      %v1655 = vadd.f32 %v1366, %v1654
      %v1656 = vpop.f32.mrf.mxu0
      %v1657 = vpop.f32.mrf.mxu0
      %v1658 = vadd.f32 %v1369, %v1657
      %v1659 = vpop.f32.mrf.mxu0
      %1660 = vmatprep.mubr.bf16.mxu0 %v826
      %1661 = vmatmul.mubr.bf16.gmra.mxu0 %v825
      %v1662 = vpop.f32.mrf.mxu0
      %v1663 = vadd.f32 %v1374, %v1662
      %v1664 = vpop.f32.mrf.mxu0
      %v1665 = vpop.f32.mrf.mxu0
      %v1666 = vadd.f32 %v1377, %v1665
      %v1667 = vpop.f32.mrf.mxu0
      %1668 = vmatprep.mubr.bf16.mxu0 %v830
      %1669 = vmatmul.mubr.bf16.gmra.mxu0 %v829
      %v1670 = vpop.f32.mrf.mxu0
      %v1671 = vadd.f32 %v1382, %v1670
      %v1672 = vpop.f32.mrf.mxu0
      %v1673 = vpop.f32.mrf.mxu0
      %v1674 = vadd.f32 %v1385, %v1673
      %v1675 = vpop.f32.mrf.mxu0
      %1676 = vmatprep.mubr.bf16.mxu0 %v834
      %1677 = vmatmul.mubr.bf16.gmra.mxu0 %v833
      %v1678 = vpop.f32.mrf.mxu0
      %v1679 = vadd.f32 %v1390, %v1678
      %v1680 = vpop.f32.mrf.mxu0
      %v1681 = vpop.f32.mrf.mxu0
      %v1682 = vadd.f32 %v1393, %v1681
      %v1683 = vpop.f32.mrf.mxu0
      %1684 = vmatprep.mubr.bf16.mxu0 %v838
      %1685 = vmatmul.mubr.bf16.gmra.mxu0 %v837
      %v1686 = vpop.f32.mrf.mxu0
      %v1687 = vadd.f32 %v1398, %v1686
      %v1688 = vpop.f32.mrf.mxu0
      %v1689 = vpop.f32.mrf.mxu0
      %v1690 = vadd.f32 %v1401, %v1689
      %v1691 = vpop.f32.mrf.mxu0
      %1692 = vmatprep.mubr.bf16.mxu0 %v842
      %1693 = vmatmul.mubr.bf16.gmra.mxu0 %v841
      %v1694 = vpop.f32.mrf.mxu0
      %v1695 = vadd.f32 %v1406, %v1694
      %v1696 = vpop.f32.mrf.mxu0
      %v1697 = vpop.f32.mrf.mxu0
      %v1698 = vadd.f32 %v1409, %v1697
      %v1699 = vpop.f32.mrf.mxu0
      %1700 = vmatprep.mubr.bf16.mxu0 %v846
      %1701 = vmatmul.mubr.bf16.gmra.mxu0 %v845
      %v1702 = vpop.f32.mrf.mxu0
      %v1703 = vadd.f32 %v1414, %v1702
      %v1704 = vpop.f32.mrf.mxu0
      %v1705 = vpop.f32.mrf.mxu0
      %v1706 = vadd.f32 %v1417, %v1705
      %v1707 = vpop.f32.mrf.mxu0
      %1708 = vmatprep.mubr.bf16.mxu0 %v850
      %1709 = vmatmul.mubr.bf16.gmra.mxu0 %v849
      %v1710 = vpop.f32.mrf.mxu0
      %v1711 = vadd.f32 %v1422, %v1710
      %v1712 = vpop.f32.mrf.mxu0
      %v1713 = vpop.f32.mrf.mxu0
      %v1714 = vadd.f32 %v1425, %v1713
      %v1715 = vpop.f32.mrf.mxu0
      %1716 = vmatprep.mubr.bf16.mxu0 %v854
      %1717 = vmatmul.mubr.bf16.gmra.mxu0 %v853
      %v1718 = vpop.f32.mrf.mxu0
      %v1719 = vadd.f32 %v1430, %v1718
      %v1720 = vpop.f32.mrf.mxu0
      %v1721 = vpop.f32.mrf.mxu0
      %v1722 = vadd.f32 %v1433, %v1721
      %v1723 = vpop.f32.mrf.mxu0
      %1724 = vmatprep.mubr.bf16.mxu0 %v858
      %1725 = vmatmul.mubr.bf16.gmra.mxu0 %v857
      %v1726 = vpop.f32.mrf.mxu0
      %v1727 = vadd.f32 %v1438, %v1726
      %v1728 = vpop.f32.mrf.mxu0
      %v1729 = vpop.f32.mrf.mxu0
      %v1730 = vadd.f32 %v1441, %v1729
      %v1731 = vpop.f32.mrf.mxu0
      %1732 = vmatprep.mubr.bf16.mxu0 %v862
      %1733 = vmatmul.mubr.bf16.gmra.mxu0 %v861
      %v1734 = vpop.f32.mrf.mxu0
      %v1735 = vadd.f32 %v1446, %v1734
      %v1736 = vpop.f32.mrf.mxu0
      %v1737 = vpop.f32.mrf.mxu0
      %v1738 = vadd.f32 %v1449, %v1737
      %v1739 = vpop.f32.mrf.mxu0
      %1740 = vmatprep.mubr.bf16.mxu0 %v866
      %1741 = vmatmul.mubr.bf16.gmra.mxu0 %v865
      %v1742 = vpop.f32.mrf.mxu0
      %v1743 = vadd.f32 %v1454, %v1742
      %v1744 = vpop.f32.mrf.mxu0
      %v1745 = vpop.f32.mrf.mxu0
      %v1746 = vadd.f32 %v1457, %v1745
      %v1747 = vpop.f32.mrf.mxu0
      %1748 = vmatprep.mubr.bf16.mxu0 %v870
      %1749 = vmatmul.mubr.bf16.gmra.mxu0 %v869
      %v1750 = vpop.f32.mrf.mxu0
      %v1751 = vadd.f32 %v1462, %v1750
      %v1752 = vpop.f32.mrf.mxu0
      %v1753 = vpop.f32.mrf.mxu0
      %v1754 = vadd.f32 %v1465, %v1753
      %v1755 = vpop.f32.mrf.mxu0
      %1756 = vmatprep.mubr.bf16.mxu0 %v874
      %1757 = vmatmul.mubr.bf16.gmra.mxu0 %v873
      %v1758 = vpop.f32.mrf.mxu0
      %v1759 = vadd.f32 %v1470, %v1758
      %v1760 = vpop.f32.mrf.mxu0
      %v1761 = vpop.f32.mrf.mxu0
      %v1762 = vadd.f32 %v1473, %v1761
      %v1763 = vpop.f32.mrf.mxu0
      %1764 = vmatprep.mubr.bf16.mxu0 %v878
      %1765 = vmatmul.mubr.bf16.gmra.mxu0 %v877
      %v1766 = vpop.f32.mrf.mxu0
      %v1767 = vadd.f32 %v1478, %v1766
      %v1768 = vpop.f32.mrf.mxu0
      %v1769 = vpop.f32.mrf.mxu0
      %v1770 = vadd.f32 %v1481, %v1769
      %v1771 = vpop.f32.mrf.mxu0
      %1772 = vmatprep.mubr.bf16.mxu0 %v882
      %1773 = vmatmul.mubr.bf16.gmra.mxu0 %v881
      %v1774 = vpop.f32.mrf.mxu0
      %v1775 = vadd.f32 %v1486, %v1774
      %v1776 = vpop.f32.mrf.mxu0
      %v1777 = vpop.f32.mrf.mxu0
      %v1778 = vadd.f32 %v1489, %v1777
      %v1779 = vpop.f32.mrf.mxu0
      %1780 = vdwg.mxu0
      %v1781 = vmul.f32 %v1527, 0.5
      %v1782 = vmul.f32 %v1530, 0.5
      %v1783 = vmul.f32 %v1535, 0.5
      %v1784 = vmul.f32 %v1538, 0.5
      %v1785 = vmul.f32 %v1543, 0.5
      %v1786 = vmul.f32 %v1546, 0.5
      %v1787 = vmul.f32 %v1551, 0.5
      %v1788 = vmul.f32 %v1554, 0.5
      %v1789 = vmul.f32 %v1559, 0.5
      %v1790 = vmul.f32 %v1562, 0.5
      %v1791 = vmul.f32 %v1567, 0.5
      %v1792 = vmul.f32 %v1570, 0.5
      %v1793 = vmul.f32 %v1575, 0.5
      %v1794 = vmul.f32 %v1578, 0.5
      %v1795 = vmul.f32 %v1583, 0.5
      %v1796 = vmul.f32 %v1586, 0.5
      %v1797 = vmul.f32 %v1591, 0.5
      %v1798 = vmul.f32 %v1594, 0.5
      %v1799 = vmul.f32 %v1599, 0.5
      %v1800 = vmul.f32 %v1602, 0.5
      %v1801 = vmul.f32 %v1607, 0.5
      %v1802 = vmul.f32 %v1610, 0.5
      %v1803 = vmul.f32 %v1615, 0.5
      %v1804 = vmul.f32 %v1618, 0.5
      %v1805 = vmul.f32 %v1623, 0.5
      %v1806 = vmul.f32 %v1626, 0.5
      %v1807 = vmul.f32 %v1631, 0.5
      %v1808 = vmul.f32 %v1634, 0.5
      %v1809 = vmul.f32 %v1639, 0.5
      %v1810 = vmul.f32 %v1642, 0.5
      %v1811 = vmul.f32 %v1647, 0.5
      %v1812 = vmul.f32 %v1650, 0.5
      %v1813 = vmul.f32 %v1655, 0.5
      %v1814 = vmul.f32 %v1658, 0.5
      %v1815 = vmul.f32 %v1663, 0.5
      %v1816 = vmul.f32 %v1666, 0.5
      %v1817 = vmul.f32 %v1671, 0.5
      %v1818 = vmul.f32 %v1674, 0.5
      %v1819 = vmul.f32 %v1679, 0.5
      %v1820 = vmul.f32 %v1682, 0.5
      %v1821 = vmul.f32 %v1687, 0.5
      %v1822 = vmul.f32 %v1690, 0.5
      %v1823 = vmul.f32 %v1695, 0.5
      %v1824 = vmul.f32 %v1698, 0.5
      %v1825 = vmul.f32 %v1703, 0.5
      %v1826 = vmul.f32 %v1706, 0.5
      %v1827 = vmul.f32 %v1711, 0.5
      %v1828 = vmul.f32 %v1714, 0.5
      %v1829 = vmul.f32 %v1719, 0.5
      %v1830 = vmul.f32 %v1722, 0.5
      %v1831 = vmul.f32 %v1727, 0.5
      %v1832 = vmul.f32 %v1730, 0.5
      %v1833 = vmul.f32 %v1735, 0.5
      %v1834 = vmul.f32 %v1738, 0.5
      %v1835 = vmul.f32 %v1743, 0.5
      %v1836 = vmul.f32 %v1746, 0.5
      %v1837 = vmul.f32 %v1751, 0.5
      %v1838 = vmul.f32 %v1754, 0.5
      %v1839 = vmul.f32 %v1759, 0.5
      %v1840 = vmul.f32 %v1762, 0.5
      %v1841 = vmul.f32 %v1767, 0.5
      %v1842 = vmul.f32 %v1770, 0.5
      %v1843 = vmul.f32 %v1775, 0.5
      %v1844 = vmul.f32 %v1778, 0.5
      %v1845 = vtanh.pop %v1781
      %v1846 = vtanh.pop %v1782
      %v1847 = vtanh.pop %v1783
      %v1848 = vtanh.pop %v1784
      %v1849 = vtanh.pop %v1785
      %v1850 = vtanh.pop %v1786
      %v1851 = vtanh.pop %v1787
      %v1852 = vtanh.pop %v1788
      %v1853 = vtanh.pop %v1789
      %v1854 = vtanh.pop %v1790
      %v1855 = vtanh.pop %v1791
      %v1856 = vtanh.pop %v1792
      %v1857 = vtanh.pop %v1793
      %v1858 = vtanh.pop %v1794
      %v1859 = vtanh.pop %v1795
      %v1860 = vtanh.pop %v1796
      %v1861 = vtanh.pop %v1797
      %v1862 = vtanh.pop %v1798
      %v1863 = vtanh.pop %v1799
      %v1864 = vtanh.pop %v1800
      %v1865 = vtanh.pop %v1801
      %v1866 = vtanh.pop %v1802
      %v1867 = vtanh.pop %v1803
      %v1868 = vtanh.pop %v1804
      %v1869 = vtanh.pop %v1805
      %v1870 = vtanh.pop %v1806
      %v1871 = vtanh.pop %v1807
      %v1872 = vtanh.pop %v1808
      %v1873 = vtanh.pop %v1809
      %v1874 = vtanh.pop %v1810
      %v1875 = vtanh.pop %v1811
      %v1876 = vtanh.pop %v1812
      %v1877 = vtanh.pop %v1813
      %v1878 = vtanh.pop %v1814
      %v1879 = vtanh.pop %v1815
      %v1880 = vtanh.pop %v1816
      %v1881 = vtanh.pop %v1817
      %v1882 = vtanh.pop %v1818
      %v1883 = vtanh.pop %v1819
      %v1884 = vtanh.pop %v1820
      %v1885 = vtanh.pop %v1821
      %v1886 = vtanh.pop %v1822
      %v1887 = vtanh.pop %v1823
      %v1888 = vtanh.pop %v1824
      %v1889 = vtanh.pop %v1825
      %v1890 = vtanh.pop %v1826
      %v1891 = vtanh.pop %v1827
      %v1892 = vtanh.pop %v1828
      %v1893 = vtanh.pop %v1829
      %v1894 = vtanh.pop %v1830
      %v1895 = vtanh.pop %v1831
      %v1896 = vtanh.pop %v1832
      %v1897 = vtanh.pop %v1833
      %v1898 = vtanh.pop %v1834
      %v1899 = vtanh.pop %v1835
      %v1900 = vtanh.pop %v1836
      %v1901 = vtanh.pop %v1837
      %v1902 = vtanh.pop %v1838
      %v1903 = vtanh.pop %v1839
      %v1904 = vtanh.pop %v1840
      %v1905 = vtanh.pop %v1841
      %v1906 = vtanh.pop %v1842
      %v1907 = vtanh.pop %v1843
      %v1908 = vtanh.pop %v1844
      %v1909 = vadd.f32 %v1845, 1.0
      %v1910 = vadd.f32 %v1846, 1.0
      %v1911 = vadd.f32 %v1847, 1.0
      %v1912 = vadd.f32 %v1848, 1.0
      %v1913 = vadd.f32 %v1849, 1.0
      %v1914 = vadd.f32 %v1850, 1.0
      %v1915 = vadd.f32 %v1851, 1.0
      %v1916 = vadd.f32 %v1852, 1.0
      %v1917 = vadd.f32 %v1853, 1.0
      %v1918 = vadd.f32 %v1854, 1.0
      %v1919 = vadd.f32 %v1855, 1.0
      %v1920 = vadd.f32 %v1856, 1.0
      %v1921 = vadd.f32 %v1857, 1.0
      %v1922 = vadd.f32 %v1858, 1.0
      %v1923 = vadd.f32 %v1859, 1.0
      %v1924 = vadd.f32 %v1860, 1.0
      %v1925 = vadd.f32 %v1861, 1.0
      %v1926 = vadd.f32 %v1862, 1.0
      %v1927 = vadd.f32 %v1863, 1.0
      %v1928 = vadd.f32 %v1864, 1.0
      %v1929 = vadd.f32 %v1865, 1.0
      %v1930 = vadd.f32 %v1866, 1.0
      %v1931 = vadd.f32 %v1867, 1.0
      %v1932 = vadd.f32 %v1868, 1.0
      %v1933 = vadd.f32 %v1869, 1.0
      %v1934 = vadd.f32 %v1870, 1.0
      %v1935 = vadd.f32 %v1871, 1.0
      %v1936 = vadd.f32 %v1872, 1.0
      %v1937 = vadd.f32 %v1873, 1.0
      %v1938 = vadd.f32 %v1874, 1.0
      %v1939 = vadd.f32 %v1875, 1.0
      %v1940 = vadd.f32 %v1876, 1.0
      %v1941 = vadd.f32 %v1877, 1.0
      %v1942 = vadd.f32 %v1878, 1.0
      %v1943 = vadd.f32 %v1879, 1.0
      %v1944 = vadd.f32 %v1880, 1.0
      %v1945 = vadd.f32 %v1881, 1.0
      %v1946 = vadd.f32 %v1882, 1.0
      %v1947 = vadd.f32 %v1883, 1.0
      %v1948 = vadd.f32 %v1884, 1.0
      %v1949 = vadd.f32 %v1885, 1.0
      %v1950 = vadd.f32 %v1886, 1.0
      %v1951 = vadd.f32 %v1887, 1.0
      %v1952 = vadd.f32 %v1888, 1.0
      %v1953 = vadd.f32 %v1889, 1.0
      %v1954 = vadd.f32 %v1890, 1.0
      %v1955 = vadd.f32 %v1891, 1.0
      %v1956 = vadd.f32 %v1892, 1.0
      %v1957 = vadd.f32 %v1893, 1.0
      %v1958 = vadd.f32 %v1894, 1.0
      %v1959 = vadd.f32 %v1895, 1.0
      %v1960 = vadd.f32 %v1896, 1.0
      %v1961 = vadd.f32 %v1897, 1.0
      %v1962 = vadd.f32 %v1898, 1.0
      %v1963 = vadd.f32 %v1899, 1.0
      %v1964 = vadd.f32 %v1900, 1.0
      %v1965 = vadd.f32 %v1901, 1.0
      %v1966 = vadd.f32 %v1902, 1.0
      %v1967 = vadd.f32 %v1903, 1.0
      %v1968 = vadd.f32 %v1904, 1.0
      %v1969 = vadd.f32 %v1905, 1.0
      %v1970 = vadd.f32 %v1906, 1.0
      %v1971 = vadd.f32 %v1907, 1.0
      %v1972 = vadd.f32 %v1908, 1.0
      %v1973 = vmul.f32 %v1909, 0.5
      %v1974 = vmul.f32 %v1910, 0.5
      %v1975 = vmul.f32 %v1911, 0.5
      %v1976 = vmul.f32 %v1912, 0.5
      %v1977 = vmul.f32 %v1913, 0.5
      %v1978 = vmul.f32 %v1914, 0.5
      %v1979 = vmul.f32 %v1915, 0.5
      %v1980 = vmul.f32 %v1916, 0.5
      %v1981 = vmul.f32 %v1917, 0.5
      %v1982 = vmul.f32 %v1918, 0.5
      %v1983 = vmul.f32 %v1919, 0.5
      %v1984 = vmul.f32 %v1920, 0.5
      %v1985 = vmul.f32 %v1921, 0.5
      %v1986 = vmul.f32 %v1922, 0.5
      %v1987 = vmul.f32 %v1923, 0.5
      %v1988 = vmul.f32 %v1924, 0.5
      %v1989 = vmul.f32 %v1925, 0.5
      %v1990 = vmul.f32 %v1926, 0.5
      %v1991 = vmul.f32 %v1927, 0.5
      %v1992 = vmul.f32 %v1928, 0.5
      %v1993 = vmul.f32 %v1929, 0.5
      %v1994 = vmul.f32 %v1930, 0.5
      %v1995 = vmul.f32 %v1931, 0.5
      %v1996 = vmul.f32 %v1932, 0.5
      %v1997 = vmul.f32 %v1933, 0.5
      %v1998 = vmul.f32 %v1934, 0.5
      %v1999 = vmul.f32 %v1935, 0.5
      %v2000 = vmul.f32 %v1936, 0.5
      %v2001 = vmul.f32 %v1937, 0.5
      %v2002 = vmul.f32 %v1938, 0.5
      %v2003 = vmul.f32 %v1939, 0.5
      %v2004 = vmul.f32 %v1940, 0.5
      %v2005 = vmul.f32 %v1941, 0.5
      %v2006 = vmul.f32 %v1942, 0.5
      %v2007 = vmul.f32 %v1943, 0.5
      %v2008 = vmul.f32 %v1944, 0.5
      %v2009 = vmul.f32 %v1945, 0.5
      %v2010 = vmul.f32 %v1946, 0.5
      %v2011 = vmul.f32 %v1947, 0.5
      %v2012 = vmul.f32 %v1948, 0.5
      %v2013 = vmul.f32 %v1949, 0.5
      %v2014 = vmul.f32 %v1950, 0.5
      %v2015 = vmul.f32 %v1951, 0.5
      %v2016 = vmul.f32 %v1952, 0.5
      %v2017 = vmul.f32 %v1953, 0.5
      %v2018 = vmul.f32 %v1954, 0.5
      %v2019 = vmul.f32 %v1955, 0.5
      %v2020 = vmul.f32 %v1956, 0.5
      %v2021 = vmul.f32 %v1957, 0.5
      %v2022 = vmul.f32 %v1958, 0.5
      %v2023 = vmul.f32 %v1959, 0.5
      %v2024 = vmul.f32 %v1960, 0.5
      %v2025 = vmul.f32 %v1961, 0.5
      %v2026 = vmul.f32 %v1962, 0.5
      %v2027 = vmul.f32 %v1963, 0.5
      %v2028 = vmul.f32 %v1964, 0.5
      %v2029 = vmul.f32 %v1965, 0.5
      %v2030 = vmul.f32 %v1966, 0.5
      %v2031 = vmul.f32 %v1967, 0.5
      %v2032 = vmul.f32 %v1968, 0.5
      %v2033 = vmul.f32 %v1969, 0.5
      %v2034 = vmul.f32 %v1970, 0.5
      %v2035 = vmul.f32 %v1971, 0.5
      %v2036 = vmul.f32 %v1972, 0.5
      %v2037 = vmul.f32 %v1527, %v1973
      %v2038 = vmul.f32 %v1530, %v1974
      %v2039 = vmul.f32 %v1535, %v1975
      %v2040 = vmul.f32 %v1538, %v1976
      %v2041 = vmul.f32 %v1543, %v1977
      %v2042 = vmul.f32 %v1546, %v1978
      %v2043 = vmul.f32 %v1551, %v1979
      %v2044 = vmul.f32 %v1554, %v1980
      %v2045 = vmul.f32 %v1559, %v1981
      %v2046 = vmul.f32 %v1562, %v1982
      %v2047 = vmul.f32 %v1567, %v1983
      %v2048 = vmul.f32 %v1570, %v1984
      %v2049 = vmul.f32 %v1575, %v1985
      %v2050 = vmul.f32 %v1578, %v1986
      %v2051 = vmul.f32 %v1583, %v1987
      %v2052 = vmul.f32 %v1586, %v1988
      %v2053 = vmul.f32 %v1591, %v1989
      %v2054 = vmul.f32 %v1594, %v1990
      %v2055 = vmul.f32 %v1599, %v1991
      %v2056 = vmul.f32 %v1602, %v1992
      %v2057 = vmul.f32 %v1607, %v1993
      %v2058 = vmul.f32 %v1610, %v1994
      %v2059 = vmul.f32 %v1615, %v1995
      %v2060 = vmul.f32 %v1618, %v1996
      %v2061 = vmul.f32 %v1623, %v1997
      %v2062 = vmul.f32 %v1626, %v1998
      %v2063 = vmul.f32 %v1631, %v1999
      %v2064 = vmul.f32 %v1634, %v2000
      %v2065 = vmul.f32 %v1639, %v2001
      %v2066 = vmul.f32 %v1642, %v2002
      %v2067 = vmul.f32 %v1647, %v2003
      %v2068 = vmul.f32 %v1650, %v2004
      %v2069 = vmul.f32 %v1655, %v2005
      %v2070 = vmul.f32 %v1658, %v2006
      %v2071 = vmul.f32 %v1663, %v2007
      %v2072 = vmul.f32 %v1666, %v2008
      %v2073 = vmul.f32 %v1671, %v2009
      %v2074 = vmul.f32 %v1674, %v2010
      %v2075 = vmul.f32 %v1679, %v2011
      %v2076 = vmul.f32 %v1682, %v2012
      %v2077 = vmul.f32 %v1687, %v2013
      %v2078 = vmul.f32 %v1690, %v2014
      %v2079 = vmul.f32 %v1695, %v2015
      %v2080 = vmul.f32 %v1698, %v2016
      %v2081 = vmul.f32 %v1703, %v2017
      %v2082 = vmul.f32 %v1706, %v2018
      %v2083 = vmul.f32 %v1711, %v2019
      %v2084 = vmul.f32 %v1714, %v2020
      %v2085 = vmul.f32 %v1719, %v2021
      %v2086 = vmul.f32 %v1722, %v2022
      %v2087 = vmul.f32 %v1727, %v2023
      %v2088 = vmul.f32 %v1730, %v2024
      %v2089 = vmul.f32 %v1735, %v2025
      %v2090 = vmul.f32 %v1738, %v2026
      %v2091 = vmul.f32 %v1743, %v2027
      %v2092 = vmul.f32 %v1746, %v2028
      %v2093 = vmul.f32 %v1751, %v2029
      %v2094 = vmul.f32 %v1754, %v2030
      %v2095 = vmul.f32 %v1759, %v2031
      %v2096 = vmul.f32 %v1762, %v2032
      %v2097 = vmul.f32 %v1767, %v2033
      %v2098 = vmul.f32 %v1770, %v2034
      %v2099 = vmul.f32 %v1775, %v2035
      %v2100 = vmul.f32 %v1778, %v2036
      %v2101 = vmax.f32 %v2037, %v2053
      %v2102 = vmax.f32 %v2038, %v2054
      %v2103 = vmax.f32 %v2039, %v2055
      %v2104 = vmax.f32 %v2040, %v2056
      %v2105 = vmax.f32 %v2041, %v2057
      %v2106 = vmax.f32 %v2042, %v2058
      %v2107 = vmax.f32 %v2043, %v2059
      %v2108 = vmax.f32 %v2044, %v2060
      %v2109 = vmax.f32 %v2045, %v2061
      %v2110 = vmax.f32 %v2046, %v2062
      %v2111 = vmax.f32 %v2047, %v2063
      %v2112 = vmax.f32 %v2048, %v2064
      %v2113 = vmax.f32 %v2049, %v2065
      %v2114 = vmax.f32 %v2050, %v2066
      %v2115 = vmax.f32 %v2051, %v2067
      %v2116 = vmax.f32 %v2052, %v2068
      %v2117 = vmax.f32 %v2101, %v2069
      %v2118 = vmax.f32 %v2102, %v2070
      %v2119 = vmax.f32 %v2103, %v2071
      %v2120 = vmax.f32 %v2104, %v2072
      %v2121 = vmax.f32 %v2105, %v2073
      %v2122 = vmax.f32 %v2106, %v2074
      %v2123 = vmax.f32 %v2107, %v2075
      %v2124 = vmax.f32 %v2108, %v2076
      %v2125 = vmax.f32 %v2109, %v2077
      %v2126 = vmax.f32 %v2110, %v2078
      %v2127 = vmax.f32 %v2111, %v2079
      %v2128 = vmax.f32 %v2112, %v2080
      %v2129 = vmax.f32 %v2113, %v2081
      %v2130 = vmax.f32 %v2114, %v2082
      %v2131 = vmax.f32 %v2115, %v2083
      %v2132 = vmax.f32 %v2116, %v2084
      %v2133 = vmax.f32 %v2117, %v2085
      %v2134 = vmax.f32 %v2118, %v2086
      %v2135 = vmax.f32 %v2119, %v2087
      %v2136 = vmax.f32 %v2120, %v2088
      %v2137 = vmax.f32 %v2121, %v2089
      %v2138 = vmax.f32 %v2122, %v2090
      %v2139 = vmax.f32 %v2123, %v2091
      %v2140 = vmax.f32 %v2124, %v2092
      %v2141 = vmax.f32 %v2125, %v2093
      %v2142 = vmax.f32 %v2126, %v2094
      %v2143 = vmax.f32 %v2127, %v2095
      %v2144 = vmax.f32 %v2128, %v2096
      %v2145 = vmax.f32 %v2129, %v2097
      %v2146 = vmax.f32 %v2130, %v2098
      %v2147 = vmax.f32 %v2131, %v2099
      %v2148 = vmax.f32 %v2132, %v2100
      %v2149 = vpack.c.bf16 %v2134, %v2133
      %v2150 = vpack.c.bf16 %v2136, %v2135
      %v2151 = vpack.c.bf16 %v2138, %v2137
      %v2152 = vpack.c.bf16 %v2140, %v2139
      %v2153 = vpack.c.bf16 %v2142, %v2141
      %v2154 = vpack.c.bf16 %v2144, %v2143
      %v2155 = vpack.c.bf16 %v2146, %v2145
      %v2156 = vpack.c.bf16 %v2148, %v2147
      %v2165 = vunpack.c.l.b16 %v2149
      %v2166 = vunpack.c.h.b16 %v2149
      %v2167 = vunpack.c.l.b16 %v2150
      %v2168 = vunpack.c.h.b16 %v2150
      %v2169 = vunpack.c.l.b16 %v2151
      %v2170 = vunpack.c.h.b16 %v2151
      %v2171 = vunpack.c.l.b16 %v2152
      %v2172 = vunpack.c.h.b16 %v2152
      %v2173 = vunpack.c.l.b16 %v2153
      %v2174 = vunpack.c.h.b16 %v2153
      %v2175 = vunpack.c.l.b16 %v2154
      %v2176 = vunpack.c.h.b16 %v2154
      %v2177 = vunpack.c.l.b16 %v2155
      %v2178 = vunpack.c.h.b16 %v2155
      %v2179 = vunpack.c.l.b16 %v2156
      %v2180 = vunpack.c.h.b16 %v2156
      %v2181 = vpack.c.b16 %v2165, %v2165
      %v2182 = vpack.c.b16 %v2166, %v2166
      %v2183 = vpack.c.b16 %v2167, %v2167
      %v2184 = vpack.c.b16 %v2168, %v2168
      %v2185 = vpack.c.b16 %v2169, %v2169
      %v2186 = vpack.c.b16 %v2170, %v2170
      %v2187 = vpack.c.b16 %v2171, %v2171
      %v2188 = vpack.c.b16 %v2172, %v2172
      %v2189 = vpack.c.b16 %v2173, %v2173
      %v2190 = vpack.c.b16 %v2174, %v2174
      %v2191 = vpack.c.b16 %v2175, %v2175
      %v2192 = vpack.c.b16 %v2176, %v2176
      %v2193 = vpack.c.b16 %v2177, %v2177
      %v2194 = vpack.c.b16 %v2178, %v2178
      %v2195 = vpack.c.b16 %v2179, %v2179
      %v2196 = vpack.c.b16 %v2180, %v2180
      %vm2213 = vcmask 519168
      %2214 = vst.msk [vmem:[%s170] sm:$0xf] %vm2213, %v2181
      %2215 = vst.msk [vmem:[%s170 + $0x4] sm:$0xf] %vm2213, %v2182
      %2216 = vst.msk [vmem:[%s170 + $0x8] sm:$0xf] %vm2213, %v2183
      %2217 = vst.msk [vmem:[%s170 + $0xc] sm:$0xf] %vm2213, %v2184
      %2218 = vst.msk [vmem:[%s170 + $0x10] sm:$0xf] %vm2213, %v2185
      %2219 = vst.msk [vmem:[%s170 + $0x14] sm:$0xf] %vm2213, %v2186
      %2220 = vst.msk [vmem:[%s170 + $0x18] sm:$0xf] %vm2213, %v2187
      %2221 = vst.msk [vmem:[%s170 + $0x1c] sm:$0xf] %vm2213, %v2188
      %2222 = vst.msk [vmem:[%s170 + $0x20] sm:$0xf] %vm2213, %v2189
      %2223 = vst.msk [vmem:[%s170 + $0x24] sm:$0xf] %vm2213, %v2190
      %2224 = vst.msk [vmem:[%s170 + $0x28] sm:$0xf] %vm2213, %v2191
      %2225 = vst.msk [vmem:[%s170 + $0x2c] sm:$0xf] %vm2213, %v2192
      %2226 = vst.msk [vmem:[%s170 + $0x30] sm:$0xf] %vm2213, %v2193
      %2227 = vst.msk [vmem:[%s170 + $0x34] sm:$0xf] %vm2213, %v2194
      %2228 = vst.msk [vmem:[%s170 + $0x38] sm:$0xf] %vm2213, %v2195
      %2229 = vst.msk [vmem:[%s170 + $0x3c] sm:$0xf] %vm2213, %v2196
      %p2230 = scmp.lt.s32.totalorder %s14, 1
      %s2231 = scalar_select %p2230, %s14, 1
      %s2232 = smul.addr %s2231, 16
      %s2233 = smul.addr %s2232, 4
      %s2234 = scalar_lea.vmem %s3, %s2233
      // Predicated region
      $region33: #{convnet3d_forward.2} parent=31 // pred_check
        %p2235 = pneg %p100
      $region34: #{convnet3d_forward.2} parent=31 // pred_check_branch
        %2237 = sbr.rel (%p2235) target = $region36
      $region35: #{convnet3d_forward.2} parent=31 // pred_region
        _
      $region36: #{convnet3d_forward.2} parent=31 // pred_fallthru
        _
    $region32: #{convnet3d_forward.2} parent=5 // pred_fallthru
      _
    %p2238 = scmp.le.s32.totalorder 2, %s9
    // Predicated region
    $region37: #{convnet3d_forward.2} parent=5 // pred_check
      %p2239 = pneg %p2238
    $region38: #{convnet3d_forward.2} parent=5 // pred_check_branch
      %2241 = sbr.rel (%p2239) target = $region40
    $region39: #{convnet3d_forward.2} parent=5 // pred_region
      %s2242 = ssub.s32 %s9, 2
      // Predicated region
      $region41: #{convnet3d_forward.2} parent=39 // pred_check
        %p2243 = pneg %p106
      $region42: #{convnet3d_forward.2} parent=39 // pred_check_branch
        %2245 = sbr.rel (%p2243) target = $region44
      $region43: #{convnet3d_forward.2} parent=39 // pred_region
        %p2246 = scmp.lt.s32.totalorder %s15, 1
        %s2247 = scalar_select %p2246, %s15, 1
        %s2248 = smul.addr %s2247, 16
        %s2249 = smul.addr %s2248, 4
        %s2250 = scalar_lea.vmem %s3, %s2249
      $region44: #{convnet3d_forward.2} parent=39 // pred_fallthru
        _
    $region40: #{convnet3d_forward.2} parent=5 // pred_fallthru
      _
  $region6: #{convnet3d_forward.2} parent=0 // loop_footer
    %s13 = sadd.s32 1, %s9
  $region7: #{convnet3d_forward.2} parent=0 // loop_footer_branch
    %8 = sbr.rel target = $region3
  $region8: #{convnet3d_forward.2} parent=0 // loop_exit
    _

// kernel: convnet3d_forward.3
$region0: #{convnet3d_forward.3}
  #allocation0 [shape = 'u32[]', space=smem, size = 0x4, offset = 0x4, fixed_abs, tag = 'smem constant byte address 0x4 - core index']
  #allocation1 [shape = 'u32[144,128]{1,0:T(1,128)}', space=vmem, size = 0x12000, scoped, tag = 'internal scratch']
  %s0 = inlined_call_operand.vmem [shape: bf16[64,9472], index: 0, kind: input, shape index: {}]
  %s1 = inlined_call_operand.vmem [shape: bf16[9472,128], index: 1, kind: input, shape index: {}]
  %s2 = inlined_call_operand.vmem [shape: f32[1,128], index: 2, kind: input, shape index: {}]
  %s3 = inlined_call_operand.vmem [shape: bf16[128,10], index: 3, kind: input, shape index: {}]
  %s4 = inlined_call_operand.vmem [shape: f32[1,10], index: 4, kind: input, shape index: {}]
  %s5 = inlined_call_operand.hbm [shape: f32[2,10], index: 5, kind: output, shape index: {}]
  %s6 = sld [smem:[#allocation0]]
  $region30: #{convnet3d_forward.3} parent=0
    _
  %s8 = ssub.s32 1, %s6
  %s9 = scalar_select 0, %s8, %s6
  $region1: #{convnet3d_forward.3} parent=0
    #allocation2 [shape = 'u8[1024]{0}', space=vmem, size = 0x400, scoped, tag = 'output window, operand 0, single buffered']
    #allocation3 [shape = 's32[1]{0}', space=sflag, size = 0x4, scoped, tag = 'scoped memory for convnet3d_forward.3']
    %10 = vsyncpa [#allocation3], 0
    // Predicated region
    $region2: #{convnet3d_forward.3} parent=1 // pred_check
      _
    $region3: #{convnet3d_forward.3} parent=1 // pred_check_branch
      %12 = sbr.rel (0) target = $region5
    $region4: #{convnet3d_forward.3} parent=1 // pred_region
      _
    $region5: #{convnet3d_forward.3} parent=1 // pred_fallthru
      _
    // Predicated region
    $region6: #{convnet3d_forward.3} parent=1 // pred_check
      _
    $region7: #{convnet3d_forward.3} parent=1 // pred_check_branch
      %14 = sbr.rel (0) target = $region9
    $region8: #{convnet3d_forward.3} parent=1 // pred_region
      _
    $region9: #{convnet3d_forward.3} parent=1 // pred_fallthru
      _
    // Predicated region
    $region10: #{convnet3d_forward.3} parent=1 // pred_check
      _
    $region11: #{convnet3d_forward.3} parent=1 // pred_check_branch
      %16 = sbr.rel (0) target = $region13
    $region12: #{convnet3d_forward.3} parent=1 // pred_region
      _
    $region13: #{convnet3d_forward.3} parent=1 // pred_fallthru
      _
    // Predicated region
    $region14: #{convnet3d_forward.3} parent=1 // pred_check
      _
    $region15: #{convnet3d_forward.3} parent=1 // pred_check_branch
      %18 = sbr.rel (0) target = $region17
    $region16: #{convnet3d_forward.3} parent=1 // pred_region
      _
    $region17: #{convnet3d_forward.3} parent=1 // pred_fallthru
      _
    // Predicated region
    $region18: #{convnet3d_forward.3} parent=1 // pred_check
      _
    $region19: #{convnet3d_forward.3} parent=1 // pred_check_branch
      %20 = sbr.rel (0) target = $region21
    $region20: #{convnet3d_forward.3} parent=1 // pred_region
      _
    $region21: #{convnet3d_forward.3} parent=1 // pred_fallthru
      _
    %v22 = vld [vmem:[%s0] sm:$0xff]
    %v23 = vld [vmem:[%s0 + $0x8] sm:$0xff]
    %v24 = vld [vmem:[%s0 + $0x10] sm:$0xff]
    %v25 = vld [vmem:[%s0 + $0x18] sm:$0xff]
    %v26 = vld [vmem:[%s0 + $0x20] sm:$0xff]
    %v27 = vld [vmem:[%s0 + $0x28] sm:$0xff]
    %v28 = vld [vmem:[%s0 + $0x30] sm:$0xff]
    %v29 = vld [vmem:[%s0 + $0x38] sm:$0xff]
    %v30 = vld [vmem:[%s0 + $0x40] sm:$0xff]
    %v31 = vld [vmem:[%s0 + $0x48] sm:$0xff]
    %v32 = vld [vmem:[%s0 + $0x50] sm:$0xff]
    %v33 = vld [vmem:[%s0 + $0x58] sm:$0xff]
    %v34 = vld [vmem:[%s0 + $0x60] sm:$0xff]
    %v35 = vld [vmem:[%s0 + $0x68] sm:$0xff]
    %v36 = vld [vmem:[%s0 + $0x70] sm:$0xff]
    %v37 = vld [vmem:[%s0 + $0x78] sm:$0xff]
    %v38 = vld [vmem:[%s0 + $0x80] sm:$0xff]
    %v39 = vld [vmem:[%s0 + $0x88] sm:$0xff]
    %v40 = vld [vmem:[%s0 + $0x90] sm:$0xff]
    %v41 = vld [vmem:[%s0 + $0x98] sm:$0xff]
    %v42 = vld [vmem:[%s0 + $0xa0] sm:$0xff]
    %v43 = vld [vmem:[%s0 + $0xa8] sm:$0xff]
    %v44 = vld [vmem:[%s0 + $0xb0] sm:$0xff]
    %v45 = vld [vmem:[%s0 + $0xb8] sm:$0xff]
    %v46 = vld [vmem:[%s0 + $0xc0] sm:$0xff]
    %v47 = vld [vmem:[%s0 + $0xc8] sm:$0xff]
    %v48 = vld [vmem:[%s0 + $0xd0] sm:$0xff]
    %v49 = vld [vmem:[%s0 + $0xd8] sm:$0xff]
    %v50 = vld [vmem:[%s0 + $0xe0] sm:$0xff]
    %v51 = vld [vmem:[%s0 + $0xe8] sm:$0xff]
    %v52 = vld [vmem:[%s0 + $0xf0] sm:$0xff]
    %v53 = vld [vmem:[%s0 + $0xf8] sm:$0xff]
    %v54 = vld [vmem:[%s0 + $0x100] sm:$0xff]
    %v55 = vld [vmem:[%s0 + $0x108] sm:$0xff]
    %v56 = vld [vmem:[%s0 + $0x110] sm:$0xff]
    %v57 = vld [vmem:[%s0 + $0x118] sm:$0xff]
    %v58 = vld [vmem:[%s0 + $0x120] sm:$0xff]
    %v59 = vld [vmem:[%s0 + $0x128] sm:$0xff]
    %v60 = vld [vmem:[%s0 + $0x130] sm:$0xff]
    %v61 = vld [vmem:[%s0 + $0x138] sm:$0xff]
    %v62 = vld [vmem:[%s0 + $0x140] sm:$0xff]
    %v63 = vld [vmem:[%s0 + $0x148] sm:$0xff]
    %v64 = vld [vmem:[%s0 + $0x150] sm:$0xff]
    %v65 = vld [vmem:[%s0 + $0x158] sm:$0xff]
    %v66 = vld [vmem:[%s0 + $0x160] sm:$0xff]
    %v67 = vld [vmem:[%s0 + $0x168] sm:$0xff]
    %v68 = vld [vmem:[%s0 + $0x170] sm:$0xff]
    %v69 = vld [vmem:[%s0 + $0x178] sm:$0xff]
    %v70 = vld [vmem:[%s0 + $0x180] sm:$0xff]
    %v71 = vld [vmem:[%s0 + $0x188] sm:$0xff]
    %v72 = vld [vmem:[%s0 + $0x190] sm:$0xff]
    %v73 = vld [vmem:[%s0 + $0x198] sm:$0xff]
    %v74 = vld [vmem:[%s0 + $0x1a0] sm:$0xff]
    %v75 = vld [vmem:[%s0 + $0x1a8] sm:$0xff]
    %v76 = vld [vmem:[%s0 + $0x1b0] sm:$0xff]
    %v77 = vld [vmem:[%s0 + $0x1b8] sm:$0xff]
    %v78 = vld [vmem:[%s0 + $0x1c0] sm:$0xff]
    %v79 = vld [vmem:[%s0 + $0x1c8] sm:$0xff]
    %v80 = vld [vmem:[%s0 + $0x1d0] sm:$0xff]
    %v81 = vld [vmem:[%s0 + $0x1d8] sm:$0xff]
    %v82 = vld [vmem:[%s0 + $0x1e0] sm:$0xff]
    %v83 = vld [vmem:[%s0 + $0x1e8] sm:$0xff]
    %v84 = vld [vmem:[%s0 + $0x1f0] sm:$0xff]
    %v85 = vld [vmem:[%s0 + $0x1f8] sm:$0xff]
    %v86 = vld [vmem:[%s0 + $0x200] sm:$0xff]
    %v87 = vld [vmem:[%s0 + $0x208] sm:$0xff]
    %v88 = vld [vmem:[%s0 + $0x210] sm:$0xff]
    %v89 = vld [vmem:[%s0 + $0x218] sm:$0xff]
    %v90 = vld [vmem:[%s0 + $0x220] sm:$0xff]
    %v91 = vld [vmem:[%s0 + $0x228] sm:$0xff]
    %v92 = vld [vmem:[%s0 + $0x230] sm:$0xff]
    %v93 = vld [vmem:[%s0 + $0x238] sm:$0xff]
    %v94 = vld [vmem:[%s0 + $0x240] sm:$0xff]
    %v95 = vld [vmem:[%s0 + $0x248] sm:$0xff]
    %v96 = vld [vmem:[%s0 + $0x250] sm:$0xff]
    %v97 = vld [vmem:[%s0 + $0x258] sm:$0xff]
    %v98 = vld [vmem:[%s0 + $0x260] sm:$0xff]
    %v99 = vld [vmem:[%s0 + $0x268] sm:$0xff]
    %v100 = vld [vmem:[%s0 + $0x270] sm:$0xff]
    %v101 = vld [vmem:[%s0 + $0x278] sm:$0xff]
    %v102 = vld [vmem:[%s0 + $0x280] sm:$0xff]
    %v103 = vld [vmem:[%s0 + $0x288] sm:$0xff]
    %v104 = vld [vmem:[%s0 + $0x290] sm:$0xff]
    %v105 = vld [vmem:[%s0 + $0x298] sm:$0xff]
    %v106 = vld [vmem:[%s0 + $0x2a0] sm:$0xff]
    %v107 = vld [vmem:[%s0 + $0x2a8] sm:$0xff]
    %v108 = vld [vmem:[%s0 + $0x2b0] sm:$0xff]
    %v109 = vld [vmem:[%s0 + $0x2b8] sm:$0xff]
    %v110 = vld [vmem:[%s0 + $0x2c0] sm:$0xff]
    %v111 = vld [vmem:[%s0 + $0x2c8] sm:$0xff]
    %v112 = vld [vmem:[%s0 + $0x2d0] sm:$0xff]
    %v113 = vld [vmem:[%s0 + $0x2d8] sm:$0xff]
    %v114 = vld [vmem:[%s0 + $0x2e0] sm:$0xff]
    %v115 = vld [vmem:[%s0 + $0x2e8] sm:$0xff]
    %v116 = vld [vmem:[%s0 + $0x2f0] sm:$0xff]
    %v117 = vld [vmem:[%s0 + $0x2f8] sm:$0xff]
    %v118 = vld [vmem:[%s0 + $0x300] sm:$0xff]
    %v119 = vld [vmem:[%s0 + $0x308] sm:$0xff]
    %v120 = vld [vmem:[%s0 + $0x310] sm:$0xff]
    %v121 = vld [vmem:[%s0 + $0x318] sm:$0xff]
    %v122 = vld [vmem:[%s0 + $0x320] sm:$0xff]
    %v123 = vld [vmem:[%s0 + $0x328] sm:$0xff]
    %v124 = vld [vmem:[%s0 + $0x330] sm:$0xff]
    %v125 = vld [vmem:[%s0 + $0x338] sm:$0xff]
    %v126 = vld [vmem:[%s0 + $0x340] sm:$0xff]
    %v127 = vld [vmem:[%s0 + $0x348] sm:$0xff]
    %v128 = vld [vmem:[%s0 + $0x350] sm:$0xff]
    %v129 = vld [vmem:[%s0 + $0x358] sm:$0xff]
    %v130 = vld [vmem:[%s0 + $0x360] sm:$0xff]
    %v131 = vld [vmem:[%s0 + $0x368] sm:$0xff]
    %v132 = vld [vmem:[%s0 + $0x370] sm:$0xff]
    %v133 = vld [vmem:[%s0 + $0x378] sm:$0xff]
    %v134 = vld [vmem:[%s0 + $0x380] sm:$0xff]
    %v135 = vld [vmem:[%s0 + $0x388] sm:$0xff]
    %v136 = vld [vmem:[%s0 + $0x390] sm:$0xff]
    %v137 = vld [vmem:[%s0 + $0x398] sm:$0xff]
    %v138 = vld [vmem:[%s0 + $0x3a0] sm:$0xff]
    %v139 = vld [vmem:[%s0 + $0x3a8] sm:$0xff]
    %v140 = vld [vmem:[%s0 + $0x3b0] sm:$0xff]
    %v141 = vld [vmem:[%s0 + $0x3b8] sm:$0xff]
    %v142 = vld [vmem:[%s0 + $0x3c0] sm:$0xff]
    %v143 = vld [vmem:[%s0 + $0x3c8] sm:$0xff]
    %v144 = vld [vmem:[%s0 + $0x3d0] sm:$0xff]
    %v145 = vld [vmem:[%s0 + $0x3d8] sm:$0xff]
    %v146 = vld [vmem:[%s0 + $0x3e0] sm:$0xff]
    %v147 = vld [vmem:[%s0 + $0x3e8] sm:$0xff]
    %v148 = vld [vmem:[%s0 + $0x3f0] sm:$0xff]
    %v149 = vld [vmem:[%s0 + $0x3f8] sm:$0xff]
    %v150 = vld [vmem:[%s0 + $0x400] sm:$0xff]
    %v151 = vld [vmem:[%s0 + $0x408] sm:$0xff]
    %v152 = vld [vmem:[%s0 + $0x410] sm:$0xff]
    %v153 = vld [vmem:[%s0 + $0x418] sm:$0xff]
    %v154 = vld [vmem:[%s0 + $0x420] sm:$0xff]
    %v155 = vld [vmem:[%s0 + $0x428] sm:$0xff]
    %v156 = vld [vmem:[%s0 + $0x430] sm:$0xff]
    %v157 = vld [vmem:[%s0 + $0x438] sm:$0xff]
    %v158 = vld [vmem:[%s0 + $0x440] sm:$0xff]
    %v159 = vld [vmem:[%s0 + $0x448] sm:$0xff]
    %v160 = vld [vmem:[%s0 + $0x450] sm:$0xff]
    %v161 = vld [vmem:[%s0 + $0x458] sm:$0xff]
    %v162 = vld [vmem:[%s0 + $0x460] sm:$0xff]
    %v163 = vld [vmem:[%s0 + $0x468] sm:$0xff]
    %v164 = vld [vmem:[%s0 + $0x470] sm:$0xff]
    %v165 = vld [vmem:[%s0 + $0x478] sm:$0xff]
    %v166 = vld [vmem:[%s0 + $0x480] sm:$0xff]
    %v167 = vld [vmem:[%s0 + $0x488] sm:$0xff]
    %v168 = vld [vmem:[%s0 + $0x490] sm:$0xff]
    %v169 = vld [vmem:[%s0 + $0x498] sm:$0xff]
    %v170 = vld [vmem:[%s0 + $0x4a0] sm:$0xff]
    %v171 = vld [vmem:[%s0 + $0x4a8] sm:$0xff]
    %v172 = vld [vmem:[%s0 + $0x4b0] sm:$0xff]
    %v173 = vld [vmem:[%s0 + $0x4b8] sm:$0xff]
    %v174 = vld [vmem:[%s0 + $0x4c0] sm:$0xff]
    %v175 = vld [vmem:[%s0 + $0x4c8] sm:$0xff]
    %v176 = vld [vmem:[%s0 + $0x4d0] sm:$0xff]
    %v177 = vld [vmem:[%s0 + $0x4d8] sm:$0xff]
    %v178 = vld [vmem:[%s0 + $0x4e0] sm:$0xff]
    %v179 = vld [vmem:[%s0 + $0x4e8] sm:$0xff]
    %v180 = vld [vmem:[%s0 + $0x4f0] sm:$0xff]
    %v181 = vld [vmem:[%s0 + $0x4f8] sm:$0xff]
    %v182 = vld [vmem:[%s0 + $0x500] sm:$0xff]
    %v183 = vld [vmem:[%s0 + $0x508] sm:$0xff]
    %v184 = vld [vmem:[%s0 + $0x510] sm:$0xff]
    %v185 = vld [vmem:[%s0 + $0x518] sm:$0xff]
    %v186 = vld [vmem:[%s0 + $0x520] sm:$0xff]
    %v187 = vld [vmem:[%s0 + $0x528] sm:$0xff]
    %v188 = vld [vmem:[%s0 + $0x530] sm:$0xff]
    %v189 = vld [vmem:[%s0 + $0x538] sm:$0xff]
    %v190 = vld [vmem:[%s0 + $0x540] sm:$0xff]
    %v191 = vld [vmem:[%s0 + $0x548] sm:$0xff]
    %v192 = vld [vmem:[%s0 + $0x550] sm:$0xff]
    %v193 = vld [vmem:[%s0 + $0x558] sm:$0xff]
    %v194 = vld [vmem:[%s0 + $0x560] sm:$0xff]
    %v195 = vld [vmem:[%s0 + $0x568] sm:$0xff]
    %v196 = vld [vmem:[%s0 + $0x570] sm:$0xff]
    %v197 = vld [vmem:[%s0 + $0x578] sm:$0xff]
    %v198 = vld [vmem:[%s0 + $0x580] sm:$0xff]
    %v199 = vld [vmem:[%s0 + $0x588] sm:$0xff]
    %v200 = vld [vmem:[%s0 + $0x590] sm:$0xff]
    %v201 = vld [vmem:[%s0 + $0x598] sm:$0xff]
    %v202 = vld [vmem:[%s0 + $0x5a0] sm:$0xff]
    %v203 = vld [vmem:[%s0 + $0x5a8] sm:$0xff]
    %v204 = vld [vmem:[%s0 + $0x5b0] sm:$0xff]
    %v205 = vld [vmem:[%s0 + $0x5b8] sm:$0xff]
    %v206 = vld [vmem:[%s0 + $0x5c0] sm:$0xff]
    %v207 = vld [vmem:[%s0 + $0x5c8] sm:$0xff]
    %v208 = vld [vmem:[%s0 + $0x5d0] sm:$0xff]
    %v209 = vld [vmem:[%s0 + $0x5d8] sm:$0xff]
    %v210 = vld [vmem:[%s0 + $0x5e0] sm:$0xff]
    %v211 = vld [vmem:[%s0 + $0x5e8] sm:$0xff]
    %v212 = vld [vmem:[%s0 + $0x5f0] sm:$0xff]
    %v213 = vld [vmem:[%s0 + $0x5f8] sm:$0xff]
    %v214 = vld [vmem:[%s0 + $0x600] sm:$0xff]
    %v215 = vld [vmem:[%s0 + $0x608] sm:$0xff]
    %v216 = vld [vmem:[%s0 + $0x610] sm:$0xff]
    %v217 = vld [vmem:[%s0 + $0x618] sm:$0xff]
    %v218 = vld [vmem:[%s0 + $0x620] sm:$0xff]
    %v219 = vld [vmem:[%s0 + $0x628] sm:$0xff]
    %v220 = vld [vmem:[%s0 + $0x630] sm:$0xff]
    %v221 = vld [vmem:[%s0 + $0x638] sm:$0xff]
    %v222 = vld [vmem:[%s0 + $0x640] sm:$0xff]
    %v223 = vld [vmem:[%s0 + $0x648] sm:$0xff]
    %v224 = vld [vmem:[%s0 + $0x650] sm:$0xff]
    %v225 = vld [vmem:[%s0 + $0x658] sm:$0xff]
    %v226 = vld [vmem:[%s0 + $0x660] sm:$0xff]
    %v227 = vld [vmem:[%s0 + $0x668] sm:$0xff]
    %v228 = vld [vmem:[%s0 + $0x670] sm:$0xff]
    %v229 = vld [vmem:[%s0 + $0x678] sm:$0xff]
    %v230 = vld [vmem:[%s0 + $0x680] sm:$0xff]
    %v231 = vld [vmem:[%s0 + $0x688] sm:$0xff]
    %v232 = vld [vmem:[%s0 + $0x690] sm:$0xff]
    %v233 = vld [vmem:[%s0 + $0x698] sm:$0xff]
    %v234 = vld [vmem:[%s0 + $0x6a0] sm:$0xff]
    %v235 = vld [vmem:[%s0 + $0x6a8] sm:$0xff]
    %v236 = vld [vmem:[%s0 + $0x6b0] sm:$0xff]
    %v237 = vld [vmem:[%s0 + $0x6b8] sm:$0xff]
    %v238 = vld [vmem:[%s0 + $0x6c0] sm:$0xff]
    %v239 = vld [vmem:[%s0 + $0x6c8] sm:$0xff]
    %v240 = vld [vmem:[%s0 + $0x6d0] sm:$0xff]
    %v241 = vld [vmem:[%s0 + $0x6d8] sm:$0xff]
    %v242 = vld [vmem:[%s0 + $0x6e0] sm:$0xff]
    %v243 = vld [vmem:[%s0 + $0x6e8] sm:$0xff]
    %v244 = vld [vmem:[%s0 + $0x6f0] sm:$0xff]
    %v245 = vld [vmem:[%s0 + $0x6f8] sm:$0xff]
    %v246 = vld [vmem:[%s0 + $0x700] sm:$0xff]
    %v247 = vld [vmem:[%s0 + $0x708] sm:$0xff]
    %v248 = vld [vmem:[%s0 + $0x710] sm:$0xff]
    %v249 = vld [vmem:[%s0 + $0x718] sm:$0xff]
    %v250 = vld [vmem:[%s0 + $0x720] sm:$0xff]
    %v251 = vld [vmem:[%s0 + $0x728] sm:$0xff]
    %v252 = vld [vmem:[%s0 + $0x730] sm:$0xff]
    %v253 = vld [vmem:[%s0 + $0x738] sm:$0xff]
    %v254 = vld [vmem:[%s0 + $0x740] sm:$0xff]
    %v255 = vld [vmem:[%s0 + $0x748] sm:$0xff]
    %v256 = vld [vmem:[%s0 + $0x750] sm:$0xff]
    %v257 = vld [vmem:[%s0 + $0x758] sm:$0xff]
    %v258 = vld [vmem:[%s0 + $0x760] sm:$0xff]
    %v259 = vld [vmem:[%s0 + $0x768] sm:$0xff]
    %v260 = vld [vmem:[%s0 + $0x770] sm:$0xff]
    %v261 = vld [vmem:[%s0 + $0x778] sm:$0xff]
    %v262 = vld [vmem:[%s0 + $0x780] sm:$0xff]
    %v263 = vld [vmem:[%s0 + $0x788] sm:$0xff]
    %v264 = vld [vmem:[%s0 + $0x790] sm:$0xff]
    %v265 = vld [vmem:[%s0 + $0x798] sm:$0xff]
    %v266 = vld [vmem:[%s0 + $0x7a0] sm:$0xff]
    %v267 = vld [vmem:[%s0 + $0x7a8] sm:$0xff]
    %v268 = vld [vmem:[%s0 + $0x7b0] sm:$0xff]
    %v269 = vld [vmem:[%s0 + $0x7b8] sm:$0xff]
    %v270 = vld [vmem:[%s0 + $0x7c0] sm:$0xff]
    %v271 = vld [vmem:[%s0 + $0x7c8] sm:$0xff]
    %v272 = vld [vmem:[%s0 + $0x7d0] sm:$0xff]
    %v273 = vld [vmem:[%s0 + $0x7d8] sm:$0xff]
    %v274 = vld [vmem:[%s0 + $0x7e0] sm:$0xff]
    %v275 = vld [vmem:[%s0 + $0x7e8] sm:$0xff]
    %v276 = vld [vmem:[%s0 + $0x7f0] sm:$0xff]
    %v277 = vld [vmem:[%s0 + $0x7f8] sm:$0xff]
    %v278 = vld [vmem:[%s0 + $0x800] sm:$0xff]
    %v279 = vld [vmem:[%s0 + $0x808] sm:$0xff]
    %v280 = vld [vmem:[%s0 + $0x810] sm:$0xff]
    %v281 = vld [vmem:[%s0 + $0x818] sm:$0xff]
    %v282 = vld [vmem:[%s0 + $0x820] sm:$0xff]
    %v283 = vld [vmem:[%s0 + $0x828] sm:$0xff]
    %v284 = vld [vmem:[%s0 + $0x830] sm:$0xff]
    %v285 = vld [vmem:[%s0 + $0x838] sm:$0xff]
    %v286 = vld [vmem:[%s0 + $0x840] sm:$0xff]
    %v287 = vld [vmem:[%s0 + $0x848] sm:$0xff]
    %v288 = vld [vmem:[%s0 + $0x850] sm:$0xff]
    %v289 = vld [vmem:[%s0 + $0x858] sm:$0xff]
    %v290 = vld [vmem:[%s0 + $0x860] sm:$0xff]
    %v291 = vld [vmem:[%s0 + $0x868] sm:$0xff]
    %v292 = vld [vmem:[%s0 + $0x870] sm:$0xff]
    %v293 = vld [vmem:[%s0 + $0x878] sm:$0xff]
    %v294 = vld [vmem:[%s0 + $0x880] sm:$0xff]
    %v295 = vld [vmem:[%s0 + $0x888] sm:$0xff]
    %v296 = vld [vmem:[%s0 + $0x890] sm:$0xff]
    %v297 = vld [vmem:[%s0 + $0x898] sm:$0xff]
    %v298 = vld [vmem:[%s0 + $0x8a0] sm:$0xff]
    %v299 = vld [vmem:[%s0 + $0x8a8] sm:$0xff]
    %v300 = vld [vmem:[%s0 + $0x8b0] sm:$0xff]
    %v301 = vld [vmem:[%s0 + $0x8b8] sm:$0xff]
    %v302 = vld [vmem:[%s0 + $0x8c0] sm:$0xff]
    %v303 = vld [vmem:[%s0 + $0x8c8] sm:$0xff]
    %v304 = vld [vmem:[%s0 + $0x8d0] sm:$0xff]
    %v305 = vld [vmem:[%s0 + $0x8d8] sm:$0xff]
    %v306 = vld [vmem:[%s0 + $0x8e0] sm:$0xff]
    %v307 = vld [vmem:[%s0 + $0x8e8] sm:$0xff]
    %v308 = vld [vmem:[%s0 + $0x8f0] sm:$0xff]
    %v309 = vld [vmem:[%s0 + $0x8f8] sm:$0xff]
    %v310 = vld [vmem:[%s0 + $0x900] sm:$0xff]
    %v311 = vld [vmem:[%s0 + $0x908] sm:$0xff]
    %v312 = vld [vmem:[%s0 + $0x910] sm:$0xff]
    %v313 = vld [vmem:[%s0 + $0x918] sm:$0xff]
    %v314 = vld [vmem:[%s0 + $0x920] sm:$0xff]
    %v315 = vld [vmem:[%s0 + $0x928] sm:$0xff]
    %v316 = vld [vmem:[%s0 + $0x930] sm:$0xff]
    %v317 = vld [vmem:[%s0 + $0x938] sm:$0xff]
    %v318 = vld [vmem:[%s1] sm:$0xf]
    %v319 = vld [vmem:[%s1 + $0x4] sm:$0xf]
    %v320 = vld [vmem:[%s1 + $0x8] sm:$0xf]
    %v321 = vld [vmem:[%s1 + $0xc] sm:$0xf]
    %v322 = vld [vmem:[%s1 + $0x10] sm:$0xf]
    %v323 = vld [vmem:[%s1 + $0x14] sm:$0xf]
    %v324 = vld [vmem:[%s1 + $0x18] sm:$0xf]
    %v325 = vld [vmem:[%s1 + $0x1c] sm:$0xf]
    %v326 = vld [vmem:[%s1 + $0x20] sm:$0xf]
    %v327 = vld [vmem:[%s1 + $0x24] sm:$0xf]
    %v328 = vld [vmem:[%s1 + $0x28] sm:$0xf]
    %v329 = vld [vmem:[%s1 + $0x2c] sm:$0xf]
    %v330 = vld [vmem:[%s1 + $0x30] sm:$0xf]
    %v331 = vld [vmem:[%s1 + $0x34] sm:$0xf]
    %v332 = vld [vmem:[%s1 + $0x38] sm:$0xf]
    %v333 = vld [vmem:[%s1 + $0x3c] sm:$0xf]
    %v334 = vld [vmem:[%s1 + $0x40] sm:$0xf]
    %v335 = vld [vmem:[%s1 + $0x44] sm:$0xf]
    %v336 = vld [vmem:[%s1 + $0x48] sm:$0xf]
    %v337 = vld [vmem:[%s1 + $0x4c] sm:$0xf]
    %v338 = vld [vmem:[%s1 + $0x50] sm:$0xf]
    %v339 = vld [vmem:[%s1 + $0x54] sm:$0xf]
    %v340 = vld [vmem:[%s1 + $0x58] sm:$0xf]
    %v341 = vld [vmem:[%s1 + $0x5c] sm:$0xf]
    %v342 = vld [vmem:[%s1 + $0x60] sm:$0xf]
    %v343 = vld [vmem:[%s1 + $0x64] sm:$0xf]
    %v344 = vld [vmem:[%s1 + $0x68] sm:$0xf]
    %v345 = vld [vmem:[%s1 + $0x6c] sm:$0xf]
    %v346 = vld [vmem:[%s1 + $0x70] sm:$0xf]
    %v347 = vld [vmem:[%s1 + $0x74] sm:$0xf]
    %v348 = vld [vmem:[%s1 + $0x78] sm:$0xf]
    %v349 = vld [vmem:[%s1 + $0x7c] sm:$0xf]
    %v350 = vld [vmem:[%s1 + $0x80] sm:$0xf]
    %v351 = vld [vmem:[%s1 + $0x84] sm:$0xf]
    %v352 = vld [vmem:[%s1 + $0x88] sm:$0xf]
    %v353 = vld [vmem:[%s1 + $0x8c] sm:$0xf]
    %v354 = vld [vmem:[%s1 + $0x90] sm:$0xf]
    %v355 = vld [vmem:[%s1 + $0x94] sm:$0xf]
    %v356 = vld [vmem:[%s1 + $0x98] sm:$0xf]
    %v357 = vld [vmem:[%s1 + $0x9c] sm:$0xf]
    %v358 = vld [vmem:[%s1 + $0xa0] sm:$0xf]
    %v359 = vld [vmem:[%s1 + $0xa4] sm:$0xf]
    %v360 = vld [vmem:[%s1 + $0xa8] sm:$0xf]
    %v361 = vld [vmem:[%s1 + $0xac] sm:$0xf]
    %v362 = vld [vmem:[%s1 + $0xb0] sm:$0xf]
    %v363 = vld [vmem:[%s1 + $0xb4] sm:$0xf]
    %v364 = vld [vmem:[%s1 + $0xb8] sm:$0xf]
    %v365 = vld [vmem:[%s1 + $0xbc] sm:$0xf]
    %v366 = vld [vmem:[%s1 + $0xc0] sm:$0xf]
    %v367 = vld [vmem:[%s1 + $0xc4] sm:$0xf]
    %v368 = vld [vmem:[%s1 + $0xc8] sm:$0xf]
    %v369 = vld [vmem:[%s1 + $0xcc] sm:$0xf]
    %v370 = vld [vmem:[%s1 + $0xd0] sm:$0xf]
    %v371 = vld [vmem:[%s1 + $0xd4] sm:$0xf]
    %v372 = vld [vmem:[%s1 + $0xd8] sm:$0xf]
    %v373 = vld [vmem:[%s1 + $0xdc] sm:$0xf]
    %v374 = vld [vmem:[%s1 + $0xe0] sm:$0xf]
    %v375 = vld [vmem:[%s1 + $0xe4] sm:$0xf]
    %v376 = vld [vmem:[%s1 + $0xe8] sm:$0xf]
    %v377 = vld [vmem:[%s1 + $0xec] sm:$0xf]
    %v378 = vld [vmem:[%s1 + $0xf0] sm:$0xf]
    %v379 = vld [vmem:[%s1 + $0xf4] sm:$0xf]
    %v380 = vld [vmem:[%s1 + $0xf8] sm:$0xf]
    %v381 = vld [vmem:[%s1 + $0xfc] sm:$0xf]
    %v382 = vld [vmem:[%s1 + $0x100] sm:$0xf]
    %v383 = vld [vmem:[%s1 + $0x104] sm:$0xf]
    %v384 = vld [vmem:[%s1 + $0x108] sm:$0xf]
    %v385 = vld [vmem:[%s1 + $0x10c] sm:$0xf]
    %v386 = vld [vmem:[%s1 + $0x110] sm:$0xf]
    %v387 = vld [vmem:[%s1 + $0x114] sm:$0xf]
    %v388 = vld [vmem:[%s1 + $0x118] sm:$0xf]
    %v389 = vld [vmem:[%s1 + $0x11c] sm:$0xf]
    %v390 = vld [vmem:[%s1 + $0x120] sm:$0xf]
    %v391 = vld [vmem:[%s1 + $0x124] sm:$0xf]
    %v392 = vld [vmem:[%s1 + $0x128] sm:$0xf]
    %v393 = vld [vmem:[%s1 + $0x12c] sm:$0xf]
    %v394 = vld [vmem:[%s1 + $0x130] sm:$0xf]
    %v395 = vld [vmem:[%s1 + $0x134] sm:$0xf]
    %v396 = vld [vmem:[%s1 + $0x138] sm:$0xf]
    %v397 = vld [vmem:[%s1 + $0x13c] sm:$0xf]
    %v398 = vld [vmem:[%s1 + $0x140] sm:$0xf]
    %v399 = vld [vmem:[%s1 + $0x144] sm:$0xf]
    %v400 = vld [vmem:[%s1 + $0x148] sm:$0xf]
    %v401 = vld [vmem:[%s1 + $0x14c] sm:$0xf]
    %v402 = vld [vmem:[%s1 + $0x150] sm:$0xf]
    %v403 = vld [vmem:[%s1 + $0x154] sm:$0xf]
    %v404 = vld [vmem:[%s1 + $0x158] sm:$0xf]
    %v405 = vld [vmem:[%s1 + $0x15c] sm:$0xf]
    %v406 = vld [vmem:[%s1 + $0x160] sm:$0xf]
    %v407 = vld [vmem:[%s1 + $0x164] sm:$0xf]
    %v408 = vld [vmem:[%s1 + $0x168] sm:$0xf]
    %v409 = vld [vmem:[%s1 + $0x16c] sm:$0xf]
    %v410 = vld [vmem:[%s1 + $0x170] sm:$0xf]
    %v411 = vld [vmem:[%s1 + $0x174] sm:$0xf]
    %v412 = vld [vmem:[%s1 + $0x178] sm:$0xf]
    %v413 = vld [vmem:[%s1 + $0x17c] sm:$0xf]
    %v414 = vld [vmem:[%s1 + $0x180] sm:$0xf]
    %v415 = vld [vmem:[%s1 + $0x184] sm:$0xf]
    %v416 = vld [vmem:[%s1 + $0x188] sm:$0xf]
    %v417 = vld [vmem:[%s1 + $0x18c] sm:$0xf]
    %v418 = vld [vmem:[%s1 + $0x190] sm:$0xf]
    %v419 = vld [vmem:[%s1 + $0x194] sm:$0xf]
    %v420 = vld [vmem:[%s1 + $0x198] sm:$0xf]
    %v421 = vld [vmem:[%s1 + $0x19c] sm:$0xf]
    %v422 = vld [vmem:[%s1 + $0x1a0] sm:$0xf]
    %v423 = vld [vmem:[%s1 + $0x1a4] sm:$0xf]
    %v424 = vld [vmem:[%s1 + $0x1a8] sm:$0xf]
    %v425 = vld [vmem:[%s1 + $0x1ac] sm:$0xf]
    %v426 = vld [vmem:[%s1 + $0x1b0] sm:$0xf]
    %v427 = vld [vmem:[%s1 + $0x1b4] sm:$0xf]
    %v428 = vld [vmem:[%s1 + $0x1b8] sm:$0xf]
    %v429 = vld [vmem:[%s1 + $0x1bc] sm:$0xf]
    %v430 = vld [vmem:[%s1 + $0x1c0] sm:$0xf]
    %v431 = vld [vmem:[%s1 + $0x1c4] sm:$0xf]
    %v432 = vld [vmem:[%s1 + $0x1c8] sm:$0xf]
    %v433 = vld [vmem:[%s1 + $0x1cc] sm:$0xf]
    %v434 = vld [vmem:[%s1 + $0x1d0] sm:$0xf]
    %v435 = vld [vmem:[%s1 + $0x1d4] sm:$0xf]
    %v436 = vld [vmem:[%s1 + $0x1d8] sm:$0xf]
    %v437 = vld [vmem:[%s1 + $0x1dc] sm:$0xf]
    %v438 = vld [vmem:[%s1 + $0x1e0] sm:$0xf]
    %v439 = vld [vmem:[%s1 + $0x1e4] sm:$0xf]
    %v440 = vld [vmem:[%s1 + $0x1e8] sm:$0xf]
    %v441 = vld [vmem:[%s1 + $0x1ec] sm:$0xf]
    %v442 = vld [vmem:[%s1 + $0x1f0] sm:$0xf]
    %v443 = vld [vmem:[%s1 + $0x1f4] sm:$0xf]
    %v444 = vld [vmem:[%s1 + $0x1f8] sm:$0xf]
    %v445 = vld [vmem:[%s1 + $0x1fc] sm:$0xf]
    %v446 = vld [vmem:[%s1 + $0x200] sm:$0xf]
    %v447 = vld [vmem:[%s1 + $0x204] sm:$0xf]
    %v448 = vld [vmem:[%s1 + $0x208] sm:$0xf]
    %v449 = vld [vmem:[%s1 + $0x20c] sm:$0xf]
    %v450 = vld [vmem:[%s1 + $0x210] sm:$0xf]
    %v451 = vld [vmem:[%s1 + $0x214] sm:$0xf]
    %v452 = vld [vmem:[%s1 + $0x218] sm:$0xf]
    %v453 = vld [vmem:[%s1 + $0x21c] sm:$0xf]
    %v454 = vld [vmem:[%s1 + $0x220] sm:$0xf]
    %v455 = vld [vmem:[%s1 + $0x224] sm:$0xf]
    %v456 = vld [vmem:[%s1 + $0x228] sm:$0xf]
    %v457 = vld [vmem:[%s1 + $0x22c] sm:$0xf]
    %v458 = vld [vmem:[%s1 + $0x230] sm:$0xf]
    %v459 = vld [vmem:[%s1 + $0x234] sm:$0xf]
    %v460 = vld [vmem:[%s1 + $0x238] sm:$0xf]
    %v461 = vld [vmem:[%s1 + $0x23c] sm:$0xf]
    %v462 = vld [vmem:[%s1 + $0x240] sm:$0xf]
    %v463 = vld [vmem:[%s1 + $0x244] sm:$0xf]
    %v464 = vld [vmem:[%s1 + $0x248] sm:$0xf]
    %v465 = vld [vmem:[%s1 + $0x24c] sm:$0xf]
    %v466 = vld [vmem:[%s1 + $0x250] sm:$0xf]
    %v467 = vld [vmem:[%s1 + $0x254] sm:$0xf]
    %v468 = vld [vmem:[%s1 + $0x258] sm:$0xf]
    %v469 = vld [vmem:[%s1 + $0x25c] sm:$0xf]
    %v470 = vld [vmem:[%s1 + $0x260] sm:$0xf]
    %v471 = vld [vmem:[%s1 + $0x264] sm:$0xf]
    %v472 = vld [vmem:[%s1 + $0x268] sm:$0xf]
    %v473 = vld [vmem:[%s1 + $0x26c] sm:$0xf]
    %v474 = vld [vmem:[%s1 + $0x270] sm:$0xf]
    %v475 = vld [vmem:[%s1 + $0x274] sm:$0xf]
    %v476 = vld [vmem:[%s1 + $0x278] sm:$0xf]
    %v477 = vld [vmem:[%s1 + $0x27c] sm:$0xf]
    %v478 = vld [vmem:[%s1 + $0x280] sm:$0xf]
    %v479 = vld [vmem:[%s1 + $0x284] sm:$0xf]
    %v480 = vld [vmem:[%s1 + $0x288] sm:$0xf]
    %v481 = vld [vmem:[%s1 + $0x28c] sm:$0xf]
    %v482 = vld [vmem:[%s1 + $0x290] sm:$0xf]
    %v483 = vld [vmem:[%s1 + $0x294] sm:$0xf]
    %v484 = vld [vmem:[%s1 + $0x298] sm:$0xf]
    %v485 = vld [vmem:[%s1 + $0x29c] sm:$0xf]
    %v486 = vld [vmem:[%s1 + $0x2a0] sm:$0xf]
    %v487 = vld [vmem:[%s1 + $0x2a4] sm:$0xf]
    %v488 = vld [vmem:[%s1 + $0x2a8] sm:$0xf]
    %v489 = vld [vmem:[%s1 + $0x2ac] sm:$0xf]
    %v490 = vld [vmem:[%s1 + $0x2b0] sm:$0xf]
    %v491 = vld [vmem:[%s1 + $0x2b4] sm:$0xf]
    %v492 = vld [vmem:[%s1 + $0x2b8] sm:$0xf]
    %v493 = vld [vmem:[%s1 + $0x2bc] sm:$0xf]
    %v494 = vld [vmem:[%s1 + $0x2c0] sm:$0xf]
    %v495 = vld [vmem:[%s1 + $0x2c4] sm:$0xf]
    %v496 = vld [vmem:[%s1 + $0x2c8] sm:$0xf]
    %v497 = vld [vmem:[%s1 + $0x2cc] sm:$0xf]
    %v498 = vld [vmem:[%s1 + $0x2d0] sm:$0xf]
    %v499 = vld [vmem:[%s1 + $0x2d4] sm:$0xf]
    %v500 = vld [vmem:[%s1 + $0x2d8] sm:$0xf]
    %v501 = vld [vmem:[%s1 + $0x2dc] sm:$0xf]
    %v502 = vld [vmem:[%s1 + $0x2e0] sm:$0xf]
    %v503 = vld [vmem:[%s1 + $0x2e4] sm:$0xf]
    %v504 = vld [vmem:[%s1 + $0x2e8] sm:$0xf]
    %v505 = vld [vmem:[%s1 + $0x2ec] sm:$0xf]
    %v506 = vld [vmem:[%s1 + $0x2f0] sm:$0xf]
    %v507 = vld [vmem:[%s1 + $0x2f4] sm:$0xf]
    %v508 = vld [vmem:[%s1 + $0x2f8] sm:$0xf]
    %v509 = vld [vmem:[%s1 + $0x2fc] sm:$0xf]
    %v510 = vld [vmem:[%s1 + $0x300] sm:$0xf]
    %v511 = vld [vmem:[%s1 + $0x304] sm:$0xf]
    %v512 = vld [vmem:[%s1 + $0x308] sm:$0xf]
    %v513 = vld [vmem:[%s1 + $0x30c] sm:$0xf]
    %v514 = vld [vmem:[%s1 + $0x310] sm:$0xf]
    %v515 = vld [vmem:[%s1 + $0x314] sm:$0xf]
    %v516 = vld [vmem:[%s1 + $0x318] sm:$0xf]
    %v517 = vld [vmem:[%s1 + $0x31c] sm:$0xf]
    %v518 = vld [vmem:[%s1 + $0x320] sm:$0xf]
    %v519 = vld [vmem:[%s1 + $0x324] sm:$0xf]
    %v520 = vld [vmem:[%s1 + $0x328] sm:$0xf]
    %v521 = vld [vmem:[%s1 + $0x32c] sm:$0xf]
    %v522 = vld [vmem:[%s1 + $0x330] sm:$0xf]
    %v523 = vld [vmem:[%s1 + $0x334] sm:$0xf]
    %v524 = vld [vmem:[%s1 + $0x338] sm:$0xf]
    %v525 = vld [vmem:[%s1 + $0x33c] sm:$0xf]
    %v526 = vld [vmem:[%s1 + $0x340] sm:$0xf]
    %v527 = vld [vmem:[%s1 + $0x344] sm:$0xf]
    %v528 = vld [vmem:[%s1 + $0x348] sm:$0xf]
    %v529 = vld [vmem:[%s1 + $0x34c] sm:$0xf]
    %v530 = vld [vmem:[%s1 + $0x350] sm:$0xf]
    %v531 = vld [vmem:[%s1 + $0x354] sm:$0xf]
    %v532 = vld [vmem:[%s1 + $0x358] sm:$0xf]
    %v533 = vld [vmem:[%s1 + $0x35c] sm:$0xf]
    %v534 = vld [vmem:[%s1 + $0x360] sm:$0xf]
    %v535 = vld [vmem:[%s1 + $0x364] sm:$0xf]
    %v536 = vld [vmem:[%s1 + $0x368] sm:$0xf]
    %v537 = vld [vmem:[%s1 + $0x36c] sm:$0xf]
    %v538 = vld [vmem:[%s1 + $0x370] sm:$0xf]
    %v539 = vld [vmem:[%s1 + $0x374] sm:$0xf]
    %v540 = vld [vmem:[%s1 + $0x378] sm:$0xf]
    %v541 = vld [vmem:[%s1 + $0x37c] sm:$0xf]
    %v542 = vld [vmem:[%s1 + $0x380] sm:$0xf]
    %v543 = vld [vmem:[%s1 + $0x384] sm:$0xf]
    %v544 = vld [vmem:[%s1 + $0x388] sm:$0xf]
    %v545 = vld [vmem:[%s1 + $0x38c] sm:$0xf]
    %v546 = vld [vmem:[%s1 + $0x390] sm:$0xf]
    %v547 = vld [vmem:[%s1 + $0x394] sm:$0xf]
    %v548 = vld [vmem:[%s1 + $0x398] sm:$0xf]
    %v549 = vld [vmem:[%s1 + $0x39c] sm:$0xf]
    %v550 = vld [vmem:[%s1 + $0x3a0] sm:$0xf]
    %v551 = vld [vmem:[%s1 + $0x3a4] sm:$0xf]
    %v552 = vld [vmem:[%s1 + $0x3a8] sm:$0xf]
    %v553 = vld [vmem:[%s1 + $0x3ac] sm:$0xf]
    %v554 = vld [vmem:[%s1 + $0x3b0] sm:$0xf]
    %v555 = vld [vmem:[%s1 + $0x3b4] sm:$0xf]
    %v556 = vld [vmem:[%s1 + $0x3b8] sm:$0xf]
    %v557 = vld [vmem:[%s1 + $0x3bc] sm:$0xf]
    %v558 = vld [vmem:[%s1 + $0x3c0] sm:$0xf]
    %v559 = vld [vmem:[%s1 + $0x3c4] sm:$0xf]
    %v560 = vld [vmem:[%s1 + $0x3c8] sm:$0xf]
    %v561 = vld [vmem:[%s1 + $0x3cc] sm:$0xf]
    %v562 = vld [vmem:[%s1 + $0x3d0] sm:$0xf]
    %v563 = vld [vmem:[%s1 + $0x3d4] sm:$0xf]
    %v564 = vld [vmem:[%s1 + $0x3d8] sm:$0xf]
    %v565 = vld [vmem:[%s1 + $0x3dc] sm:$0xf]
    %v566 = vld [vmem:[%s1 + $0x3e0] sm:$0xf]
    %v567 = vld [vmem:[%s1 + $0x3e4] sm:$0xf]
    %v568 = vld [vmem:[%s1 + $0x3e8] sm:$0xf]
    %v569 = vld [vmem:[%s1 + $0x3ec] sm:$0xf]
    %v570 = vld [vmem:[%s1 + $0x3f0] sm:$0xf]
    %v571 = vld [vmem:[%s1 + $0x3f4] sm:$0xf]
    %v572 = vld [vmem:[%s1 + $0x3f8] sm:$0xf]
    %v573 = vld [vmem:[%s1 + $0x3fc] sm:$0xf]
    %v574 = vld [vmem:[%s1 + $0x400] sm:$0xf]
    %v575 = vld [vmem:[%s1 + $0x404] sm:$0xf]
    %v576 = vld [vmem:[%s1 + $0x408] sm:$0xf]
    %v577 = vld [vmem:[%s1 + $0x40c] sm:$0xf]
    %v578 = vld [vmem:[%s1 + $0x410] sm:$0xf]
    %v579 = vld [vmem:[%s1 + $0x414] sm:$0xf]
    %v580 = vld [vmem:[%s1 + $0x418] sm:$0xf]
    %v581 = vld [vmem:[%s1 + $0x41c] sm:$0xf]
    %v582 = vld [vmem:[%s1 + $0x420] sm:$0xf]
    %v583 = vld [vmem:[%s1 + $0x424] sm:$0xf]
    %v584 = vld [vmem:[%s1 + $0x428] sm:$0xf]
    %v585 = vld [vmem:[%s1 + $0x42c] sm:$0xf]
    %v586 = vld [vmem:[%s1 + $0x430] sm:$0xf]
    %v587 = vld [vmem:[%s1 + $0x434] sm:$0xf]
    %v588 = vld [vmem:[%s1 + $0x438] sm:$0xf]
    %v589 = vld [vmem:[%s1 + $0x43c] sm:$0xf]
    %v590 = vld [vmem:[%s1 + $0x440] sm:$0xf]
    %v591 = vld [vmem:[%s1 + $0x444] sm:$0xf]
    %v592 = vld [vmem:[%s1 + $0x448] sm:$0xf]
    %v593 = vld [vmem:[%s1 + $0x44c] sm:$0xf]
    %v594 = vld [vmem:[%s1 + $0x450] sm:$0xf]
    %v595 = vld [vmem:[%s1 + $0x454] sm:$0xf]
    %v596 = vld [vmem:[%s1 + $0x458] sm:$0xf]
    %v597 = vld [vmem:[%s1 + $0x45c] sm:$0xf]
    %v598 = vld [vmem:[%s1 + $0x460] sm:$0xf]
    %v599 = vld [vmem:[%s1 + $0x464] sm:$0xf]
    %v600 = vld [vmem:[%s1 + $0x468] sm:$0xf]
    %v601 = vld [vmem:[%s1 + $0x46c] sm:$0xf]
    %v602 = vld [vmem:[%s1 + $0x470] sm:$0xf]
    %v603 = vld [vmem:[%s1 + $0x474] sm:$0xf]
    %v604 = vld [vmem:[%s1 + $0x478] sm:$0xf]
    %v605 = vld [vmem:[%s1 + $0x47c] sm:$0xf]
    %v606 = vld [vmem:[%s1 + $0x480] sm:$0xf]
    %v607 = vld [vmem:[%s1 + $0x484] sm:$0xf]
    %v608 = vld [vmem:[%s1 + $0x488] sm:$0xf]
    %v609 = vld [vmem:[%s1 + $0x48c] sm:$0xf]
    %v610 = vld [vmem:[%s1 + $0x490] sm:$0xf]
    %v611 = vld [vmem:[%s1 + $0x494] sm:$0xf]
    %v612 = vld [vmem:[%s1 + $0x498] sm:$0xf]
    %v613 = vld [vmem:[%s1 + $0x49c] sm:$0xf]
    %v614 = vld [vmem:[%s1 + $0x4a0] sm:$0xf]
    %v615 = vld [vmem:[%s1 + $0x4a4] sm:$0xf]
    %v616 = vld [vmem:[%s1 + $0x4a8] sm:$0xf]
    %v617 = vld [vmem:[%s1 + $0x4ac] sm:$0xf]
    %v618 = vld [vmem:[%s1 + $0x4b0] sm:$0xf]
    %v619 = vld [vmem:[%s1 + $0x4b4] sm:$0xf]
    %v620 = vld [vmem:[%s1 + $0x4b8] sm:$0xf]
    %v621 = vld [vmem:[%s1 + $0x4bc] sm:$0xf]
    %v622 = vld [vmem:[%s1 + $0x4c0] sm:$0xf]
    %v623 = vld [vmem:[%s1 + $0x4c4] sm:$0xf]
    %v624 = vld [vmem:[%s1 + $0x4c8] sm:$0xf]
    %v625 = vld [vmem:[%s1 + $0x4cc] sm:$0xf]
    %v626 = vld [vmem:[%s1 + $0x4d0] sm:$0xf]
    %v627 = vld [vmem:[%s1 + $0x4d4] sm:$0xf]
    %v628 = vld [vmem:[%s1 + $0x4d8] sm:$0xf]
    %v629 = vld [vmem:[%s1 + $0x4dc] sm:$0xf]
    %v630 = vld [vmem:[%s1 + $0x4e0] sm:$0xf]
    %v631 = vld [vmem:[%s1 + $0x4e4] sm:$0xf]
    %v632 = vld [vmem:[%s1 + $0x4e8] sm:$0xf]
    %v633 = vld [vmem:[%s1 + $0x4ec] sm:$0xf]
    %v634 = vld [vmem:[%s1 + $0x4f0] sm:$0xf]
    %v635 = vld [vmem:[%s1 + $0x4f4] sm:$0xf]
    %v636 = vld [vmem:[%s1 + $0x4f8] sm:$0xf]
    %v637 = vld [vmem:[%s1 + $0x4fc] sm:$0xf]
    %v638 = vld [vmem:[%s1 + $0x500] sm:$0xf]
    %v639 = vld [vmem:[%s1 + $0x504] sm:$0xf]
    %v640 = vld [vmem:[%s1 + $0x508] sm:$0xf]
    %v641 = vld [vmem:[%s1 + $0x50c] sm:$0xf]
    %v642 = vld [vmem:[%s1 + $0x510] sm:$0xf]
    %v643 = vld [vmem:[%s1 + $0x514] sm:$0xf]
    %v644 = vld [vmem:[%s1 + $0x518] sm:$0xf]
    %v645 = vld [vmem:[%s1 + $0x51c] sm:$0xf]
    %v646 = vld [vmem:[%s1 + $0x520] sm:$0xf]
    %v647 = vld [vmem:[%s1 + $0x524] sm:$0xf]
    %v648 = vld [vmem:[%s1 + $0x528] sm:$0xf]
    %v649 = vld [vmem:[%s1 + $0x52c] sm:$0xf]
    %v650 = vld [vmem:[%s1 + $0x530] sm:$0xf]
    %v651 = vld [vmem:[%s1 + $0x534] sm:$0xf]
    %v652 = vld [vmem:[%s1 + $0x538] sm:$0xf]
    %v653 = vld [vmem:[%s1 + $0x53c] sm:$0xf]
    %v654 = vld [vmem:[%s1 + $0x540] sm:$0xf]
    %v655 = vld [vmem:[%s1 + $0x544] sm:$0xf]
    %v656 = vld [vmem:[%s1 + $0x548] sm:$0xf]
    %v657 = vld [vmem:[%s1 + $0x54c] sm:$0xf]
    %v658 = vld [vmem:[%s1 + $0x550] sm:$0xf]
    %v659 = vld [vmem:[%s1 + $0x554] sm:$0xf]
    %v660 = vld [vmem:[%s1 + $0x558] sm:$0xf]
    %v661 = vld [vmem:[%s1 + $0x55c] sm:$0xf]
    %v662 = vld [vmem:[%s1 + $0x560] sm:$0xf]
    %v663 = vld [vmem:[%s1 + $0x564] sm:$0xf]
    %v664 = vld [vmem:[%s1 + $0x568] sm:$0xf]
    %v665 = vld [vmem:[%s1 + $0x56c] sm:$0xf]
    %v666 = vld [vmem:[%s1 + $0x570] sm:$0xf]
    %v667 = vld [vmem:[%s1 + $0x574] sm:$0xf]
    %v668 = vld [vmem:[%s1 + $0x578] sm:$0xf]
    %v669 = vld [vmem:[%s1 + $0x57c] sm:$0xf]
    %v670 = vld [vmem:[%s1 + $0x580] sm:$0xf]
    %v671 = vld [vmem:[%s1 + $0x584] sm:$0xf]
    %v672 = vld [vmem:[%s1 + $0x588] sm:$0xf]
    %v673 = vld [vmem:[%s1 + $0x58c] sm:$0xf]
    %v674 = vld [vmem:[%s1 + $0x590] sm:$0xf]
    %v675 = vld [vmem:[%s1 + $0x594] sm:$0xf]
    %v676 = vld [vmem:[%s1 + $0x598] sm:$0xf]
    %v677 = vld [vmem:[%s1 + $0x59c] sm:$0xf]
    %v678 = vld [vmem:[%s1 + $0x5a0] sm:$0xf]
    %v679 = vld [vmem:[%s1 + $0x5a4] sm:$0xf]
    %v680 = vld [vmem:[%s1 + $0x5a8] sm:$0xf]
    %v681 = vld [vmem:[%s1 + $0x5ac] sm:$0xf]
    %v682 = vld [vmem:[%s1 + $0x5b0] sm:$0xf]
    %v683 = vld [vmem:[%s1 + $0x5b4] sm:$0xf]
    %v684 = vld [vmem:[%s1 + $0x5b8] sm:$0xf]
    %v685 = vld [vmem:[%s1 + $0x5bc] sm:$0xf]
    %v686 = vld [vmem:[%s1 + $0x5c0] sm:$0xf]
    %v687 = vld [vmem:[%s1 + $0x5c4] sm:$0xf]
    %v688 = vld [vmem:[%s1 + $0x5c8] sm:$0xf]
    %v689 = vld [vmem:[%s1 + $0x5cc] sm:$0xf]
    %v690 = vld [vmem:[%s1 + $0x5d0] sm:$0xf]
    %v691 = vld [vmem:[%s1 + $0x5d4] sm:$0xf]
    %v692 = vld [vmem:[%s1 + $0x5d8] sm:$0xf]
    %v693 = vld [vmem:[%s1 + $0x5dc] sm:$0xf]
    %v694 = vld [vmem:[%s1 + $0x5e0] sm:$0xf]
    %v695 = vld [vmem:[%s1 + $0x5e4] sm:$0xf]
    %v696 = vld [vmem:[%s1 + $0x5e8] sm:$0xf]
    %v697 = vld [vmem:[%s1 + $0x5ec] sm:$0xf]
    %v698 = vld [vmem:[%s1 + $0x5f0] sm:$0xf]
    %v699 = vld [vmem:[%s1 + $0x5f4] sm:$0xf]
    %v700 = vld [vmem:[%s1 + $0x5f8] sm:$0xf]
    %v701 = vld [vmem:[%s1 + $0x5fc] sm:$0xf]
    %v702 = vld [vmem:[%s1 + $0x600] sm:$0xf]
    %v703 = vld [vmem:[%s1 + $0x604] sm:$0xf]
    %v704 = vld [vmem:[%s1 + $0x608] sm:$0xf]
    %v705 = vld [vmem:[%s1 + $0x60c] sm:$0xf]
    %v706 = vld [vmem:[%s1 + $0x610] sm:$0xf]
    %v707 = vld [vmem:[%s1 + $0x614] sm:$0xf]
    %v708 = vld [vmem:[%s1 + $0x618] sm:$0xf]
    %v709 = vld [vmem:[%s1 + $0x61c] sm:$0xf]
    %v710 = vld [vmem:[%s1 + $0x620] sm:$0xf]
    %v711 = vld [vmem:[%s1 + $0x624] sm:$0xf]
    %v712 = vld [vmem:[%s1 + $0x628] sm:$0xf]
    %v713 = vld [vmem:[%s1 + $0x62c] sm:$0xf]
    %v714 = vld [vmem:[%s1 + $0x630] sm:$0xf]
    %v715 = vld [vmem:[%s1 + $0x634] sm:$0xf]
    %v716 = vld [vmem:[%s1 + $0x638] sm:$0xf]
    %v717 = vld [vmem:[%s1 + $0x63c] sm:$0xf]
    %v718 = vld [vmem:[%s1 + $0x640] sm:$0xf]
    %v719 = vld [vmem:[%s1 + $0x644] sm:$0xf]
    %v720 = vld [vmem:[%s1 + $0x648] sm:$0xf]
    %v721 = vld [vmem:[%s1 + $0x64c] sm:$0xf]
    %v722 = vld [vmem:[%s1 + $0x650] sm:$0xf]
    %v723 = vld [vmem:[%s1 + $0x654] sm:$0xf]
    %v724 = vld [vmem:[%s1 + $0x658] sm:$0xf]
    %v725 = vld [vmem:[%s1 + $0x65c] sm:$0xf]
    %v726 = vld [vmem:[%s1 + $0x660] sm:$0xf]
    %v727 = vld [vmem:[%s1 + $0x664] sm:$0xf]
    %v728 = vld [vmem:[%s1 + $0x668] sm:$0xf]
    %v729 = vld [vmem:[%s1 + $0x66c] sm:$0xf]
    %v730 = vld [vmem:[%s1 + $0x670] sm:$0xf]
    %v731 = vld [vmem:[%s1 + $0x674] sm:$0xf]
    %v732 = vld [vmem:[%s1 + $0x678] sm:$0xf]
    %v733 = vld [vmem:[%s1 + $0x67c] sm:$0xf]
    %v734 = vld [vmem:[%s1 + $0x680] sm:$0xf]
    %v735 = vld [vmem:[%s1 + $0x684] sm:$0xf]
    %v736 = vld [vmem:[%s1 + $0x688] sm:$0xf]
    %v737 = vld [vmem:[%s1 + $0x68c] sm:$0xf]
    %v738 = vld [vmem:[%s1 + $0x690] sm:$0xf]
    %v739 = vld [vmem:[%s1 + $0x694] sm:$0xf]
    %v740 = vld [vmem:[%s1 + $0x698] sm:$0xf]
    %v741 = vld [vmem:[%s1 + $0x69c] sm:$0xf]
    %v742 = vld [vmem:[%s1 + $0x6a0] sm:$0xf]
    %v743 = vld [vmem:[%s1 + $0x6a4] sm:$0xf]
    %v744 = vld [vmem:[%s1 + $0x6a8] sm:$0xf]
    %v745 = vld [vmem:[%s1 + $0x6ac] sm:$0xf]
    %v746 = vld [vmem:[%s1 + $0x6b0] sm:$0xf]
    %v747 = vld [vmem:[%s1 + $0x6b4] sm:$0xf]
    %v748 = vld [vmem:[%s1 + $0x6b8] sm:$0xf]
    %v749 = vld [vmem:[%s1 + $0x6bc] sm:$0xf]
    %v750 = vld [vmem:[%s1 + $0x6c0] sm:$0xf]
    %v751 = vld [vmem:[%s1 + $0x6c4] sm:$0xf]
    %v752 = vld [vmem:[%s1 + $0x6c8] sm:$0xf]
    %v753 = vld [vmem:[%s1 + $0x6cc] sm:$0xf]
    %v754 = vld [vmem:[%s1 + $0x6d0] sm:$0xf]
    %v755 = vld [vmem:[%s1 + $0x6d4] sm:$0xf]
    %v756 = vld [vmem:[%s1 + $0x6d8] sm:$0xf]
    %v757 = vld [vmem:[%s1 + $0x6dc] sm:$0xf]
    %v758 = vld [vmem:[%s1 + $0x6e0] sm:$0xf]
    %v759 = vld [vmem:[%s1 + $0x6e4] sm:$0xf]
    %v760 = vld [vmem:[%s1 + $0x6e8] sm:$0xf]
    %v761 = vld [vmem:[%s1 + $0x6ec] sm:$0xf]
    %v762 = vld [vmem:[%s1 + $0x6f0] sm:$0xf]
    %v763 = vld [vmem:[%s1 + $0x6f4] sm:$0xf]
    %v764 = vld [vmem:[%s1 + $0x6f8] sm:$0xf]
    %v765 = vld [vmem:[%s1 + $0x6fc] sm:$0xf]
    %v766 = vld [vmem:[%s1 + $0x700] sm:$0xf]
    %v767 = vld [vmem:[%s1 + $0x704] sm:$0xf]
    %v768 = vld [vmem:[%s1 + $0x708] sm:$0xf]
    %v769 = vld [vmem:[%s1 + $0x70c] sm:$0xf]
    %v770 = vld [vmem:[%s1 + $0x710] sm:$0xf]
    %v771 = vld [vmem:[%s1 + $0x714] sm:$0xf]
    %v772 = vld [vmem:[%s1 + $0x718] sm:$0xf]
    %v773 = vld [vmem:[%s1 + $0x71c] sm:$0xf]
    %v774 = vld [vmem:[%s1 + $0x720] sm:$0xf]
    %v775 = vld [vmem:[%s1 + $0x724] sm:$0xf]
    %v776 = vld [vmem:[%s1 + $0x728] sm:$0xf]
    %v777 = vld [vmem:[%s1 + $0x72c] sm:$0xf]
    %v778 = vld [vmem:[%s1 + $0x730] sm:$0xf]
    %v779 = vld [vmem:[%s1 + $0x734] sm:$0xf]
    %v780 = vld [vmem:[%s1 + $0x738] sm:$0xf]
    %v781 = vld [vmem:[%s1 + $0x73c] sm:$0xf]
    %v782 = vld [vmem:[%s1 + $0x740] sm:$0xf]
    %v783 = vld [vmem:[%s1 + $0x744] sm:$0xf]
    %v784 = vld [vmem:[%s1 + $0x748] sm:$0xf]
    %v785 = vld [vmem:[%s1 + $0x74c] sm:$0xf]
    %v786 = vld [vmem:[%s1 + $0x750] sm:$0xf]
    %v787 = vld [vmem:[%s1 + $0x754] sm:$0xf]
    %v788 = vld [vmem:[%s1 + $0x758] sm:$0xf]
    %v789 = vld [vmem:[%s1 + $0x75c] sm:$0xf]
    %v790 = vld [vmem:[%s1 + $0x760] sm:$0xf]
    %v791 = vld [vmem:[%s1 + $0x764] sm:$0xf]
    %v792 = vld [vmem:[%s1 + $0x768] sm:$0xf]
    %v793 = vld [vmem:[%s1 + $0x76c] sm:$0xf]
    %v794 = vld [vmem:[%s1 + $0x770] sm:$0xf]
    %v795 = vld [vmem:[%s1 + $0x774] sm:$0xf]
    %v796 = vld [vmem:[%s1 + $0x778] sm:$0xf]
    %v797 = vld [vmem:[%s1 + $0x77c] sm:$0xf]
    %v798 = vld [vmem:[%s1 + $0x780] sm:$0xf]
    %v799 = vld [vmem:[%s1 + $0x784] sm:$0xf]
    %v800 = vld [vmem:[%s1 + $0x788] sm:$0xf]
    %v801 = vld [vmem:[%s1 + $0x78c] sm:$0xf]
    %v802 = vld [vmem:[%s1 + $0x790] sm:$0xf]
    %v803 = vld [vmem:[%s1 + $0x794] sm:$0xf]
    %v804 = vld [vmem:[%s1 + $0x798] sm:$0xf]
    %v805 = vld [vmem:[%s1 + $0x79c] sm:$0xf]
    %v806 = vld [vmem:[%s1 + $0x7a0] sm:$0xf]
    %v807 = vld [vmem:[%s1 + $0x7a4] sm:$0xf]
    %v808 = vld [vmem:[%s1 + $0x7a8] sm:$0xf]
    %v809 = vld [vmem:[%s1 + $0x7ac] sm:$0xf]
    %v810 = vld [vmem:[%s1 + $0x7b0] sm:$0xf]
    %v811 = vld [vmem:[%s1 + $0x7b4] sm:$0xf]
    %v812 = vld [vmem:[%s1 + $0x7b8] sm:$0xf]
    %v813 = vld [vmem:[%s1 + $0x7bc] sm:$0xf]
    %v814 = vld [vmem:[%s1 + $0x7c0] sm:$0xf]
    %v815 = vld [vmem:[%s1 + $0x7c4] sm:$0xf]
    %v816 = vld [vmem:[%s1 + $0x7c8] sm:$0xf]
    %v817 = vld [vmem:[%s1 + $0x7cc] sm:$0xf]
    %v818 = vld [vmem:[%s1 + $0x7d0] sm:$0xf]
    %v819 = vld [vmem:[%s1 + $0x7d4] sm:$0xf]
    %v820 = vld [vmem:[%s1 + $0x7d8] sm:$0xf]
    %v821 = vld [vmem:[%s1 + $0x7dc] sm:$0xf]
    %v822 = vld [vmem:[%s1 + $0x7e0] sm:$0xf]
    %v823 = vld [vmem:[%s1 + $0x7e4] sm:$0xf]
    %v824 = vld [vmem:[%s1 + $0x7e8] sm:$0xf]
    %v825 = vld [vmem:[%s1 + $0x7ec] sm:$0xf]
    %v826 = vld [vmem:[%s1 + $0x7f0] sm:$0xf]
    %v827 = vld [vmem:[%s1 + $0x7f4] sm:$0xf]
    %v828 = vld [vmem:[%s1 + $0x7f8] sm:$0xf]
    %v829 = vld [vmem:[%s1 + $0x7fc] sm:$0xf]
    %v830 = vld [vmem:[%s1 + $0x800] sm:$0xf]
    %v831 = vld [vmem:[%s1 + $0x804] sm:$0xf]
    %v832 = vld [vmem:[%s1 + $0x808] sm:$0xf]
    %v833 = vld [vmem:[%s1 + $0x80c] sm:$0xf]
    %v834 = vld [vmem:[%s1 + $0x810] sm:$0xf]
    %v835 = vld [vmem:[%s1 + $0x814] sm:$0xf]
    %v836 = vld [vmem:[%s1 + $0x818] sm:$0xf]
    %v837 = vld [vmem:[%s1 + $0x81c] sm:$0xf]
    %v838 = vld [vmem:[%s1 + $0x820] sm:$0xf]
    %v839 = vld [vmem:[%s1 + $0x824] sm:$0xf]
    %v840 = vld [vmem:[%s1 + $0x828] sm:$0xf]
    %v841 = vld [vmem:[%s1 + $0x82c] sm:$0xf]
    %v842 = vld [vmem:[%s1 + $0x830] sm:$0xf]
    %v843 = vld [vmem:[%s1 + $0x834] sm:$0xf]
    %v844 = vld [vmem:[%s1 + $0x838] sm:$0xf]
    %v845 = vld [vmem:[%s1 + $0x83c] sm:$0xf]
    %v846 = vld [vmem:[%s1 + $0x840] sm:$0xf]
    %v847 = vld [vmem:[%s1 + $0x844] sm:$0xf]
    %v848 = vld [vmem:[%s1 + $0x848] sm:$0xf]
    %v849 = vld [vmem:[%s1 + $0x84c] sm:$0xf]
    %v850 = vld [vmem:[%s1 + $0x850] sm:$0xf]
    %v851 = vld [vmem:[%s1 + $0x854] sm:$0xf]
    %v852 = vld [vmem:[%s1 + $0x858] sm:$0xf]
    %v853 = vld [vmem:[%s1 + $0x85c] sm:$0xf]
    %v854 = vld [vmem:[%s1 + $0x860] sm:$0xf]
    %v855 = vld [vmem:[%s1 + $0x864] sm:$0xf]
    %v856 = vld [vmem:[%s1 + $0x868] sm:$0xf]
    %v857 = vld [vmem:[%s1 + $0x86c] sm:$0xf]
    %v858 = vld [vmem:[%s1 + $0x870] sm:$0xf]
    %v859 = vld [vmem:[%s1 + $0x874] sm:$0xf]
    %v860 = vld [vmem:[%s1 + $0x878] sm:$0xf]
    %v861 = vld [vmem:[%s1 + $0x87c] sm:$0xf]
    %v862 = vld [vmem:[%s1 + $0x880] sm:$0xf]
    %v863 = vld [vmem:[%s1 + $0x884] sm:$0xf]
    %v864 = vld [vmem:[%s1 + $0x888] sm:$0xf]
    %v865 = vld [vmem:[%s1 + $0x88c] sm:$0xf]
    %v866 = vld [vmem:[%s1 + $0x890] sm:$0xf]
    %v867 = vld [vmem:[%s1 + $0x894] sm:$0xf]
    %v868 = vld [vmem:[%s1 + $0x898] sm:$0xf]
    %v869 = vld [vmem:[%s1 + $0x89c] sm:$0xf]
    %v870 = vld [vmem:[%s1 + $0x8a0] sm:$0xf]
    %v871 = vld [vmem:[%s1 + $0x8a4] sm:$0xf]
    %v872 = vld [vmem:[%s1 + $0x8a8] sm:$0xf]
    %v873 = vld [vmem:[%s1 + $0x8ac] sm:$0xf]
    %v874 = vld [vmem:[%s1 + $0x8b0] sm:$0xf]
    %v875 = vld [vmem:[%s1 + $0x8b4] sm:$0xf]
    %v876 = vld [vmem:[%s1 + $0x8b8] sm:$0xf]
    %v877 = vld [vmem:[%s1 + $0x8bc] sm:$0xf]
    %v878 = vld [vmem:[%s1 + $0x8c0] sm:$0xf]
    %v879 = vld [vmem:[%s1 + $0x8c4] sm:$0xf]
    %v880 = vld [vmem:[%s1 + $0x8c8] sm:$0xf]
    %v881 = vld [vmem:[%s1 + $0x8cc] sm:$0xf]
    %v882 = vld [vmem:[%s1 + $0x8d0] sm:$0xf]
    %v883 = vld [vmem:[%s1 + $0x8d4] sm:$0xf]
    %v884 = vld [vmem:[%s1 + $0x8d8] sm:$0xf]
    %v885 = vld [vmem:[%s1 + $0x8dc] sm:$0xf]
    %v886 = vld [vmem:[%s1 + $0x8e0] sm:$0xf]
    %v887 = vld [vmem:[%s1 + $0x8e4] sm:$0xf]
    %v888 = vld [vmem:[%s1 + $0x8e8] sm:$0xf]
    %v889 = vld [vmem:[%s1 + $0x8ec] sm:$0xf]
    %v890 = vld [vmem:[%s1 + $0x8f0] sm:$0xf]
    %v891 = vld [vmem:[%s1 + $0x8f4] sm:$0xf]
    %v892 = vld [vmem:[%s1 + $0x8f8] sm:$0xf]
    %v893 = vld [vmem:[%s1 + $0x8fc] sm:$0xf]
    %v894 = vld [vmem:[%s1 + $0x900] sm:$0xf]
    %v895 = vld [vmem:[%s1 + $0x904] sm:$0xf]
    %v896 = vld [vmem:[%s1 + $0x908] sm:$0xf]
    %v897 = vld [vmem:[%s1 + $0x90c] sm:$0xf]
    %v898 = vld [vmem:[%s1 + $0x910] sm:$0xf]
    %v899 = vld [vmem:[%s1 + $0x914] sm:$0xf]
    %v900 = vld [vmem:[%s1 + $0x918] sm:$0xf]
    %v901 = vld [vmem:[%s1 + $0x91c] sm:$0xf]
    %v902 = vld [vmem:[%s1 + $0x920] sm:$0xf]
    %v903 = vld [vmem:[%s1 + $0x924] sm:$0xf]
    %v904 = vld [vmem:[%s1 + $0x928] sm:$0xf]
    %v905 = vld [vmem:[%s1 + $0x92c] sm:$0xf]
    %v906 = vld [vmem:[%s1 + $0x930] sm:$0xf]
    %v907 = vld [vmem:[%s1 + $0x934] sm:$0xf]
    %v908 = vld [vmem:[%s1 + $0x938] sm:$0xf]
    %v909 = vld [vmem:[%s1 + $0x93c] sm:$0xf]
    %v910 = vld [vmem:[%s1 + $0x940] sm:$0xf]
    %v911 = vld [vmem:[%s1 + $0x944] sm:$0xf]
    %v912 = vld [vmem:[%s1 + $0x948] sm:$0xf]
    %v913 = vld [vmem:[%s1 + $0x94c] sm:$0xf]
    %v914 = vld [vmem:[%s1 + $0x950] sm:$0xf]
    %v915 = vld [vmem:[%s1 + $0x954] sm:$0xf]
    %v916 = vld [vmem:[%s1 + $0x958] sm:$0xf]
    %v917 = vld [vmem:[%s1 + $0x95c] sm:$0xf]
    %v918 = vld [vmem:[%s1 + $0x960] sm:$0xf]
    %v919 = vld [vmem:[%s1 + $0x964] sm:$0xf]
    %v920 = vld [vmem:[%s1 + $0x968] sm:$0xf]
    %v921 = vld [vmem:[%s1 + $0x96c] sm:$0xf]
    %v922 = vld [vmem:[%s1 + $0x970] sm:$0xf]
    %v923 = vld [vmem:[%s1 + $0x974] sm:$0xf]
    %v924 = vld [vmem:[%s1 + $0x978] sm:$0xf]
    %v925 = vld [vmem:[%s1 + $0x97c] sm:$0xf]
    %v926 = vld [vmem:[%s1 + $0x980] sm:$0xf]
    %v927 = vld [vmem:[%s1 + $0x984] sm:$0xf]
    %v928 = vld [vmem:[%s1 + $0x988] sm:$0xf]
    %v929 = vld [vmem:[%s1 + $0x98c] sm:$0xf]
    %v930 = vld [vmem:[%s1 + $0x990] sm:$0xf]
    %v931 = vld [vmem:[%s1 + $0x994] sm:$0xf]
    %v932 = vld [vmem:[%s1 + $0x998] sm:$0xf]
    %v933 = vld [vmem:[%s1 + $0x99c] sm:$0xf]
    %v934 = vld [vmem:[%s1 + $0x9a0] sm:$0xf]
    %v935 = vld [vmem:[%s1 + $0x9a4] sm:$0xf]
    %v936 = vld [vmem:[%s1 + $0x9a8] sm:$0xf]
    %v937 = vld [vmem:[%s1 + $0x9ac] sm:$0xf]
    %v938 = vld [vmem:[%s1 + $0x9b0] sm:$0xf]
    %v939 = vld [vmem:[%s1 + $0x9b4] sm:$0xf]
    %v940 = vld [vmem:[%s1 + $0x9b8] sm:$0xf]
    %v941 = vld [vmem:[%s1 + $0x9bc] sm:$0xf]
    %v942 = vld [vmem:[%s1 + $0x9c0] sm:$0xf]
    %v943 = vld [vmem:[%s1 + $0x9c4] sm:$0xf]
    %v944 = vld [vmem:[%s1 + $0x9c8] sm:$0xf]
    %v945 = vld [vmem:[%s1 + $0x9cc] sm:$0xf]
    %v946 = vld [vmem:[%s1 + $0x9d0] sm:$0xf]
    %v947 = vld [vmem:[%s1 + $0x9d4] sm:$0xf]
    %v948 = vld [vmem:[%s1 + $0x9d8] sm:$0xf]
    %v949 = vld [vmem:[%s1 + $0x9dc] sm:$0xf]
    %v950 = vld [vmem:[%s1 + $0x9e0] sm:$0xf]
    %v951 = vld [vmem:[%s1 + $0x9e4] sm:$0xf]
    %v952 = vld [vmem:[%s1 + $0x9e8] sm:$0xf]
    %v953 = vld [vmem:[%s1 + $0x9ec] sm:$0xf]
    %v954 = vld [vmem:[%s1 + $0x9f0] sm:$0xf]
    %v955 = vld [vmem:[%s1 + $0x9f4] sm:$0xf]
    %v956 = vld [vmem:[%s1 + $0x9f8] sm:$0xf]
    %v957 = vld [vmem:[%s1 + $0x9fc] sm:$0xf]
    %v958 = vld [vmem:[%s1 + $0xa00] sm:$0xf]
    %v959 = vld [vmem:[%s1 + $0xa04] sm:$0xf]
    %v960 = vld [vmem:[%s1 + $0xa08] sm:$0xf]
    %v961 = vld [vmem:[%s1 + $0xa0c] sm:$0xf]
    %v962 = vld [vmem:[%s1 + $0xa10] sm:$0xf]
    %v963 = vld [vmem:[%s1 + $0xa14] sm:$0xf]
    %v964 = vld [vmem:[%s1 + $0xa18] sm:$0xf]
    %v965 = vld [vmem:[%s1 + $0xa1c] sm:$0xf]
    %v966 = vld [vmem:[%s1 + $0xa20] sm:$0xf]
    %v967 = vld [vmem:[%s1 + $0xa24] sm:$0xf]
    %v968 = vld [vmem:[%s1 + $0xa28] sm:$0xf]
    %v969 = vld [vmem:[%s1 + $0xa2c] sm:$0xf]
    %v970 = vld [vmem:[%s1 + $0xa30] sm:$0xf]
    %v971 = vld [vmem:[%s1 + $0xa34] sm:$0xf]
    %v972 = vld [vmem:[%s1 + $0xa38] sm:$0xf]
    %v973 = vld [vmem:[%s1 + $0xa3c] sm:$0xf]
    %v974 = vld [vmem:[%s1 + $0xa40] sm:$0xf]
    %v975 = vld [vmem:[%s1 + $0xa44] sm:$0xf]
    %v976 = vld [vmem:[%s1 + $0xa48] sm:$0xf]
    %v977 = vld [vmem:[%s1 + $0xa4c] sm:$0xf]
    %v978 = vld [vmem:[%s1 + $0xa50] sm:$0xf]
    %v979 = vld [vmem:[%s1 + $0xa54] sm:$0xf]
    %v980 = vld [vmem:[%s1 + $0xa58] sm:$0xf]
    %v981 = vld [vmem:[%s1 + $0xa5c] sm:$0xf]
    %v982 = vld [vmem:[%s1 + $0xa60] sm:$0xf]
    %v983 = vld [vmem:[%s1 + $0xa64] sm:$0xf]
    %v984 = vld [vmem:[%s1 + $0xa68] sm:$0xf]
    %v985 = vld [vmem:[%s1 + $0xa6c] sm:$0xf]
    %v986 = vld [vmem:[%s1 + $0xa70] sm:$0xf]
    %v987 = vld [vmem:[%s1 + $0xa74] sm:$0xf]
    %v988 = vld [vmem:[%s1 + $0xa78] sm:$0xf]
    %v989 = vld [vmem:[%s1 + $0xa7c] sm:$0xf]
    %v990 = vld [vmem:[%s1 + $0xa80] sm:$0xf]
    %v991 = vld [vmem:[%s1 + $0xa84] sm:$0xf]
    %v992 = vld [vmem:[%s1 + $0xa88] sm:$0xf]
    %v993 = vld [vmem:[%s1 + $0xa8c] sm:$0xf]
    %v994 = vld [vmem:[%s1 + $0xa90] sm:$0xf]
    %v995 = vld [vmem:[%s1 + $0xa94] sm:$0xf]
    %v996 = vld [vmem:[%s1 + $0xa98] sm:$0xf]
    %v997 = vld [vmem:[%s1 + $0xa9c] sm:$0xf]
    %v998 = vld [vmem:[%s1 + $0xaa0] sm:$0xf]
    %v999 = vld [vmem:[%s1 + $0xaa4] sm:$0xf]
    %v1000 = vld [vmem:[%s1 + $0xaa8] sm:$0xf]
    %v1001 = vld [vmem:[%s1 + $0xaac] sm:$0xf]
    %v1002 = vld [vmem:[%s1 + $0xab0] sm:$0xf]
    %v1003 = vld [vmem:[%s1 + $0xab4] sm:$0xf]
    %v1004 = vld [vmem:[%s1 + $0xab8] sm:$0xf]
    %v1005 = vld [vmem:[%s1 + $0xabc] sm:$0xf]
    %v1006 = vld [vmem:[%s1 + $0xac0] sm:$0xf]
    %v1007 = vld [vmem:[%s1 + $0xac4] sm:$0xf]
    %v1008 = vld [vmem:[%s1 + $0xac8] sm:$0xf]
    %v1009 = vld [vmem:[%s1 + $0xacc] sm:$0xf]
    %v1010 = vld [vmem:[%s1 + $0xad0] sm:$0xf]
    %v1011 = vld [vmem:[%s1 + $0xad4] sm:$0xf]
    %v1012 = vld [vmem:[%s1 + $0xad8] sm:$0xf]
    %v1013 = vld [vmem:[%s1 + $0xadc] sm:$0xf]
    %v1014 = vld [vmem:[%s1 + $0xae0] sm:$0xf]
    %v1015 = vld [vmem:[%s1 + $0xae4] sm:$0xf]
    %v1016 = vld [vmem:[%s1 + $0xae8] sm:$0xf]
    %v1017 = vld [vmem:[%s1 + $0xaec] sm:$0xf]
    %v1018 = vld [vmem:[%s1 + $0xaf0] sm:$0xf]
    %v1019 = vld [vmem:[%s1 + $0xaf4] sm:$0xf]
    %v1020 = vld [vmem:[%s1 + $0xaf8] sm:$0xf]
    %v1021 = vld [vmem:[%s1 + $0xafc] sm:$0xf]
    %v1022 = vld [vmem:[%s1 + $0xb00] sm:$0xf]
    %v1023 = vld [vmem:[%s1 + $0xb04] sm:$0xf]
    %v1024 = vld [vmem:[%s1 + $0xb08] sm:$0xf]
    %v1025 = vld [vmem:[%s1 + $0xb0c] sm:$0xf]
    %v1026 = vld [vmem:[%s1 + $0xb10] sm:$0xf]
    %v1027 = vld [vmem:[%s1 + $0xb14] sm:$0xf]
    %v1028 = vld [vmem:[%s1 + $0xb18] sm:$0xf]
    %v1029 = vld [vmem:[%s1 + $0xb1c] sm:$0xf]
    %v1030 = vld [vmem:[%s1 + $0xb20] sm:$0xf]
    %v1031 = vld [vmem:[%s1 + $0xb24] sm:$0xf]
    %v1032 = vld [vmem:[%s1 + $0xb28] sm:$0xf]
    %v1033 = vld [vmem:[%s1 + $0xb2c] sm:$0xf]
    %v1034 = vld [vmem:[%s1 + $0xb30] sm:$0xf]
    %v1035 = vld [vmem:[%s1 + $0xb34] sm:$0xf]
    %v1036 = vld [vmem:[%s1 + $0xb38] sm:$0xf]
    %v1037 = vld [vmem:[%s1 + $0xb3c] sm:$0xf]
    %v1038 = vld [vmem:[%s1 + $0xb40] sm:$0xf]
    %v1039 = vld [vmem:[%s1 + $0xb44] sm:$0xf]
    %v1040 = vld [vmem:[%s1 + $0xb48] sm:$0xf]
    %v1041 = vld [vmem:[%s1 + $0xb4c] sm:$0xf]
    %v1042 = vld [vmem:[%s1 + $0xb50] sm:$0xf]
    %v1043 = vld [vmem:[%s1 + $0xb54] sm:$0xf]
    %v1044 = vld [vmem:[%s1 + $0xb58] sm:$0xf]
    %v1045 = vld [vmem:[%s1 + $0xb5c] sm:$0xf]
    %v1046 = vld [vmem:[%s1 + $0xb60] sm:$0xf]
    %v1047 = vld [vmem:[%s1 + $0xb64] sm:$0xf]
    %v1048 = vld [vmem:[%s1 + $0xb68] sm:$0xf]
    %v1049 = vld [vmem:[%s1 + $0xb6c] sm:$0xf]
    %v1050 = vld [vmem:[%s1 + $0xb70] sm:$0xf]
    %v1051 = vld [vmem:[%s1 + $0xb74] sm:$0xf]
    %v1052 = vld [vmem:[%s1 + $0xb78] sm:$0xf]
    %v1053 = vld [vmem:[%s1 + $0xb7c] sm:$0xf]
    %v1054 = vld [vmem:[%s1 + $0xb80] sm:$0xf]
    %v1055 = vld [vmem:[%s1 + $0xb84] sm:$0xf]
    %v1056 = vld [vmem:[%s1 + $0xb88] sm:$0xf]
    %v1057 = vld [vmem:[%s1 + $0xb8c] sm:$0xf]
    %v1058 = vld [vmem:[%s1 + $0xb90] sm:$0xf]
    %v1059 = vld [vmem:[%s1 + $0xb94] sm:$0xf]
    %v1060 = vld [vmem:[%s1 + $0xb98] sm:$0xf]
    %v1061 = vld [vmem:[%s1 + $0xb9c] sm:$0xf]
    %v1062 = vld [vmem:[%s1 + $0xba0] sm:$0xf]
    %v1063 = vld [vmem:[%s1 + $0xba4] sm:$0xf]
    %v1064 = vld [vmem:[%s1 + $0xba8] sm:$0xf]
    %v1065 = vld [vmem:[%s1 + $0xbac] sm:$0xf]
    %v1066 = vld [vmem:[%s1 + $0xbb0] sm:$0xf]
    %v1067 = vld [vmem:[%s1 + $0xbb4] sm:$0xf]
    %v1068 = vld [vmem:[%s1 + $0xbb8] sm:$0xf]
    %v1069 = vld [vmem:[%s1 + $0xbbc] sm:$0xf]
    %v1070 = vld [vmem:[%s1 + $0xbc0] sm:$0xf]
    %v1071 = vld [vmem:[%s1 + $0xbc4] sm:$0xf]
    %v1072 = vld [vmem:[%s1 + $0xbc8] sm:$0xf]
    %v1073 = vld [vmem:[%s1 + $0xbcc] sm:$0xf]
    %v1074 = vld [vmem:[%s1 + $0xbd0] sm:$0xf]
    %v1075 = vld [vmem:[%s1 + $0xbd4] sm:$0xf]
    %v1076 = vld [vmem:[%s1 + $0xbd8] sm:$0xf]
    %v1077 = vld [vmem:[%s1 + $0xbdc] sm:$0xf]
    %v1078 = vld [vmem:[%s1 + $0xbe0] sm:$0xf]
    %v1079 = vld [vmem:[%s1 + $0xbe4] sm:$0xf]
    %v1080 = vld [vmem:[%s1 + $0xbe8] sm:$0xf]
    %v1081 = vld [vmem:[%s1 + $0xbec] sm:$0xf]
    %v1082 = vld [vmem:[%s1 + $0xbf0] sm:$0xf]
    %v1083 = vld [vmem:[%s1 + $0xbf4] sm:$0xf]
    %v1084 = vld [vmem:[%s1 + $0xbf8] sm:$0xf]
    %v1085 = vld [vmem:[%s1 + $0xbfc] sm:$0xf]
    %v1086 = vld [vmem:[%s1 + $0xc00] sm:$0xf]
    %v1087 = vld [vmem:[%s1 + $0xc04] sm:$0xf]
    %v1088 = vld [vmem:[%s1 + $0xc08] sm:$0xf]
    %v1089 = vld [vmem:[%s1 + $0xc0c] sm:$0xf]
    %v1090 = vld [vmem:[%s1 + $0xc10] sm:$0xf]
    %v1091 = vld [vmem:[%s1 + $0xc14] sm:$0xf]
    %v1092 = vld [vmem:[%s1 + $0xc18] sm:$0xf]
    %v1093 = vld [vmem:[%s1 + $0xc1c] sm:$0xf]
    %v1094 = vld [vmem:[%s1 + $0xc20] sm:$0xf]
    %v1095 = vld [vmem:[%s1 + $0xc24] sm:$0xf]
    %v1096 = vld [vmem:[%s1 + $0xc28] sm:$0xf]
    %v1097 = vld [vmem:[%s1 + $0xc2c] sm:$0xf]
    %v1098 = vld [vmem:[%s1 + $0xc30] sm:$0xf]
    %v1099 = vld [vmem:[%s1 + $0xc34] sm:$0xf]
    %v1100 = vld [vmem:[%s1 + $0xc38] sm:$0xf]
    %v1101 = vld [vmem:[%s1 + $0xc3c] sm:$0xf]
    %v1102 = vld [vmem:[%s1 + $0xc40] sm:$0xf]
    %v1103 = vld [vmem:[%s1 + $0xc44] sm:$0xf]
    %v1104 = vld [vmem:[%s1 + $0xc48] sm:$0xf]
    %v1105 = vld [vmem:[%s1 + $0xc4c] sm:$0xf]
    %v1106 = vld [vmem:[%s1 + $0xc50] sm:$0xf]
    %v1107 = vld [vmem:[%s1 + $0xc54] sm:$0xf]
    %v1108 = vld [vmem:[%s1 + $0xc58] sm:$0xf]
    %v1109 = vld [vmem:[%s1 + $0xc5c] sm:$0xf]
    %v1110 = vld [vmem:[%s1 + $0xc60] sm:$0xf]
    %v1111 = vld [vmem:[%s1 + $0xc64] sm:$0xf]
    %v1112 = vld [vmem:[%s1 + $0xc68] sm:$0xf]
    %v1113 = vld [vmem:[%s1 + $0xc6c] sm:$0xf]
    %v1114 = vld [vmem:[%s1 + $0xc70] sm:$0xf]
    %v1115 = vld [vmem:[%s1 + $0xc74] sm:$0xf]
    %v1116 = vld [vmem:[%s1 + $0xc78] sm:$0xf]
    %v1117 = vld [vmem:[%s1 + $0xc7c] sm:$0xf]
    %v1118 = vld [vmem:[%s1 + $0xc80] sm:$0xf]
    %v1119 = vld [vmem:[%s1 + $0xc84] sm:$0xf]
    %v1120 = vld [vmem:[%s1 + $0xc88] sm:$0xf]
    %v1121 = vld [vmem:[%s1 + $0xc8c] sm:$0xf]
    %v1122 = vld [vmem:[%s1 + $0xc90] sm:$0xf]
    %v1123 = vld [vmem:[%s1 + $0xc94] sm:$0xf]
    %v1124 = vld [vmem:[%s1 + $0xc98] sm:$0xf]
    %v1125 = vld [vmem:[%s1 + $0xc9c] sm:$0xf]
    %v1126 = vld [vmem:[%s1 + $0xca0] sm:$0xf]
    %v1127 = vld [vmem:[%s1 + $0xca4] sm:$0xf]
    %v1128 = vld [vmem:[%s1 + $0xca8] sm:$0xf]
    %v1129 = vld [vmem:[%s1 + $0xcac] sm:$0xf]
    %v1130 = vld [vmem:[%s1 + $0xcb0] sm:$0xf]
    %v1131 = vld [vmem:[%s1 + $0xcb4] sm:$0xf]
    %v1132 = vld [vmem:[%s1 + $0xcb8] sm:$0xf]
    %v1133 = vld [vmem:[%s1 + $0xcbc] sm:$0xf]
    %v1134 = vld [vmem:[%s1 + $0xcc0] sm:$0xf]
    %v1135 = vld [vmem:[%s1 + $0xcc4] sm:$0xf]
    %v1136 = vld [vmem:[%s1 + $0xcc8] sm:$0xf]
    %v1137 = vld [vmem:[%s1 + $0xccc] sm:$0xf]
    %v1138 = vld [vmem:[%s1 + $0xcd0] sm:$0xf]
    %v1139 = vld [vmem:[%s1 + $0xcd4] sm:$0xf]
    %v1140 = vld [vmem:[%s1 + $0xcd8] sm:$0xf]
    %v1141 = vld [vmem:[%s1 + $0xcdc] sm:$0xf]
    %v1142 = vld [vmem:[%s1 + $0xce0] sm:$0xf]
    %v1143 = vld [vmem:[%s1 + $0xce4] sm:$0xf]
    %v1144 = vld [vmem:[%s1 + $0xce8] sm:$0xf]
    %v1145 = vld [vmem:[%s1 + $0xcec] sm:$0xf]
    %v1146 = vld [vmem:[%s1 + $0xcf0] sm:$0xf]
    %v1147 = vld [vmem:[%s1 + $0xcf4] sm:$0xf]
    %v1148 = vld [vmem:[%s1 + $0xcf8] sm:$0xf]
    %v1149 = vld [vmem:[%s1 + $0xcfc] sm:$0xf]
    %v1150 = vld [vmem:[%s1 + $0xd00] sm:$0xf]
    %v1151 = vld [vmem:[%s1 + $0xd04] sm:$0xf]
    %v1152 = vld [vmem:[%s1 + $0xd08] sm:$0xf]
    %v1153 = vld [vmem:[%s1 + $0xd0c] sm:$0xf]
    %v1154 = vld [vmem:[%s1 + $0xd10] sm:$0xf]
    %v1155 = vld [vmem:[%s1 + $0xd14] sm:$0xf]
    %v1156 = vld [vmem:[%s1 + $0xd18] sm:$0xf]
    %v1157 = vld [vmem:[%s1 + $0xd1c] sm:$0xf]
    %v1158 = vld [vmem:[%s1 + $0xd20] sm:$0xf]
    %v1159 = vld [vmem:[%s1 + $0xd24] sm:$0xf]
    %v1160 = vld [vmem:[%s1 + $0xd28] sm:$0xf]
    %v1161 = vld [vmem:[%s1 + $0xd2c] sm:$0xf]
    %v1162 = vld [vmem:[%s1 + $0xd30] sm:$0xf]
    %v1163 = vld [vmem:[%s1 + $0xd34] sm:$0xf]
    %v1164 = vld [vmem:[%s1 + $0xd38] sm:$0xf]
    %v1165 = vld [vmem:[%s1 + $0xd3c] sm:$0xf]
    %v1166 = vld [vmem:[%s1 + $0xd40] sm:$0xf]
    %v1167 = vld [vmem:[%s1 + $0xd44] sm:$0xf]
    %v1168 = vld [vmem:[%s1 + $0xd48] sm:$0xf]
    %v1169 = vld [vmem:[%s1 + $0xd4c] sm:$0xf]
    %v1170 = vld [vmem:[%s1 + $0xd50] sm:$0xf]
    %v1171 = vld [vmem:[%s1 + $0xd54] sm:$0xf]
    %v1172 = vld [vmem:[%s1 + $0xd58] sm:$0xf]
    %v1173 = vld [vmem:[%s1 + $0xd5c] sm:$0xf]
    %v1174 = vld [vmem:[%s1 + $0xd60] sm:$0xf]
    %v1175 = vld [vmem:[%s1 + $0xd64] sm:$0xf]
    %v1176 = vld [vmem:[%s1 + $0xd68] sm:$0xf]
    %v1177 = vld [vmem:[%s1 + $0xd6c] sm:$0xf]
    %v1178 = vld [vmem:[%s1 + $0xd70] sm:$0xf]
    %v1179 = vld [vmem:[%s1 + $0xd74] sm:$0xf]
    %v1180 = vld [vmem:[%s1 + $0xd78] sm:$0xf]
    %v1181 = vld [vmem:[%s1 + $0xd7c] sm:$0xf]
    %v1182 = vld [vmem:[%s1 + $0xd80] sm:$0xf]
    %v1183 = vld [vmem:[%s1 + $0xd84] sm:$0xf]
    %v1184 = vld [vmem:[%s1 + $0xd88] sm:$0xf]
    %v1185 = vld [vmem:[%s1 + $0xd8c] sm:$0xf]
    %v1186 = vld [vmem:[%s1 + $0xd90] sm:$0xf]
    %v1187 = vld [vmem:[%s1 + $0xd94] sm:$0xf]
    %v1188 = vld [vmem:[%s1 + $0xd98] sm:$0xf]
    %v1189 = vld [vmem:[%s1 + $0xd9c] sm:$0xf]
    %v1190 = vld [vmem:[%s1 + $0xda0] sm:$0xf]
    %v1191 = vld [vmem:[%s1 + $0xda4] sm:$0xf]
    %v1192 = vld [vmem:[%s1 + $0xda8] sm:$0xf]
    %v1193 = vld [vmem:[%s1 + $0xdac] sm:$0xf]
    %v1194 = vld [vmem:[%s1 + $0xdb0] sm:$0xf]
    %v1195 = vld [vmem:[%s1 + $0xdb4] sm:$0xf]
    %v1196 = vld [vmem:[%s1 + $0xdb8] sm:$0xf]
    %v1197 = vld [vmem:[%s1 + $0xdbc] sm:$0xf]
    %v1198 = vld [vmem:[%s1 + $0xdc0] sm:$0xf]
    %v1199 = vld [vmem:[%s1 + $0xdc4] sm:$0xf]
    %v1200 = vld [vmem:[%s1 + $0xdc8] sm:$0xf]
    %v1201 = vld [vmem:[%s1 + $0xdcc] sm:$0xf]
    %v1202 = vld [vmem:[%s1 + $0xdd0] sm:$0xf]
    %v1203 = vld [vmem:[%s1 + $0xdd4] sm:$0xf]
    %v1204 = vld [vmem:[%s1 + $0xdd8] sm:$0xf]
    %v1205 = vld [vmem:[%s1 + $0xddc] sm:$0xf]
    %v1206 = vld [vmem:[%s1 + $0xde0] sm:$0xf]
    %v1207 = vld [vmem:[%s1 + $0xde4] sm:$0xf]
    %v1208 = vld [vmem:[%s1 + $0xde8] sm:$0xf]
    %v1209 = vld [vmem:[%s1 + $0xdec] sm:$0xf]
    %v1210 = vld [vmem:[%s1 + $0xdf0] sm:$0xf]
    %v1211 = vld [vmem:[%s1 + $0xdf4] sm:$0xf]
    %v1212 = vld [vmem:[%s1 + $0xdf8] sm:$0xf]
    %v1213 = vld [vmem:[%s1 + $0xdfc] sm:$0xf]
    %v1214 = vld [vmem:[%s1 + $0xe00] sm:$0xf]
    %v1215 = vld [vmem:[%s1 + $0xe04] sm:$0xf]
    %v1216 = vld [vmem:[%s1 + $0xe08] sm:$0xf]
    %v1217 = vld [vmem:[%s1 + $0xe0c] sm:$0xf]
    %v1218 = vld [vmem:[%s1 + $0xe10] sm:$0xf]
    %v1219 = vld [vmem:[%s1 + $0xe14] sm:$0xf]
    %v1220 = vld [vmem:[%s1 + $0xe18] sm:$0xf]
    %v1221 = vld [vmem:[%s1 + $0xe1c] sm:$0xf]
    %v1222 = vld [vmem:[%s1 + $0xe20] sm:$0xf]
    %v1223 = vld [vmem:[%s1 + $0xe24] sm:$0xf]
    %v1224 = vld [vmem:[%s1 + $0xe28] sm:$0xf]
    %v1225 = vld [vmem:[%s1 + $0xe2c] sm:$0xf]
    %v1226 = vld [vmem:[%s1 + $0xe30] sm:$0xf]
    %v1227 = vld [vmem:[%s1 + $0xe34] sm:$0xf]
    %v1228 = vld [vmem:[%s1 + $0xe38] sm:$0xf]
    %v1229 = vld [vmem:[%s1 + $0xe3c] sm:$0xf]
    %v1230 = vld [vmem:[%s1 + $0xe40] sm:$0xf]
    %v1231 = vld [vmem:[%s1 + $0xe44] sm:$0xf]
    %v1232 = vld [vmem:[%s1 + $0xe48] sm:$0xf]
    %v1233 = vld [vmem:[%s1 + $0xe4c] sm:$0xf]
    %v1234 = vld [vmem:[%s1 + $0xe50] sm:$0xf]
    %v1235 = vld [vmem:[%s1 + $0xe54] sm:$0xf]
    %v1236 = vld [vmem:[%s1 + $0xe58] sm:$0xf]
    %v1237 = vld [vmem:[%s1 + $0xe5c] sm:$0xf]
    %v1238 = vld [vmem:[%s1 + $0xe60] sm:$0xf]
    %v1239 = vld [vmem:[%s1 + $0xe64] sm:$0xf]
    %v1240 = vld [vmem:[%s1 + $0xe68] sm:$0xf]
    %v1241 = vld [vmem:[%s1 + $0xe6c] sm:$0xf]
    %v1242 = vld [vmem:[%s1 + $0xe70] sm:$0xf]
    %v1243 = vld [vmem:[%s1 + $0xe74] sm:$0xf]
    %v1244 = vld [vmem:[%s1 + $0xe78] sm:$0xf]
    %v1245 = vld [vmem:[%s1 + $0xe7c] sm:$0xf]
    %v1246 = vld [vmem:[%s1 + $0xe80] sm:$0xf]
    %v1247 = vld [vmem:[%s1 + $0xe84] sm:$0xf]
    %v1248 = vld [vmem:[%s1 + $0xe88] sm:$0xf]
    %v1249 = vld [vmem:[%s1 + $0xe8c] sm:$0xf]
    %v1250 = vld [vmem:[%s1 + $0xe90] sm:$0xf]
    %v1251 = vld [vmem:[%s1 + $0xe94] sm:$0xf]
    %v1252 = vld [vmem:[%s1 + $0xe98] sm:$0xf]
    %v1253 = vld [vmem:[%s1 + $0xe9c] sm:$0xf]
    %v1254 = vld [vmem:[%s1 + $0xea0] sm:$0xf]
    %v1255 = vld [vmem:[%s1 + $0xea4] sm:$0xf]
    %v1256 = vld [vmem:[%s1 + $0xea8] sm:$0xf]
    %v1257 = vld [vmem:[%s1 + $0xeac] sm:$0xf]
    %v1258 = vld [vmem:[%s1 + $0xeb0] sm:$0xf]
    %v1259 = vld [vmem:[%s1 + $0xeb4] sm:$0xf]
    %v1260 = vld [vmem:[%s1 + $0xeb8] sm:$0xf]
    %v1261 = vld [vmem:[%s1 + $0xebc] sm:$0xf]
    %v1262 = vld [vmem:[%s1 + $0xec0] sm:$0xf]
    %v1263 = vld [vmem:[%s1 + $0xec4] sm:$0xf]
    %v1264 = vld [vmem:[%s1 + $0xec8] sm:$0xf]
    %v1265 = vld [vmem:[%s1 + $0xecc] sm:$0xf]
    %v1266 = vld [vmem:[%s1 + $0xed0] sm:$0xf]
    %v1267 = vld [vmem:[%s1 + $0xed4] sm:$0xf]
    %v1268 = vld [vmem:[%s1 + $0xed8] sm:$0xf]
    %v1269 = vld [vmem:[%s1 + $0xedc] sm:$0xf]
    %v1270 = vld [vmem:[%s1 + $0xee0] sm:$0xf]
    %v1271 = vld [vmem:[%s1 + $0xee4] sm:$0xf]
    %v1272 = vld [vmem:[%s1 + $0xee8] sm:$0xf]
    %v1273 = vld [vmem:[%s1 + $0xeec] sm:$0xf]
    %v1274 = vld [vmem:[%s1 + $0xef0] sm:$0xf]
    %v1275 = vld [vmem:[%s1 + $0xef4] sm:$0xf]
    %v1276 = vld [vmem:[%s1 + $0xef8] sm:$0xf]
    %v1277 = vld [vmem:[%s1 + $0xefc] sm:$0xf]
    %v1278 = vld [vmem:[%s1 + $0xf00] sm:$0xf]
    %v1279 = vld [vmem:[%s1 + $0xf04] sm:$0xf]
    %v1280 = vld [vmem:[%s1 + $0xf08] sm:$0xf]
    %v1281 = vld [vmem:[%s1 + $0xf0c] sm:$0xf]
    %v1282 = vld [vmem:[%s1 + $0xf10] sm:$0xf]
    %v1283 = vld [vmem:[%s1 + $0xf14] sm:$0xf]
    %v1284 = vld [vmem:[%s1 + $0xf18] sm:$0xf]
    %v1285 = vld [vmem:[%s1 + $0xf1c] sm:$0xf]
    %v1286 = vld [vmem:[%s1 + $0xf20] sm:$0xf]
    %v1287 = vld [vmem:[%s1 + $0xf24] sm:$0xf]
    %v1288 = vld [vmem:[%s1 + $0xf28] sm:$0xf]
    %v1289 = vld [vmem:[%s1 + $0xf2c] sm:$0xf]
    %v1290 = vld [vmem:[%s1 + $0xf30] sm:$0xf]
    %v1291 = vld [vmem:[%s1 + $0xf34] sm:$0xf]
    %v1292 = vld [vmem:[%s1 + $0xf38] sm:$0xf]
    %v1293 = vld [vmem:[%s1 + $0xf3c] sm:$0xf]
    %v1294 = vld [vmem:[%s1 + $0xf40] sm:$0xf]
    %v1295 = vld [vmem:[%s1 + $0xf44] sm:$0xf]
    %v1296 = vld [vmem:[%s1 + $0xf48] sm:$0xf]
    %v1297 = vld [vmem:[%s1 + $0xf4c] sm:$0xf]
    %v1298 = vld [vmem:[%s1 + $0xf50] sm:$0xf]
    %v1299 = vld [vmem:[%s1 + $0xf54] sm:$0xf]
    %v1300 = vld [vmem:[%s1 + $0xf58] sm:$0xf]
    %v1301 = vld [vmem:[%s1 + $0xf5c] sm:$0xf]
    %v1302 = vld [vmem:[%s1 + $0xf60] sm:$0xf]
    %v1303 = vld [vmem:[%s1 + $0xf64] sm:$0xf]
    %v1304 = vld [vmem:[%s1 + $0xf68] sm:$0xf]
    %v1305 = vld [vmem:[%s1 + $0xf6c] sm:$0xf]
    %v1306 = vld [vmem:[%s1 + $0xf70] sm:$0xf]
    %v1307 = vld [vmem:[%s1 + $0xf74] sm:$0xf]
    %v1308 = vld [vmem:[%s1 + $0xf78] sm:$0xf]
    %v1309 = vld [vmem:[%s1 + $0xf7c] sm:$0xf]
    %v1310 = vld [vmem:[%s1 + $0xf80] sm:$0xf]
    %v1311 = vld [vmem:[%s1 + $0xf84] sm:$0xf]
    %v1312 = vld [vmem:[%s1 + $0xf88] sm:$0xf]
    %v1313 = vld [vmem:[%s1 + $0xf8c] sm:$0xf]
    %v1314 = vld [vmem:[%s1 + $0xf90] sm:$0xf]
    %v1315 = vld [vmem:[%s1 + $0xf94] sm:$0xf]
    %v1316 = vld [vmem:[%s1 + $0xf98] sm:$0xf]
    %v1317 = vld [vmem:[%s1 + $0xf9c] sm:$0xf]
    %v1318 = vld [vmem:[%s1 + $0xfa0] sm:$0xf]
    %v1319 = vld [vmem:[%s1 + $0xfa4] sm:$0xf]
    %v1320 = vld [vmem:[%s1 + $0xfa8] sm:$0xf]
    %v1321 = vld [vmem:[%s1 + $0xfac] sm:$0xf]
    %v1322 = vld [vmem:[%s1 + $0xfb0] sm:$0xf]
    %v1323 = vld [vmem:[%s1 + $0xfb4] sm:$0xf]
    %v1324 = vld [vmem:[%s1 + $0xfb8] sm:$0xf]
    %v1325 = vld [vmem:[%s1 + $0xfbc] sm:$0xf]
    %v1326 = vld [vmem:[%s1 + $0xfc0] sm:$0xf]
    %v1327 = vld [vmem:[%s1 + $0xfc4] sm:$0xf]
    %v1328 = vld [vmem:[%s1 + $0xfc8] sm:$0xf]
    %v1329 = vld [vmem:[%s1 + $0xfcc] sm:$0xf]
    %v1330 = vld [vmem:[%s1 + $0xfd0] sm:$0xf]
    %v1331 = vld [vmem:[%s1 + $0xfd4] sm:$0xf]
    %v1332 = vld [vmem:[%s1 + $0xfd8] sm:$0xf]
    %v1333 = vld [vmem:[%s1 + $0xfdc] sm:$0xf]
    %v1334 = vld [vmem:[%s1 + $0xfe0] sm:$0xf]
    %v1335 = vld [vmem:[%s1 + $0xfe4] sm:$0xf]
    %v1336 = vld [vmem:[%s1 + $0xfe8] sm:$0xf]
    %v1337 = vld [vmem:[%s1 + $0xfec] sm:$0xf]
    %v1338 = vld [vmem:[%s1 + $0xff0] sm:$0xf]
    %v1339 = vld [vmem:[%s1 + $0xff4] sm:$0xf]
    %v1340 = vld [vmem:[%s1 + $0xff8] sm:$0xf]
    %v1341 = vld [vmem:[%s1 + $0xffc] sm:$0xf]
    %v1342 = vld [vmem:[%s1 + $0x1000] sm:$0xf]
    %v1343 = vld [vmem:[%s1 + $0x1004] sm:$0xf]
    %v1344 = vld [vmem:[%s1 + $0x1008] sm:$0xf]
    %v1345 = vld [vmem:[%s1 + $0x100c] sm:$0xf]
    %v1346 = vld [vmem:[%s1 + $0x1010] sm:$0xf]
    %v1347 = vld [vmem:[%s1 + $0x1014] sm:$0xf]
    %v1348 = vld [vmem:[%s1 + $0x1018] sm:$0xf]
    %v1349 = vld [vmem:[%s1 + $0x101c] sm:$0xf]
    %v1350 = vld [vmem:[%s1 + $0x1020] sm:$0xf]
    %v1351 = vld [vmem:[%s1 + $0x1024] sm:$0xf]
    %v1352 = vld [vmem:[%s1 + $0x1028] sm:$0xf]
    %v1353 = vld [vmem:[%s1 + $0x102c] sm:$0xf]
    %v1354 = vld [vmem:[%s1 + $0x1030] sm:$0xf]
    %v1355 = vld [vmem:[%s1 + $0x1034] sm:$0xf]
    %v1356 = vld [vmem:[%s1 + $0x1038] sm:$0xf]
    %v1357 = vld [vmem:[%s1 + $0x103c] sm:$0xf]
    %v1358 = vld [vmem:[%s1 + $0x1040] sm:$0xf]
    %v1359 = vld [vmem:[%s1 + $0x1044] sm:$0xf]
    %v1360 = vld [vmem:[%s1 + $0x1048] sm:$0xf]
    %v1361 = vld [vmem:[%s1 + $0x104c] sm:$0xf]
    %v1362 = vld [vmem:[%s1 + $0x1050] sm:$0xf]
    %v1363 = vld [vmem:[%s1 + $0x1054] sm:$0xf]
    %v1364 = vld [vmem:[%s1 + $0x1058] sm:$0xf]
    %v1365 = vld [vmem:[%s1 + $0x105c] sm:$0xf]
    %v1366 = vld [vmem:[%s1 + $0x1060] sm:$0xf]
    %v1367 = vld [vmem:[%s1 + $0x1064] sm:$0xf]
    %v1368 = vld [vmem:[%s1 + $0x1068] sm:$0xf]
    %v1369 = vld [vmem:[%s1 + $0x106c] sm:$0xf]
    %v1370 = vld [vmem:[%s1 + $0x1070] sm:$0xf]
    %v1371 = vld [vmem:[%s1 + $0x1074] sm:$0xf]
    %v1372 = vld [vmem:[%s1 + $0x1078] sm:$0xf]
    %v1373 = vld [vmem:[%s1 + $0x107c] sm:$0xf]
    %v1374 = vld [vmem:[%s1 + $0x1080] sm:$0xf]
    %v1375 = vld [vmem:[%s1 + $0x1084] sm:$0xf]
    %v1376 = vld [vmem:[%s1 + $0x1088] sm:$0xf]
    %v1377 = vld [vmem:[%s1 + $0x108c] sm:$0xf]
    %v1378 = vld [vmem:[%s1 + $0x1090] sm:$0xf]
    %v1379 = vld [vmem:[%s1 + $0x1094] sm:$0xf]
    %v1380 = vld [vmem:[%s1 + $0x1098] sm:$0xf]
    %v1381 = vld [vmem:[%s1 + $0x109c] sm:$0xf]
    %v1382 = vld [vmem:[%s1 + $0x10a0] sm:$0xf]
    %v1383 = vld [vmem:[%s1 + $0x10a4] sm:$0xf]
    %v1384 = vld [vmem:[%s1 + $0x10a8] sm:$0xf]
    %v1385 = vld [vmem:[%s1 + $0x10ac] sm:$0xf]
    %v1386 = vld [vmem:[%s1 + $0x10b0] sm:$0xf]
    %v1387 = vld [vmem:[%s1 + $0x10b4] sm:$0xf]
    %v1388 = vld [vmem:[%s1 + $0x10b8] sm:$0xf]
    %v1389 = vld [vmem:[%s1 + $0x10bc] sm:$0xf]
    %v1390 = vld [vmem:[%s1 + $0x10c0] sm:$0xf]
    %v1391 = vld [vmem:[%s1 + $0x10c4] sm:$0xf]
    %v1392 = vld [vmem:[%s1 + $0x10c8] sm:$0xf]
    %v1393 = vld [vmem:[%s1 + $0x10cc] sm:$0xf]
    %v1394 = vld [vmem:[%s1 + $0x10d0] sm:$0xf]
    %v1395 = vld [vmem:[%s1 + $0x10d4] sm:$0xf]
    %v1396 = vld [vmem:[%s1 + $0x10d8] sm:$0xf]
    %v1397 = vld [vmem:[%s1 + $0x10dc] sm:$0xf]
    %v1398 = vld [vmem:[%s1 + $0x10e0] sm:$0xf]
    %v1399 = vld [vmem:[%s1 + $0x10e4] sm:$0xf]
    %v1400 = vld [vmem:[%s1 + $0x10e8] sm:$0xf]
    %v1401 = vld [vmem:[%s1 + $0x10ec] sm:$0xf]
    %v1402 = vld [vmem:[%s1 + $0x10f0] sm:$0xf]
    %v1403 = vld [vmem:[%s1 + $0x10f4] sm:$0xf]
    %v1404 = vld [vmem:[%s1 + $0x10f8] sm:$0xf]
    %v1405 = vld [vmem:[%s1 + $0x10fc] sm:$0xf]
    %v1406 = vld [vmem:[%s1 + $0x1100] sm:$0xf]
    %v1407 = vld [vmem:[%s1 + $0x1104] sm:$0xf]
    %v1408 = vld [vmem:[%s1 + $0x1108] sm:$0xf]
    %v1409 = vld [vmem:[%s1 + $0x110c] sm:$0xf]
    %v1410 = vld [vmem:[%s1 + $0x1110] sm:$0xf]
    %v1411 = vld [vmem:[%s1 + $0x1114] sm:$0xf]
    %v1412 = vld [vmem:[%s1 + $0x1118] sm:$0xf]
    %v1413 = vld [vmem:[%s1 + $0x111c] sm:$0xf]
    %v1414 = vld [vmem:[%s1 + $0x1120] sm:$0xf]
    %v1415 = vld [vmem:[%s1 + $0x1124] sm:$0xf]
    %v1416 = vld [vmem:[%s1 + $0x1128] sm:$0xf]
    %v1417 = vld [vmem:[%s1 + $0x112c] sm:$0xf]
    %v1418 = vld [vmem:[%s1 + $0x1130] sm:$0xf]
    %v1419 = vld [vmem:[%s1 + $0x1134] sm:$0xf]
    %v1420 = vld [vmem:[%s1 + $0x1138] sm:$0xf]
    %v1421 = vld [vmem:[%s1 + $0x113c] sm:$0xf]
    %v1422 = vld [vmem:[%s1 + $0x1140] sm:$0xf]
    %v1423 = vld [vmem:[%s1 + $0x1144] sm:$0xf]
    %v1424 = vld [vmem:[%s1 + $0x1148] sm:$0xf]
    %v1425 = vld [vmem:[%s1 + $0x114c] sm:$0xf]
    %v1426 = vld [vmem:[%s1 + $0x1150] sm:$0xf]
    %v1427 = vld [vmem:[%s1 + $0x1154] sm:$0xf]
    %v1428 = vld [vmem:[%s1 + $0x1158] sm:$0xf]
    %v1429 = vld [vmem:[%s1 + $0x115c] sm:$0xf]
    %v1430 = vld [vmem:[%s1 + $0x1160] sm:$0xf]
    %v1431 = vld [vmem:[%s1 + $0x1164] sm:$0xf]
    %v1432 = vld [vmem:[%s1 + $0x1168] sm:$0xf]
    %v1433 = vld [vmem:[%s1 + $0x116c] sm:$0xf]
    %v1434 = vld [vmem:[%s1 + $0x1170] sm:$0xf]
    %v1435 = vld [vmem:[%s1 + $0x1174] sm:$0xf]
    %v1436 = vld [vmem:[%s1 + $0x1178] sm:$0xf]
    %v1437 = vld [vmem:[%s1 + $0x117c] sm:$0xf]
    %v1438 = vld [vmem:[%s1 + $0x1180] sm:$0xf]
    %v1439 = vld [vmem:[%s1 + $0x1184] sm:$0xf]
    %v1440 = vld [vmem:[%s1 + $0x1188] sm:$0xf]
    %v1441 = vld [vmem:[%s1 + $0x118c] sm:$0xf]
    %v1442 = vld [vmem:[%s1 + $0x1190] sm:$0xf]
    %v1443 = vld [vmem:[%s1 + $0x1194] sm:$0xf]
    %v1444 = vld [vmem:[%s1 + $0x1198] sm:$0xf]
    %v1445 = vld [vmem:[%s1 + $0x119c] sm:$0xf]
    %v1446 = vld [vmem:[%s1 + $0x11a0] sm:$0xf]
    %v1447 = vld [vmem:[%s1 + $0x11a4] sm:$0xf]
    %v1448 = vld [vmem:[%s1 + $0x11a8] sm:$0xf]
    %v1449 = vld [vmem:[%s1 + $0x11ac] sm:$0xf]
    %v1450 = vld [vmem:[%s1 + $0x11b0] sm:$0xf]
    %v1451 = vld [vmem:[%s1 + $0x11b4] sm:$0xf]
    %v1452 = vld [vmem:[%s1 + $0x11b8] sm:$0xf]
    %v1453 = vld [vmem:[%s1 + $0x11bc] sm:$0xf]
    %v1454 = vld [vmem:[%s1 + $0x11c0] sm:$0xf]
    %v1455 = vld [vmem:[%s1 + $0x11c4] sm:$0xf]
    %v1456 = vld [vmem:[%s1 + $0x11c8] sm:$0xf]
    %v1457 = vld [vmem:[%s1 + $0x11cc] sm:$0xf]
    %v1458 = vld [vmem:[%s1 + $0x11d0] sm:$0xf]
    %v1459 = vld [vmem:[%s1 + $0x11d4] sm:$0xf]
    %v1460 = vld [vmem:[%s1 + $0x11d8] sm:$0xf]
    %v1461 = vld [vmem:[%s1 + $0x11dc] sm:$0xf]
    %v1462 = vld [vmem:[%s1 + $0x11e0] sm:$0xf]
    %v1463 = vld [vmem:[%s1 + $0x11e4] sm:$0xf]
    %v1464 = vld [vmem:[%s1 + $0x11e8] sm:$0xf]
    %v1465 = vld [vmem:[%s1 + $0x11ec] sm:$0xf]
    %v1466 = vld [vmem:[%s1 + $0x11f0] sm:$0xf]
    %v1467 = vld [vmem:[%s1 + $0x11f4] sm:$0xf]
    %v1468 = vld [vmem:[%s1 + $0x11f8] sm:$0xf]
    %v1469 = vld [vmem:[%s1 + $0x11fc] sm:$0xf]
    %v1470 = vld [vmem:[%s1 + $0x1200] sm:$0xf]
    %v1471 = vld [vmem:[%s1 + $0x1204] sm:$0xf]
    %v1472 = vld [vmem:[%s1 + $0x1208] sm:$0xf]
    %v1473 = vld [vmem:[%s1 + $0x120c] sm:$0xf]
    %v1474 = vld [vmem:[%s1 + $0x1210] sm:$0xf]
    %v1475 = vld [vmem:[%s1 + $0x1214] sm:$0xf]
    %v1476 = vld [vmem:[%s1 + $0x1218] sm:$0xf]
    %v1477 = vld [vmem:[%s1 + $0x121c] sm:$0xf]
    %v1478 = vld [vmem:[%s1 + $0x1220] sm:$0xf]
    %v1479 = vld [vmem:[%s1 + $0x1224] sm:$0xf]
    %v1480 = vld [vmem:[%s1 + $0x1228] sm:$0xf]
    %v1481 = vld [vmem:[%s1 + $0x122c] sm:$0xf]
    %v1482 = vld [vmem:[%s1 + $0x1230] sm:$0xf]
    %v1483 = vld [vmem:[%s1 + $0x1234] sm:$0xf]
    %v1484 = vld [vmem:[%s1 + $0x1238] sm:$0xf]
    %v1485 = vld [vmem:[%s1 + $0x123c] sm:$0xf]
    %v1486 = vld [vmem:[%s1 + $0x1240] sm:$0xf]
    %v1487 = vld [vmem:[%s1 + $0x1244] sm:$0xf]
    %v1488 = vld [vmem:[%s1 + $0x1248] sm:$0xf]
    %v1489 = vld [vmem:[%s1 + $0x124c] sm:$0xf]
    %v1490 = vld [vmem:[%s1 + $0x1250] sm:$0xf]
    %v1491 = vld [vmem:[%s1 + $0x1254] sm:$0xf]
    %v1492 = vld [vmem:[%s1 + $0x1258] sm:$0xf]
    %v1493 = vld [vmem:[%s1 + $0x125c] sm:$0xf]
    %v1494 = vld [vmem:[%s1 + $0x1260] sm:$0xf]
    %v1495 = vld [vmem:[%s1 + $0x1264] sm:$0xf]
    %v1496 = vld [vmem:[%s1 + $0x1268] sm:$0xf]
    %v1497 = vld [vmem:[%s1 + $0x126c] sm:$0xf]
    %v1498 = vld [vmem:[%s1 + $0x1270] sm:$0xf]
    %v1499 = vld [vmem:[%s1 + $0x1274] sm:$0xf]
    %v1500 = vld [vmem:[%s1 + $0x1278] sm:$0xf]
    %v1501 = vld [vmem:[%s1 + $0x127c] sm:$0xf]
    %v1502 = vld [vmem:[%s2] sm:$0x1]
    %v1504 = vlaneseq
    %v1505 = vshrl.u32 %v1504, 7
    %v1506 = vsub.s32 0, %v1505
    %v1507 = vrot.slane %v1502, %v1506
    %v1805 = vunpack.c.l.b16 %v22
    %v1806 = vunpack.c.h.b16 %v22
    %v1807 = vunpack.c.l.b16 %v23
    %v1808 = vunpack.c.h.b16 %v23
    %v1809 = vunpack.c.l.b16 %v24
    %v1810 = vunpack.c.h.b16 %v24
    %v1811 = vunpack.c.l.b16 %v25
    %v1812 = vunpack.c.h.b16 %v25
    %v1813 = vunpack.c.l.b16 %v26
    %v1814 = vunpack.c.h.b16 %v26
    %v1815 = vunpack.c.l.b16 %v27
    %v1816 = vunpack.c.h.b16 %v27
    %v1817 = vunpack.c.l.b16 %v28
    %v1818 = vunpack.c.h.b16 %v28
    %v1819 = vunpack.c.l.b16 %v29
    %v1820 = vunpack.c.h.b16 %v29
    %v1821 = vunpack.c.l.b16 %v30
    %v1822 = vunpack.c.h.b16 %v30
    %v1823 = vunpack.c.l.b16 %v31
    %v1824 = vunpack.c.h.b16 %v31
    %v1825 = vunpack.c.l.b16 %v32
    %v1826 = vunpack.c.h.b16 %v32
    %v1827 = vunpack.c.l.b16 %v33
    %v1828 = vunpack.c.h.b16 %v33
    %v1829 = vunpack.c.l.b16 %v34
    %v1830 = vunpack.c.h.b16 %v34
    %v1831 = vunpack.c.l.b16 %v35
    %v1832 = vunpack.c.h.b16 %v35
    %v1833 = vunpack.c.l.b16 %v36
    %v1834 = vunpack.c.h.b16 %v36
    %v1835 = vunpack.c.l.b16 %v37
    %v1836 = vunpack.c.h.b16 %v37
    %v1837 = vunpack.c.l.b16 %v38
    %v1838 = vunpack.c.h.b16 %v38
    %v1839 = vunpack.c.l.b16 %v39
    %v1840 = vunpack.c.h.b16 %v39
    %v1841 = vunpack.c.l.b16 %v40
    %v1842 = vunpack.c.h.b16 %v40
    %v1843 = vunpack.c.l.b16 %v41
    %v1844 = vunpack.c.h.b16 %v41
    %v1845 = vunpack.c.l.b16 %v42
    %v1846 = vunpack.c.h.b16 %v42
    %v1847 = vunpack.c.l.b16 %v43
    %v1848 = vunpack.c.h.b16 %v43
    %v1849 = vunpack.c.l.b16 %v44
    %v1850 = vunpack.c.h.b16 %v44
    %v1851 = vunpack.c.l.b16 %v45
    %v1852 = vunpack.c.h.b16 %v45
    %v1853 = vunpack.c.l.b16 %v46
    %v1854 = vunpack.c.h.b16 %v46
    %v1855 = vunpack.c.l.b16 %v47
    %v1856 = vunpack.c.h.b16 %v47
    %v1857 = vunpack.c.l.b16 %v48
    %v1858 = vunpack.c.h.b16 %v48
    %v1859 = vunpack.c.l.b16 %v49
    %v1860 = vunpack.c.h.b16 %v49
    %v1861 = vunpack.c.l.b16 %v50
    %v1862 = vunpack.c.h.b16 %v50
    %v1863 = vunpack.c.l.b16 %v51
    %v1864 = vunpack.c.h.b16 %v51
    %v1865 = vunpack.c.l.b16 %v52
    %v1866 = vunpack.c.h.b16 %v52
    %v1867 = vunpack.c.l.b16 %v53
    %v1868 = vunpack.c.h.b16 %v53
    %v1869 = vunpack.c.l.b16 %v54
    %v1870 = vunpack.c.h.b16 %v54
    %v1871 = vunpack.c.l.b16 %v55
    %v1872 = vunpack.c.h.b16 %v55
    %v1873 = vunpack.c.l.b16 %v56
    %v1874 = vunpack.c.h.b16 %v56
    %v1875 = vunpack.c.l.b16 %v57
    %v1876 = vunpack.c.h.b16 %v57
    %v1877 = vunpack.c.l.b16 %v58
    %v1878 = vunpack.c.h.b16 %v58
    %v1879 = vunpack.c.l.b16 %v59
    %v1880 = vunpack.c.h.b16 %v59
    %v1881 = vunpack.c.l.b16 %v60
    %v1882 = vunpack.c.h.b16 %v60
    %v1883 = vunpack.c.l.b16 %v61
    %v1884 = vunpack.c.h.b16 %v61
    %v1885 = vunpack.c.l.b16 %v62
    %v1886 = vunpack.c.h.b16 %v62
    %v1887 = vunpack.c.l.b16 %v63
    %v1888 = vunpack.c.h.b16 %v63
    %v1889 = vunpack.c.l.b16 %v64
    %v1890 = vunpack.c.h.b16 %v64
    %v1891 = vunpack.c.l.b16 %v65
    %v1892 = vunpack.c.h.b16 %v65
    %v1893 = vunpack.c.l.b16 %v66
    %v1894 = vunpack.c.h.b16 %v66
    %v1895 = vunpack.c.l.b16 %v67
    %v1896 = vunpack.c.h.b16 %v67
    %v1897 = vunpack.c.l.b16 %v68
    %v1898 = vunpack.c.h.b16 %v68
    %v1899 = vunpack.c.l.b16 %v69
    %v1900 = vunpack.c.h.b16 %v69
    %v1901 = vunpack.c.l.b16 %v70
    %v1902 = vunpack.c.h.b16 %v70
    %v1903 = vunpack.c.l.b16 %v71
    %v1904 = vunpack.c.h.b16 %v71
    %v1905 = vunpack.c.l.b16 %v72
    %v1906 = vunpack.c.h.b16 %v72
    %v1907 = vunpack.c.l.b16 %v73
    %v1908 = vunpack.c.h.b16 %v73
    %v1909 = vunpack.c.l.b16 %v74
    %v1910 = vunpack.c.h.b16 %v74
    %v1911 = vunpack.c.l.b16 %v75
    %v1912 = vunpack.c.h.b16 %v75
    %v1913 = vunpack.c.l.b16 %v76
    %v1914 = vunpack.c.h.b16 %v76
    %v1915 = vunpack.c.l.b16 %v77
    %v1916 = vunpack.c.h.b16 %v77
    %v1917 = vunpack.c.l.b16 %v78
    %v1918 = vunpack.c.h.b16 %v78
    %v1919 = vunpack.c.l.b16 %v79
    %v1920 = vunpack.c.h.b16 %v79
    %v1921 = vunpack.c.l.b16 %v80
    %v1922 = vunpack.c.h.b16 %v80
    %v1923 = vunpack.c.l.b16 %v81
    %v1924 = vunpack.c.h.b16 %v81
    %v1925 = vunpack.c.l.b16 %v82
    %v1926 = vunpack.c.h.b16 %v82
    %v1927 = vunpack.c.l.b16 %v83
    %v1928 = vunpack.c.h.b16 %v83
    %v1929 = vunpack.c.l.b16 %v84
    %v1930 = vunpack.c.h.b16 %v84
    %v1931 = vunpack.c.l.b16 %v85
    %v1932 = vunpack.c.h.b16 %v85
    %v1933 = vunpack.c.l.b16 %v86
    %v1934 = vunpack.c.h.b16 %v86
    %v1935 = vunpack.c.l.b16 %v87
    %v1936 = vunpack.c.h.b16 %v87
    %v1937 = vunpack.c.l.b16 %v88
    %v1938 = vunpack.c.h.b16 %v88
    %v1939 = vunpack.c.l.b16 %v89
    %v1940 = vunpack.c.h.b16 %v89
    %v1941 = vunpack.c.l.b16 %v90
    %v1942 = vunpack.c.h.b16 %v90
    %v1943 = vunpack.c.l.b16 %v91
    %v1944 = vunpack.c.h.b16 %v91
    %v1945 = vunpack.c.l.b16 %v92
    %v1946 = vunpack.c.h.b16 %v92
    %v1947 = vunpack.c.l.b16 %v93
    %v1948 = vunpack.c.h.b16 %v93
    %v1949 = vunpack.c.l.b16 %v94
    %v1950 = vunpack.c.h.b16 %v94
    %v1951 = vunpack.c.l.b16 %v95
    %v1952 = vunpack.c.h.b16 %v95
    %v1953 = vunpack.c.l.b16 %v96
    %v1954 = vunpack.c.h.b16 %v96
    %v1955 = vunpack.c.l.b16 %v97
    %v1956 = vunpack.c.h.b16 %v97
    %v1957 = vunpack.c.l.b16 %v98
    %v1958 = vunpack.c.h.b16 %v98
    %v1959 = vunpack.c.l.b16 %v99
    %v1960 = vunpack.c.h.b16 %v99
    %v1961 = vunpack.c.l.b16 %v100
    %v1962 = vunpack.c.h.b16 %v100
    %v1963 = vunpack.c.l.b16 %v101
    %v1964 = vunpack.c.h.b16 %v101
    %v1965 = vunpack.c.l.b16 %v102
    %v1966 = vunpack.c.h.b16 %v102
    %v1967 = vunpack.c.l.b16 %v103
    %v1968 = vunpack.c.h.b16 %v103
    %v1969 = vunpack.c.l.b16 %v104
    %v1970 = vunpack.c.h.b16 %v104
    %v1971 = vunpack.c.l.b16 %v105
    %v1972 = vunpack.c.h.b16 %v105
    %v1973 = vunpack.c.l.b16 %v106
    %v1974 = vunpack.c.h.b16 %v106
    %v1975 = vunpack.c.l.b16 %v107
    %v1976 = vunpack.c.h.b16 %v107
    %v1977 = vunpack.c.l.b16 %v108
    %v1978 = vunpack.c.h.b16 %v108
    %v1979 = vunpack.c.l.b16 %v109
    %v1980 = vunpack.c.h.b16 %v109
    %v1981 = vunpack.c.l.b16 %v110
    %v1982 = vunpack.c.h.b16 %v110
    %v1983 = vunpack.c.l.b16 %v111
    %v1984 = vunpack.c.h.b16 %v111
    %v1985 = vunpack.c.l.b16 %v112
    %v1986 = vunpack.c.h.b16 %v112
    %v1987 = vunpack.c.l.b16 %v113
    %v1988 = vunpack.c.h.b16 %v113
    %v1989 = vunpack.c.l.b16 %v114
    %v1990 = vunpack.c.h.b16 %v114
    %v1991 = vunpack.c.l.b16 %v115
    %v1992 = vunpack.c.h.b16 %v115
    %v1993 = vunpack.c.l.b16 %v116
    %v1994 = vunpack.c.h.b16 %v116
    %v1995 = vunpack.c.l.b16 %v117
    %v1996 = vunpack.c.h.b16 %v117
    %v1997 = vunpack.c.l.b16 %v118
    %v1998 = vunpack.c.h.b16 %v118
    %v1999 = vunpack.c.l.b16 %v119
    %v2000 = vunpack.c.h.b16 %v119
    %v2001 = vunpack.c.l.b16 %v120
    %v2002 = vunpack.c.h.b16 %v120
    %v2003 = vunpack.c.l.b16 %v121
    %v2004 = vunpack.c.h.b16 %v121
    %v2005 = vunpack.c.l.b16 %v122
    %v2006 = vunpack.c.h.b16 %v122
    %v2007 = vunpack.c.l.b16 %v123
    %v2008 = vunpack.c.h.b16 %v123
    %v2009 = vunpack.c.l.b16 %v124
    %v2010 = vunpack.c.h.b16 %v124
    %v2011 = vunpack.c.l.b16 %v125
    %v2012 = vunpack.c.h.b16 %v125
    %v2013 = vunpack.c.l.b16 %v126
    %v2014 = vunpack.c.h.b16 %v126
    %v2015 = vunpack.c.l.b16 %v127
    %v2016 = vunpack.c.h.b16 %v127
    %v2017 = vunpack.c.l.b16 %v128
    %v2018 = vunpack.c.h.b16 %v128
    %v2019 = vunpack.c.l.b16 %v129
    %v2020 = vunpack.c.h.b16 %v129
    %v2021 = vunpack.c.l.b16 %v130
    %v2022 = vunpack.c.h.b16 %v130
    %v2023 = vunpack.c.l.b16 %v131
    %v2024 = vunpack.c.h.b16 %v131
    %v2025 = vunpack.c.l.b16 %v132
    %v2026 = vunpack.c.h.b16 %v132
    %v2027 = vunpack.c.l.b16 %v133
    %v2028 = vunpack.c.h.b16 %v133
    %v2029 = vunpack.c.l.b16 %v134
    %v2030 = vunpack.c.h.b16 %v134
    %v2031 = vunpack.c.l.b16 %v135
    %v2032 = vunpack.c.h.b16 %v135
    %v2033 = vunpack.c.l.b16 %v136
    %v2034 = vunpack.c.h.b16 %v136
    %v2035 = vunpack.c.l.b16 %v137
    %v2036 = vunpack.c.h.b16 %v137
    %v2037 = vunpack.c.l.b16 %v138
    %v2038 = vunpack.c.h.b16 %v138
    %v2039 = vunpack.c.l.b16 %v139
    %v2040 = vunpack.c.h.b16 %v139
    %v2041 = vunpack.c.l.b16 %v140
    %v2042 = vunpack.c.h.b16 %v140
    %v2043 = vunpack.c.l.b16 %v141
    %v2044 = vunpack.c.h.b16 %v141
    %v2045 = vunpack.c.l.b16 %v142
    %v2046 = vunpack.c.h.b16 %v142
    %v2047 = vunpack.c.l.b16 %v143
    %v2048 = vunpack.c.h.b16 %v143
    %v2049 = vunpack.c.l.b16 %v144
    %v2050 = vunpack.c.h.b16 %v144
    %v2051 = vunpack.c.l.b16 %v145
    %v2052 = vunpack.c.h.b16 %v145
    %v2053 = vunpack.c.l.b16 %v146
    %v2054 = vunpack.c.h.b16 %v146
    %v2055 = vunpack.c.l.b16 %v147
    %v2056 = vunpack.c.h.b16 %v147
    %v2057 = vunpack.c.l.b16 %v148
    %v2058 = vunpack.c.h.b16 %v148
    %v2059 = vunpack.c.l.b16 %v149
    %v2060 = vunpack.c.h.b16 %v149
    %v2061 = vunpack.c.l.b16 %v150
    %v2062 = vunpack.c.h.b16 %v150
    %v2063 = vunpack.c.l.b16 %v151
    %v2064 = vunpack.c.h.b16 %v151
    %v2065 = vunpack.c.l.b16 %v152
    %v2066 = vunpack.c.h.b16 %v152
    %v2067 = vunpack.c.l.b16 %v153
    %v2068 = vunpack.c.h.b16 %v153
    %v2069 = vunpack.c.l.b16 %v154
    %v2070 = vunpack.c.h.b16 %v154
    %v2071 = vunpack.c.l.b16 %v155
    %v2072 = vunpack.c.h.b16 %v155
    %v2073 = vunpack.c.l.b16 %v156
    %v2074 = vunpack.c.h.b16 %v156
    %v2075 = vunpack.c.l.b16 %v157
    %v2076 = vunpack.c.h.b16 %v157
    %v2077 = vunpack.c.l.b16 %v158
    %v2078 = vunpack.c.h.b16 %v158
    %v2079 = vunpack.c.l.b16 %v159
    %v2080 = vunpack.c.h.b16 %v159
    %v2081 = vunpack.c.l.b16 %v160
    %v2082 = vunpack.c.h.b16 %v160
    %v2083 = vunpack.c.l.b16 %v161
    %v2084 = vunpack.c.h.b16 %v161
    %v2085 = vunpack.c.l.b16 %v162
    %v2086 = vunpack.c.h.b16 %v162
    %v2087 = vunpack.c.l.b16 %v163
    %v2088 = vunpack.c.h.b16 %v163
    %v2089 = vunpack.c.l.b16 %v164
    %v2090 = vunpack.c.h.b16 %v164
    %v2091 = vunpack.c.l.b16 %v165
    %v2092 = vunpack.c.h.b16 %v165
    %v2093 = vunpack.c.l.b16 %v166
    %v2094 = vunpack.c.h.b16 %v166
    %v2095 = vunpack.c.l.b16 %v167
    %v2096 = vunpack.c.h.b16 %v167
    %v2097 = vunpack.c.l.b16 %v168
    %v2098 = vunpack.c.h.b16 %v168
    %v2099 = vunpack.c.l.b16 %v169
    %v2100 = vunpack.c.h.b16 %v169
    %v2101 = vunpack.c.l.b16 %v170
    %v2102 = vunpack.c.h.b16 %v170
    %v2103 = vunpack.c.l.b16 %v171
    %v2104 = vunpack.c.h.b16 %v171
    %v2105 = vunpack.c.l.b16 %v172
    %v2106 = vunpack.c.h.b16 %v172
    %v2107 = vunpack.c.l.b16 %v173
    %v2108 = vunpack.c.h.b16 %v173
    %v2109 = vunpack.c.l.b16 %v174
    %v2110 = vunpack.c.h.b16 %v174
    %v2111 = vunpack.c.l.b16 %v175
    %v2112 = vunpack.c.h.b16 %v175
    %v2113 = vunpack.c.l.b16 %v176
    %v2114 = vunpack.c.h.b16 %v176
    %v2115 = vunpack.c.l.b16 %v177
    %v2116 = vunpack.c.h.b16 %v177
    %v2117 = vunpack.c.l.b16 %v178
    %v2118 = vunpack.c.h.b16 %v178
    %v2119 = vunpack.c.l.b16 %v179
    %v2120 = vunpack.c.h.b16 %v179
    %v2121 = vunpack.c.l.b16 %v180
    %v2122 = vunpack.c.h.b16 %v180
    %v2123 = vunpack.c.l.b16 %v181
    %v2124 = vunpack.c.h.b16 %v181
    %v2125 = vunpack.c.l.b16 %v182
    %v2126 = vunpack.c.h.b16 %v182
    %v2127 = vunpack.c.l.b16 %v183
    %v2128 = vunpack.c.h.b16 %v183
    %v2129 = vunpack.c.l.b16 %v184
    %v2130 = vunpack.c.h.b16 %v184
    %v2131 = vunpack.c.l.b16 %v185
    %v2132 = vunpack.c.h.b16 %v185
    %v2133 = vunpack.c.l.b16 %v186
    %v2134 = vunpack.c.h.b16 %v186
    %v2135 = vunpack.c.l.b16 %v187
    %v2136 = vunpack.c.h.b16 %v187
    %v2137 = vunpack.c.l.b16 %v188
    %v2138 = vunpack.c.h.b16 %v188
    %v2139 = vunpack.c.l.b16 %v189
    %v2140 = vunpack.c.h.b16 %v189
    %v2141 = vunpack.c.l.b16 %v190
    %v2142 = vunpack.c.h.b16 %v190
    %v2143 = vunpack.c.l.b16 %v191
    %v2144 = vunpack.c.h.b16 %v191
    %v2145 = vunpack.c.l.b16 %v192
    %v2146 = vunpack.c.h.b16 %v192
    %v2147 = vunpack.c.l.b16 %v193
    %v2148 = vunpack.c.h.b16 %v193
    %v2149 = vunpack.c.l.b16 %v194
    %v2150 = vunpack.c.h.b16 %v194
    %v2151 = vunpack.c.l.b16 %v195
    %v2152 = vunpack.c.h.b16 %v195
    %v2153 = vunpack.c.l.b16 %v196
    %v2154 = vunpack.c.h.b16 %v196
    %v2155 = vunpack.c.l.b16 %v197
    %v2156 = vunpack.c.h.b16 %v197
    %v2157 = vunpack.c.l.b16 %v198
    %v2158 = vunpack.c.h.b16 %v198
    %v2159 = vunpack.c.l.b16 %v199
    %v2160 = vunpack.c.h.b16 %v199
    %v2161 = vunpack.c.l.b16 %v200
    %v2162 = vunpack.c.h.b16 %v200
    %v2163 = vunpack.c.l.b16 %v201
    %v2164 = vunpack.c.h.b16 %v201
    %v2165 = vunpack.c.l.b16 %v202
    %v2166 = vunpack.c.h.b16 %v202
    %v2167 = vunpack.c.l.b16 %v203
    %v2168 = vunpack.c.h.b16 %v203
    %v2169 = vunpack.c.l.b16 %v204
    %v2170 = vunpack.c.h.b16 %v204
    %v2171 = vunpack.c.l.b16 %v205
    %v2172 = vunpack.c.h.b16 %v205
    %v2173 = vunpack.c.l.b16 %v206
    %v2174 = vunpack.c.h.b16 %v206
    %v2175 = vunpack.c.l.b16 %v207
    %v2176 = vunpack.c.h.b16 %v207
    %v2177 = vunpack.c.l.b16 %v208
    %v2178 = vunpack.c.h.b16 %v208
    %v2179 = vunpack.c.l.b16 %v209
    %v2180 = vunpack.c.h.b16 %v209
    %v2181 = vunpack.c.l.b16 %v210
    %v2182 = vunpack.c.h.b16 %v210
    %v2183 = vunpack.c.l.b16 %v211
    %v2184 = vunpack.c.h.b16 %v211
    %v2185 = vunpack.c.l.b16 %v212
    %v2186 = vunpack.c.h.b16 %v212
    %v2187 = vunpack.c.l.b16 %v213
    %v2188 = vunpack.c.h.b16 %v213
    %v2189 = vunpack.c.l.b16 %v214
    %v2190 = vunpack.c.h.b16 %v214
    %v2191 = vunpack.c.l.b16 %v215
    %v2192 = vunpack.c.h.b16 %v215
    %v2193 = vunpack.c.l.b16 %v216
    %v2194 = vunpack.c.h.b16 %v216
    %v2195 = vunpack.c.l.b16 %v217
    %v2196 = vunpack.c.h.b16 %v217
    %v2197 = vunpack.c.l.b16 %v218
    %v2198 = vunpack.c.h.b16 %v218
    %v2199 = vunpack.c.l.b16 %v219
    %v2200 = vunpack.c.h.b16 %v219
    %v2201 = vunpack.c.l.b16 %v220
    %v2202 = vunpack.c.h.b16 %v220
    %v2203 = vunpack.c.l.b16 %v221
    %v2204 = vunpack.c.h.b16 %v221
    %v2205 = vunpack.c.l.b16 %v222
    %v2206 = vunpack.c.h.b16 %v222
    %v2207 = vunpack.c.l.b16 %v223
    %v2208 = vunpack.c.h.b16 %v223
    %v2209 = vunpack.c.l.b16 %v224
    %v2210 = vunpack.c.h.b16 %v224
    %v2211 = vunpack.c.l.b16 %v225
    %v2212 = vunpack.c.h.b16 %v225
    %v2213 = vunpack.c.l.b16 %v226
    %v2214 = vunpack.c.h.b16 %v226
    %v2215 = vunpack.c.l.b16 %v227
    %v2216 = vunpack.c.h.b16 %v227
    %v2217 = vunpack.c.l.b16 %v228
    %v2218 = vunpack.c.h.b16 %v228
    %v2219 = vunpack.c.l.b16 %v229
    %v2220 = vunpack.c.h.b16 %v229
    %v2221 = vunpack.c.l.b16 %v230
    %v2222 = vunpack.c.h.b16 %v230
    %v2223 = vunpack.c.l.b16 %v231
    %v2224 = vunpack.c.h.b16 %v231
    %v2225 = vunpack.c.l.b16 %v232
    %v2226 = vunpack.c.h.b16 %v232
    %v2227 = vunpack.c.l.b16 %v233
    %v2228 = vunpack.c.h.b16 %v233
    %v2229 = vunpack.c.l.b16 %v234
    %v2230 = vunpack.c.h.b16 %v234
    %v2231 = vunpack.c.l.b16 %v235
    %v2232 = vunpack.c.h.b16 %v235
    %v2233 = vunpack.c.l.b16 %v236
    %v2234 = vunpack.c.h.b16 %v236
    %v2235 = vunpack.c.l.b16 %v237
    %v2236 = vunpack.c.h.b16 %v237
    %v2237 = vunpack.c.l.b16 %v238
    %v2238 = vunpack.c.h.b16 %v238
    %v2239 = vunpack.c.l.b16 %v239
    %v2240 = vunpack.c.h.b16 %v239
    %v2241 = vunpack.c.l.b16 %v240
    %v2242 = vunpack.c.h.b16 %v240
    %v2243 = vunpack.c.l.b16 %v241
    %v2244 = vunpack.c.h.b16 %v241
    %v2245 = vunpack.c.l.b16 %v242
    %v2246 = vunpack.c.h.b16 %v242
    %v2247 = vunpack.c.l.b16 %v243
    %v2248 = vunpack.c.h.b16 %v243
    %v2249 = vunpack.c.l.b16 %v244
    %v2250 = vunpack.c.h.b16 %v244
    %v2251 = vunpack.c.l.b16 %v245
    %v2252 = vunpack.c.h.b16 %v245
    %v2253 = vunpack.c.l.b16 %v246
    %v2254 = vunpack.c.h.b16 %v246
    %v2255 = vunpack.c.l.b16 %v247
    %v2256 = vunpack.c.h.b16 %v247
    %v2257 = vunpack.c.l.b16 %v248
    %v2258 = vunpack.c.h.b16 %v248
    %v2259 = vunpack.c.l.b16 %v249
    %v2260 = vunpack.c.h.b16 %v249
    %v2261 = vunpack.c.l.b16 %v250
    %v2262 = vunpack.c.h.b16 %v250
    %v2263 = vunpack.c.l.b16 %v251
    %v2264 = vunpack.c.h.b16 %v251
    %v2265 = vunpack.c.l.b16 %v252
    %v2266 = vunpack.c.h.b16 %v252
    %v2267 = vunpack.c.l.b16 %v253
    %v2268 = vunpack.c.h.b16 %v253
    %v2269 = vunpack.c.l.b16 %v254
    %v2270 = vunpack.c.h.b16 %v254
    %v2271 = vunpack.c.l.b16 %v255
    %v2272 = vunpack.c.h.b16 %v255
    %v2273 = vunpack.c.l.b16 %v256
    %v2274 = vunpack.c.h.b16 %v256
    %v2275 = vunpack.c.l.b16 %v257
    %v2276 = vunpack.c.h.b16 %v257
    %v2277 = vunpack.c.l.b16 %v258
    %v2278 = vunpack.c.h.b16 %v258
    %v2279 = vunpack.c.l.b16 %v259
    %v2280 = vunpack.c.h.b16 %v259
    %v2281 = vunpack.c.l.b16 %v260
    %v2282 = vunpack.c.h.b16 %v260
    %v2283 = vunpack.c.l.b16 %v261
    %v2284 = vunpack.c.h.b16 %v261
    %v2285 = vunpack.c.l.b16 %v262
    %v2286 = vunpack.c.h.b16 %v262
    %v2287 = vunpack.c.l.b16 %v263
    %v2288 = vunpack.c.h.b16 %v263
    %v2289 = vunpack.c.l.b16 %v264
    %v2290 = vunpack.c.h.b16 %v264
    %v2291 = vunpack.c.l.b16 %v265
    %v2292 = vunpack.c.h.b16 %v265
    %v2293 = vunpack.c.l.b16 %v266
    %v2294 = vunpack.c.h.b16 %v266
    %v2295 = vunpack.c.l.b16 %v267
    %v2296 = vunpack.c.h.b16 %v267
    %v2297 = vunpack.c.l.b16 %v268
    %v2298 = vunpack.c.h.b16 %v268
    %v2299 = vunpack.c.l.b16 %v269
    %v2300 = vunpack.c.h.b16 %v269
    %v2301 = vunpack.c.l.b16 %v270
    %v2302 = vunpack.c.h.b16 %v270
    %v2303 = vunpack.c.l.b16 %v271
    %v2304 = vunpack.c.h.b16 %v271
    %v2305 = vunpack.c.l.b16 %v272
    %v2306 = vunpack.c.h.b16 %v272
    %v2307 = vunpack.c.l.b16 %v273
    %v2308 = vunpack.c.h.b16 %v273
    %v2309 = vunpack.c.l.b16 %v274
    %v2310 = vunpack.c.h.b16 %v274
    %v2311 = vunpack.c.l.b16 %v275
    %v2312 = vunpack.c.h.b16 %v275
    %v2313 = vunpack.c.l.b16 %v276
    %v2314 = vunpack.c.h.b16 %v276
    %v2315 = vunpack.c.l.b16 %v277
    %v2316 = vunpack.c.h.b16 %v277
    %v2317 = vunpack.c.l.b16 %v278
    %v2318 = vunpack.c.h.b16 %v278
    %v2319 = vunpack.c.l.b16 %v279
    %v2320 = vunpack.c.h.b16 %v279
    %v2321 = vunpack.c.l.b16 %v280
    %v2322 = vunpack.c.h.b16 %v280
    %v2323 = vunpack.c.l.b16 %v281
    %v2324 = vunpack.c.h.b16 %v281
    %v2325 = vunpack.c.l.b16 %v282
    %v2326 = vunpack.c.h.b16 %v282
    %v2327 = vunpack.c.l.b16 %v283
    %v2328 = vunpack.c.h.b16 %v283
    %v2329 = vunpack.c.l.b16 %v284
    %v2330 = vunpack.c.h.b16 %v284
    %v2331 = vunpack.c.l.b16 %v285
    %v2332 = vunpack.c.h.b16 %v285
    %v2333 = vunpack.c.l.b16 %v286
    %v2334 = vunpack.c.h.b16 %v286
    %v2335 = vunpack.c.l.b16 %v287
    %v2336 = vunpack.c.h.b16 %v287
    %v2337 = vunpack.c.l.b16 %v288
    %v2338 = vunpack.c.h.b16 %v288
    %v2339 = vunpack.c.l.b16 %v289
    %v2340 = vunpack.c.h.b16 %v289
    %v2341 = vunpack.c.l.b16 %v290
    %v2342 = vunpack.c.h.b16 %v290
    %v2343 = vunpack.c.l.b16 %v291
    %v2344 = vunpack.c.h.b16 %v291
    %v2345 = vunpack.c.l.b16 %v292
    %v2346 = vunpack.c.h.b16 %v292
    %v2347 = vunpack.c.l.b16 %v293
    %v2348 = vunpack.c.h.b16 %v293
    %v2349 = vunpack.c.l.b16 %v294
    %v2350 = vunpack.c.h.b16 %v294
    %v2351 = vunpack.c.l.b16 %v295
    %v2352 = vunpack.c.h.b16 %v295
    %v2353 = vunpack.c.l.b16 %v296
    %v2354 = vunpack.c.h.b16 %v296
    %v2355 = vunpack.c.l.b16 %v297
    %v2356 = vunpack.c.h.b16 %v297
    %v2357 = vunpack.c.l.b16 %v298
    %v2358 = vunpack.c.h.b16 %v298
    %v2359 = vunpack.c.l.b16 %v299
    %v2360 = vunpack.c.h.b16 %v299
    %v2361 = vunpack.c.l.b16 %v300
    %v2362 = vunpack.c.h.b16 %v300
    %v2363 = vunpack.c.l.b16 %v301
    %v2364 = vunpack.c.h.b16 %v301
    %v2365 = vunpack.c.l.b16 %v302
    %v2366 = vunpack.c.h.b16 %v302
    %v2367 = vunpack.c.l.b16 %v303
    %v2368 = vunpack.c.h.b16 %v303
    %v2369 = vunpack.c.l.b16 %v304
    %v2370 = vunpack.c.h.b16 %v304
    %v2371 = vunpack.c.l.b16 %v305
    %v2372 = vunpack.c.h.b16 %v305
    %v2373 = vunpack.c.l.b16 %v306
    %v2374 = vunpack.c.h.b16 %v306
    %v2375 = vunpack.c.l.b16 %v307
    %v2376 = vunpack.c.h.b16 %v307
    %v2377 = vunpack.c.l.b16 %v308
    %v2378 = vunpack.c.h.b16 %v308
    %v2379 = vunpack.c.l.b16 %v309
    %v2380 = vunpack.c.h.b16 %v309
    %v2381 = vunpack.c.l.b16 %v310
    %v2382 = vunpack.c.h.b16 %v310
    %v2383 = vunpack.c.l.b16 %v311
    %v2384 = vunpack.c.h.b16 %v311
    %v2385 = vunpack.c.l.b16 %v312
    %v2386 = vunpack.c.h.b16 %v312
    %v2387 = vunpack.c.l.b16 %v313
    %v2388 = vunpack.c.h.b16 %v313
    %v2389 = vunpack.c.l.b16 %v314
    %v2390 = vunpack.c.h.b16 %v314
    %v2391 = vunpack.c.l.b16 %v315
    %v2392 = vunpack.c.h.b16 %v315
    %v2393 = vunpack.c.l.b16 %v316
    %v2394 = vunpack.c.h.b16 %v316
    %v2395 = vunpack.c.l.b16 %v317
    %v2396 = vunpack.c.h.b16 %v317
    %v2397 = vpack.c.b16 %v1879, %v1805
    %v2398 = vpack.c.b16 %v1880, %v1806
    %v2399 = vpack.c.b16 %v1881, %v1807
    %v2400 = vpack.c.b16 %v1882, %v1808
    %v2401 = vpack.c.b16 %v1883, %v1809
    %v2402 = vpack.c.b16 %v1884, %v1810
    %v2403 = vpack.c.b16 %v1885, %v1811
    %v2404 = vpack.c.b16 %v1886, %v1812
    %v2405 = vpack.c.b16 %v1887, %v1813
    %v2406 = vpack.c.b16 %v1888, %v1814
    %v2407 = vpack.c.b16 %v1889, %v1815
    %v2408 = vpack.c.b16 %v1890, %v1816
    %v2409 = vpack.c.b16 %v1891, %v1817
    %v2410 = vpack.c.b16 %v1892, %v1818
    %v2411 = vpack.c.b16 %v1893, %v1819
    %v2412 = vpack.c.b16 %v1894, %v1820
    %v2413 = vpack.c.b16 %v1895, %v1821
    %v2414 = vpack.c.b16 %v1896, %v1822
    %v2415 = vpack.c.b16 %v1897, %v1823
    %v2416 = vpack.c.b16 %v1898, %v1824
    %v2417 = vpack.c.b16 %v1899, %v1825
    %v2418 = vpack.c.b16 %v1900, %v1826
    %v2419 = vpack.c.b16 %v1901, %v1827
    %v2420 = vpack.c.b16 %v1902, %v1828
    %v2421 = vpack.c.b16 %v1903, %v1829
    %v2422 = vpack.c.b16 %v1904, %v1830
    %v2423 = vpack.c.b16 %v1905, %v1831
    %v2424 = vpack.c.b16 %v1906, %v1832
    %v2425 = vpack.c.b16 %v1907, %v1833
    %v2426 = vpack.c.b16 %v1908, %v1834
    %v2427 = vpack.c.b16 %v1909, %v1835
    %v2428 = vpack.c.b16 %v1910, %v1836
    %v2429 = vpack.c.b16 %v1911, %v1837
    %v2430 = vpack.c.b16 %v1912, %v1838
    %v2431 = vpack.c.b16 %v1913, %v1839
    %v2432 = vpack.c.b16 %v1914, %v1840
    %v2433 = vpack.c.b16 %v1915, %v1841
    %v2434 = vpack.c.b16 %v1916, %v1842
    %v2435 = vpack.c.b16 %v1917, %v1843
    %v2436 = vpack.c.b16 %v1918, %v1844
    %v2437 = vpack.c.b16 %v1919, %v1845
    %v2438 = vpack.c.b16 %v1920, %v1846
    %v2439 = vpack.c.b16 %v1921, %v1847
    %v2440 = vpack.c.b16 %v1922, %v1848
    %v2441 = vpack.c.b16 %v1923, %v1849
    %v2442 = vpack.c.b16 %v1924, %v1850
    %v2443 = vpack.c.b16 %v1925, %v1851
    %v2444 = vpack.c.b16 %v1926, %v1852
    %v2445 = vpack.c.b16 %v1927, %v1853
    %v2446 = vpack.c.b16 %v1928, %v1854
    %v2447 = vpack.c.b16 %v1929, %v1855
    %v2448 = vpack.c.b16 %v1930, %v1856
    %v2449 = vpack.c.b16 %v1931, %v1857
    %v2450 = vpack.c.b16 %v1932, %v1858
    %v2451 = vpack.c.b16 %v1933, %v1859
    %v2452 = vpack.c.b16 %v1934, %v1860
    %v2453 = vpack.c.b16 %v1935, %v1861
    %v2454 = vpack.c.b16 %v1936, %v1862
    %v2455 = vpack.c.b16 %v1937, %v1863
    %v2456 = vpack.c.b16 %v1938, %v1864
    %v2457 = vpack.c.b16 %v1939, %v1865
    %v2458 = vpack.c.b16 %v1940, %v1866
    %v2459 = vpack.c.b16 %v1941, %v1867
    %v2460 = vpack.c.b16 %v1942, %v1868
    %v2461 = vpack.c.b16 %v1943, %v1869
    %v2462 = vpack.c.b16 %v1944, %v1870
    %v2463 = vpack.c.b16 %v1945, %v1871
    %v2464 = vpack.c.b16 %v1946, %v1872
    %v2465 = vpack.c.b16 %v1947, %v1873
    %v2466 = vpack.c.b16 %v1948, %v1874
    %v2467 = vpack.c.b16 %v1949, %v1875
    %v2468 = vpack.c.b16 %v1950, %v1876
    %v2469 = vpack.c.b16 %v1951, %v1877
    %v2470 = vpack.c.b16 %v1952, %v1878
    %v2471 = vpack.c.b16 %v2027, %v1953
    %v2472 = vpack.c.b16 %v2028, %v1954
    %v2473 = vpack.c.b16 %v2029, %v1955
    %v2474 = vpack.c.b16 %v2030, %v1956
    %v2475 = vpack.c.b16 %v2031, %v1957
    %v2476 = vpack.c.b16 %v2032, %v1958
    %v2477 = vpack.c.b16 %v2033, %v1959
    %v2478 = vpack.c.b16 %v2034, %v1960
    %v2479 = vpack.c.b16 %v2035, %v1961
    %v2480 = vpack.c.b16 %v2036, %v1962
    %v2481 = vpack.c.b16 %v2037, %v1963
    %v2482 = vpack.c.b16 %v2038, %v1964
    %v2483 = vpack.c.b16 %v2039, %v1965
    %v2484 = vpack.c.b16 %v2040, %v1966
    %v2485 = vpack.c.b16 %v2041, %v1967
    %v2486 = vpack.c.b16 %v2042, %v1968
    %v2487 = vpack.c.b16 %v2043, %v1969
    %v2488 = vpack.c.b16 %v2044, %v1970
    %v2489 = vpack.c.b16 %v2045, %v1971
    %v2490 = vpack.c.b16 %v2046, %v1972
    %v2491 = vpack.c.b16 %v2047, %v1973
    %v2492 = vpack.c.b16 %v2048, %v1974
    %v2493 = vpack.c.b16 %v2049, %v1975
    %v2494 = vpack.c.b16 %v2050, %v1976
    %v2495 = vpack.c.b16 %v2051, %v1977
    %v2496 = vpack.c.b16 %v2052, %v1978
    %v2497 = vpack.c.b16 %v2053, %v1979
    %v2498 = vpack.c.b16 %v2054, %v1980
    %v2499 = vpack.c.b16 %v2055, %v1981
    %v2500 = vpack.c.b16 %v2056, %v1982
    %v2501 = vpack.c.b16 %v2057, %v1983
    %v2502 = vpack.c.b16 %v2058, %v1984
    %v2503 = vpack.c.b16 %v2059, %v1985
    %v2504 = vpack.c.b16 %v2060, %v1986
    %v2505 = vpack.c.b16 %v2061, %v1987
    %v2506 = vpack.c.b16 %v2062, %v1988
    %v2507 = vpack.c.b16 %v2063, %v1989
    %v2508 = vpack.c.b16 %v2064, %v1990
    %v2509 = vpack.c.b16 %v2065, %v1991
    %v2510 = vpack.c.b16 %v2066, %v1992
    %v2511 = vpack.c.b16 %v2067, %v1993
    %v2512 = vpack.c.b16 %v2068, %v1994
    %v2513 = vpack.c.b16 %v2069, %v1995
    %v2514 = vpack.c.b16 %v2070, %v1996
    %v2515 = vpack.c.b16 %v2071, %v1997
    %v2516 = vpack.c.b16 %v2072, %v1998
    %v2517 = vpack.c.b16 %v2073, %v1999
    %v2518 = vpack.c.b16 %v2074, %v2000
    %v2519 = vpack.c.b16 %v2075, %v2001
    %v2520 = vpack.c.b16 %v2076, %v2002
    %v2521 = vpack.c.b16 %v2077, %v2003
    %v2522 = vpack.c.b16 %v2078, %v2004
    %v2523 = vpack.c.b16 %v2079, %v2005
    %v2524 = vpack.c.b16 %v2080, %v2006
    %v2525 = vpack.c.b16 %v2081, %v2007
    %v2526 = vpack.c.b16 %v2082, %v2008
    %v2527 = vpack.c.b16 %v2083, %v2009
    %v2528 = vpack.c.b16 %v2084, %v2010
    %v2529 = vpack.c.b16 %v2085, %v2011
    %v2530 = vpack.c.b16 %v2086, %v2012
    %v2531 = vpack.c.b16 %v2087, %v2013
    %v2532 = vpack.c.b16 %v2088, %v2014
    %v2533 = vpack.c.b16 %v2089, %v2015
    %v2534 = vpack.c.b16 %v2090, %v2016
    %v2535 = vpack.c.b16 %v2091, %v2017
    %v2536 = vpack.c.b16 %v2092, %v2018
    %v2537 = vpack.c.b16 %v2093, %v2019
    %v2538 = vpack.c.b16 %v2094, %v2020
    %v2539 = vpack.c.b16 %v2095, %v2021
    %v2540 = vpack.c.b16 %v2096, %v2022
    %v2541 = vpack.c.b16 %v2097, %v2023
    %v2542 = vpack.c.b16 %v2098, %v2024
    %v2543 = vpack.c.b16 %v2099, %v2025
    %v2544 = vpack.c.b16 %v2100, %v2026
    %v2545 = vpack.c.b16 %v2175, %v2101
    %v2546 = vpack.c.b16 %v2176, %v2102
    %v2547 = vpack.c.b16 %v2177, %v2103
    %v2548 = vpack.c.b16 %v2178, %v2104
    %v2549 = vpack.c.b16 %v2179, %v2105
    %v2550 = vpack.c.b16 %v2180, %v2106
    %v2551 = vpack.c.b16 %v2181, %v2107
    %v2552 = vpack.c.b16 %v2182, %v2108
    %v2553 = vpack.c.b16 %v2183, %v2109
    %v2554 = vpack.c.b16 %v2184, %v2110
    %v2555 = vpack.c.b16 %v2185, %v2111
    %v2556 = vpack.c.b16 %v2186, %v2112
    %v2557 = vpack.c.b16 %v2187, %v2113
    %v2558 = vpack.c.b16 %v2188, %v2114
    %v2559 = vpack.c.b16 %v2189, %v2115
    %v2560 = vpack.c.b16 %v2190, %v2116
    %v2561 = vpack.c.b16 %v2191, %v2117
    %v2562 = vpack.c.b16 %v2192, %v2118
    %v2563 = vpack.c.b16 %v2193, %v2119
    %v2564 = vpack.c.b16 %v2194, %v2120
    %v2565 = vpack.c.b16 %v2195, %v2121
    %v2566 = vpack.c.b16 %v2196, %v2122
    %v2567 = vpack.c.b16 %v2197, %v2123
    %v2568 = vpack.c.b16 %v2198, %v2124
    %v2569 = vpack.c.b16 %v2199, %v2125
    %v2570 = vpack.c.b16 %v2200, %v2126
    %v2571 = vpack.c.b16 %v2201, %v2127
    %v2572 = vpack.c.b16 %v2202, %v2128
    %v2573 = vpack.c.b16 %v2203, %v2129
    %v2574 = vpack.c.b16 %v2204, %v2130
    %v2575 = vpack.c.b16 %v2205, %v2131
    %v2576 = vpack.c.b16 %v2206, %v2132
    %v2577 = vpack.c.b16 %v2207, %v2133
    %v2578 = vpack.c.b16 %v2208, %v2134
    %v2579 = vpack.c.b16 %v2209, %v2135
    %v2580 = vpack.c.b16 %v2210, %v2136
    %v2581 = vpack.c.b16 %v2211, %v2137
    %v2582 = vpack.c.b16 %v2212, %v2138
    %v2583 = vpack.c.b16 %v2213, %v2139
    %v2584 = vpack.c.b16 %v2214, %v2140
    %v2585 = vpack.c.b16 %v2215, %v2141
    %v2586 = vpack.c.b16 %v2216, %v2142
    %v2587 = vpack.c.b16 %v2217, %v2143
    %v2588 = vpack.c.b16 %v2218, %v2144
    %v2589 = vpack.c.b16 %v2219, %v2145
    %v2590 = vpack.c.b16 %v2220, %v2146
    %v2591 = vpack.c.b16 %v2221, %v2147
    %v2592 = vpack.c.b16 %v2222, %v2148
    %v2593 = vpack.c.b16 %v2223, %v2149
    %v2594 = vpack.c.b16 %v2224, %v2150
    %v2595 = vpack.c.b16 %v2225, %v2151
    %v2596 = vpack.c.b16 %v2226, %v2152
    %v2597 = vpack.c.b16 %v2227, %v2153
    %v2598 = vpack.c.b16 %v2228, %v2154
    %v2599 = vpack.c.b16 %v2229, %v2155
    %v2600 = vpack.c.b16 %v2230, %v2156
    %v2601 = vpack.c.b16 %v2231, %v2157
    %v2602 = vpack.c.b16 %v2232, %v2158
    %v2603 = vpack.c.b16 %v2233, %v2159
    %v2604 = vpack.c.b16 %v2234, %v2160
    %v2605 = vpack.c.b16 %v2235, %v2161
    %v2606 = vpack.c.b16 %v2236, %v2162
    %v2607 = vpack.c.b16 %v2237, %v2163
    %v2608 = vpack.c.b16 %v2238, %v2164
    %v2609 = vpack.c.b16 %v2239, %v2165
    %v2610 = vpack.c.b16 %v2240, %v2166
    %v2611 = vpack.c.b16 %v2241, %v2167
    %v2612 = vpack.c.b16 %v2242, %v2168
    %v2613 = vpack.c.b16 %v2243, %v2169
    %v2614 = vpack.c.b16 %v2244, %v2170
    %v2615 = vpack.c.b16 %v2245, %v2171
    %v2616 = vpack.c.b16 %v2246, %v2172
    %v2617 = vpack.c.b16 %v2247, %v2173
    %v2618 = vpack.c.b16 %v2248, %v2174
    %v2619 = vpack.c.b16 %v2323, %v2249
    %v2620 = vpack.c.b16 %v2324, %v2250
    %v2621 = vpack.c.b16 %v2325, %v2251
    %v2622 = vpack.c.b16 %v2326, %v2252
    %v2623 = vpack.c.b16 %v2327, %v2253
    %v2624 = vpack.c.b16 %v2328, %v2254
    %v2625 = vpack.c.b16 %v2329, %v2255
    %v2626 = vpack.c.b16 %v2330, %v2256
    %v2627 = vpack.c.b16 %v2331, %v2257
    %v2628 = vpack.c.b16 %v2332, %v2258
    %v2629 = vpack.c.b16 %v2333, %v2259
    %v2630 = vpack.c.b16 %v2334, %v2260
    %v2631 = vpack.c.b16 %v2335, %v2261
    %v2632 = vpack.c.b16 %v2336, %v2262
    %v2633 = vpack.c.b16 %v2337, %v2263
    %v2634 = vpack.c.b16 %v2338, %v2264
    %v2635 = vpack.c.b16 %v2339, %v2265
    %v2636 = vpack.c.b16 %v2340, %v2266
    %v2637 = vpack.c.b16 %v2341, %v2267
    %v2638 = vpack.c.b16 %v2342, %v2268
    %v2639 = vpack.c.b16 %v2343, %v2269
    %v2640 = vpack.c.b16 %v2344, %v2270
    %v2641 = vpack.c.b16 %v2345, %v2271
    %v2642 = vpack.c.b16 %v2346, %v2272
    %v2643 = vpack.c.b16 %v2347, %v2273
    %v2644 = vpack.c.b16 %v2348, %v2274
    %v2645 = vpack.c.b16 %v2349, %v2275
    %v2646 = vpack.c.b16 %v2350, %v2276
    %v2647 = vpack.c.b16 %v2351, %v2277
    %v2648 = vpack.c.b16 %v2352, %v2278
    %v2649 = vpack.c.b16 %v2353, %v2279
    %v2650 = vpack.c.b16 %v2354, %v2280
    %v2651 = vpack.c.b16 %v2355, %v2281
    %v2652 = vpack.c.b16 %v2356, %v2282
    %v2653 = vpack.c.b16 %v2357, %v2283
    %v2654 = vpack.c.b16 %v2358, %v2284
    %v2655 = vpack.c.b16 %v2359, %v2285
    %v2656 = vpack.c.b16 %v2360, %v2286
    %v2657 = vpack.c.b16 %v2361, %v2287
    %v2658 = vpack.c.b16 %v2362, %v2288
    %v2659 = vpack.c.b16 %v2363, %v2289
    %v2660 = vpack.c.b16 %v2364, %v2290
    %v2661 = vpack.c.b16 %v2365, %v2291
    %v2662 = vpack.c.b16 %v2366, %v2292
    %v2663 = vpack.c.b16 %v2367, %v2293
    %v2664 = vpack.c.b16 %v2368, %v2294
    %v2665 = vpack.c.b16 %v2369, %v2295
    %v2666 = vpack.c.b16 %v2370, %v2296
    %v2667 = vpack.c.b16 %v2371, %v2297
    %v2668 = vpack.c.b16 %v2372, %v2298
    %v2669 = vpack.c.b16 %v2373, %v2299
    %v2670 = vpack.c.b16 %v2374, %v2300
    %v2671 = vpack.c.b16 %v2375, %v2301
    %v2672 = vpack.c.b16 %v2376, %v2302
    %v2673 = vpack.c.b16 %v2377, %v2303
    %v2674 = vpack.c.b16 %v2378, %v2304
    %v2675 = vpack.c.b16 %v2379, %v2305
    %v2676 = vpack.c.b16 %v2380, %v2306
    %v2677 = vpack.c.b16 %v2381, %v2307
    %v2678 = vpack.c.b16 %v2382, %v2308
    %v2679 = vpack.c.b16 %v2383, %v2309
    %v2680 = vpack.c.b16 %v2384, %v2310
    %v2681 = vpack.c.b16 %v2385, %v2311
    %v2682 = vpack.c.b16 %v2386, %v2312
    %v2683 = vpack.c.b16 %v2387, %v2313
    %v2684 = vpack.c.b16 %v2388, %v2314
    %v2685 = vpack.c.b16 %v2389, %v2315
    %v2686 = vpack.c.b16 %v2390, %v2316
    %v2687 = vpack.c.b16 %v2391, %v2317
    %v2688 = vpack.c.b16 %v2392, %v2318
    %v2689 = vpack.c.b16 %v2393, %v2319
    %v2690 = vpack.c.b16 %v2394, %v2320
    %v2691 = vpack.c.b16 %v2395, %v2321
    %v2692 = vpack.c.b16 %v2396, %v2322
    %v4173 = vunpack.c.l.b16 %v318
    %v4174 = vunpack.c.l.b16 %v319
    %v4175 = vunpack.c.l.b16 %v320
    %v4176 = vunpack.c.l.b16 %v321
    %v4177 = vunpack.c.l.b16 %v322
    %v4178 = vunpack.c.l.b16 %v323
    %v4179 = vunpack.c.l.b16 %v324
    %v4180 = vunpack.c.l.b16 %v325
    %v4181 = vunpack.c.l.b16 %v326
    %v4182 = vunpack.c.l.b16 %v327
    %v4183 = vunpack.c.l.b16 %v328
    %v4184 = vunpack.c.l.b16 %v329
    %v4185 = vunpack.c.l.b16 %v330
    %v4186 = vunpack.c.l.b16 %v331
    %v4187 = vunpack.c.l.b16 %v332
    %v4188 = vunpack.c.l.b16 %v333
    %v4189 = vunpack.c.l.b16 %v334
    %v4190 = vunpack.c.l.b16 %v335
    %v4191 = vunpack.c.l.b16 %v336
    %v4192 = vunpack.c.l.b16 %v337
    %v4193 = vunpack.c.l.b16 %v338
    %v4194 = vunpack.c.l.b16 %v339
    %v4195 = vunpack.c.l.b16 %v340
    %v4196 = vunpack.c.l.b16 %v341
    %v4197 = vunpack.c.l.b16 %v342
    %v4198 = vunpack.c.l.b16 %v343
    %v4199 = vunpack.c.l.b16 %v344
    %v4200 = vunpack.c.l.b16 %v345
    %v4201 = vunpack.c.l.b16 %v346
    %v4202 = vunpack.c.l.b16 %v347
    %v4203 = vunpack.c.l.b16 %v348
    %v4204 = vunpack.c.l.b16 %v349
    %v4205 = vunpack.c.l.b16 %v350
    %v4206 = vunpack.c.l.b16 %v351
    %v4207 = vunpack.c.l.b16 %v352
    %v4208 = vunpack.c.l.b16 %v353
    %v4209 = vunpack.c.l.b16 %v354
    %v4210 = vunpack.c.l.b16 %v355
    %v4211 = vunpack.c.l.b16 %v356
    %v4212 = vunpack.c.l.b16 %v357
    %v4213 = vunpack.c.l.b16 %v358
    %v4214 = vunpack.c.l.b16 %v359
    %v4215 = vunpack.c.l.b16 %v360
    %v4216 = vunpack.c.l.b16 %v361
    %v4217 = vunpack.c.l.b16 %v362
    %v4218 = vunpack.c.l.b16 %v363
    %v4219 = vunpack.c.l.b16 %v364
    %v4220 = vunpack.c.l.b16 %v365
    %v4221 = vunpack.c.l.b16 %v366
    %v4222 = vunpack.c.l.b16 %v367
    %v4223 = vunpack.c.l.b16 %v368
    %v4224 = vunpack.c.l.b16 %v369
    %v4225 = vunpack.c.l.b16 %v370
    %v4226 = vunpack.c.l.b16 %v371
    %v4227 = vunpack.c.l.b16 %v372
    %v4228 = vunpack.c.l.b16 %v373
    %v4229 = vunpack.c.l.b16 %v374
    %v4230 = vunpack.c.l.b16 %v375
    %v4231 = vunpack.c.l.b16 %v376
    %v4232 = vunpack.c.l.b16 %v377
    %v4233 = vunpack.c.l.b16 %v378
    %v4234 = vunpack.c.l.b16 %v379
    %v4235 = vunpack.c.l.b16 %v380
    %v4236 = vunpack.c.l.b16 %v381
    %v4237 = vunpack.c.l.b16 %v382
    %v4238 = vunpack.c.l.b16 %v383
    %v4239 = vunpack.c.l.b16 %v384
    %v4240 = vunpack.c.l.b16 %v385
    %v4241 = vunpack.c.l.b16 %v386
    %v4242 = vunpack.c.l.b16 %v387
    %v4243 = vunpack.c.l.b16 %v388
    %v4244 = vunpack.c.l.b16 %v389
    %v4245 = vunpack.c.l.b16 %v390
    %v4246 = vunpack.c.l.b16 %v391
    %v4247 = vunpack.c.l.b16 %v392
    %v4248 = vunpack.c.l.b16 %v393
    %v4249 = vunpack.c.l.b16 %v394
    %v4250 = vunpack.c.l.b16 %v395
    %v4251 = vunpack.c.l.b16 %v396
    %v4252 = vunpack.c.l.b16 %v397
    %v4253 = vunpack.c.l.b16 %v398
    %v4254 = vunpack.c.l.b16 %v399
    %v4255 = vunpack.c.l.b16 %v400
    %v4256 = vunpack.c.l.b16 %v401
    %v4257 = vunpack.c.l.b16 %v402
    %v4258 = vunpack.c.l.b16 %v403
    %v4259 = vunpack.c.l.b16 %v404
    %v4260 = vunpack.c.l.b16 %v405
    %v4261 = vunpack.c.l.b16 %v406
    %v4262 = vunpack.c.l.b16 %v407
    %v4263 = vunpack.c.l.b16 %v408
    %v4264 = vunpack.c.l.b16 %v409
    %v4265 = vunpack.c.l.b16 %v410
    %v4266 = vunpack.c.l.b16 %v411
    %v4267 = vunpack.c.l.b16 %v412
    %v4268 = vunpack.c.l.b16 %v413
    %v4269 = vunpack.c.l.b16 %v414
    %v4270 = vunpack.c.l.b16 %v415
    %v4271 = vunpack.c.l.b16 %v416
    %v4272 = vunpack.c.l.b16 %v417
    %v4273 = vunpack.c.l.b16 %v418
    %v4274 = vunpack.c.l.b16 %v419
    %v4275 = vunpack.c.l.b16 %v420
    %v4276 = vunpack.c.l.b16 %v421
    %v4277 = vunpack.c.l.b16 %v422
    %v4278 = vunpack.c.l.b16 %v423
    %v4279 = vunpack.c.l.b16 %v424
    %v4280 = vunpack.c.l.b16 %v425
    %v4281 = vunpack.c.l.b16 %v426
    %v4282 = vunpack.c.l.b16 %v427
    %v4283 = vunpack.c.l.b16 %v428
    %v4284 = vunpack.c.l.b16 %v429
    %v4285 = vunpack.c.l.b16 %v430
    %v4286 = vunpack.c.l.b16 %v431
    %v4287 = vunpack.c.l.b16 %v432
    %v4288 = vunpack.c.l.b16 %v433
    %v4289 = vunpack.c.l.b16 %v434
    %v4290 = vunpack.c.l.b16 %v435
    %v4291 = vunpack.c.l.b16 %v436
    %v4292 = vunpack.c.l.b16 %v437
    %v4293 = vunpack.c.l.b16 %v438
    %v4294 = vunpack.c.l.b16 %v439
    %v4295 = vunpack.c.l.b16 %v440
    %v4296 = vunpack.c.l.b16 %v441
    %v4297 = vunpack.c.l.b16 %v442
    %v4298 = vunpack.c.l.b16 %v443
    %v4299 = vunpack.c.l.b16 %v444
    %v4300 = vunpack.c.l.b16 %v445
    %v4301 = vunpack.c.l.b16 %v446
    %v4302 = vunpack.c.l.b16 %v447
    %v4303 = vunpack.c.l.b16 %v448
    %v4304 = vunpack.c.l.b16 %v449
    %v4305 = vunpack.c.l.b16 %v450
    %v4306 = vunpack.c.l.b16 %v451
    %v4307 = vunpack.c.l.b16 %v452
    %v4308 = vunpack.c.l.b16 %v453
    %v4309 = vunpack.c.l.b16 %v454
    %v4310 = vunpack.c.l.b16 %v455
    %v4311 = vunpack.c.l.b16 %v456
    %v4312 = vunpack.c.l.b16 %v457
    %v4313 = vunpack.c.l.b16 %v458
    %v4314 = vunpack.c.l.b16 %v459
    %v4315 = vunpack.c.l.b16 %v460
    %v4316 = vunpack.c.l.b16 %v461
    %v4317 = vunpack.c.l.b16 %v462
    %v4318 = vunpack.c.l.b16 %v463
    %v4319 = vunpack.c.l.b16 %v464
    %v4320 = vunpack.c.l.b16 %v465
    %v4321 = vunpack.c.l.b16 %v466
    %v4322 = vunpack.c.l.b16 %v467
    %v4323 = vunpack.c.l.b16 %v468
    %v4324 = vunpack.c.l.b16 %v469
    %v4325 = vunpack.c.l.b16 %v470
    %v4326 = vunpack.c.l.b16 %v471
    %v4327 = vunpack.c.l.b16 %v472
    %v4328 = vunpack.c.l.b16 %v473
    %v4329 = vunpack.c.l.b16 %v474
    %v4330 = vunpack.c.l.b16 %v475
    %v4331 = vunpack.c.l.b16 %v476
    %v4332 = vunpack.c.l.b16 %v477
    %v4333 = vunpack.c.l.b16 %v478
    %v4334 = vunpack.c.l.b16 %v479
    %v4335 = vunpack.c.l.b16 %v480
    %v4336 = vunpack.c.l.b16 %v481
    %v4337 = vunpack.c.l.b16 %v482
    %v4338 = vunpack.c.l.b16 %v483
    %v4339 = vunpack.c.l.b16 %v484
    %v4340 = vunpack.c.l.b16 %v485
    %v4341 = vunpack.c.l.b16 %v486
    %v4342 = vunpack.c.l.b16 %v487
    %v4343 = vunpack.c.l.b16 %v488
    %v4344 = vunpack.c.l.b16 %v489
    %v4345 = vunpack.c.l.b16 %v490
    %v4346 = vunpack.c.l.b16 %v491
    %v4347 = vunpack.c.l.b16 %v492
    %v4348 = vunpack.c.l.b16 %v493
    %v4349 = vunpack.c.l.b16 %v494
    %v4350 = vunpack.c.l.b16 %v495
    %v4351 = vunpack.c.l.b16 %v496
    %v4352 = vunpack.c.l.b16 %v497
    %v4353 = vunpack.c.l.b16 %v498
    %v4354 = vunpack.c.l.b16 %v499
    %v4355 = vunpack.c.l.b16 %v500
    %v4356 = vunpack.c.l.b16 %v501
    %v4357 = vunpack.c.l.b16 %v502
    %v4358 = vunpack.c.l.b16 %v503
    %v4359 = vunpack.c.l.b16 %v504
    %v4360 = vunpack.c.l.b16 %v505
    %v4361 = vunpack.c.l.b16 %v506
    %v4362 = vunpack.c.l.b16 %v507
    %v4363 = vunpack.c.l.b16 %v508
    %v4364 = vunpack.c.l.b16 %v509
    %v4365 = vunpack.c.l.b16 %v510
    %v4366 = vunpack.c.l.b16 %v511
    %v4367 = vunpack.c.l.b16 %v512
    %v4368 = vunpack.c.l.b16 %v513
    %v4369 = vunpack.c.l.b16 %v514
    %v4370 = vunpack.c.l.b16 %v515
    %v4371 = vunpack.c.l.b16 %v516
    %v4372 = vunpack.c.l.b16 %v517
    %v4373 = vunpack.c.l.b16 %v518
    %v4374 = vunpack.c.l.b16 %v519
    %v4375 = vunpack.c.l.b16 %v520
    %v4376 = vunpack.c.l.b16 %v521
    %v4377 = vunpack.c.l.b16 %v522
    %v4378 = vunpack.c.l.b16 %v523
    %v4379 = vunpack.c.l.b16 %v524
    %v4380 = vunpack.c.l.b16 %v525
    %v4381 = vunpack.c.l.b16 %v526
    %v4382 = vunpack.c.l.b16 %v527
    %v4383 = vunpack.c.l.b16 %v528
    %v4384 = vunpack.c.l.b16 %v529
    %v4385 = vunpack.c.l.b16 %v530
    %v4386 = vunpack.c.l.b16 %v531
    %v4387 = vunpack.c.l.b16 %v532
    %v4388 = vunpack.c.l.b16 %v533
    %v4389 = vunpack.c.l.b16 %v534
    %v4390 = vunpack.c.l.b16 %v535
    %v4391 = vunpack.c.l.b16 %v536
    %v4392 = vunpack.c.l.b16 %v537
    %v4393 = vunpack.c.l.b16 %v538
    %v4394 = vunpack.c.l.b16 %v539
    %v4395 = vunpack.c.l.b16 %v540
    %v4396 = vunpack.c.l.b16 %v541
    %v4397 = vunpack.c.l.b16 %v542
    %v4398 = vunpack.c.l.b16 %v543
    %v4399 = vunpack.c.l.b16 %v544
    %v4400 = vunpack.c.l.b16 %v545
    %v4401 = vunpack.c.l.b16 %v546
    %v4402 = vunpack.c.l.b16 %v547
    %v4403 = vunpack.c.l.b16 %v548
    %v4404 = vunpack.c.l.b16 %v549
    %v4405 = vunpack.c.l.b16 %v550
    %v4406 = vunpack.c.l.b16 %v551
    %v4407 = vunpack.c.l.b16 %v552
    %v4408 = vunpack.c.l.b16 %v553
    %v4409 = vunpack.c.l.b16 %v554
    %v4410 = vunpack.c.l.b16 %v555
    %v4411 = vunpack.c.l.b16 %v556
    %v4412 = vunpack.c.l.b16 %v557
    %v4413 = vunpack.c.l.b16 %v558
    %v4414 = vunpack.c.l.b16 %v559
    %v4415 = vunpack.c.l.b16 %v560
    %v4416 = vunpack.c.l.b16 %v561
    %v4417 = vunpack.c.l.b16 %v562
    %v4418 = vunpack.c.l.b16 %v563
    %v4419 = vunpack.c.l.b16 %v564
    %v4420 = vunpack.c.l.b16 %v565
    %v4421 = vunpack.c.l.b16 %v566
    %v4422 = vunpack.c.l.b16 %v567
    %v4423 = vunpack.c.l.b16 %v568
    %v4424 = vunpack.c.l.b16 %v569
    %v4425 = vunpack.c.l.b16 %v570
    %v4426 = vunpack.c.l.b16 %v571
    %v4427 = vunpack.c.l.b16 %v572
    %v4428 = vunpack.c.l.b16 %v573
    %v4429 = vunpack.c.l.b16 %v574
    %v4430 = vunpack.c.l.b16 %v575
    %v4431 = vunpack.c.l.b16 %v576
    %v4432 = vunpack.c.l.b16 %v577
    %v4433 = vunpack.c.l.b16 %v578
    %v4434 = vunpack.c.l.b16 %v579
    %v4435 = vunpack.c.l.b16 %v580
    %v4436 = vunpack.c.l.b16 %v581
    %v4437 = vunpack.c.l.b16 %v582
    %v4438 = vunpack.c.l.b16 %v583
    %v4439 = vunpack.c.l.b16 %v584
    %v4440 = vunpack.c.l.b16 %v585
    %v4441 = vunpack.c.l.b16 %v586
    %v4442 = vunpack.c.l.b16 %v587
    %v4443 = vunpack.c.l.b16 %v588
    %v4444 = vunpack.c.l.b16 %v589
    %v4445 = vunpack.c.l.b16 %v590
    %v4446 = vunpack.c.l.b16 %v591
    %v4447 = vunpack.c.l.b16 %v592
    %v4448 = vunpack.c.l.b16 %v593
    %v4449 = vunpack.c.l.b16 %v594
    %v4450 = vunpack.c.l.b16 %v595
    %v4451 = vunpack.c.l.b16 %v596
    %v4452 = vunpack.c.l.b16 %v597
    %v4453 = vunpack.c.l.b16 %v598
    %v4454 = vunpack.c.l.b16 %v599
    %v4455 = vunpack.c.l.b16 %v600
    %v4456 = vunpack.c.l.b16 %v601
    %v4457 = vunpack.c.l.b16 %v602
    %v4458 = vunpack.c.l.b16 %v603
    %v4459 = vunpack.c.l.b16 %v604
    %v4460 = vunpack.c.l.b16 %v605
    %v4461 = vunpack.c.l.b16 %v606
    %v4462 = vunpack.c.l.b16 %v607
    %v4463 = vunpack.c.l.b16 %v608
    %v4464 = vunpack.c.l.b16 %v609
    %v4465 = vunpack.c.l.b16 %v610
    %v4466 = vunpack.c.l.b16 %v611
    %v4467 = vunpack.c.l.b16 %v612
    %v4468 = vunpack.c.l.b16 %v613
    %v4469 = vunpack.c.l.b16 %v614
    %v4470 = vunpack.c.l.b16 %v615
    %v4471 = vunpack.c.l.b16 %v616
    %v4472 = vunpack.c.l.b16 %v617
    %v4473 = vunpack.c.l.b16 %v618
    %v4474 = vunpack.c.l.b16 %v619
    %v4475 = vunpack.c.l.b16 %v620
    %v4476 = vunpack.c.l.b16 %v621
    %v4477 = vunpack.c.l.b16 %v622
    %v4478 = vunpack.c.l.b16 %v623
    %v4479 = vunpack.c.l.b16 %v624
    %v4480 = vunpack.c.l.b16 %v625
    %v4481 = vunpack.c.l.b16 %v626
    %v4482 = vunpack.c.l.b16 %v627
    %v4483 = vunpack.c.l.b16 %v628
    %v4484 = vunpack.c.l.b16 %v629
    %v4485 = vunpack.c.l.b16 %v630
    %v4486 = vunpack.c.l.b16 %v631
    %v4487 = vunpack.c.l.b16 %v632
    %v4488 = vunpack.c.l.b16 %v633
    %v4489 = vunpack.c.l.b16 %v634
    %v4490 = vunpack.c.l.b16 %v635
    %v4491 = vunpack.c.l.b16 %v636
    %v4492 = vunpack.c.l.b16 %v637
    %v4493 = vunpack.c.l.b16 %v638
    %v4494 = vunpack.c.l.b16 %v639
    %v4495 = vunpack.c.l.b16 %v640
    %v4496 = vunpack.c.l.b16 %v641
    %v4497 = vunpack.c.l.b16 %v642
    %v4498 = vunpack.c.l.b16 %v643
    %v4499 = vunpack.c.l.b16 %v644
    %v4500 = vunpack.c.l.b16 %v645
    %v4501 = vunpack.c.l.b16 %v646
    %v4502 = vunpack.c.l.b16 %v647
    %v4503 = vunpack.c.l.b16 %v648
    %v4504 = vunpack.c.l.b16 %v649
    %v4505 = vunpack.c.l.b16 %v650
    %v4506 = vunpack.c.l.b16 %v651
    %v4507 = vunpack.c.l.b16 %v652
    %v4508 = vunpack.c.l.b16 %v653
    %v4509 = vunpack.c.l.b16 %v654
    %v4510 = vunpack.c.l.b16 %v655
    %v4511 = vunpack.c.l.b16 %v656
    %v4512 = vunpack.c.l.b16 %v657
    %v4513 = vunpack.c.l.b16 %v658
    %v4514 = vunpack.c.l.b16 %v659
    %v4515 = vunpack.c.l.b16 %v660
    %v4516 = vunpack.c.l.b16 %v661
    %v4517 = vunpack.c.l.b16 %v662
    %v4518 = vunpack.c.l.b16 %v663
    %v4519 = vunpack.c.l.b16 %v664
    %v4520 = vunpack.c.l.b16 %v665
    %v4521 = vunpack.c.l.b16 %v666
    %v4522 = vunpack.c.l.b16 %v667
    %v4523 = vunpack.c.l.b16 %v668
    %v4524 = vunpack.c.l.b16 %v669
    %v4525 = vunpack.c.l.b16 %v670
    %v4526 = vunpack.c.l.b16 %v671
    %v4527 = vunpack.c.l.b16 %v672
    %v4528 = vunpack.c.l.b16 %v673
    %v4529 = vunpack.c.l.b16 %v674
    %v4530 = vunpack.c.l.b16 %v675
    %v4531 = vunpack.c.l.b16 %v676
    %v4532 = vunpack.c.l.b16 %v677
    %v4533 = vunpack.c.l.b16 %v678
    %v4534 = vunpack.c.l.b16 %v679
    %v4535 = vunpack.c.l.b16 %v680
    %v4536 = vunpack.c.l.b16 %v681
    %v4537 = vunpack.c.l.b16 %v682
    %v4538 = vunpack.c.l.b16 %v683
    %v4539 = vunpack.c.l.b16 %v684
    %v4540 = vunpack.c.l.b16 %v685
    %v4541 = vunpack.c.l.b16 %v686
    %v4542 = vunpack.c.l.b16 %v687
    %v4543 = vunpack.c.l.b16 %v688
    %v4544 = vunpack.c.l.b16 %v689
    %v4545 = vunpack.c.l.b16 %v690
    %v4546 = vunpack.c.l.b16 %v691
    %v4547 = vunpack.c.l.b16 %v692
    %v4548 = vunpack.c.l.b16 %v693
    %v4549 = vunpack.c.l.b16 %v694
    %v4550 = vunpack.c.l.b16 %v695
    %v4551 = vunpack.c.l.b16 %v696
    %v4552 = vunpack.c.l.b16 %v697
    %v4553 = vunpack.c.l.b16 %v698
    %v4554 = vunpack.c.l.b16 %v699
    %v4555 = vunpack.c.l.b16 %v700
    %v4556 = vunpack.c.l.b16 %v701
    %v4557 = vunpack.c.l.b16 %v702
    %v4558 = vunpack.c.l.b16 %v703
    %v4559 = vunpack.c.l.b16 %v704
    %v4560 = vunpack.c.l.b16 %v705
    %v4561 = vunpack.c.l.b16 %v706
    %v4562 = vunpack.c.l.b16 %v707
    %v4563 = vunpack.c.l.b16 %v708
    %v4564 = vunpack.c.l.b16 %v709
    %v4565 = vunpack.c.l.b16 %v710
    %v4566 = vunpack.c.l.b16 %v711
    %v4567 = vunpack.c.l.b16 %v712
    %v4568 = vunpack.c.l.b16 %v713
    %v4569 = vunpack.c.l.b16 %v714
    %v4570 = vunpack.c.l.b16 %v715
    %v4571 = vunpack.c.l.b16 %v716
    %v4572 = vunpack.c.l.b16 %v717
    %v4573 = vunpack.c.l.b16 %v718
    %v4574 = vunpack.c.l.b16 %v719
    %v4575 = vunpack.c.l.b16 %v720
    %v4576 = vunpack.c.l.b16 %v721
    %v4577 = vunpack.c.l.b16 %v722
    %v4578 = vunpack.c.l.b16 %v723
    %v4579 = vunpack.c.l.b16 %v724
    %v4580 = vunpack.c.l.b16 %v725
    %v4581 = vunpack.c.l.b16 %v726
    %v4582 = vunpack.c.l.b16 %v727
    %v4583 = vunpack.c.l.b16 %v728
    %v4584 = vunpack.c.l.b16 %v729
    %v4585 = vunpack.c.l.b16 %v730
    %v4586 = vunpack.c.l.b16 %v731
    %v4587 = vunpack.c.l.b16 %v732
    %v4588 = vunpack.c.l.b16 %v733
    %v4589 = vunpack.c.l.b16 %v734
    %v4590 = vunpack.c.l.b16 %v735
    %v4591 = vunpack.c.l.b16 %v736
    %v4592 = vunpack.c.l.b16 %v737
    %v4593 = vunpack.c.l.b16 %v738
    %v4594 = vunpack.c.l.b16 %v739
    %v4595 = vunpack.c.l.b16 %v740
    %v4596 = vunpack.c.l.b16 %v741
    %v4597 = vunpack.c.l.b16 %v742
    %v4598 = vunpack.c.l.b16 %v743
    %v4599 = vunpack.c.l.b16 %v744
    %v4600 = vunpack.c.l.b16 %v745
    %v4601 = vunpack.c.l.b16 %v746
    %v4602 = vunpack.c.l.b16 %v747
    %v4603 = vunpack.c.l.b16 %v748
    %v4604 = vunpack.c.l.b16 %v749
    %v4605 = vunpack.c.l.b16 %v750
    %v4606 = vunpack.c.l.b16 %v751
    %v4607 = vunpack.c.l.b16 %v752
    %v4608 = vunpack.c.l.b16 %v753
    %v4609 = vunpack.c.l.b16 %v754
    %v4610 = vunpack.c.l.b16 %v755
    %v4611 = vunpack.c.l.b16 %v756
    %v4612 = vunpack.c.l.b16 %v757
    %v4613 = vunpack.c.l.b16 %v758
    %v4614 = vunpack.c.l.b16 %v759
    %v4615 = vunpack.c.l.b16 %v760
    %v4616 = vunpack.c.l.b16 %v761
    %v4617 = vunpack.c.l.b16 %v762
    %v4618 = vunpack.c.l.b16 %v763
    %v4619 = vunpack.c.l.b16 %v764
    %v4620 = vunpack.c.l.b16 %v765
    %v4621 = vunpack.c.l.b16 %v766
    %v4622 = vunpack.c.l.b16 %v767
    %v4623 = vunpack.c.l.b16 %v768
    %v4624 = vunpack.c.l.b16 %v769
    %v4625 = vunpack.c.l.b16 %v770
    %v4626 = vunpack.c.l.b16 %v771
    %v4627 = vunpack.c.l.b16 %v772
    %v4628 = vunpack.c.l.b16 %v773
    %v4629 = vunpack.c.l.b16 %v774
    %v4630 = vunpack.c.l.b16 %v775
    %v4631 = vunpack.c.l.b16 %v776
    %v4632 = vunpack.c.l.b16 %v777
    %v4633 = vunpack.c.l.b16 %v778
    %v4634 = vunpack.c.l.b16 %v779
    %v4635 = vunpack.c.l.b16 %v780
    %v4636 = vunpack.c.l.b16 %v781
    %v4637 = vunpack.c.l.b16 %v782
    %v4638 = vunpack.c.l.b16 %v783
    %v4639 = vunpack.c.l.b16 %v784
    %v4640 = vunpack.c.l.b16 %v785
    %v4641 = vunpack.c.l.b16 %v786
    %v4642 = vunpack.c.l.b16 %v787
    %v4643 = vunpack.c.l.b16 %v788
    %v4644 = vunpack.c.l.b16 %v789
    %v4645 = vunpack.c.l.b16 %v790
    %v4646 = vunpack.c.l.b16 %v791
    %v4647 = vunpack.c.l.b16 %v792
    %v4648 = vunpack.c.l.b16 %v793
    %v4649 = vunpack.c.l.b16 %v794
    %v4650 = vunpack.c.l.b16 %v795
    %v4651 = vunpack.c.l.b16 %v796
    %v4652 = vunpack.c.l.b16 %v797
    %v4653 = vunpack.c.l.b16 %v798
    %v4654 = vunpack.c.l.b16 %v799
    %v4655 = vunpack.c.l.b16 %v800
    %v4656 = vunpack.c.l.b16 %v801
    %v4657 = vunpack.c.l.b16 %v802
    %v4658 = vunpack.c.l.b16 %v803
    %v4659 = vunpack.c.l.b16 %v804
    %v4660 = vunpack.c.l.b16 %v805
    %v4661 = vunpack.c.l.b16 %v806
    %v4662 = vunpack.c.l.b16 %v807
    %v4663 = vunpack.c.l.b16 %v808
    %v4664 = vunpack.c.l.b16 %v809
    %v4665 = vunpack.c.l.b16 %v810
    %v4666 = vunpack.c.l.b16 %v811
    %v4667 = vunpack.c.l.b16 %v812
    %v4668 = vunpack.c.l.b16 %v813
    %v4669 = vunpack.c.l.b16 %v814
    %v4670 = vunpack.c.l.b16 %v815
    %v4671 = vunpack.c.l.b16 %v816
    %v4672 = vunpack.c.l.b16 %v817
    %v4673 = vunpack.c.l.b16 %v818
    %v4674 = vunpack.c.l.b16 %v819
    %v4675 = vunpack.c.l.b16 %v820
    %v4676 = vunpack.c.l.b16 %v821
    %v4677 = vunpack.c.l.b16 %v822
    %v4678 = vunpack.c.l.b16 %v823
    %v4679 = vunpack.c.l.b16 %v824
    %v4680 = vunpack.c.l.b16 %v825
    %v4681 = vunpack.c.l.b16 %v826
    %v4682 = vunpack.c.l.b16 %v827
    %v4683 = vunpack.c.l.b16 %v828
    %v4684 = vunpack.c.l.b16 %v829
    %v4685 = vunpack.c.l.b16 %v830
    %v4686 = vunpack.c.l.b16 %v831
    %v4687 = vunpack.c.l.b16 %v832
    %v4688 = vunpack.c.l.b16 %v833
    %v4689 = vunpack.c.l.b16 %v834
    %v4690 = vunpack.c.l.b16 %v835
    %v4691 = vunpack.c.l.b16 %v836
    %v4692 = vunpack.c.l.b16 %v837
    %v4693 = vunpack.c.l.b16 %v838
    %v4694 = vunpack.c.l.b16 %v839
    %v4695 = vunpack.c.l.b16 %v840
    %v4696 = vunpack.c.l.b16 %v841
    %v4697 = vunpack.c.l.b16 %v842
    %v4698 = vunpack.c.l.b16 %v843
    %v4699 = vunpack.c.l.b16 %v844
    %v4700 = vunpack.c.l.b16 %v845
    %v4701 = vunpack.c.l.b16 %v846
    %v4702 = vunpack.c.l.b16 %v847
    %v4703 = vunpack.c.l.b16 %v848
    %v4704 = vunpack.c.l.b16 %v849
    %v4705 = vunpack.c.l.b16 %v850
    %v4706 = vunpack.c.l.b16 %v851
    %v4707 = vunpack.c.l.b16 %v852
    %v4708 = vunpack.c.l.b16 %v853
    %v4709 = vunpack.c.l.b16 %v854
    %v4710 = vunpack.c.l.b16 %v855
    %v4711 = vunpack.c.l.b16 %v856
    %v4712 = vunpack.c.l.b16 %v857
    %v4713 = vunpack.c.l.b16 %v858
    %v4714 = vunpack.c.l.b16 %v859
    %v4715 = vunpack.c.l.b16 %v860
    %v4716 = vunpack.c.l.b16 %v861
    %v4717 = vunpack.c.l.b16 %v862
    %v4718 = vunpack.c.l.b16 %v863
    %v4719 = vunpack.c.l.b16 %v864
    %v4720 = vunpack.c.l.b16 %v865
    %v4721 = vunpack.c.l.b16 %v866
    %v4722 = vunpack.c.l.b16 %v867
    %v4723 = vunpack.c.l.b16 %v868
    %v4724 = vunpack.c.l.b16 %v869
    %v4725 = vunpack.c.l.b16 %v870
    %v4726 = vunpack.c.l.b16 %v871
    %v4727 = vunpack.c.l.b16 %v872
    %v4728 = vunpack.c.l.b16 %v873
    %v4729 = vunpack.c.l.b16 %v874
    %v4730 = vunpack.c.l.b16 %v875
    %v4731 = vunpack.c.l.b16 %v876
    %v4732 = vunpack.c.l.b16 %v877
    %v4733 = vunpack.c.l.b16 %v878
    %v4734 = vunpack.c.l.b16 %v879
    %v4735 = vunpack.c.l.b16 %v880
    %v4736 = vunpack.c.l.b16 %v881
    %v4737 = vunpack.c.l.b16 %v882
    %v4738 = vunpack.c.l.b16 %v883
    %v4739 = vunpack.c.l.b16 %v884
    %v4740 = vunpack.c.l.b16 %v885
    %v4741 = vunpack.c.l.b16 %v886
    %v4742 = vunpack.c.l.b16 %v887
    %v4743 = vunpack.c.l.b16 %v888
    %v4744 = vunpack.c.l.b16 %v889
    %v4745 = vunpack.c.l.b16 %v890
    %v4746 = vunpack.c.l.b16 %v891
    %v4747 = vunpack.c.l.b16 %v892
    %v4748 = vunpack.c.l.b16 %v893
    %v4749 = vunpack.c.l.b16 %v894
    %v4750 = vunpack.c.l.b16 %v895
    %v4751 = vunpack.c.l.b16 %v896
    %v4752 = vunpack.c.l.b16 %v897
    %v4753 = vunpack.c.l.b16 %v898
    %v4754 = vunpack.c.l.b16 %v899
    %v4755 = vunpack.c.l.b16 %v900
    %v4756 = vunpack.c.l.b16 %v901
    %v4757 = vunpack.c.l.b16 %v902
    %v4758 = vunpack.c.l.b16 %v903
    %v4759 = vunpack.c.l.b16 %v904
    %v4760 = vunpack.c.l.b16 %v905
    %v4761 = vunpack.c.l.b16 %v906
    %v4762 = vunpack.c.l.b16 %v907
    %v4763 = vunpack.c.l.b16 %v908
    %v4764 = vunpack.c.l.b16 %v909
    %v4765 = vunpack.c.l.b16 %v910
    %v4766 = vunpack.c.l.b16 %v911
    %v4767 = vunpack.c.l.b16 %v912
    %v4768 = vunpack.c.l.b16 %v913
    %v4769 = vunpack.c.l.b16 %v914
    %v4770 = vunpack.c.l.b16 %v915
    %v4771 = vunpack.c.l.b16 %v916
    %v4772 = vunpack.c.l.b16 %v917
    %v4773 = vunpack.c.l.b16 %v918
    %v4774 = vunpack.c.l.b16 %v919
    %v4775 = vunpack.c.l.b16 %v920
    %v4776 = vunpack.c.l.b16 %v921
    %v4777 = vunpack.c.l.b16 %v922
    %v4778 = vunpack.c.l.b16 %v923
    %v4779 = vunpack.c.l.b16 %v924
    %v4780 = vunpack.c.l.b16 %v925
    %v4781 = vunpack.c.l.b16 %v926
    %v4782 = vunpack.c.l.b16 %v927
    %v4783 = vunpack.c.l.b16 %v928
    %v4784 = vunpack.c.l.b16 %v929
    %v4785 = vunpack.c.l.b16 %v930
    %v4786 = vunpack.c.l.b16 %v931
    %v4787 = vunpack.c.l.b16 %v932
    %v4788 = vunpack.c.l.b16 %v933
    %v4789 = vunpack.c.l.b16 %v934
    %v4790 = vunpack.c.l.b16 %v935
    %v4791 = vunpack.c.l.b16 %v936
    %v4792 = vunpack.c.l.b16 %v937
    %v4793 = vunpack.c.l.b16 %v938
    %v4794 = vunpack.c.l.b16 %v939
    %v4795 = vunpack.c.l.b16 %v940
    %v4796 = vunpack.c.l.b16 %v941
    %v4797 = vunpack.c.l.b16 %v942
    %v4798 = vunpack.c.l.b16 %v943
    %v4799 = vunpack.c.l.b16 %v944
    %v4800 = vunpack.c.l.b16 %v945
    %v4801 = vunpack.c.l.b16 %v946
    %v4802 = vunpack.c.l.b16 %v947
    %v4803 = vunpack.c.l.b16 %v948
    %v4804 = vunpack.c.l.b16 %v949
    %v4805 = vunpack.c.l.b16 %v950
    %v4806 = vunpack.c.l.b16 %v951
    %v4807 = vunpack.c.l.b16 %v952
    %v4808 = vunpack.c.l.b16 %v953
    %v4809 = vunpack.c.l.b16 %v954
    %v4810 = vunpack.c.l.b16 %v955
    %v4811 = vunpack.c.l.b16 %v956
    %v4812 = vunpack.c.l.b16 %v957
    %v4813 = vunpack.c.l.b16 %v958
    %v4814 = vunpack.c.l.b16 %v959
    %v4815 = vunpack.c.l.b16 %v960
    %v4816 = vunpack.c.l.b16 %v961
    %v4817 = vunpack.c.l.b16 %v962
    %v4818 = vunpack.c.l.b16 %v963
    %v4819 = vunpack.c.l.b16 %v964
    %v4820 = vunpack.c.l.b16 %v965
    %v4821 = vunpack.c.l.b16 %v966
    %v4822 = vunpack.c.l.b16 %v967
    %v4823 = vunpack.c.l.b16 %v968
    %v4824 = vunpack.c.l.b16 %v969
    %v4825 = vunpack.c.l.b16 %v970
    %v4826 = vunpack.c.l.b16 %v971
    %v4827 = vunpack.c.l.b16 %v972
    %v4828 = vunpack.c.l.b16 %v973
    %v4829 = vunpack.c.l.b16 %v974
    %v4830 = vunpack.c.l.b16 %v975
    %v4831 = vunpack.c.l.b16 %v976
    %v4832 = vunpack.c.l.b16 %v977
    %v4833 = vunpack.c.l.b16 %v978
    %v4834 = vunpack.c.l.b16 %v979
    %v4835 = vunpack.c.l.b16 %v980
    %v4836 = vunpack.c.l.b16 %v981
    %v4837 = vunpack.c.l.b16 %v982
    %v4838 = vunpack.c.l.b16 %v983
    %v4839 = vunpack.c.l.b16 %v984
    %v4840 = vunpack.c.l.b16 %v985
    %v4841 = vunpack.c.l.b16 %v986
    %v4842 = vunpack.c.l.b16 %v987
    %v4843 = vunpack.c.l.b16 %v988
    %v4844 = vunpack.c.l.b16 %v989
    %v4845 = vunpack.c.l.b16 %v990
    %v4846 = vunpack.c.l.b16 %v991
    %v4847 = vunpack.c.l.b16 %v992
    %v4848 = vunpack.c.l.b16 %v993
    %v4849 = vunpack.c.l.b16 %v994
    %v4850 = vunpack.c.l.b16 %v995
    %v4851 = vunpack.c.l.b16 %v996
    %v4852 = vunpack.c.l.b16 %v997
    %v4853 = vunpack.c.l.b16 %v998
    %v4854 = vunpack.c.l.b16 %v999
    %v4855 = vunpack.c.l.b16 %v1000
    %v4856 = vunpack.c.l.b16 %v1001
    %v4857 = vunpack.c.l.b16 %v1002
    %v4858 = vunpack.c.l.b16 %v1003
    %v4859 = vunpack.c.l.b16 %v1004
    %v4860 = vunpack.c.l.b16 %v1005
    %v4861 = vunpack.c.l.b16 %v1006
    %v4862 = vunpack.c.l.b16 %v1007
    %v4863 = vunpack.c.l.b16 %v1008
    %v4864 = vunpack.c.l.b16 %v1009
    %v4865 = vunpack.c.l.b16 %v1010
    %v4866 = vunpack.c.l.b16 %v1011
    %v4867 = vunpack.c.l.b16 %v1012
    %v4868 = vunpack.c.l.b16 %v1013
    %v4869 = vunpack.c.l.b16 %v1014
    %v4870 = vunpack.c.l.b16 %v1015
    %v4871 = vunpack.c.l.b16 %v1016
    %v4872 = vunpack.c.l.b16 %v1017
    %v4873 = vunpack.c.l.b16 %v1018
    %v4874 = vunpack.c.l.b16 %v1019
    %v4875 = vunpack.c.l.b16 %v1020
    %v4876 = vunpack.c.l.b16 %v1021
    %v4877 = vunpack.c.l.b16 %v1022
    %v4878 = vunpack.c.l.b16 %v1023
    %v4879 = vunpack.c.l.b16 %v1024
    %v4880 = vunpack.c.l.b16 %v1025
    %v4881 = vunpack.c.l.b16 %v1026
    %v4882 = vunpack.c.l.b16 %v1027
    %v4883 = vunpack.c.l.b16 %v1028
    %v4884 = vunpack.c.l.b16 %v1029
    %v4885 = vunpack.c.l.b16 %v1030
    %v4886 = vunpack.c.l.b16 %v1031
    %v4887 = vunpack.c.l.b16 %v1032
    %v4888 = vunpack.c.l.b16 %v1033
    %v4889 = vunpack.c.l.b16 %v1034
    %v4890 = vunpack.c.l.b16 %v1035
    %v4891 = vunpack.c.l.b16 %v1036
    %v4892 = vunpack.c.l.b16 %v1037
    %v4893 = vunpack.c.l.b16 %v1038
    %v4894 = vunpack.c.l.b16 %v1039
    %v4895 = vunpack.c.l.b16 %v1040
    %v4896 = vunpack.c.l.b16 %v1041
    %v4897 = vunpack.c.l.b16 %v1042
    %v4898 = vunpack.c.l.b16 %v1043
    %v4899 = vunpack.c.l.b16 %v1044
    %v4900 = vunpack.c.l.b16 %v1045
    %v4901 = vunpack.c.l.b16 %v1046
    %v4902 = vunpack.c.l.b16 %v1047
    %v4903 = vunpack.c.l.b16 %v1048
    %v4904 = vunpack.c.l.b16 %v1049
    %v4905 = vunpack.c.l.b16 %v1050
    %v4906 = vunpack.c.l.b16 %v1051
    %v4907 = vunpack.c.l.b16 %v1052
    %v4908 = vunpack.c.l.b16 %v1053
    %v4909 = vunpack.c.l.b16 %v1054
    %v4910 = vunpack.c.l.b16 %v1055
    %v4911 = vunpack.c.l.b16 %v1056
    %v4912 = vunpack.c.l.b16 %v1057
    %v4913 = vunpack.c.l.b16 %v1058
    %v4914 = vunpack.c.l.b16 %v1059
    %v4915 = vunpack.c.l.b16 %v1060
    %v4916 = vunpack.c.l.b16 %v1061
    %v4917 = vunpack.c.l.b16 %v1062
    %v4918 = vunpack.c.l.b16 %v1063
    %v4919 = vunpack.c.l.b16 %v1064
    %v4920 = vunpack.c.l.b16 %v1065
    %v4921 = vunpack.c.l.b16 %v1066
    %v4922 = vunpack.c.l.b16 %v1067
    %v4923 = vunpack.c.l.b16 %v1068
    %v4924 = vunpack.c.l.b16 %v1069
    %v4925 = vunpack.c.l.b16 %v1070
    %v4926 = vunpack.c.l.b16 %v1071
    %v4927 = vunpack.c.l.b16 %v1072
    %v4928 = vunpack.c.l.b16 %v1073
    %v4929 = vunpack.c.l.b16 %v1074
    %v4930 = vunpack.c.l.b16 %v1075
    %v4931 = vunpack.c.l.b16 %v1076
    %v4932 = vunpack.c.l.b16 %v1077
    %v4933 = vunpack.c.l.b16 %v1078
    %v4934 = vunpack.c.l.b16 %v1079
    %v4935 = vunpack.c.l.b16 %v1080
    %v4936 = vunpack.c.l.b16 %v1081
    %v4937 = vunpack.c.l.b16 %v1082
    %v4938 = vunpack.c.l.b16 %v1083
    %v4939 = vunpack.c.l.b16 %v1084
    %v4940 = vunpack.c.l.b16 %v1085
    %v4941 = vunpack.c.l.b16 %v1086
    %v4942 = vunpack.c.l.b16 %v1087
    %v4943 = vunpack.c.l.b16 %v1088
    %v4944 = vunpack.c.l.b16 %v1089
    %v4945 = vunpack.c.l.b16 %v1090
    %v4946 = vunpack.c.l.b16 %v1091
    %v4947 = vunpack.c.l.b16 %v1092
    %v4948 = vunpack.c.l.b16 %v1093
    %v4949 = vunpack.c.l.b16 %v1094
    %v4950 = vunpack.c.l.b16 %v1095
    %v4951 = vunpack.c.l.b16 %v1096
    %v4952 = vunpack.c.l.b16 %v1097
    %v4953 = vunpack.c.l.b16 %v1098
    %v4954 = vunpack.c.l.b16 %v1099
    %v4955 = vunpack.c.l.b16 %v1100
    %v4956 = vunpack.c.l.b16 %v1101
    %v4957 = vunpack.c.l.b16 %v1102
    %v4958 = vunpack.c.l.b16 %v1103
    %v4959 = vunpack.c.l.b16 %v1104
    %v4960 = vunpack.c.l.b16 %v1105
    %v4961 = vunpack.c.l.b16 %v1106
    %v4962 = vunpack.c.l.b16 %v1107
    %v4963 = vunpack.c.l.b16 %v1108
    %v4964 = vunpack.c.l.b16 %v1109
    %v4965 = vunpack.c.l.b16 %v1110
    %v4966 = vunpack.c.l.b16 %v1111
    %v4967 = vunpack.c.l.b16 %v1112
    %v4968 = vunpack.c.l.b16 %v1113
    %v4969 = vunpack.c.l.b16 %v1114
    %v4970 = vunpack.c.l.b16 %v1115
    %v4971 = vunpack.c.l.b16 %v1116
    %v4972 = vunpack.c.l.b16 %v1117
    %v4973 = vunpack.c.l.b16 %v1118
    %v4974 = vunpack.c.l.b16 %v1119
    %v4975 = vunpack.c.l.b16 %v1120
    %v4976 = vunpack.c.l.b16 %v1121
    %v4977 = vunpack.c.l.b16 %v1122
    %v4978 = vunpack.c.l.b16 %v1123
    %v4979 = vunpack.c.l.b16 %v1124
    %v4980 = vunpack.c.l.b16 %v1125
    %v4981 = vunpack.c.l.b16 %v1126
    %v4982 = vunpack.c.l.b16 %v1127
    %v4983 = vunpack.c.l.b16 %v1128
    %v4984 = vunpack.c.l.b16 %v1129
    %v4985 = vunpack.c.l.b16 %v1130
    %v4986 = vunpack.c.l.b16 %v1131
    %v4987 = vunpack.c.l.b16 %v1132
    %v4988 = vunpack.c.l.b16 %v1133
    %v4989 = vunpack.c.l.b16 %v1134
    %v4990 = vunpack.c.l.b16 %v1135
    %v4991 = vunpack.c.l.b16 %v1136
    %v4992 = vunpack.c.l.b16 %v1137
    %v4993 = vunpack.c.l.b16 %v1138
    %v4994 = vunpack.c.l.b16 %v1139
    %v4995 = vunpack.c.l.b16 %v1140
    %v4996 = vunpack.c.l.b16 %v1141
    %v4997 = vunpack.c.l.b16 %v1142
    %v4998 = vunpack.c.l.b16 %v1143
    %v4999 = vunpack.c.l.b16 %v1144
    %v5000 = vunpack.c.l.b16 %v1145
    %v5001 = vunpack.c.l.b16 %v1146
    %v5002 = vunpack.c.l.b16 %v1147
    %v5003 = vunpack.c.l.b16 %v1148
    %v5004 = vunpack.c.l.b16 %v1149
    %v5005 = vunpack.c.l.b16 %v1150
    %v5006 = vunpack.c.l.b16 %v1151
    %v5007 = vunpack.c.l.b16 %v1152
    %v5008 = vunpack.c.l.b16 %v1153
    %v5009 = vunpack.c.l.b16 %v1154
    %v5010 = vunpack.c.l.b16 %v1155
    %v5011 = vunpack.c.l.b16 %v1156
    %v5012 = vunpack.c.l.b16 %v1157
    %v5013 = vunpack.c.l.b16 %v1158
    %v5014 = vunpack.c.l.b16 %v1159
    %v5015 = vunpack.c.l.b16 %v1160
    %v5016 = vunpack.c.l.b16 %v1161
    %v5017 = vunpack.c.l.b16 %v1162
    %v5018 = vunpack.c.l.b16 %v1163
    %v5019 = vunpack.c.l.b16 %v1164
    %v5020 = vunpack.c.l.b16 %v1165
    %v5021 = vunpack.c.l.b16 %v1166
    %v5022 = vunpack.c.l.b16 %v1167
    %v5023 = vunpack.c.l.b16 %v1168
    %v5024 = vunpack.c.l.b16 %v1169
    %v5025 = vunpack.c.l.b16 %v1170
    %v5026 = vunpack.c.l.b16 %v1171
    %v5027 = vunpack.c.l.b16 %v1172
    %v5028 = vunpack.c.l.b16 %v1173
    %v5029 = vunpack.c.l.b16 %v1174
    %v5030 = vunpack.c.l.b16 %v1175
    %v5031 = vunpack.c.l.b16 %v1176
    %v5032 = vunpack.c.l.b16 %v1177
    %v5033 = vunpack.c.l.b16 %v1178
    %v5034 = vunpack.c.l.b16 %v1179
    %v5035 = vunpack.c.l.b16 %v1180
    %v5036 = vunpack.c.l.b16 %v1181
    %v5037 = vunpack.c.l.b16 %v1182
    %v5038 = vunpack.c.l.b16 %v1183
    %v5039 = vunpack.c.l.b16 %v1184
    %v5040 = vunpack.c.l.b16 %v1185
    %v5041 = vunpack.c.l.b16 %v1186
    %v5042 = vunpack.c.l.b16 %v1187
    %v5043 = vunpack.c.l.b16 %v1188
    %v5044 = vunpack.c.l.b16 %v1189
    %v5045 = vunpack.c.l.b16 %v1190
    %v5046 = vunpack.c.l.b16 %v1191
    %v5047 = vunpack.c.l.b16 %v1192
    %v5048 = vunpack.c.l.b16 %v1193
    %v5049 = vunpack.c.l.b16 %v1194
    %v5050 = vunpack.c.l.b16 %v1195
    %v5051 = vunpack.c.l.b16 %v1196
    %v5052 = vunpack.c.l.b16 %v1197
    %v5053 = vunpack.c.l.b16 %v1198
    %v5054 = vunpack.c.l.b16 %v1199
    %v5055 = vunpack.c.l.b16 %v1200
    %v5056 = vunpack.c.l.b16 %v1201
    %v5057 = vunpack.c.l.b16 %v1202
    %v5058 = vunpack.c.l.b16 %v1203
    %v5059 = vunpack.c.l.b16 %v1204
    %v5060 = vunpack.c.l.b16 %v1205
    %v5061 = vunpack.c.l.b16 %v1206
    %v5062 = vunpack.c.l.b16 %v1207
    %v5063 = vunpack.c.l.b16 %v1208
    %v5064 = vunpack.c.l.b16 %v1209
    %v5065 = vunpack.c.l.b16 %v1210
    %v5066 = vunpack.c.l.b16 %v1211
    %v5067 = vunpack.c.l.b16 %v1212
    %v5068 = vunpack.c.l.b16 %v1213
    %v5069 = vunpack.c.l.b16 %v1214
    %v5070 = vunpack.c.l.b16 %v1215
    %v5071 = vunpack.c.l.b16 %v1216
    %v5072 = vunpack.c.l.b16 %v1217
    %v5073 = vunpack.c.l.b16 %v1218
    %v5074 = vunpack.c.l.b16 %v1219
    %v5075 = vunpack.c.l.b16 %v1220
    %v5076 = vunpack.c.l.b16 %v1221
    %v5077 = vunpack.c.l.b16 %v1222
    %v5078 = vunpack.c.l.b16 %v1223
    %v5079 = vunpack.c.l.b16 %v1224
    %v5080 = vunpack.c.l.b16 %v1225
    %v5081 = vunpack.c.l.b16 %v1226
    %v5082 = vunpack.c.l.b16 %v1227
    %v5083 = vunpack.c.l.b16 %v1228
    %v5084 = vunpack.c.l.b16 %v1229
    %v5085 = vunpack.c.l.b16 %v1230
    %v5086 = vunpack.c.l.b16 %v1231
    %v5087 = vunpack.c.l.b16 %v1232
    %v5088 = vunpack.c.l.b16 %v1233
    %v5089 = vunpack.c.l.b16 %v1234
    %v5090 = vunpack.c.l.b16 %v1235
    %v5091 = vunpack.c.l.b16 %v1236
    %v5092 = vunpack.c.l.b16 %v1237
    %v5093 = vunpack.c.l.b16 %v1238
    %v5094 = vunpack.c.l.b16 %v1239
    %v5095 = vunpack.c.l.b16 %v1240
    %v5096 = vunpack.c.l.b16 %v1241
    %v5097 = vunpack.c.l.b16 %v1242
    %v5098 = vunpack.c.l.b16 %v1243
    %v5099 = vunpack.c.l.b16 %v1244
    %v5100 = vunpack.c.l.b16 %v1245
    %v5101 = vunpack.c.l.b16 %v1246
    %v5102 = vunpack.c.l.b16 %v1247
    %v5103 = vunpack.c.l.b16 %v1248
    %v5104 = vunpack.c.l.b16 %v1249
    %v5105 = vunpack.c.l.b16 %v1250
    %v5106 = vunpack.c.l.b16 %v1251
    %v5107 = vunpack.c.l.b16 %v1252
    %v5108 = vunpack.c.l.b16 %v1253
    %v5109 = vunpack.c.l.b16 %v1254
    %v5110 = vunpack.c.l.b16 %v1255
    %v5111 = vunpack.c.l.b16 %v1256
    %v5112 = vunpack.c.l.b16 %v1257
    %v5113 = vunpack.c.l.b16 %v1258
    %v5114 = vunpack.c.l.b16 %v1259
    %v5115 = vunpack.c.l.b16 %v1260
    %v5116 = vunpack.c.l.b16 %v1261
    %v5117 = vunpack.c.l.b16 %v1262
    %v5118 = vunpack.c.l.b16 %v1263
    %v5119 = vunpack.c.l.b16 %v1264
    %v5120 = vunpack.c.l.b16 %v1265
    %v5121 = vunpack.c.l.b16 %v1266
    %v5122 = vunpack.c.l.b16 %v1267
    %v5123 = vunpack.c.l.b16 %v1268
    %v5124 = vunpack.c.l.b16 %v1269
    %v5125 = vunpack.c.l.b16 %v1270
    %v5126 = vunpack.c.l.b16 %v1271
    %v5127 = vunpack.c.l.b16 %v1272
    %v5128 = vunpack.c.l.b16 %v1273
    %v5129 = vunpack.c.l.b16 %v1274
    %v5130 = vunpack.c.l.b16 %v1275
    %v5131 = vunpack.c.l.b16 %v1276
    %v5132 = vunpack.c.l.b16 %v1277
    %v5133 = vunpack.c.l.b16 %v1278
    %v5134 = vunpack.c.l.b16 %v1279
    %v5135 = vunpack.c.l.b16 %v1280
    %v5136 = vunpack.c.l.b16 %v1281
    %v5137 = vunpack.c.l.b16 %v1282
    %v5138 = vunpack.c.l.b16 %v1283
    %v5139 = vunpack.c.l.b16 %v1284
    %v5140 = vunpack.c.l.b16 %v1285
    %v5141 = vunpack.c.l.b16 %v1286
    %v5142 = vunpack.c.l.b16 %v1287
    %v5143 = vunpack.c.l.b16 %v1288
    %v5144 = vunpack.c.l.b16 %v1289
    %v5145 = vunpack.c.l.b16 %v1290
    %v5146 = vunpack.c.l.b16 %v1291
    %v5147 = vunpack.c.l.b16 %v1292
    %v5148 = vunpack.c.l.b16 %v1293
    %v5149 = vunpack.c.l.b16 %v1294
    %v5150 = vunpack.c.l.b16 %v1295
    %v5151 = vunpack.c.l.b16 %v1296
    %v5152 = vunpack.c.l.b16 %v1297
    %v5153 = vunpack.c.l.b16 %v1298
    %v5154 = vunpack.c.l.b16 %v1299
    %v5155 = vunpack.c.l.b16 %v1300
    %v5156 = vunpack.c.l.b16 %v1301
    %v5157 = vunpack.c.l.b16 %v1302
    %v5158 = vunpack.c.l.b16 %v1303
    %v5159 = vunpack.c.l.b16 %v1304
    %v5160 = vunpack.c.l.b16 %v1305
    %v5161 = vunpack.c.l.b16 %v1306
    %v5162 = vunpack.c.l.b16 %v1307
    %v5163 = vunpack.c.l.b16 %v1308
    %v5164 = vunpack.c.l.b16 %v1309
    %v5165 = vunpack.c.l.b16 %v1310
    %v5166 = vunpack.c.l.b16 %v1311
    %v5167 = vunpack.c.l.b16 %v1312
    %v5168 = vunpack.c.l.b16 %v1313
    %v5169 = vunpack.c.l.b16 %v1314
    %v5170 = vunpack.c.l.b16 %v1315
    %v5171 = vunpack.c.l.b16 %v1316
    %v5172 = vunpack.c.l.b16 %v1317
    %v5173 = vunpack.c.l.b16 %v1318
    %v5174 = vunpack.c.l.b16 %v1319
    %v5175 = vunpack.c.l.b16 %v1320
    %v5176 = vunpack.c.l.b16 %v1321
    %v5177 = vunpack.c.l.b16 %v1322
    %v5178 = vunpack.c.l.b16 %v1323
    %v5179 = vunpack.c.l.b16 %v1324
    %v5180 = vunpack.c.l.b16 %v1325
    %v5181 = vunpack.c.l.b16 %v1326
    %v5182 = vunpack.c.l.b16 %v1327
    %v5183 = vunpack.c.l.b16 %v1328
    %v5184 = vunpack.c.l.b16 %v1329
    %v5185 = vunpack.c.l.b16 %v1330
    %v5186 = vunpack.c.l.b16 %v1331
    %v5187 = vunpack.c.l.b16 %v1332
    %v5188 = vunpack.c.l.b16 %v1333
    %v5189 = vunpack.c.l.b16 %v1334
    %v5190 = vunpack.c.l.b16 %v1335
    %v5191 = vunpack.c.l.b16 %v1336
    %v5192 = vunpack.c.l.b16 %v1337
    %v5193 = vunpack.c.l.b16 %v1338
    %v5194 = vunpack.c.l.b16 %v1339
    %v5195 = vunpack.c.l.b16 %v1340
    %v5196 = vunpack.c.l.b16 %v1341
    %v5197 = vunpack.c.l.b16 %v1342
    %v5198 = vunpack.c.l.b16 %v1343
    %v5199 = vunpack.c.l.b16 %v1344
    %v5200 = vunpack.c.l.b16 %v1345
    %v5201 = vunpack.c.l.b16 %v1346
    %v5202 = vunpack.c.l.b16 %v1347
    %v5203 = vunpack.c.l.b16 %v1348
    %v5204 = vunpack.c.l.b16 %v1349
    %v5205 = vunpack.c.l.b16 %v1350
    %v5206 = vunpack.c.l.b16 %v1351
    %v5207 = vunpack.c.l.b16 %v1352
    %v5208 = vunpack.c.l.b16 %v1353
    %v5209 = vunpack.c.l.b16 %v1354
    %v5210 = vunpack.c.l.b16 %v1355
    %v5211 = vunpack.c.l.b16 %v1356
    %v5212 = vunpack.c.l.b16 %v1357
    %v5213 = vunpack.c.l.b16 %v1358
    %v5214 = vunpack.c.l.b16 %v1359
    %v5215 = vunpack.c.l.b16 %v1360
    %v5216 = vunpack.c.l.b16 %v1361
    %v5217 = vunpack.c.l.b16 %v1362
    %v5218 = vunpack.c.l.b16 %v1363
    %v5219 = vunpack.c.l.b16 %v1364
    %v5220 = vunpack.c.l.b16 %v1365
    %v5221 = vunpack.c.l.b16 %v1366
    %v5222 = vunpack.c.l.b16 %v1367
    %v5223 = vunpack.c.l.b16 %v1368
    %v5224 = vunpack.c.l.b16 %v1369
    %v5225 = vunpack.c.l.b16 %v1370
    %v5226 = vunpack.c.l.b16 %v1371
    %v5227 = vunpack.c.l.b16 %v1372
    %v5228 = vunpack.c.l.b16 %v1373
    %v5229 = vunpack.c.l.b16 %v1374
    %v5230 = vunpack.c.l.b16 %v1375
    %v5231 = vunpack.c.l.b16 %v1376
    %v5232 = vunpack.c.l.b16 %v1377
    %v5233 = vunpack.c.l.b16 %v1378
    %v5234 = vunpack.c.l.b16 %v1379
    %v5235 = vunpack.c.l.b16 %v1380
    %v5236 = vunpack.c.l.b16 %v1381
    %v5237 = vunpack.c.l.b16 %v1382
    %v5238 = vunpack.c.l.b16 %v1383
    %v5239 = vunpack.c.l.b16 %v1384
    %v5240 = vunpack.c.l.b16 %v1385
    %v5241 = vunpack.c.l.b16 %v1386
    %v5242 = vunpack.c.l.b16 %v1387
    %v5243 = vunpack.c.l.b16 %v1388
    %v5244 = vunpack.c.l.b16 %v1389
    %v5245 = vunpack.c.l.b16 %v1390
    %v5246 = vunpack.c.l.b16 %v1391
    %v5247 = vunpack.c.l.b16 %v1392
    %v5248 = vunpack.c.l.b16 %v1393
    %v5249 = vunpack.c.l.b16 %v1394
    %v5250 = vunpack.c.l.b16 %v1395
    %v5251 = vunpack.c.l.b16 %v1396
    %v5252 = vunpack.c.l.b16 %v1397
    %v5253 = vunpack.c.l.b16 %v1398
    %v5254 = vunpack.c.l.b16 %v1399
    %v5255 = vunpack.c.l.b16 %v1400
    %v5256 = vunpack.c.l.b16 %v1401
    %v5257 = vunpack.c.l.b16 %v1402
    %v5258 = vunpack.c.l.b16 %v1403
    %v5259 = vunpack.c.l.b16 %v1404
    %v5260 = vunpack.c.l.b16 %v1405
    %v5261 = vunpack.c.l.b16 %v1406
    %v5262 = vunpack.c.l.b16 %v1407
    %v5263 = vunpack.c.l.b16 %v1408
    %v5264 = vunpack.c.l.b16 %v1409
    %v5265 = vunpack.c.l.b16 %v1410
    %v5266 = vunpack.c.l.b16 %v1411
    %v5267 = vunpack.c.l.b16 %v1412
    %v5268 = vunpack.c.l.b16 %v1413
    %v5269 = vunpack.c.l.b16 %v1414
    %v5270 = vunpack.c.l.b16 %v1415
    %v5271 = vunpack.c.l.b16 %v1416
    %v5272 = vunpack.c.l.b16 %v1417
    %v5273 = vunpack.c.l.b16 %v1418
    %v5274 = vunpack.c.l.b16 %v1419
    %v5275 = vunpack.c.l.b16 %v1420
    %v5276 = vunpack.c.l.b16 %v1421
    %v5277 = vunpack.c.l.b16 %v1422
    %v5278 = vunpack.c.l.b16 %v1423
    %v5279 = vunpack.c.l.b16 %v1424
    %v5280 = vunpack.c.l.b16 %v1425
    %v5281 = vunpack.c.l.b16 %v1426
    %v5282 = vunpack.c.l.b16 %v1427
    %v5283 = vunpack.c.l.b16 %v1428
    %v5284 = vunpack.c.l.b16 %v1429
    %v5285 = vunpack.c.l.b16 %v1430
    %v5286 = vunpack.c.l.b16 %v1431
    %v5287 = vunpack.c.l.b16 %v1432
    %v5288 = vunpack.c.l.b16 %v1433
    %v5289 = vunpack.c.l.b16 %v1434
    %v5290 = vunpack.c.l.b16 %v1435
    %v5291 = vunpack.c.l.b16 %v1436
    %v5292 = vunpack.c.l.b16 %v1437
    %v5293 = vunpack.c.l.b16 %v1438
    %v5294 = vunpack.c.l.b16 %v1439
    %v5295 = vunpack.c.l.b16 %v1440
    %v5296 = vunpack.c.l.b16 %v1441
    %v5297 = vunpack.c.l.b16 %v1442
    %v5298 = vunpack.c.l.b16 %v1443
    %v5299 = vunpack.c.l.b16 %v1444
    %v5300 = vunpack.c.l.b16 %v1445
    %v5301 = vunpack.c.l.b16 %v1446
    %v5302 = vunpack.c.l.b16 %v1447
    %v5303 = vunpack.c.l.b16 %v1448
    %v5304 = vunpack.c.l.b16 %v1449
    %v5305 = vunpack.c.l.b16 %v1450
    %v5306 = vunpack.c.l.b16 %v1451
    %v5307 = vunpack.c.l.b16 %v1452
    %v5308 = vunpack.c.l.b16 %v1453
    %v5309 = vunpack.c.l.b16 %v1454
    %v5310 = vunpack.c.l.b16 %v1455
    %v5311 = vunpack.c.l.b16 %v1456
    %v5312 = vunpack.c.l.b16 %v1457
    %v5313 = vunpack.c.l.b16 %v1458
    %v5314 = vunpack.c.l.b16 %v1459
    %v5315 = vunpack.c.l.b16 %v1460
    %v5316 = vunpack.c.l.b16 %v1461
    %v5317 = vunpack.c.l.b16 %v1462
    %v5318 = vunpack.c.l.b16 %v1463
    %v5319 = vunpack.c.l.b16 %v1464
    %v5320 = vunpack.c.l.b16 %v1465
    %v5321 = vunpack.c.l.b16 %v1466
    %v5322 = vunpack.c.l.b16 %v1467
    %v5323 = vunpack.c.l.b16 %v1468
    %v5324 = vunpack.c.l.b16 %v1469
    %v5325 = vunpack.c.l.b16 %v1470
    %v5326 = vunpack.c.l.b16 %v1471
    %v5327 = vunpack.c.l.b16 %v1472
    %v5328 = vunpack.c.l.b16 %v1473
    %v5329 = vunpack.c.l.b16 %v1474
    %v5330 = vunpack.c.l.b16 %v1475
    %v5331 = vunpack.c.l.b16 %v1476
    %v5332 = vunpack.c.l.b16 %v1477
    %v5333 = vunpack.c.l.b16 %v1478
    %v5334 = vunpack.c.l.b16 %v1479
    %v5335 = vunpack.c.l.b16 %v1480
    %v5336 = vunpack.c.l.b16 %v1481
    %v5337 = vunpack.c.l.b16 %v1482
    %v5338 = vunpack.c.l.b16 %v1483
    %v5339 = vunpack.c.l.b16 %v1484
    %v5340 = vunpack.c.l.b16 %v1485
    %v5341 = vunpack.c.l.b16 %v1486
    %v5342 = vunpack.c.l.b16 %v1487
    %v5343 = vunpack.c.l.b16 %v1488
    %v5344 = vunpack.c.l.b16 %v1489
    %v5345 = vunpack.c.l.b16 %v1490
    %v5346 = vunpack.c.l.b16 %v1491
    %v5347 = vunpack.c.l.b16 %v1492
    %v5348 = vunpack.c.l.b16 %v1493
    %v5349 = vunpack.c.l.b16 %v1494
    %v5350 = vunpack.c.l.b16 %v1495
    %v5351 = vunpack.c.l.b16 %v1496
    %v5352 = vunpack.c.l.b16 %v1497
    %v5353 = vunpack.c.l.b16 %v1498
    %v5354 = vunpack.c.l.b16 %v1499
    %v5355 = vunpack.c.l.b16 %v1500
    %v5356 = vunpack.c.l.b16 %v1501
    %v5357 = vpack.c.b16 %v4174, %v4173
    %v5358 = vpack.c.b16 %v4176, %v4175
    %v5359 = vpack.c.b16 %v4178, %v4177
    %v5360 = vpack.c.b16 %v4180, %v4179
    %v5361 = vpack.c.b16 %v4182, %v4181
    %v5362 = vpack.c.b16 %v4184, %v4183
    %v5363 = vpack.c.b16 %v4186, %v4185
    %v5364 = vpack.c.b16 %v4188, %v4187
    %v5365 = vpack.c.b16 %v4190, %v4189
    %v5366 = vpack.c.b16 %v4192, %v4191
    %v5367 = vpack.c.b16 %v4194, %v4193
    %v5368 = vpack.c.b16 %v4196, %v4195
    %v5369 = vpack.c.b16 %v4198, %v4197
    %v5370 = vpack.c.b16 %v4200, %v4199
    %v5371 = vpack.c.b16 %v4202, %v4201
    %v5372 = vpack.c.b16 %v4204, %v4203
    %v5373 = vpack.c.b16 %v4206, %v4205
    %v5374 = vpack.c.b16 %v4208, %v4207
    %v5375 = vpack.c.b16 %v4210, %v4209
    %v5376 = vpack.c.b16 %v4212, %v4211
    %v5377 = vpack.c.b16 %v4214, %v4213
    %v5378 = vpack.c.b16 %v4216, %v4215
    %v5379 = vpack.c.b16 %v4218, %v4217
    %v5380 = vpack.c.b16 %v4220, %v4219
    %v5381 = vpack.c.b16 %v4222, %v4221
    %v5382 = vpack.c.b16 %v4224, %v4223
    %v5383 = vpack.c.b16 %v4226, %v4225
    %v5384 = vpack.c.b16 %v4228, %v4227
    %v5385 = vpack.c.b16 %v4230, %v4229
    %v5386 = vpack.c.b16 %v4232, %v4231
    %v5387 = vpack.c.b16 %v4234, %v4233
    %v5388 = vpack.c.b16 %v4236, %v4235
    %v5389 = vpack.c.b16 %v4238, %v4237
    %v5390 = vpack.c.b16 %v4240, %v4239
    %v5391 = vpack.c.b16 %v4242, %v4241
    %v5392 = vpack.c.b16 %v4244, %v4243
    %v5393 = vpack.c.b16 %v4246, %v4245
    %v5394 = vpack.c.b16 %v4248, %v4247
    %v5395 = vpack.c.b16 %v4250, %v4249
    %v5396 = vpack.c.b16 %v4252, %v4251
    %v5397 = vpack.c.b16 %v4254, %v4253
    %v5398 = vpack.c.b16 %v4256, %v4255
    %v5399 = vpack.c.b16 %v4258, %v4257
    %v5400 = vpack.c.b16 %v4260, %v4259
    %v5401 = vpack.c.b16 %v4262, %v4261
    %v5402 = vpack.c.b16 %v4264, %v4263
    %v5403 = vpack.c.b16 %v4266, %v4265
    %v5404 = vpack.c.b16 %v4268, %v4267
    %v5405 = vpack.c.b16 %v4270, %v4269
    %v5406 = vpack.c.b16 %v4272, %v4271
    %v5407 = vpack.c.b16 %v4274, %v4273
    %v5408 = vpack.c.b16 %v4276, %v4275
    %v5409 = vpack.c.b16 %v4278, %v4277
    %v5410 = vpack.c.b16 %v4280, %v4279
    %v5411 = vpack.c.b16 %v4282, %v4281
    %v5412 = vpack.c.b16 %v4284, %v4283
    %v5413 = vpack.c.b16 %v4286, %v4285
    %v5414 = vpack.c.b16 %v4288, %v4287
    %v5415 = vpack.c.b16 %v4290, %v4289
    %v5416 = vpack.c.b16 %v4292, %v4291
    %v5417 = vpack.c.b16 %v4294, %v4293
    %v5418 = vpack.c.b16 %v4296, %v4295
    %v5419 = vpack.c.b16 %v4298, %v4297
    %v5420 = vpack.c.b16 %v4300, %v4299
    %v5421 = vpack.c.b16 %v4302, %v4301
    %v5422 = vpack.c.b16 %v4304, %v4303
    %v5423 = vpack.c.b16 %v4306, %v4305
    %v5424 = vpack.c.b16 %v4308, %v4307
    %v5425 = vpack.c.b16 %v4310, %v4309
    %v5426 = vpack.c.b16 %v4312, %v4311
    %v5427 = vpack.c.b16 %v4314, %v4313
    %v5428 = vpack.c.b16 %v4316, %v4315
    %v5429 = vpack.c.b16 %v4318, %v4317
    %v5430 = vpack.c.b16 %v4320, %v4319
    %v5431 = vpack.c.b16 %v4322, %v4321
    %v5432 = vpack.c.b16 %v4324, %v4323
    %v5433 = vpack.c.b16 %v4326, %v4325
    %v5434 = vpack.c.b16 %v4328, %v4327
    %v5435 = vpack.c.b16 %v4330, %v4329
    %v5436 = vpack.c.b16 %v4332, %v4331
    %v5437 = vpack.c.b16 %v4334, %v4333
    %v5438 = vpack.c.b16 %v4336, %v4335
    %v5439 = vpack.c.b16 %v4338, %v4337
    %v5440 = vpack.c.b16 %v4340, %v4339
    %v5441 = vpack.c.b16 %v4342, %v4341
    %v5442 = vpack.c.b16 %v4344, %v4343
    %v5443 = vpack.c.b16 %v4346, %v4345
    %v5444 = vpack.c.b16 %v4348, %v4347
    %v5445 = vpack.c.b16 %v4350, %v4349
    %v5446 = vpack.c.b16 %v4352, %v4351
    %v5447 = vpack.c.b16 %v4354, %v4353
    %v5448 = vpack.c.b16 %v4356, %v4355
    %v5449 = vpack.c.b16 %v4358, %v4357
    %v5450 = vpack.c.b16 %v4360, %v4359
    %v5451 = vpack.c.b16 %v4362, %v4361
    %v5452 = vpack.c.b16 %v4364, %v4363
    %v5453 = vpack.c.b16 %v4366, %v4365
    %v5454 = vpack.c.b16 %v4368, %v4367
    %v5455 = vpack.c.b16 %v4370, %v4369
    %v5456 = vpack.c.b16 %v4372, %v4371
    %v5457 = vpack.c.b16 %v4374, %v4373
    %v5458 = vpack.c.b16 %v4376, %v4375
    %v5459 = vpack.c.b16 %v4378, %v4377
    %v5460 = vpack.c.b16 %v4380, %v4379
    %v5461 = vpack.c.b16 %v4382, %v4381
    %v5462 = vpack.c.b16 %v4384, %v4383
    %v5463 = vpack.c.b16 %v4386, %v4385
    %v5464 = vpack.c.b16 %v4388, %v4387
    %v5465 = vpack.c.b16 %v4390, %v4389
    %v5466 = vpack.c.b16 %v4392, %v4391
    %v5467 = vpack.c.b16 %v4394, %v4393
    %v5468 = vpack.c.b16 %v4396, %v4395
    %v5469 = vpack.c.b16 %v4398, %v4397
    %v5470 = vpack.c.b16 %v4400, %v4399
    %v5471 = vpack.c.b16 %v4402, %v4401
    %v5472 = vpack.c.b16 %v4404, %v4403
    %v5473 = vpack.c.b16 %v4406, %v4405
    %v5474 = vpack.c.b16 %v4408, %v4407
    %v5475 = vpack.c.b16 %v4410, %v4409
    %v5476 = vpack.c.b16 %v4412, %v4411
    %v5477 = vpack.c.b16 %v4414, %v4413
    %v5478 = vpack.c.b16 %v4416, %v4415
    %v5479 = vpack.c.b16 %v4418, %v4417
    %v5480 = vpack.c.b16 %v4420, %v4419
    %v5481 = vpack.c.b16 %v4422, %v4421
    %v5482 = vpack.c.b16 %v4424, %v4423
    %v5483 = vpack.c.b16 %v4426, %v4425
    %v5484 = vpack.c.b16 %v4428, %v4427
    %v5485 = vpack.c.b16 %v4430, %v4429
    %v5486 = vpack.c.b16 %v4432, %v4431
    %v5487 = vpack.c.b16 %v4434, %v4433
    %v5488 = vpack.c.b16 %v4436, %v4435
    %v5489 = vpack.c.b16 %v4438, %v4437
    %v5490 = vpack.c.b16 %v4440, %v4439
    %v5491 = vpack.c.b16 %v4442, %v4441
    %v5492 = vpack.c.b16 %v4444, %v4443
    %v5493 = vpack.c.b16 %v4446, %v4445
    %v5494 = vpack.c.b16 %v4448, %v4447
    %v5495 = vpack.c.b16 %v4450, %v4449
    %v5496 = vpack.c.b16 %v4452, %v4451
    %v5497 = vpack.c.b16 %v4454, %v4453
    %v5498 = vpack.c.b16 %v4456, %v4455
    %v5499 = vpack.c.b16 %v4458, %v4457
    %v5500 = vpack.c.b16 %v4460, %v4459
    %v5501 = vpack.c.b16 %v4462, %v4461
    %v5502 = vpack.c.b16 %v4464, %v4463
    %v5503 = vpack.c.b16 %v4466, %v4465
    %v5504 = vpack.c.b16 %v4468, %v4467
    %v5505 = vpack.c.b16 %v4470, %v4469
    %v5506 = vpack.c.b16 %v4472, %v4471
    %v5507 = vpack.c.b16 %v4474, %v4473
    %v5508 = vpack.c.b16 %v4476, %v4475
    %v5509 = vpack.c.b16 %v4478, %v4477
    %v5510 = vpack.c.b16 %v4480, %v4479
    %v5511 = vpack.c.b16 %v4482, %v4481
    %v5512 = vpack.c.b16 %v4484, %v4483
    %v5513 = vpack.c.b16 %v4486, %v4485
    %v5514 = vpack.c.b16 %v4488, %v4487
    %v5515 = vpack.c.b16 %v4490, %v4489
    %v5516 = vpack.c.b16 %v4492, %v4491
    %v5517 = vpack.c.b16 %v4494, %v4493
    %v5518 = vpack.c.b16 %v4496, %v4495
    %v5519 = vpack.c.b16 %v4498, %v4497
    %v5520 = vpack.c.b16 %v4500, %v4499
    %v5521 = vpack.c.b16 %v4502, %v4501
    %v5522 = vpack.c.b16 %v4504, %v4503
    %v5523 = vpack.c.b16 %v4506, %v4505
    %v5524 = vpack.c.b16 %v4508, %v4507
    %v5525 = vpack.c.b16 %v4510, %v4509
    %v5526 = vpack.c.b16 %v4512, %v4511
    %v5527 = vpack.c.b16 %v4514, %v4513
    %v5528 = vpack.c.b16 %v4516, %v4515
    %v5529 = vpack.c.b16 %v4518, %v4517
    %v5530 = vpack.c.b16 %v4520, %v4519
    %v5531 = vpack.c.b16 %v4522, %v4521
    %v5532 = vpack.c.b16 %v4524, %v4523
    %v5533 = vpack.c.b16 %v4526, %v4525
    %v5534 = vpack.c.b16 %v4528, %v4527
    %v5535 = vpack.c.b16 %v4530, %v4529
    %v5536 = vpack.c.b16 %v4532, %v4531
    %v5537 = vpack.c.b16 %v4534, %v4533
    %v5538 = vpack.c.b16 %v4536, %v4535
    %v5539 = vpack.c.b16 %v4538, %v4537
    %v5540 = vpack.c.b16 %v4540, %v4539
    %v5541 = vpack.c.b16 %v4542, %v4541
    %v5542 = vpack.c.b16 %v4544, %v4543
    %v5543 = vpack.c.b16 %v4546, %v4545
    %v5544 = vpack.c.b16 %v4548, %v4547
    %v5545 = vpack.c.b16 %v4550, %v4549
    %v5546 = vpack.c.b16 %v4552, %v4551
    %v5547 = vpack.c.b16 %v4554, %v4553
    %v5548 = vpack.c.b16 %v4556, %v4555
    %v5549 = vpack.c.b16 %v4558, %v4557
    %v5550 = vpack.c.b16 %v4560, %v4559
    %v5551 = vpack.c.b16 %v4562, %v4561
    %v5552 = vpack.c.b16 %v4564, %v4563
    %v5553 = vpack.c.b16 %v4566, %v4565
    %v5554 = vpack.c.b16 %v4568, %v4567
    %v5555 = vpack.c.b16 %v4570, %v4569
    %v5556 = vpack.c.b16 %v4572, %v4571
    %v5557 = vpack.c.b16 %v4574, %v4573
    %v5558 = vpack.c.b16 %v4576, %v4575
    %v5559 = vpack.c.b16 %v4578, %v4577
    %v5560 = vpack.c.b16 %v4580, %v4579
    %v5561 = vpack.c.b16 %v4582, %v4581
    %v5562 = vpack.c.b16 %v4584, %v4583
    %v5563 = vpack.c.b16 %v4586, %v4585
    %v5564 = vpack.c.b16 %v4588, %v4587
    %v5565 = vpack.c.b16 %v4590, %v4589
    %v5566 = vpack.c.b16 %v4592, %v4591
    %v5567 = vpack.c.b16 %v4594, %v4593
    %v5568 = vpack.c.b16 %v4596, %v4595
    %v5569 = vpack.c.b16 %v4598, %v4597
    %v5570 = vpack.c.b16 %v4600, %v4599
    %v5571 = vpack.c.b16 %v4602, %v4601
    %v5572 = vpack.c.b16 %v4604, %v4603
    %v5573 = vpack.c.b16 %v4606, %v4605
    %v5574 = vpack.c.b16 %v4608, %v4607
    %v5575 = vpack.c.b16 %v4610, %v4609
    %v5576 = vpack.c.b16 %v4612, %v4611
    %v5577 = vpack.c.b16 %v4614, %v4613
    %v5578 = vpack.c.b16 %v4616, %v4615
    %v5579 = vpack.c.b16 %v4618, %v4617
    %v5580 = vpack.c.b16 %v4620, %v4619
    %v5581 = vpack.c.b16 %v4622, %v4621
    %v5582 = vpack.c.b16 %v4624, %v4623
    %v5583 = vpack.c.b16 %v4626, %v4625
    %v5584 = vpack.c.b16 %v4628, %v4627
    %v5585 = vpack.c.b16 %v4630, %v4629
    %v5586 = vpack.c.b16 %v4632, %v4631
    %v5587 = vpack.c.b16 %v4634, %v4633
    %v5588 = vpack.c.b16 %v4636, %v4635
    %v5589 = vpack.c.b16 %v4638, %v4637
    %v5590 = vpack.c.b16 %v4640, %v4639
    %v5591 = vpack.c.b16 %v4642, %v4641
    %v5592 = vpack.c.b16 %v4644, %v4643
    %v5593 = vpack.c.b16 %v4646, %v4645
    %v5594 = vpack.c.b16 %v4648, %v4647
    %v5595 = vpack.c.b16 %v4650, %v4649
    %v5596 = vpack.c.b16 %v4652, %v4651
    %v5597 = vpack.c.b16 %v4654, %v4653
    %v5598 = vpack.c.b16 %v4656, %v4655
    %v5599 = vpack.c.b16 %v4658, %v4657
    %v5600 = vpack.c.b16 %v4660, %v4659
    %v5601 = vpack.c.b16 %v4662, %v4661
    %v5602 = vpack.c.b16 %v4664, %v4663
    %v5603 = vpack.c.b16 %v4666, %v4665
    %v5604 = vpack.c.b16 %v4668, %v4667
    %v5605 = vpack.c.b16 %v4670, %v4669
    %v5606 = vpack.c.b16 %v4672, %v4671
    %v5607 = vpack.c.b16 %v4674, %v4673
    %v5608 = vpack.c.b16 %v4676, %v4675
    %v5609 = vpack.c.b16 %v4678, %v4677
    %v5610 = vpack.c.b16 %v4680, %v4679
    %v5611 = vpack.c.b16 %v4682, %v4681
    %v5612 = vpack.c.b16 %v4684, %v4683
    %v5613 = vpack.c.b16 %v4686, %v4685
    %v5614 = vpack.c.b16 %v4688, %v4687
    %v5615 = vpack.c.b16 %v4690, %v4689
    %v5616 = vpack.c.b16 %v4692, %v4691
    %v5617 = vpack.c.b16 %v4694, %v4693
    %v5618 = vpack.c.b16 %v4696, %v4695
    %v5619 = vpack.c.b16 %v4698, %v4697
    %v5620 = vpack.c.b16 %v4700, %v4699
    %v5621 = vpack.c.b16 %v4702, %v4701
    %v5622 = vpack.c.b16 %v4704, %v4703
    %v5623 = vpack.c.b16 %v4706, %v4705
    %v5624 = vpack.c.b16 %v4708, %v4707
    %v5625 = vpack.c.b16 %v4710, %v4709
    %v5626 = vpack.c.b16 %v4712, %v4711
    %v5627 = vpack.c.b16 %v4714, %v4713
    %v5628 = vpack.c.b16 %v4716, %v4715
    %v5629 = vpack.c.b16 %v4718, %v4717
    %v5630 = vpack.c.b16 %v4720, %v4719
    %v5631 = vpack.c.b16 %v4722, %v4721
    %v5632 = vpack.c.b16 %v4724, %v4723
    %v5633 = vpack.c.b16 %v4726, %v4725
    %v5634 = vpack.c.b16 %v4728, %v4727
    %v5635 = vpack.c.b16 %v4730, %v4729
    %v5636 = vpack.c.b16 %v4732, %v4731
    %v5637 = vpack.c.b16 %v4734, %v4733
    %v5638 = vpack.c.b16 %v4736, %v4735
    %v5639 = vpack.c.b16 %v4738, %v4737
    %v5640 = vpack.c.b16 %v4740, %v4739
    %v5641 = vpack.c.b16 %v4742, %v4741
    %v5642 = vpack.c.b16 %v4744, %v4743
    %v5643 = vpack.c.b16 %v4746, %v4745
    %v5644 = vpack.c.b16 %v4748, %v4747
    %v5645 = vpack.c.b16 %v4750, %v4749
    %v5646 = vpack.c.b16 %v4752, %v4751
    %v5647 = vpack.c.b16 %v4754, %v4753
    %v5648 = vpack.c.b16 %v4756, %v4755
    %v5649 = vpack.c.b16 %v4758, %v4757
    %v5650 = vpack.c.b16 %v4760, %v4759
    %v5651 = vpack.c.b16 %v4762, %v4761
    %v5652 = vpack.c.b16 %v4764, %v4763
    %v5653 = vpack.c.b16 %v4766, %v4765
    %v5654 = vpack.c.b16 %v4768, %v4767
    %v5655 = vpack.c.b16 %v4770, %v4769
    %v5656 = vpack.c.b16 %v4772, %v4771
    %v5657 = vpack.c.b16 %v4774, %v4773
    %v5658 = vpack.c.b16 %v4776, %v4775
    %v5659 = vpack.c.b16 %v4778, %v4777
    %v5660 = vpack.c.b16 %v4780, %v4779
    %v5661 = vpack.c.b16 %v4782, %v4781
    %v5662 = vpack.c.b16 %v4784, %v4783
    %v5663 = vpack.c.b16 %v4786, %v4785
    %v5664 = vpack.c.b16 %v4788, %v4787
    %v5665 = vpack.c.b16 %v4790, %v4789
    %v5666 = vpack.c.b16 %v4792, %v4791
    %v5667 = vpack.c.b16 %v4794, %v4793
    %v5668 = vpack.c.b16 %v4796, %v4795
    %v5669 = vpack.c.b16 %v4798, %v4797
    %v5670 = vpack.c.b16 %v4800, %v4799
    %v5671 = vpack.c.b16 %v4802, %v4801
    %v5672 = vpack.c.b16 %v4804, %v4803
    %v5673 = vpack.c.b16 %v4806, %v4805
    %v5674 = vpack.c.b16 %v4808, %v4807
    %v5675 = vpack.c.b16 %v4810, %v4809
    %v5676 = vpack.c.b16 %v4812, %v4811
    %v5677 = vpack.c.b16 %v4814, %v4813
    %v5678 = vpack.c.b16 %v4816, %v4815
    %v5679 = vpack.c.b16 %v4818, %v4817
    %v5680 = vpack.c.b16 %v4820, %v4819
    %v5681 = vpack.c.b16 %v4822, %v4821
    %v5682 = vpack.c.b16 %v4824, %v4823
    %v5683 = vpack.c.b16 %v4826, %v4825
    %v5684 = vpack.c.b16 %v4828, %v4827
    %v5685 = vpack.c.b16 %v4830, %v4829
    %v5686 = vpack.c.b16 %v4832, %v4831
    %v5687 = vpack.c.b16 %v4834, %v4833
    %v5688 = vpack.c.b16 %v4836, %v4835
    %v5689 = vpack.c.b16 %v4838, %v4837
    %v5690 = vpack.c.b16 %v4840, %v4839
    %v5691 = vpack.c.b16 %v4842, %v4841
    %v5692 = vpack.c.b16 %v4844, %v4843
    %v5693 = vpack.c.b16 %v4846, %v4845
    %v5694 = vpack.c.b16 %v4848, %v4847
    %v5695 = vpack.c.b16 %v4850, %v4849
    %v5696 = vpack.c.b16 %v4852, %v4851
    %v5697 = vpack.c.b16 %v4854, %v4853
    %v5698 = vpack.c.b16 %v4856, %v4855
    %v5699 = vpack.c.b16 %v4858, %v4857
    %v5700 = vpack.c.b16 %v4860, %v4859
    %v5701 = vpack.c.b16 %v4862, %v4861
    %v5702 = vpack.c.b16 %v4864, %v4863
    %v5703 = vpack.c.b16 %v4866, %v4865
    %v5704 = vpack.c.b16 %v4868, %v4867
    %v5705 = vpack.c.b16 %v4870, %v4869
    %v5706 = vpack.c.b16 %v4872, %v4871
    %v5707 = vpack.c.b16 %v4874, %v4873
    %v5708 = vpack.c.b16 %v4876, %v4875
    %v5709 = vpack.c.b16 %v4878, %v4877
    %v5710 = vpack.c.b16 %v4880, %v4879
    %v5711 = vpack.c.b16 %v4882, %v4881
    %v5712 = vpack.c.b16 %v4884, %v4883
    %v5713 = vpack.c.b16 %v4886, %v4885
    %v5714 = vpack.c.b16 %v4888, %v4887
    %v5715 = vpack.c.b16 %v4890, %v4889
    %v5716 = vpack.c.b16 %v4892, %v4891
    %v5717 = vpack.c.b16 %v4894, %v4893
    %v5718 = vpack.c.b16 %v4896, %v4895
    %v5719 = vpack.c.b16 %v4898, %v4897
    %v5720 = vpack.c.b16 %v4900, %v4899
    %v5721 = vpack.c.b16 %v4902, %v4901
    %v5722 = vpack.c.b16 %v4904, %v4903
    %v5723 = vpack.c.b16 %v4906, %v4905
    %v5724 = vpack.c.b16 %v4908, %v4907
    %v5725 = vpack.c.b16 %v4910, %v4909
    %v5726 = vpack.c.b16 %v4912, %v4911
    %v5727 = vpack.c.b16 %v4914, %v4913
    %v5728 = vpack.c.b16 %v4916, %v4915
    %v5729 = vpack.c.b16 %v4918, %v4917
    %v5730 = vpack.c.b16 %v4920, %v4919
    %v5731 = vpack.c.b16 %v4922, %v4921
    %v5732 = vpack.c.b16 %v4924, %v4923
    %v5733 = vpack.c.b16 %v4926, %v4925
    %v5734 = vpack.c.b16 %v4928, %v4927
    %v5735 = vpack.c.b16 %v4930, %v4929
    %v5736 = vpack.c.b16 %v4932, %v4931
    %v5737 = vpack.c.b16 %v4934, %v4933
    %v5738 = vpack.c.b16 %v4936, %v4935
    %v5739 = vpack.c.b16 %v4938, %v4937
    %v5740 = vpack.c.b16 %v4940, %v4939
    %v5741 = vpack.c.b16 %v4942, %v4941
    %v5742 = vpack.c.b16 %v4944, %v4943
    %v5743 = vpack.c.b16 %v4946, %v4945
    %v5744 = vpack.c.b16 %v4948, %v4947
    %v5745 = vpack.c.b16 %v4950, %v4949
    %v5746 = vpack.c.b16 %v4952, %v4951
    %v5747 = vpack.c.b16 %v4954, %v4953
    %v5748 = vpack.c.b16 %v4956, %v4955
    %v5749 = vpack.c.b16 %v4958, %v4957
    %v5750 = vpack.c.b16 %v4960, %v4959
    %v5751 = vpack.c.b16 %v4962, %v4961
    %v5752 = vpack.c.b16 %v4964, %v4963
    %v5753 = vpack.c.b16 %v4966, %v4965
    %v5754 = vpack.c.b16 %v4968, %v4967
    %v5755 = vpack.c.b16 %v4970, %v4969
    %v5756 = vpack.c.b16 %v4972, %v4971
    %v5757 = vpack.c.b16 %v4974, %v4973
    %v5758 = vpack.c.b16 %v4976, %v4975
    %v5759 = vpack.c.b16 %v4978, %v4977
    %v5760 = vpack.c.b16 %v4980, %v4979
    %v5761 = vpack.c.b16 %v4982, %v4981
    %v5762 = vpack.c.b16 %v4984, %v4983
    %v5763 = vpack.c.b16 %v4986, %v4985
    %v5764 = vpack.c.b16 %v4988, %v4987
    %v5765 = vpack.c.b16 %v4990, %v4989
    %v5766 = vpack.c.b16 %v4992, %v4991
    %v5767 = vpack.c.b16 %v4994, %v4993
    %v5768 = vpack.c.b16 %v4996, %v4995
    %v5769 = vpack.c.b16 %v4998, %v4997
    %v5770 = vpack.c.b16 %v5000, %v4999
    %v5771 = vpack.c.b16 %v5002, %v5001
    %v5772 = vpack.c.b16 %v5004, %v5003
    %v5773 = vpack.c.b16 %v5006, %v5005
    %v5774 = vpack.c.b16 %v5008, %v5007
    %v5775 = vpack.c.b16 %v5010, %v5009
    %v5776 = vpack.c.b16 %v5012, %v5011
    %v5777 = vpack.c.b16 %v5014, %v5013
    %v5778 = vpack.c.b16 %v5016, %v5015
    %v5779 = vpack.c.b16 %v5018, %v5017
    %v5780 = vpack.c.b16 %v5020, %v5019
    %v5781 = vpack.c.b16 %v5022, %v5021
    %v5782 = vpack.c.b16 %v5024, %v5023
    %v5783 = vpack.c.b16 %v5026, %v5025
    %v5784 = vpack.c.b16 %v5028, %v5027
    %v5785 = vpack.c.b16 %v5030, %v5029
    %v5786 = vpack.c.b16 %v5032, %v5031
    %v5787 = vpack.c.b16 %v5034, %v5033
    %v5788 = vpack.c.b16 %v5036, %v5035
    %v5789 = vpack.c.b16 %v5038, %v5037
    %v5790 = vpack.c.b16 %v5040, %v5039
    %v5791 = vpack.c.b16 %v5042, %v5041
    %v5792 = vpack.c.b16 %v5044, %v5043
    %v5793 = vpack.c.b16 %v5046, %v5045
    %v5794 = vpack.c.b16 %v5048, %v5047
    %v5795 = vpack.c.b16 %v5050, %v5049
    %v5796 = vpack.c.b16 %v5052, %v5051
    %v5797 = vpack.c.b16 %v5054, %v5053
    %v5798 = vpack.c.b16 %v5056, %v5055
    %v5799 = vpack.c.b16 %v5058, %v5057
    %v5800 = vpack.c.b16 %v5060, %v5059
    %v5801 = vpack.c.b16 %v5062, %v5061
    %v5802 = vpack.c.b16 %v5064, %v5063
    %v5803 = vpack.c.b16 %v5066, %v5065
    %v5804 = vpack.c.b16 %v5068, %v5067
    %v5805 = vpack.c.b16 %v5070, %v5069
    %v5806 = vpack.c.b16 %v5072, %v5071
    %v5807 = vpack.c.b16 %v5074, %v5073
    %v5808 = vpack.c.b16 %v5076, %v5075
    %v5809 = vpack.c.b16 %v5078, %v5077
    %v5810 = vpack.c.b16 %v5080, %v5079
    %v5811 = vpack.c.b16 %v5082, %v5081
    %v5812 = vpack.c.b16 %v5084, %v5083
    %v5813 = vpack.c.b16 %v5086, %v5085
    %v5814 = vpack.c.b16 %v5088, %v5087
    %v5815 = vpack.c.b16 %v5090, %v5089
    %v5816 = vpack.c.b16 %v5092, %v5091
    %v5817 = vpack.c.b16 %v5094, %v5093
    %v5818 = vpack.c.b16 %v5096, %v5095
    %v5819 = vpack.c.b16 %v5098, %v5097
    %v5820 = vpack.c.b16 %v5100, %v5099
    %v5821 = vpack.c.b16 %v5102, %v5101
    %v5822 = vpack.c.b16 %v5104, %v5103
    %v5823 = vpack.c.b16 %v5106, %v5105
    %v5824 = vpack.c.b16 %v5108, %v5107
    %v5825 = vpack.c.b16 %v5110, %v5109
    %v5826 = vpack.c.b16 %v5112, %v5111
    %v5827 = vpack.c.b16 %v5114, %v5113
    %v5828 = vpack.c.b16 %v5116, %v5115
    %v5829 = vpack.c.b16 %v5118, %v5117
    %v5830 = vpack.c.b16 %v5120, %v5119
    %v5831 = vpack.c.b16 %v5122, %v5121
    %v5832 = vpack.c.b16 %v5124, %v5123
    %v5833 = vpack.c.b16 %v5126, %v5125
    %v5834 = vpack.c.b16 %v5128, %v5127
    %v5835 = vpack.c.b16 %v5130, %v5129
    %v5836 = vpack.c.b16 %v5132, %v5131
    %v5837 = vpack.c.b16 %v5134, %v5133
    %v5838 = vpack.c.b16 %v5136, %v5135
    %v5839 = vpack.c.b16 %v5138, %v5137
    %v5840 = vpack.c.b16 %v5140, %v5139
    %v5841 = vpack.c.b16 %v5142, %v5141
    %v5842 = vpack.c.b16 %v5144, %v5143
    %v5843 = vpack.c.b16 %v5146, %v5145
    %v5844 = vpack.c.b16 %v5148, %v5147
    %v5845 = vpack.c.b16 %v5150, %v5149
    %v5846 = vpack.c.b16 %v5152, %v5151
    %v5847 = vpack.c.b16 %v5154, %v5153
    %v5848 = vpack.c.b16 %v5156, %v5155
    %v5849 = vpack.c.b16 %v5158, %v5157
    %v5850 = vpack.c.b16 %v5160, %v5159
    %v5851 = vpack.c.b16 %v5162, %v5161
    %v5852 = vpack.c.b16 %v5164, %v5163
    %v5853 = vpack.c.b16 %v5166, %v5165
    %v5854 = vpack.c.b16 %v5168, %v5167
    %v5855 = vpack.c.b16 %v5170, %v5169
    %v5856 = vpack.c.b16 %v5172, %v5171
    %v5857 = vpack.c.b16 %v5174, %v5173
    %v5858 = vpack.c.b16 %v5176, %v5175
    %v5859 = vpack.c.b16 %v5178, %v5177
    %v5860 = vpack.c.b16 %v5180, %v5179
    %v5861 = vpack.c.b16 %v5182, %v5181
    %v5862 = vpack.c.b16 %v5184, %v5183
    %v5863 = vpack.c.b16 %v5186, %v5185
    %v5864 = vpack.c.b16 %v5188, %v5187
    %v5865 = vpack.c.b16 %v5190, %v5189
    %v5866 = vpack.c.b16 %v5192, %v5191
    %v5867 = vpack.c.b16 %v5194, %v5193
    %v5868 = vpack.c.b16 %v5196, %v5195
    %v5869 = vpack.c.b16 %v5198, %v5197
    %v5870 = vpack.c.b16 %v5200, %v5199
    %v5871 = vpack.c.b16 %v5202, %v5201
    %v5872 = vpack.c.b16 %v5204, %v5203
    %v5873 = vpack.c.b16 %v5206, %v5205
    %v5874 = vpack.c.b16 %v5208, %v5207
    %v5875 = vpack.c.b16 %v5210, %v5209
    %v5876 = vpack.c.b16 %v5212, %v5211
    %v5877 = vpack.c.b16 %v5214, %v5213
    %v5878 = vpack.c.b16 %v5216, %v5215
    %v5879 = vpack.c.b16 %v5218, %v5217
    %v5880 = vpack.c.b16 %v5220, %v5219
    %v5881 = vpack.c.b16 %v5222, %v5221
    %v5882 = vpack.c.b16 %v5224, %v5223
    %v5883 = vpack.c.b16 %v5226, %v5225
    %v5884 = vpack.c.b16 %v5228, %v5227
    %v5885 = vpack.c.b16 %v5230, %v5229
    %v5886 = vpack.c.b16 %v5232, %v5231
    %v5887 = vpack.c.b16 %v5234, %v5233
    %v5888 = vpack.c.b16 %v5236, %v5235
    %v5889 = vpack.c.b16 %v5238, %v5237
    %v5890 = vpack.c.b16 %v5240, %v5239
    %v5891 = vpack.c.b16 %v5242, %v5241
    %v5892 = vpack.c.b16 %v5244, %v5243
    %v5893 = vpack.c.b16 %v5246, %v5245
    %v5894 = vpack.c.b16 %v5248, %v5247
    %v5895 = vpack.c.b16 %v5250, %v5249
    %v5896 = vpack.c.b16 %v5252, %v5251
    %v5897 = vpack.c.b16 %v5254, %v5253
    %v5898 = vpack.c.b16 %v5256, %v5255
    %v5899 = vpack.c.b16 %v5258, %v5257
    %v5900 = vpack.c.b16 %v5260, %v5259
    %v5901 = vpack.c.b16 %v5262, %v5261
    %v5902 = vpack.c.b16 %v5264, %v5263
    %v5903 = vpack.c.b16 %v5266, %v5265
    %v5904 = vpack.c.b16 %v5268, %v5267
    %v5905 = vpack.c.b16 %v5270, %v5269
    %v5906 = vpack.c.b16 %v5272, %v5271
    %v5907 = vpack.c.b16 %v5274, %v5273
    %v5908 = vpack.c.b16 %v5276, %v5275
    %v5909 = vpack.c.b16 %v5278, %v5277
    %v5910 = vpack.c.b16 %v5280, %v5279
    %v5911 = vpack.c.b16 %v5282, %v5281
    %v5912 = vpack.c.b16 %v5284, %v5283
    %v5913 = vpack.c.b16 %v5286, %v5285
    %v5914 = vpack.c.b16 %v5288, %v5287
    %v5915 = vpack.c.b16 %v5290, %v5289
    %v5916 = vpack.c.b16 %v5292, %v5291
    %v5917 = vpack.c.b16 %v5294, %v5293
    %v5918 = vpack.c.b16 %v5296, %v5295
    %v5919 = vpack.c.b16 %v5298, %v5297
    %v5920 = vpack.c.b16 %v5300, %v5299
    %v5921 = vpack.c.b16 %v5302, %v5301
    %v5922 = vpack.c.b16 %v5304, %v5303
    %v5923 = vpack.c.b16 %v5306, %v5305
    %v5924 = vpack.c.b16 %v5308, %v5307
    %v5925 = vpack.c.b16 %v5310, %v5309
    %v5926 = vpack.c.b16 %v5312, %v5311
    %v5927 = vpack.c.b16 %v5314, %v5313
    %v5928 = vpack.c.b16 %v5316, %v5315
    %v5929 = vpack.c.b16 %v5318, %v5317
    %v5930 = vpack.c.b16 %v5320, %v5319
    %v5931 = vpack.c.b16 %v5322, %v5321
    %v5932 = vpack.c.b16 %v5324, %v5323
    %v5933 = vpack.c.b16 %v5326, %v5325
    %v5934 = vpack.c.b16 %v5328, %v5327
    %v5935 = vpack.c.b16 %v5330, %v5329
    %v5936 = vpack.c.b16 %v5332, %v5331
    %v5937 = vpack.c.b16 %v5334, %v5333
    %v5938 = vpack.c.b16 %v5336, %v5335
    %v5939 = vpack.c.b16 %v5338, %v5337
    %v5940 = vpack.c.b16 %v5340, %v5339
    %v5941 = vpack.c.b16 %v5342, %v5341
    %v5942 = vpack.c.b16 %v5344, %v5343
    %v5943 = vpack.c.b16 %v5346, %v5345
    %v5944 = vpack.c.b16 %v5348, %v5347
    %v5945 = vpack.c.b16 %v5350, %v5349
    %v5946 = vpack.c.b16 %v5352, %v5351
    %v5947 = vpack.c.b16 %v5354, %v5353
    %v5948 = vpack.c.b16 %v5356, %v5355
    %6541 = vmatprep.subr.bf16.mxu0 0
    %6542 = vmatpush1.bf16.msra.mxu0 %v5364
    %6543 = vmatprep.subr.bf16.mxu0 0
    %6544 = vmatpush1.bf16.msra.mxu0 %v5363
    %6545 = vmatprep.subr.bf16.mxu0 0
    %6546 = vmatpush1.bf16.msra.mxu0 %v5362
    %6547 = vmatprep.subr.bf16.mxu0 0
    %6548 = vmatpush1.bf16.msra.mxu0 %v5361
    %6549 = vmatprep.subr.bf16.mxu0 0
    %6550 = vmatpush1.bf16.msra.mxu0 %v5360
    %6551 = vmatprep.subr.bf16.mxu0 0
    %6552 = vmatpush1.bf16.msra.mxu0 %v5359
    %6553 = vmatprep.subr.bf16.mxu0 0
    %6554 = vmatpush1.bf16.msra.mxu0 %v5358
    %6555 = vmatprep.subr.bf16.mxu0 0
    %6556 = vmatpush1.bf16.msra.mxu0 %v5357
    %6557 = vmatprep.subr.bf16.mxu0 0
    %6558 = vmatpush2.bf16.msra.mxu0 %v5372
    %6559 = vmatprep.subr.bf16.mxu0 0
    %6560 = vmatpush2.bf16.msra.mxu0 %v5371
    %6561 = vmatprep.subr.bf16.mxu0 0
    %6562 = vmatpush2.bf16.msra.mxu0 %v5370
    %6563 = vmatprep.subr.bf16.mxu0 0
    %6564 = vmatpush2.bf16.msra.mxu0 %v5369
    %6565 = vmatprep.subr.bf16.mxu0 0
    %6566 = vmatpush2.bf16.msra.mxu0 %v5368
    %6567 = vmatprep.subr.bf16.mxu0 0
    %6568 = vmatpush2.bf16.msra.mxu0 %v5367
    %6569 = vmatprep.subr.bf16.mxu0 0
    %6570 = vmatpush2.bf16.msra.mxu0 %v5366
    %6571 = vmatprep.subr.bf16.mxu0 0
    %6572 = vmatpush2.bf16.msra.mxu0 %v5365
    %6573 = vmatprep.mubr.bf16.mxu0 %v2398
    %6574 = vmatmul.mubr.bf16.gmra.mxu0 %v2397
    %v6575 = vpop.f32.mrf.mxu0
    %v6576 = vadd.f32 %v1507, %v6575
    %v6577 = vpop.f32.mrf.mxu0
    %v6578 = vpop.f32.mrf.mxu0
    %v6579 = vadd.f32 %v1507, %v6578
    %v6580 = vpop.f32.mrf.mxu0
    %6581 = vmatprep.mubr.bf16.mxu0 %v2472
    %6582 = vmatmul.mubr.bf16.gmra.mxu0 %v2471
    %v6583 = vpop.f32.mrf.mxu0
    %v6584 = vadd.f32 %v1507, %v6583
    %v6585 = vpop.f32.mrf.mxu0
    %v6586 = vpop.f32.mrf.mxu0
    %v6587 = vadd.f32 %v1507, %v6586
    %v6588 = vpop.f32.mrf.mxu0
    %6589 = vmatprep.mubr.bf16.mxu0 %v2546
    %6590 = vmatmul.mubr.bf16.gmra.mxu0 %v2545
    %v6591 = vpop.f32.mrf.mxu0
    %v6592 = vadd.f32 %v1507, %v6591
    %v6593 = vpop.f32.mrf.mxu0
    %v6594 = vpop.f32.mrf.mxu0
    %v6595 = vadd.f32 %v1507, %v6594
    %v6596 = vpop.f32.mrf.mxu0
    %6597 = vmatprep.mubr.bf16.mxu0 %v2620
    %6598 = vmatmul.mubr.bf16.gmra.mxu0 %v2619
    %v6599 = vpop.f32.mrf.mxu0
    %v6600 = vadd.f32 %v1507, %v6599
    %v6601 = vpop.f32.mrf.mxu0
    %v6602 = vpop.f32.mrf.mxu0
    %v6603 = vadd.f32 %v1507, %v6602
    %v6604 = vpop.f32.mrf.mxu0
    %6605 = vdwg.mxu0
    %6606 = vmatprep.subr.bf16.mxu0 0
    %6607 = vmatpush1.bf16.msra.mxu0 %v5380
    %6608 = vmatprep.subr.bf16.mxu0 0
    %6609 = vmatpush1.bf16.msra.mxu0 %v5379
    %6610 = vmatprep.subr.bf16.mxu0 0
    %6611 = vmatpush1.bf16.msra.mxu0 %v5378
    %6612 = vmatprep.subr.bf16.mxu0 0
    %6613 = vmatpush1.bf16.msra.mxu0 %v5377
    %6614 = vmatprep.subr.bf16.mxu0 0
    %6615 = vmatpush1.bf16.msra.mxu0 %v5376
    %6616 = vmatprep.subr.bf16.mxu0 0
    %6617 = vmatpush1.bf16.msra.mxu0 %v5375
    %6618 = vmatprep.subr.bf16.mxu0 0
    %6619 = vmatpush1.bf16.msra.mxu0 %v5374
    %6620 = vmatprep.subr.bf16.mxu0 0
    %6621 = vmatpush1.bf16.msra.mxu0 %v5373
    %6622 = vmatprep.subr.bf16.mxu0 0
    %6623 = vmatpush2.bf16.msra.mxu0 %v5388
    %6624 = vmatprep.subr.bf16.mxu0 0
    %6625 = vmatpush2.bf16.msra.mxu0 %v5387
    %6626 = vmatprep.subr.bf16.mxu0 0
    %6627 = vmatpush2.bf16.msra.mxu0 %v5386
    %6628 = vmatprep.subr.bf16.mxu0 0
    %6629 = vmatpush2.bf16.msra.mxu0 %v5385
    %6630 = vmatprep.subr.bf16.mxu0 0
    %6631 = vmatpush2.bf16.msra.mxu0 %v5384
    %6632 = vmatprep.subr.bf16.mxu0 0
    %6633 = vmatpush2.bf16.msra.mxu0 %v5383
    %6634 = vmatprep.subr.bf16.mxu0 0
    %6635 = vmatpush2.bf16.msra.mxu0 %v5382
    %6636 = vmatprep.subr.bf16.mxu0 0
    %6637 = vmatpush2.bf16.msra.mxu0 %v5381
    %6638 = vmatprep.mubr.bf16.mxu0 %v2400
    %6639 = vmatmul.mubr.bf16.gmra.mxu0 %v2399
    %v6640 = vpop.f32.mrf.mxu0
    %v6641 = vadd.f32 %v6576, %v6640
    %v6642 = vpop.f32.mrf.mxu0
    %v6643 = vpop.f32.mrf.mxu0
    %v6644 = vadd.f32 %v6579, %v6643
    %v6645 = vpop.f32.mrf.mxu0
    %6646 = vmatprep.mubr.bf16.mxu0 %v2474
    %6647 = vmatmul.mubr.bf16.gmra.mxu0 %v2473
    %v6648 = vpop.f32.mrf.mxu0
    %v6649 = vadd.f32 %v6584, %v6648
    %v6650 = vpop.f32.mrf.mxu0
    %v6651 = vpop.f32.mrf.mxu0
    %v6652 = vadd.f32 %v6587, %v6651
    %v6653 = vpop.f32.mrf.mxu0
    %6654 = vmatprep.mubr.bf16.mxu0 %v2548
    %6655 = vmatmul.mubr.bf16.gmra.mxu0 %v2547
    %v6656 = vpop.f32.mrf.mxu0
    %v6657 = vadd.f32 %v6592, %v6656
    %v6658 = vpop.f32.mrf.mxu0
    %v6659 = vpop.f32.mrf.mxu0
    %v6660 = vadd.f32 %v6595, %v6659
    %v6661 = vpop.f32.mrf.mxu0
    %6662 = vmatprep.mubr.bf16.mxu0 %v2622
    %6663 = vmatmul.mubr.bf16.gmra.mxu0 %v2621
    %v6664 = vpop.f32.mrf.mxu0
    %v6665 = vadd.f32 %v6600, %v6664
    %v6666 = vpop.f32.mrf.mxu0
    %v6667 = vpop.f32.mrf.mxu0
    %v6668 = vadd.f32 %v6603, %v6667
    %v6669 = vpop.f32.mrf.mxu0
    %6670 = vdwg.mxu0
    %6671 = vmatprep.subr.bf16.mxu0 0
    %6672 = vmatpush1.bf16.msra.mxu0 %v5396
    %6673 = vmatprep.subr.bf16.mxu0 0
    %6674 = vmatpush1.bf16.msra.mxu0 %v5395
    %6675 = vmatprep.subr.bf16.mxu0 0
    %6676 = vmatpush1.bf16.msra.mxu0 %v5394
    %6677 = vmatprep.subr.bf16.mxu0 0
    %6678 = vmatpush1.bf16.msra.mxu0 %v5393
    %6679 = vmatprep.subr.bf16.mxu0 0
    %6680 = vmatpush1.bf16.msra.mxu0 %v5392
    %6681 = vmatprep.subr.bf16.mxu0 0
    %6682 = vmatpush1.bf16.msra.mxu0 %v5391
    %6683 = vmatprep.subr.bf16.mxu0 0
    %6684 = vmatpush1.bf16.msra.mxu0 %v5390
    %6685 = vmatprep.subr.bf16.mxu0 0
    %6686 = vmatpush1.bf16.msra.mxu0 %v5389
    %6687 = vmatprep.subr.bf16.mxu0 0
    %6688 = vmatpush2.bf16.msra.mxu0 %v5404
    %6689 = vmatprep.subr.bf16.mxu0 0
    %6690 = vmatpush2.bf16.msra.mxu0 %v5403
    %6691 = vmatprep.subr.bf16.mxu0 0
    %6692 = vmatpush2.bf16.msra.mxu0 %v5402
    %6693 = vmatprep.subr.bf16.mxu0 0
    %6694 = vmatpush2.bf16.msra.mxu0 %v5401
    %6695 = vmatprep.subr.bf16.mxu0 0
    %6696 = vmatpush2.bf16.msra.mxu0 %v5400
    %6697 = vmatprep.subr.bf16.mxu0 0
    %6698 = vmatpush2.bf16.msra.mxu0 %v5399
    %6699 = vmatprep.subr.bf16.mxu0 0
    %6700 = vmatpush2.bf16.msra.mxu0 %v5398
    %6701 = vmatprep.subr.bf16.mxu0 0
    %6702 = vmatpush2.bf16.msra.mxu0 %v5397
    %6703 = vmatprep.mubr.bf16.mxu0 %v2402
    %6704 = vmatmul.mubr.bf16.gmra.mxu0 %v2401
    %v6705 = vpop.f32.mrf.mxu0
    %v6706 = vadd.f32 %v6641, %v6705
    %v6707 = vpop.f32.mrf.mxu0
    %v6708 = vpop.f32.mrf.mxu0
    %v6709 = vadd.f32 %v6644, %v6708
    %v6710 = vpop.f32.mrf.mxu0
    %6711 = vmatprep.mubr.bf16.mxu0 %v2476
    %6712 = vmatmul.mubr.bf16.gmra.mxu0 %v2475
    %v6713 = vpop.f32.mrf.mxu0
    %v6714 = vadd.f32 %v6649, %v6713
    %v6715 = vpop.f32.mrf.mxu0
    %v6716 = vpop.f32.mrf.mxu0
    %v6717 = vadd.f32 %v6652, %v6716
    %v6718 = vpop.f32.mrf.mxu0
    %6719 = vmatprep.mubr.bf16.mxu0 %v2550
    %6720 = vmatmul.mubr.bf16.gmra.mxu0 %v2549
    %v6721 = vpop.f32.mrf.mxu0
    %v6722 = vadd.f32 %v6657, %v6721
    %v6723 = vpop.f32.mrf.mxu0
    %v6724 = vpop.f32.mrf.mxu0
    %v6725 = vadd.f32 %v6660, %v6724
    %v6726 = vpop.f32.mrf.mxu0
    %6727 = vmatprep.mubr.bf16.mxu0 %v2624
    %6728 = vmatmul.mubr.bf16.gmra.mxu0 %v2623
    %v6729 = vpop.f32.mrf.mxu0
    %v6730 = vadd.f32 %v6665, %v6729
    %v6731 = vpop.f32.mrf.mxu0
    %v6732 = vpop.f32.mrf.mxu0
    %v6733 = vadd.f32 %v6668, %v6732
    %v6734 = vpop.f32.mrf.mxu0
    %6735 = vdwg.mxu0
    %6736 = vmatprep.subr.bf16.mxu0 0
    %6737 = vmatpush1.bf16.msra.mxu0 %v5412
    %6738 = vmatprep.subr.bf16.mxu0 0
    %6739 = vmatpush1.bf16.msra.mxu0 %v5411
    %6740 = vmatprep.subr.bf16.mxu0 0
    %6741 = vmatpush1.bf16.msra.mxu0 %v5410
    %6742 = vmatprep.subr.bf16.mxu0 0
    %6743 = vmatpush1.bf16.msra.mxu0 %v5409
    %6744 = vmatprep.subr.bf16.mxu0 0
    %6745 = vmatpush1.bf16.msra.mxu0 %v5408
    %6746 = vmatprep.subr.bf16.mxu0 0
    %6747 = vmatpush1.bf16.msra.mxu0 %v5407
    %6748 = vmatprep.subr.bf16.mxu0 0
    %6749 = vmatpush1.bf16.msra.mxu0 %v5406
    %6750 = vmatprep.subr.bf16.mxu0 0
    %6751 = vmatpush1.bf16.msra.mxu0 %v5405
    %6752 = vmatprep.subr.bf16.mxu0 0
    %6753 = vmatpush2.bf16.msra.mxu0 %v5420
    %6754 = vmatprep.subr.bf16.mxu0 0
    %6755 = vmatpush2.bf16.msra.mxu0 %v5419
    %6756 = vmatprep.subr.bf16.mxu0 0
    %6757 = vmatpush2.bf16.msra.mxu0 %v5418
    %6758 = vmatprep.subr.bf16.mxu0 0
    %6759 = vmatpush2.bf16.msra.mxu0 %v5417
    %6760 = vmatprep.subr.bf16.mxu0 0
    %6761 = vmatpush2.bf16.msra.mxu0 %v5416
    %6762 = vmatprep.subr.bf16.mxu0 0
    %6763 = vmatpush2.bf16.msra.mxu0 %v5415
    %6764 = vmatprep.subr.bf16.mxu0 0
    %6765 = vmatpush2.bf16.msra.mxu0 %v5414
    %6766 = vmatprep.subr.bf16.mxu0 0
    %6767 = vmatpush2.bf16.msra.mxu0 %v5413
    %6768 = vmatprep.mubr.bf16.mxu0 %v2404
    %6769 = vmatmul.mubr.bf16.gmra.mxu0 %v2403
    %v6770 = vpop.f32.mrf.mxu0
    %v6771 = vadd.f32 %v6706, %v6770
    %v6772 = vpop.f32.mrf.mxu0
    %v6773 = vpop.f32.mrf.mxu0
    %v6774 = vadd.f32 %v6709, %v6773
    %v6775 = vpop.f32.mrf.mxu0
    %6776 = vmatprep.mubr.bf16.mxu0 %v2478
    %6777 = vmatmul.mubr.bf16.gmra.mxu0 %v2477
    %v6778 = vpop.f32.mrf.mxu0
    %v6779 = vadd.f32 %v6714, %v6778
    %v6780 = vpop.f32.mrf.mxu0
    %v6781 = vpop.f32.mrf.mxu0
    %v6782 = vadd.f32 %v6717, %v6781
    %v6783 = vpop.f32.mrf.mxu0
    %6784 = vmatprep.mubr.bf16.mxu0 %v2552
    %6785 = vmatmul.mubr.bf16.gmra.mxu0 %v2551
    %v6786 = vpop.f32.mrf.mxu0
    %v6787 = vadd.f32 %v6722, %v6786
    %v6788 = vpop.f32.mrf.mxu0
    %v6789 = vpop.f32.mrf.mxu0
    %v6790 = vadd.f32 %v6725, %v6789
    %v6791 = vpop.f32.mrf.mxu0
    %6792 = vmatprep.mubr.bf16.mxu0 %v2626
    %6793 = vmatmul.mubr.bf16.gmra.mxu0 %v2625
    %v6794 = vpop.f32.mrf.mxu0
    %v6795 = vadd.f32 %v6730, %v6794
    %v6796 = vpop.f32.mrf.mxu0
    %v6797 = vpop.f32.mrf.mxu0
    %v6798 = vadd.f32 %v6733, %v6797
    %v6799 = vpop.f32.mrf.mxu0
    %6800 = vdwg.mxu0
    %6801 = vmatprep.subr.bf16.mxu0 0
    %6802 = vmatpush1.bf16.msra.mxu0 %v5428
    %6803 = vmatprep.subr.bf16.mxu0 0
    %6804 = vmatpush1.bf16.msra.mxu0 %v5427
    %6805 = vmatprep.subr.bf16.mxu0 0
    %6806 = vmatpush1.bf16.msra.mxu0 %v5426
    %6807 = vmatprep.subr.bf16.mxu0 0
    %6808 = vmatpush1.bf16.msra.mxu0 %v5425
    %6809 = vmatprep.subr.bf16.mxu0 0
    %6810 = vmatpush1.bf16.msra.mxu0 %v5424
    %6811 = vmatprep.subr.bf16.mxu0 0
    %6812 = vmatpush1.bf16.msra.mxu0 %v5423
    %6813 = vmatprep.subr.bf16.mxu0 0
    %6814 = vmatpush1.bf16.msra.mxu0 %v5422
    %6815 = vmatprep.subr.bf16.mxu0 0
    %6816 = vmatpush1.bf16.msra.mxu0 %v5421
    %6817 = vmatprep.subr.bf16.mxu0 0
    %6818 = vmatpush2.bf16.msra.mxu0 %v5436
    %6819 = vmatprep.subr.bf16.mxu0 0
    %6820 = vmatpush2.bf16.msra.mxu0 %v5435
    %6821 = vmatprep.subr.bf16.mxu0 0
    %6822 = vmatpush2.bf16.msra.mxu0 %v5434
    %6823 = vmatprep.subr.bf16.mxu0 0
    %6824 = vmatpush2.bf16.msra.mxu0 %v5433
    %6825 = vmatprep.subr.bf16.mxu0 0
    %6826 = vmatpush2.bf16.msra.mxu0 %v5432
    %6827 = vmatprep.subr.bf16.mxu0 0
    %6828 = vmatpush2.bf16.msra.mxu0 %v5431
    %6829 = vmatprep.subr.bf16.mxu0 0
    %6830 = vmatpush2.bf16.msra.mxu0 %v5430
    %6831 = vmatprep.subr.bf16.mxu0 0
    %6832 = vmatpush2.bf16.msra.mxu0 %v5429
    %6833 = vmatprep.mubr.bf16.mxu0 %v2406
    %6834 = vmatmul.mubr.bf16.gmra.mxu0 %v2405
    %v6835 = vpop.f32.mrf.mxu0
    %v6836 = vadd.f32 %v6771, %v6835
    %v6837 = vpop.f32.mrf.mxu0
    %v6838 = vpop.f32.mrf.mxu0
    %v6839 = vadd.f32 %v6774, %v6838
    %v6840 = vpop.f32.mrf.mxu0
    %6841 = vmatprep.mubr.bf16.mxu0 %v2480
    %6842 = vmatmul.mubr.bf16.gmra.mxu0 %v2479
    %v6843 = vpop.f32.mrf.mxu0
    %v6844 = vadd.f32 %v6779, %v6843
    %v6845 = vpop.f32.mrf.mxu0
    %v6846 = vpop.f32.mrf.mxu0
    %v6847 = vadd.f32 %v6782, %v6846
    %v6848 = vpop.f32.mrf.mxu0
    %6849 = vmatprep.mubr.bf16.mxu0 %v2554
    %6850 = vmatmul.mubr.bf16.gmra.mxu0 %v2553
    %v6851 = vpop.f32.mrf.mxu0
    %v6852 = vadd.f32 %v6787, %v6851
    %v6853 = vpop.f32.mrf.mxu0
    %v6854 = vpop.f32.mrf.mxu0
    %v6855 = vadd.f32 %v6790, %v6854
    %v6856 = vpop.f32.mrf.mxu0
    %6857 = vmatprep.mubr.bf16.mxu0 %v2628
    %6858 = vmatmul.mubr.bf16.gmra.mxu0 %v2627
    %v6859 = vpop.f32.mrf.mxu0
    %v6860 = vadd.f32 %v6795, %v6859
    %v6861 = vpop.f32.mrf.mxu0
    %v6862 = vpop.f32.mrf.mxu0
    %v6863 = vadd.f32 %v6798, %v6862
    %v6864 = vpop.f32.mrf.mxu0
    %6865 = vdwg.mxu0
    %6866 = vmatprep.subr.bf16.mxu0 0
    %6867 = vmatpush1.bf16.msra.mxu0 %v5444
    %6868 = vmatprep.subr.bf16.mxu0 0
    %6869 = vmatpush1.bf16.msra.mxu0 %v5443
    %6870 = vmatprep.subr.bf16.mxu0 0
    %6871 = vmatpush1.bf16.msra.mxu0 %v5442
    %6872 = vmatprep.subr.bf16.mxu0 0
    %6873 = vmatpush1.bf16.msra.mxu0 %v5441
    %6874 = vmatprep.subr.bf16.mxu0 0
    %6875 = vmatpush1.bf16.msra.mxu0 %v5440
    %6876 = vmatprep.subr.bf16.mxu0 0
    %6877 = vmatpush1.bf16.msra.mxu0 %v5439
    %6878 = vmatprep.subr.bf16.mxu0 0
    %6879 = vmatpush1.bf16.msra.mxu0 %v5438
    %6880 = vmatprep.subr.bf16.mxu0 0
    %6881 = vmatpush1.bf16.msra.mxu0 %v5437
    %6882 = vmatprep.subr.bf16.mxu0 0
    %6883 = vmatpush2.bf16.msra.mxu0 %v5452
    %6884 = vmatprep.subr.bf16.mxu0 0
    %6885 = vmatpush2.bf16.msra.mxu0 %v5451
    %6886 = vmatprep.subr.bf16.mxu0 0
    %6887 = vmatpush2.bf16.msra.mxu0 %v5450
    %6888 = vmatprep.subr.bf16.mxu0 0
    %6889 = vmatpush2.bf16.msra.mxu0 %v5449
    %6890 = vmatprep.subr.bf16.mxu0 0
    %6891 = vmatpush2.bf16.msra.mxu0 %v5448
    %6892 = vmatprep.subr.bf16.mxu0 0
    %6893 = vmatpush2.bf16.msra.mxu0 %v5447
    %6894 = vmatprep.subr.bf16.mxu0 0
    %6895 = vmatpush2.bf16.msra.mxu0 %v5446
    %6896 = vmatprep.subr.bf16.mxu0 0
    %6897 = vmatpush2.bf16.msra.mxu0 %v5445
    %6898 = vmatprep.mubr.bf16.mxu0 %v2408
    %6899 = vmatmul.mubr.bf16.gmra.mxu0 %v2407
    %v6900 = vpop.f32.mrf.mxu0
    %v6901 = vadd.f32 %v6836, %v6900
    %v6902 = vpop.f32.mrf.mxu0
    %v6903 = vpop.f32.mrf.mxu0
    %v6904 = vadd.f32 %v6839, %v6903
    %v6905 = vpop.f32.mrf.mxu0
    %6906 = vmatprep.mubr.bf16.mxu0 %v2482
    %6907 = vmatmul.mubr.bf16.gmra.mxu0 %v2481
    %v6908 = vpop.f32.mrf.mxu0
    %v6909 = vadd.f32 %v6844, %v6908
    %v6910 = vpop.f32.mrf.mxu0
    %v6911 = vpop.f32.mrf.mxu0
    %v6912 = vadd.f32 %v6847, %v6911
    %v6913 = vpop.f32.mrf.mxu0
    %6914 = vmatprep.mubr.bf16.mxu0 %v2556
    %6915 = vmatmul.mubr.bf16.gmra.mxu0 %v2555
    %v6916 = vpop.f32.mrf.mxu0
    %v6917 = vadd.f32 %v6852, %v6916
    %v6918 = vpop.f32.mrf.mxu0
    %v6919 = vpop.f32.mrf.mxu0
    %v6920 = vadd.f32 %v6855, %v6919
    %v6921 = vpop.f32.mrf.mxu0
    %6922 = vmatprep.mubr.bf16.mxu0 %v2630
    %6923 = vmatmul.mubr.bf16.gmra.mxu0 %v2629
    %v6924 = vpop.f32.mrf.mxu0
    %v6925 = vadd.f32 %v6860, %v6924
    %v6926 = vpop.f32.mrf.mxu0
    %v6927 = vpop.f32.mrf.mxu0
    %v6928 = vadd.f32 %v6863, %v6927
    %v6929 = vpop.f32.mrf.mxu0
    %6930 = vdwg.mxu0
    %6931 = vmatprep.subr.bf16.mxu0 0
    %6932 = vmatpush1.bf16.msra.mxu0 %v5460
    %6933 = vmatprep.subr.bf16.mxu0 0
    %6934 = vmatpush1.bf16.msra.mxu0 %v5459
    %6935 = vmatprep.subr.bf16.mxu0 0
    %6936 = vmatpush1.bf16.msra.mxu0 %v5458
    %6937 = vmatprep.subr.bf16.mxu0 0
    %6938 = vmatpush1.bf16.msra.mxu0 %v5457
    %6939 = vmatprep.subr.bf16.mxu0 0
    %6940 = vmatpush1.bf16.msra.mxu0 %v5456
    %6941 = vmatprep.subr.bf16.mxu0 0
    %6942 = vmatpush1.bf16.msra.mxu0 %v5455
    %6943 = vmatprep.subr.bf16.mxu0 0
    %6944 = vmatpush1.bf16.msra.mxu0 %v5454
    %6945 = vmatprep.subr.bf16.mxu0 0
    %6946 = vmatpush1.bf16.msra.mxu0 %v5453
    %6947 = vmatprep.subr.bf16.mxu0 0
    %6948 = vmatpush2.bf16.msra.mxu0 %v5468
    %6949 = vmatprep.subr.bf16.mxu0 0
    %6950 = vmatpush2.bf16.msra.mxu0 %v5467
    %6951 = vmatprep.subr.bf16.mxu0 0
    %6952 = vmatpush2.bf16.msra.mxu0 %v5466
    %6953 = vmatprep.subr.bf16.mxu0 0
    %6954 = vmatpush2.bf16.msra.mxu0 %v5465
    %6955 = vmatprep.subr.bf16.mxu0 0
    %6956 = vmatpush2.bf16.msra.mxu0 %v5464
    %6957 = vmatprep.subr.bf16.mxu0 0
    %6958 = vmatpush2.bf16.msra.mxu0 %v5463
    %6959 = vmatprep.subr.bf16.mxu0 0
    %6960 = vmatpush2.bf16.msra.mxu0 %v5462
    %6961 = vmatprep.subr.bf16.mxu0 0
    %6962 = vmatpush2.bf16.msra.mxu0 %v5461
    %6963 = vmatprep.mubr.bf16.mxu0 %v2410
    %6964 = vmatmul.mubr.bf16.gmra.mxu0 %v2409
    %v6965 = vpop.f32.mrf.mxu0
    %v6966 = vadd.f32 %v6901, %v6965
    %v6967 = vpop.f32.mrf.mxu0
    %v6968 = vpop.f32.mrf.mxu0
    %v6969 = vadd.f32 %v6904, %v6968
    %v6970 = vpop.f32.mrf.mxu0
    %6971 = vmatprep.mubr.bf16.mxu0 %v2484
    %6972 = vmatmul.mubr.bf16.gmra.mxu0 %v2483
    %v6973 = vpop.f32.mrf.mxu0
    %v6974 = vadd.f32 %v6909, %v6973
    %v6975 = vpop.f32.mrf.mxu0
    %v6976 = vpop.f32.mrf.mxu0
    %v6977 = vadd.f32 %v6912, %v6976
    %v6978 = vpop.f32.mrf.mxu0
    %6979 = vmatprep.mubr.bf16.mxu0 %v2558
    %6980 = vmatmul.mubr.bf16.gmra.mxu0 %v2557
    %v6981 = vpop.f32.mrf.mxu0
    %v6982 = vadd.f32 %v6917, %v6981
    %v6983 = vpop.f32.mrf.mxu0
    %v6984 = vpop.f32.mrf.mxu0
    %v6985 = vadd.f32 %v6920, %v6984
    %v6986 = vpop.f32.mrf.mxu0
    %6987 = vmatprep.mubr.bf16.mxu0 %v2632
    %6988 = vmatmul.mubr.bf16.gmra.mxu0 %v2631
    %v6989 = vpop.f32.mrf.mxu0
    %v6990 = vadd.f32 %v6925, %v6989
    %v6991 = vpop.f32.mrf.mxu0
    %v6992 = vpop.f32.mrf.mxu0
    %v6993 = vadd.f32 %v6928, %v6992
    %v6994 = vpop.f32.mrf.mxu0
    %6995 = vdwg.mxu0
    %6996 = vmatprep.subr.bf16.mxu0 0
    %6997 = vmatpush1.bf16.msra.mxu0 %v5476
    %6998 = vmatprep.subr.bf16.mxu0 0
    %6999 = vmatpush1.bf16.msra.mxu0 %v5475
    %7000 = vmatprep.subr.bf16.mxu0 0
    %7001 = vmatpush1.bf16.msra.mxu0 %v5474
    %7002 = vmatprep.subr.bf16.mxu0 0
    %7003 = vmatpush1.bf16.msra.mxu0 %v5473
    %7004 = vmatprep.subr.bf16.mxu0 0
    %7005 = vmatpush1.bf16.msra.mxu0 %v5472
    %7006 = vmatprep.subr.bf16.mxu0 0
    %7007 = vmatpush1.bf16.msra.mxu0 %v5471
    %7008 = vmatprep.subr.bf16.mxu0 0
    %7009 = vmatpush1.bf16.msra.mxu0 %v5470
    %7010 = vmatprep.subr.bf16.mxu0 0
    %7011 = vmatpush1.bf16.msra.mxu0 %v5469
    %7012 = vmatprep.subr.bf16.mxu0 0
    %7013 = vmatpush2.bf16.msra.mxu0 %v5484
    %7014 = vmatprep.subr.bf16.mxu0 0
    %7015 = vmatpush2.bf16.msra.mxu0 %v5483
    %7016 = vmatprep.subr.bf16.mxu0 0
    %7017 = vmatpush2.bf16.msra.mxu0 %v5482
    %7018 = vmatprep.subr.bf16.mxu0 0
    %7019 = vmatpush2.bf16.msra.mxu0 %v5481
    %7020 = vmatprep.subr.bf16.mxu0 0
    %7021 = vmatpush2.bf16.msra.mxu0 %v5480
    %7022 = vmatprep.subr.bf16.mxu0 0
    %7023 = vmatpush2.bf16.msra.mxu0 %v5479
    %7024 = vmatprep.subr.bf16.mxu0 0
    %7025 = vmatpush2.bf16.msra.mxu0 %v5478
    %7026 = vmatprep.subr.bf16.mxu0 0
    %7027 = vmatpush2.bf16.msra.mxu0 %v5477
    %7028 = vmatprep.mubr.bf16.mxu0 %v2412
    %7029 = vmatmul.mubr.bf16.gmra.mxu0 %v2411
    %v7030 = vpop.f32.mrf.mxu0
    %v7031 = vadd.f32 %v6966, %v7030
    %v7032 = vpop.f32.mrf.mxu0
    %v7033 = vpop.f32.mrf.mxu0
    %v7034 = vadd.f32 %v6969, %v7033
    %v7035 = vpop.f32.mrf.mxu0
    %7036 = vmatprep.mubr.bf16.mxu0 %v2486
    %7037 = vmatmul.mubr.bf16.gmra.mxu0 %v2485
    %v7038 = vpop.f32.mrf.mxu0
    %v7039 = vadd.f32 %v6974, %v7038
    %v7040 = vpop.f32.mrf.mxu0
    %v7041 = vpop.f32.mrf.mxu0
    %v7042 = vadd.f32 %v6977, %v7041
    %v7043 = vpop.f32.mrf.mxu0
    %7044 = vmatprep.mubr.bf16.mxu0 %v2560
    %7045 = vmatmul.mubr.bf16.gmra.mxu0 %v2559
    %v7046 = vpop.f32.mrf.mxu0
    %v7047 = vadd.f32 %v6982, %v7046
    %v7048 = vpop.f32.mrf.mxu0
    %v7049 = vpop.f32.mrf.mxu0
    %v7050 = vadd.f32 %v6985, %v7049
    %v7051 = vpop.f32.mrf.mxu0
    %7052 = vmatprep.mubr.bf16.mxu0 %v2634
    %7053 = vmatmul.mubr.bf16.gmra.mxu0 %v2633
    %v7054 = vpop.f32.mrf.mxu0
    %v7055 = vadd.f32 %v6990, %v7054
    %v7056 = vpop.f32.mrf.mxu0
    %v7057 = vpop.f32.mrf.mxu0
    %v7058 = vadd.f32 %v6993, %v7057
    %v7059 = vpop.f32.mrf.mxu0
    %7060 = vdwg.mxu0
    %7061 = vmatprep.subr.bf16.mxu0 0
    %7062 = vmatpush1.bf16.msra.mxu0 %v5492
    %7063 = vmatprep.subr.bf16.mxu0 0
    %7064 = vmatpush1.bf16.msra.mxu0 %v5491
    %7065 = vmatprep.subr.bf16.mxu0 0
    %7066 = vmatpush1.bf16.msra.mxu0 %v5490
    %7067 = vmatprep.subr.bf16.mxu0 0
    %7068 = vmatpush1.bf16.msra.mxu0 %v5489
    %7069 = vmatprep.subr.bf16.mxu0 0
    %7070 = vmatpush1.bf16.msra.mxu0 %v5488
    %7071 = vmatprep.subr.bf16.mxu0 0
    %7072 = vmatpush1.bf16.msra.mxu0 %v5487
    %7073 = vmatprep.subr.bf16.mxu0 0
    %7074 = vmatpush1.bf16.msra.mxu0 %v5486
    %7075 = vmatprep.subr.bf16.mxu0 0
    %7076 = vmatpush1.bf16.msra.mxu0 %v5485
    %7077 = vmatprep.subr.bf16.mxu0 0
    %7078 = vmatpush2.bf16.msra.mxu0 %v5500
    %7079 = vmatprep.subr.bf16.mxu0 0
    %7080 = vmatpush2.bf16.msra.mxu0 %v5499
    %7081 = vmatprep.subr.bf16.mxu0 0
    %7082 = vmatpush2.bf16.msra.mxu0 %v5498
    %7083 = vmatprep.subr.bf16.mxu0 0
    %7084 = vmatpush2.bf16.msra.mxu0 %v5497
    %7085 = vmatprep.subr.bf16.mxu0 0
    %7086 = vmatpush2.bf16.msra.mxu0 %v5496
    %7087 = vmatprep.subr.bf16.mxu0 0
    %7088 = vmatpush2.bf16.msra.mxu0 %v5495
    %7089 = vmatprep.subr.bf16.mxu0 0
    %7090 = vmatpush2.bf16.msra.mxu0 %v5494
    %7091 = vmatprep.subr.bf16.mxu0 0
    %7092 = vmatpush2.bf16.msra.mxu0 %v5493
    %7093 = vmatprep.mubr.bf16.mxu0 %v2414
    %7094 = vmatmul.mubr.bf16.gmra.mxu0 %v2413
    %v7095 = vpop.f32.mrf.mxu0
    %v7096 = vadd.f32 %v7031, %v7095
    %v7097 = vpop.f32.mrf.mxu0
    %v7098 = vpop.f32.mrf.mxu0
    %v7099 = vadd.f32 %v7034, %v7098
    %v7100 = vpop.f32.mrf.mxu0
    %7101 = vmatprep.mubr.bf16.mxu0 %v2488
    %7102 = vmatmul.mubr.bf16.gmra.mxu0 %v2487
    %v7103 = vpop.f32.mrf.mxu0
    %v7104 = vadd.f32 %v7039, %v7103
    %v7105 = vpop.f32.mrf.mxu0
    %v7106 = vpop.f32.mrf.mxu0
    %v7107 = vadd.f32 %v7042, %v7106
    %v7108 = vpop.f32.mrf.mxu0
    %7109 = vmatprep.mubr.bf16.mxu0 %v2562
    %7110 = vmatmul.mubr.bf16.gmra.mxu0 %v2561
    %v7111 = vpop.f32.mrf.mxu0
    %v7112 = vadd.f32 %v7047, %v7111
    %v7113 = vpop.f32.mrf.mxu0
    %v7114 = vpop.f32.mrf.mxu0
    %v7115 = vadd.f32 %v7050, %v7114
    %v7116 = vpop.f32.mrf.mxu0
    %7117 = vmatprep.mubr.bf16.mxu0 %v2636
    %7118 = vmatmul.mubr.bf16.gmra.mxu0 %v2635
    %v7119 = vpop.f32.mrf.mxu0
    %v7120 = vadd.f32 %v7055, %v7119
    %v7121 = vpop.f32.mrf.mxu0
    %v7122 = vpop.f32.mrf.mxu0
    %v7123 = vadd.f32 %v7058, %v7122
    %v7124 = vpop.f32.mrf.mxu0
    %7125 = vdwg.mxu0
    %7126 = vmatprep.subr.bf16.mxu0 0
    %7127 = vmatpush1.bf16.msra.mxu0 %v5508
    %7128 = vmatprep.subr.bf16.mxu0 0
    %7129 = vmatpush1.bf16.msra.mxu0 %v5507
    %7130 = vmatprep.subr.bf16.mxu0 0
    %7131 = vmatpush1.bf16.msra.mxu0 %v5506
    %7132 = vmatprep.subr.bf16.mxu0 0
    %7133 = vmatpush1.bf16.msra.mxu0 %v5505
    %7134 = vmatprep.subr.bf16.mxu0 0
    %7135 = vmatpush1.bf16.msra.mxu0 %v5504
    %7136 = vmatprep.subr.bf16.mxu0 0
    %7137 = vmatpush1.bf16.msra.mxu0 %v5503
    %7138 = vmatprep.subr.bf16.mxu0 0
    %7139 = vmatpush1.bf16.msra.mxu0 %v5502
    %7140 = vmatprep.subr.bf16.mxu0 0
    %7141 = vmatpush1.bf16.msra.mxu0 %v5501
    %7142 = vmatprep.subr.bf16.mxu0 0
    %7143 = vmatpush2.bf16.msra.mxu0 %v5516
    %7144 = vmatprep.subr.bf16.mxu0 0
    %7145 = vmatpush2.bf16.msra.mxu0 %v5515
    %7146 = vmatprep.subr.bf16.mxu0 0
    %7147 = vmatpush2.bf16.msra.mxu0 %v5514
    %7148 = vmatprep.subr.bf16.mxu0 0
    %7149 = vmatpush2.bf16.msra.mxu0 %v5513
    %7150 = vmatprep.subr.bf16.mxu0 0
    %7151 = vmatpush2.bf16.msra.mxu0 %v5512
    %7152 = vmatprep.subr.bf16.mxu0 0
    %7153 = vmatpush2.bf16.msra.mxu0 %v5511
    %7154 = vmatprep.subr.bf16.mxu0 0
    %7155 = vmatpush2.bf16.msra.mxu0 %v5510
    %7156 = vmatprep.subr.bf16.mxu0 0
    %7157 = vmatpush2.bf16.msra.mxu0 %v5509
    %7158 = vmatprep.mubr.bf16.mxu0 %v2416
    %7159 = vmatmul.mubr.bf16.gmra.mxu0 %v2415
    %v7160 = vpop.f32.mrf.mxu0
    %v7161 = vadd.f32 %v7096, %v7160
    %v7162 = vpop.f32.mrf.mxu0
    %v7163 = vpop.f32.mrf.mxu0
    %v7164 = vadd.f32 %v7099, %v7163
    %v7165 = vpop.f32.mrf.mxu0
    %7166 = vmatprep.mubr.bf16.mxu0 %v2490
    %7167 = vmatmul.mubr.bf16.gmra.mxu0 %v2489
    %v7168 = vpop.f32.mrf.mxu0
    %v7169 = vadd.f32 %v7104, %v7168
    %v7170 = vpop.f32.mrf.mxu0
    %v7171 = vpop.f32.mrf.mxu0
    %v7172 = vadd.f32 %v7107, %v7171
    %v7173 = vpop.f32.mrf.mxu0
    %7174 = vmatprep.mubr.bf16.mxu0 %v2564
    %7175 = vmatmul.mubr.bf16.gmra.mxu0 %v2563
    %v7176 = vpop.f32.mrf.mxu0
    %v7177 = vadd.f32 %v7112, %v7176
    %v7178 = vpop.f32.mrf.mxu0
    %v7179 = vpop.f32.mrf.mxu0
    %v7180 = vadd.f32 %v7115, %v7179
    %v7181 = vpop.f32.mrf.mxu0
    %7182 = vmatprep.mubr.bf16.mxu0 %v2638
    %7183 = vmatmul.mubr.bf16.gmra.mxu0 %v2637
    %v7184 = vpop.f32.mrf.mxu0
    %v7185 = vadd.f32 %v7120, %v7184
    %v7186 = vpop.f32.mrf.mxu0
    %v7187 = vpop.f32.mrf.mxu0
    %v7188 = vadd.f32 %v7123, %v7187
    %v7189 = vpop.f32.mrf.mxu0
    %7190 = vdwg.mxu0
    %7191 = vmatprep.subr.bf16.mxu0 0
    %7192 = vmatpush1.bf16.msra.mxu0 %v5524
    %7193 = vmatprep.subr.bf16.mxu0 0
    %7194 = vmatpush1.bf16.msra.mxu0 %v5523
    %7195 = vmatprep.subr.bf16.mxu0 0
    %7196 = vmatpush1.bf16.msra.mxu0 %v5522
    %7197 = vmatprep.subr.bf16.mxu0 0
    %7198 = vmatpush1.bf16.msra.mxu0 %v5521
    %7199 = vmatprep.subr.bf16.mxu0 0
    %7200 = vmatpush1.bf16.msra.mxu0 %v5520
    %7201 = vmatprep.subr.bf16.mxu0 0
    %7202 = vmatpush1.bf16.msra.mxu0 %v5519
    %7203 = vmatprep.subr.bf16.mxu0 0
    %7204 = vmatpush1.bf16.msra.mxu0 %v5518
    %7205 = vmatprep.subr.bf16.mxu0 0
    %7206 = vmatpush1.bf16.msra.mxu0 %v5517
    %7207 = vmatprep.subr.bf16.mxu0 0
    %7208 = vmatpush2.bf16.msra.mxu0 %v5532
    %7209 = vmatprep.subr.bf16.mxu0 0
    %7210 = vmatpush2.bf16.msra.mxu0 %v5531
    %7211 = vmatprep.subr.bf16.mxu0 0
    %7212 = vmatpush2.bf16.msra.mxu0 %v5530
    %7213 = vmatprep.subr.bf16.mxu0 0
    %7214 = vmatpush2.bf16.msra.mxu0 %v5529
    %7215 = vmatprep.subr.bf16.mxu0 0
    %7216 = vmatpush2.bf16.msra.mxu0 %v5528
    %7217 = vmatprep.subr.bf16.mxu0 0
    %7218 = vmatpush2.bf16.msra.mxu0 %v5527
    %7219 = vmatprep.subr.bf16.mxu0 0
    %7220 = vmatpush2.bf16.msra.mxu0 %v5526
    %7221 = vmatprep.subr.bf16.mxu0 0
    %7222 = vmatpush2.bf16.msra.mxu0 %v5525
    %7223 = vmatprep.mubr.bf16.mxu0 %v2418
    %7224 = vmatmul.mubr.bf16.gmra.mxu0 %v2417
    %v7225 = vpop.f32.mrf.mxu0
    %v7226 = vadd.f32 %v7161, %v7225
    %v7227 = vpop.f32.mrf.mxu0
    %v7228 = vpop.f32.mrf.mxu0
    %v7229 = vadd.f32 %v7164, %v7228
    %v7230 = vpop.f32.mrf.mxu0
    %7231 = vmatprep.mubr.bf16.mxu0 %v2492
    %7232 = vmatmul.mubr.bf16.gmra.mxu0 %v2491
    %v7233 = vpop.f32.mrf.mxu0
    %v7234 = vadd.f32 %v7169, %v7233
    %v7235 = vpop.f32.mrf.mxu0
    %v7236 = vpop.f32.mrf.mxu0
    %v7237 = vadd.f32 %v7172, %v7236
    %v7238 = vpop.f32.mrf.mxu0
    %7239 = vmatprep.mubr.bf16.mxu0 %v2566
    %7240 = vmatmul.mubr.bf16.gmra.mxu0 %v2565
    %v7241 = vpop.f32.mrf.mxu0
    %v7242 = vadd.f32 %v7177, %v7241
    %v7243 = vpop.f32.mrf.mxu0
    %v7244 = vpop.f32.mrf.mxu0
    %v7245 = vadd.f32 %v7180, %v7244
    %v7246 = vpop.f32.mrf.mxu0
    %7247 = vmatprep.mubr.bf16.mxu0 %v2640
    %7248 = vmatmul.mubr.bf16.gmra.mxu0 %v2639
    %v7249 = vpop.f32.mrf.mxu0
    %v7250 = vadd.f32 %v7185, %v7249
    %v7251 = vpop.f32.mrf.mxu0
    %v7252 = vpop.f32.mrf.mxu0
    %v7253 = vadd.f32 %v7188, %v7252
    %v7254 = vpop.f32.mrf.mxu0
    %7255 = vdwg.mxu0
    %7256 = vmatprep.subr.bf16.mxu0 0
    %7257 = vmatpush1.bf16.msra.mxu0 %v5540
    %7258 = vmatprep.subr.bf16.mxu0 0
    %7259 = vmatpush1.bf16.msra.mxu0 %v5539
    %7260 = vmatprep.subr.bf16.mxu0 0
    %7261 = vmatpush1.bf16.msra.mxu0 %v5538
    %7262 = vmatprep.subr.bf16.mxu0 0
    %7263 = vmatpush1.bf16.msra.mxu0 %v5537
    %7264 = vmatprep.subr.bf16.mxu0 0
    %7265 = vmatpush1.bf16.msra.mxu0 %v5536
    %7266 = vmatprep.subr.bf16.mxu0 0
    %7267 = vmatpush1.bf16.msra.mxu0 %v5535
    %7268 = vmatprep.subr.bf16.mxu0 0
    %7269 = vmatpush1.bf16.msra.mxu0 %v5534
    %7270 = vmatprep.subr.bf16.mxu0 0
    %7271 = vmatpush1.bf16.msra.mxu0 %v5533
    %7272 = vmatprep.subr.bf16.mxu0 0
    %7273 = vmatpush2.bf16.msra.mxu0 %v5548
    %7274 = vmatprep.subr.bf16.mxu0 0
    %7275 = vmatpush2.bf16.msra.mxu0 %v5547
    %7276 = vmatprep.subr.bf16.mxu0 0
    %7277 = vmatpush2.bf16.msra.mxu0 %v5546
    %7278 = vmatprep.subr.bf16.mxu0 0
    %7279 = vmatpush2.bf16.msra.mxu0 %v5545
    %7280 = vmatprep.subr.bf16.mxu0 0
    %7281 = vmatpush2.bf16.msra.mxu0 %v5544
    %7282 = vmatprep.subr.bf16.mxu0 0
    %7283 = vmatpush2.bf16.msra.mxu0 %v5543
    %7284 = vmatprep.subr.bf16.mxu0 0
    %7285 = vmatpush2.bf16.msra.mxu0 %v5542
    %7286 = vmatprep.subr.bf16.mxu0 0
    %7287 = vmatpush2.bf16.msra.mxu0 %v5541
    %7288 = vmatprep.mubr.bf16.mxu0 %v2420
    %7289 = vmatmul.mubr.bf16.gmra.mxu0 %v2419
    %v7290 = vpop.f32.mrf.mxu0
    %v7291 = vadd.f32 %v7226, %v7290
    %v7292 = vpop.f32.mrf.mxu0
    %v7293 = vpop.f32.mrf.mxu0
    %v7294 = vadd.f32 %v7229, %v7293
    %v7295 = vpop.f32.mrf.mxu0
    %7296 = vmatprep.mubr.bf16.mxu0 %v2494
    %7297 = vmatmul.mubr.bf16.gmra.mxu0 %v2493
    %v7298 = vpop.f32.mrf.mxu0
    %v7299 = vadd.f32 %v7234, %v7298
    %v7300 = vpop.f32.mrf.mxu0
    %v7301 = vpop.f32.mrf.mxu0
    %v7302 = vadd.f32 %v7237, %v7301
    %v7303 = vpop.f32.mrf.mxu0
    %7304 = vmatprep.mubr.bf16.mxu0 %v2568
    %7305 = vmatmul.mubr.bf16.gmra.mxu0 %v2567
    %v7306 = vpop.f32.mrf.mxu0
    %v7307 = vadd.f32 %v7242, %v7306
    %v7308 = vpop.f32.mrf.mxu0
    %v7309 = vpop.f32.mrf.mxu0
    %v7310 = vadd.f32 %v7245, %v7309
    %v7311 = vpop.f32.mrf.mxu0
    %7312 = vmatprep.mubr.bf16.mxu0 %v2642
    %7313 = vmatmul.mubr.bf16.gmra.mxu0 %v2641
    %v7314 = vpop.f32.mrf.mxu0
    %v7315 = vadd.f32 %v7250, %v7314
    %v7316 = vpop.f32.mrf.mxu0
    %v7317 = vpop.f32.mrf.mxu0
    %v7318 = vadd.f32 %v7253, %v7317
    %v7319 = vpop.f32.mrf.mxu0
    %7320 = vdwg.mxu0
    %7321 = vmatprep.subr.bf16.mxu0 0
    %7322 = vmatpush1.bf16.msra.mxu0 %v5556
    %7323 = vmatprep.subr.bf16.mxu0 0
    %7324 = vmatpush1.bf16.msra.mxu0 %v5555
    %7325 = vmatprep.subr.bf16.mxu0 0
    %7326 = vmatpush1.bf16.msra.mxu0 %v5554
    %7327 = vmatprep.subr.bf16.mxu0 0
    %7328 = vmatpush1.bf16.msra.mxu0 %v5553
    %7329 = vmatprep.subr.bf16.mxu0 0
    %7330 = vmatpush1.bf16.msra.mxu0 %v5552
    %7331 = vmatprep.subr.bf16.mxu0 0
    %7332 = vmatpush1.bf16.msra.mxu0 %v5551
    %7333 = vmatprep.subr.bf16.mxu0 0
    %7334 = vmatpush1.bf16.msra.mxu0 %v5550
    %7335 = vmatprep.subr.bf16.mxu0 0
    %7336 = vmatpush1.bf16.msra.mxu0 %v5549
    %7337 = vmatprep.subr.bf16.mxu0 0
    %7338 = vmatpush2.bf16.msra.mxu0 %v5564
    %7339 = vmatprep.subr.bf16.mxu0 0
    %7340 = vmatpush2.bf16.msra.mxu0 %v5563
    %7341 = vmatprep.subr.bf16.mxu0 0
    %7342 = vmatpush2.bf16.msra.mxu0 %v5562
    %7343 = vmatprep.subr.bf16.mxu0 0
    %7344 = vmatpush2.bf16.msra.mxu0 %v5561
    %7345 = vmatprep.subr.bf16.mxu0 0
    %7346 = vmatpush2.bf16.msra.mxu0 %v5560
    %7347 = vmatprep.subr.bf16.mxu0 0
    %7348 = vmatpush2.bf16.msra.mxu0 %v5559
    %7349 = vmatprep.subr.bf16.mxu0 0
    %7350 = vmatpush2.bf16.msra.mxu0 %v5558
    %7351 = vmatprep.subr.bf16.mxu0 0
    %7352 = vmatpush2.bf16.msra.mxu0 %v5557
    %7353 = vmatprep.mubr.bf16.mxu0 %v2422
    %7354 = vmatmul.mubr.bf16.gmra.mxu0 %v2421
    %v7355 = vpop.f32.mrf.mxu0
    %v7356 = vadd.f32 %v7291, %v7355
    %v7357 = vpop.f32.mrf.mxu0
    %v7358 = vpop.f32.mrf.mxu0
    %v7359 = vadd.f32 %v7294, %v7358
    %v7360 = vpop.f32.mrf.mxu0
    %7361 = vmatprep.mubr.bf16.mxu0 %v2496
    %7362 = vmatmul.mubr.bf16.gmra.mxu0 %v2495
    %v7363 = vpop.f32.mrf.mxu0
    %v7364 = vadd.f32 %v7299, %v7363
    %v7365 = vpop.f32.mrf.mxu0
    %v7366 = vpop.f32.mrf.mxu0
    %v7367 = vadd.f32 %v7302, %v7366
    %v7368 = vpop.f32.mrf.mxu0
    %7369 = vmatprep.mubr.bf16.mxu0 %v2570
    %7370 = vmatmul.mubr.bf16.gmra.mxu0 %v2569
    %v7371 = vpop.f32.mrf.mxu0
    %v7372 = vadd.f32 %v7307, %v7371
    %v7373 = vpop.f32.mrf.mxu0
    %v7374 = vpop.f32.mrf.mxu0
    %v7375 = vadd.f32 %v7310, %v7374
    %v7376 = vpop.f32.mrf.mxu0
    %7377 = vmatprep.mubr.bf16.mxu0 %v2644
    %7378 = vmatmul.mubr.bf16.gmra.mxu0 %v2643
    %v7379 = vpop.f32.mrf.mxu0
    %v7380 = vadd.f32 %v7315, %v7379
    %v7381 = vpop.f32.mrf.mxu0
    %v7382 = vpop.f32.mrf.mxu0
    %v7383 = vadd.f32 %v7318, %v7382
    %v7384 = vpop.f32.mrf.mxu0
    %7385 = vdwg.mxu0
    %7386 = vmatprep.subr.bf16.mxu0 0
    %7387 = vmatpush1.bf16.msra.mxu0 %v5572
    %7388 = vmatprep.subr.bf16.mxu0 0
    %7389 = vmatpush1.bf16.msra.mxu0 %v5571
    %7390 = vmatprep.subr.bf16.mxu0 0
    %7391 = vmatpush1.bf16.msra.mxu0 %v5570
    %7392 = vmatprep.subr.bf16.mxu0 0
    %7393 = vmatpush1.bf16.msra.mxu0 %v5569
    %7394 = vmatprep.subr.bf16.mxu0 0
    %7395 = vmatpush1.bf16.msra.mxu0 %v5568
    %7396 = vmatprep.subr.bf16.mxu0 0
    %7397 = vmatpush1.bf16.msra.mxu0 %v5567
    %7398 = vmatprep.subr.bf16.mxu0 0
    %7399 = vmatpush1.bf16.msra.mxu0 %v5566
    %7400 = vmatprep.subr.bf16.mxu0 0
    %7401 = vmatpush1.bf16.msra.mxu0 %v5565
    %7402 = vmatprep.subr.bf16.mxu0 0
    %7403 = vmatpush2.bf16.msra.mxu0 %v5580
    %7404 = vmatprep.subr.bf16.mxu0 0
    %7405 = vmatpush2.bf16.msra.mxu0 %v5579
    %7406 = vmatprep.subr.bf16.mxu0 0
    %7407 = vmatpush2.bf16.msra.mxu0 %v5578
    %7408 = vmatprep.subr.bf16.mxu0 0
    %7409 = vmatpush2.bf16.msra.mxu0 %v5577
    %7410 = vmatprep.subr.bf16.mxu0 0
    %7411 = vmatpush2.bf16.msra.mxu0 %v5576
    %7412 = vmatprep.subr.bf16.mxu0 0
    %7413 = vmatpush2.bf16.msra.mxu0 %v5575
    %7414 = vmatprep.subr.bf16.mxu0 0
    %7415 = vmatpush2.bf16.msra.mxu0 %v5574
    %7416 = vmatprep.subr.bf16.mxu0 0
    %7417 = vmatpush2.bf16.msra.mxu0 %v5573
    %7418 = vmatprep.mubr.bf16.mxu0 %v2424
    %7419 = vmatmul.mubr.bf16.gmra.mxu0 %v2423
    %v7420 = vpop.f32.mrf.mxu0
    %v7421 = vadd.f32 %v7356, %v7420
    %v7422 = vpop.f32.mrf.mxu0
    %v7423 = vpop.f32.mrf.mxu0
    %v7424 = vadd.f32 %v7359, %v7423
    %v7425 = vpop.f32.mrf.mxu0
    %7426 = vmatprep.mubr.bf16.mxu0 %v2498
    %7427 = vmatmul.mubr.bf16.gmra.mxu0 %v2497
    %v7428 = vpop.f32.mrf.mxu0
    %v7429 = vadd.f32 %v7364, %v7428
    %v7430 = vpop.f32.mrf.mxu0
    %v7431 = vpop.f32.mrf.mxu0
    %v7432 = vadd.f32 %v7367, %v7431
    %v7433 = vpop.f32.mrf.mxu0
    %7434 = vmatprep.mubr.bf16.mxu0 %v2572
    %7435 = vmatmul.mubr.bf16.gmra.mxu0 %v2571
    %v7436 = vpop.f32.mrf.mxu0
    %v7437 = vadd.f32 %v7372, %v7436
    %v7438 = vpop.f32.mrf.mxu0
    %v7439 = vpop.f32.mrf.mxu0
    %v7440 = vadd.f32 %v7375, %v7439
    %v7441 = vpop.f32.mrf.mxu0
    %7442 = vmatprep.mubr.bf16.mxu0 %v2646
    %7443 = vmatmul.mubr.bf16.gmra.mxu0 %v2645
    %v7444 = vpop.f32.mrf.mxu0
    %v7445 = vadd.f32 %v7380, %v7444
    %v7446 = vpop.f32.mrf.mxu0
    %v7447 = vpop.f32.mrf.mxu0
    %v7448 = vadd.f32 %v7383, %v7447
    %v7449 = vpop.f32.mrf.mxu0
    %7450 = vdwg.mxu0
    %7451 = vmatprep.subr.bf16.mxu0 0
    %7452 = vmatpush1.bf16.msra.mxu0 %v5588
    %7453 = vmatprep.subr.bf16.mxu0 0
    %7454 = vmatpush1.bf16.msra.mxu0 %v5587
    %7455 = vmatprep.subr.bf16.mxu0 0
    %7456 = vmatpush1.bf16.msra.mxu0 %v5586
    %7457 = vmatprep.subr.bf16.mxu0 0
    %7458 = vmatpush1.bf16.msra.mxu0 %v5585
    %7459 = vmatprep.subr.bf16.mxu0 0
    %7460 = vmatpush1.bf16.msra.mxu0 %v5584
    %7461 = vmatprep.subr.bf16.mxu0 0
    %7462 = vmatpush1.bf16.msra.mxu0 %v5583
    %7463 = vmatprep.subr.bf16.mxu0 0
    %7464 = vmatpush1.bf16.msra.mxu0 %v5582
    %7465 = vmatprep.subr.bf16.mxu0 0
    %7466 = vmatpush1.bf16.msra.mxu0 %v5581
    %7467 = vmatprep.subr.bf16.mxu0 0
    %7468 = vmatpush2.bf16.msra.mxu0 %v5596
    %7469 = vmatprep.subr.bf16.mxu0 0
    %7470 = vmatpush2.bf16.msra.mxu0 %v5595
    %7471 = vmatprep.subr.bf16.mxu0 0
    %7472 = vmatpush2.bf16.msra.mxu0 %v5594
    %7473 = vmatprep.subr.bf16.mxu0 0
    %7474 = vmatpush2.bf16.msra.mxu0 %v5593
    %7475 = vmatprep.subr.bf16.mxu0 0
    %7476 = vmatpush2.bf16.msra.mxu0 %v5592
    %7477 = vmatprep.subr.bf16.mxu0 0
    %7478 = vmatpush2.bf16.msra.mxu0 %v5591
    %7479 = vmatprep.subr.bf16.mxu0 0
    %7480 = vmatpush2.bf16.msra.mxu0 %v5590
    %7481 = vmatprep.subr.bf16.mxu0 0
    %7482 = vmatpush2.bf16.msra.mxu0 %v5589
    %7483 = vmatprep.mubr.bf16.mxu0 %v2426
    %7484 = vmatmul.mubr.bf16.gmra.mxu0 %v2425
    %v7485 = vpop.f32.mrf.mxu0
    %v7486 = vadd.f32 %v7421, %v7485
    %v7487 = vpop.f32.mrf.mxu0
    %v7488 = vpop.f32.mrf.mxu0
    %v7489 = vadd.f32 %v7424, %v7488
    %v7490 = vpop.f32.mrf.mxu0
    %7491 = vmatprep.mubr.bf16.mxu0 %v2500
    %7492 = vmatmul.mubr.bf16.gmra.mxu0 %v2499
    %v7493 = vpop.f32.mrf.mxu0
    %v7494 = vadd.f32 %v7429, %v7493
    %v7495 = vpop.f32.mrf.mxu0
    %v7496 = vpop.f32.mrf.mxu0
    %v7497 = vadd.f32 %v7432, %v7496
    %v7498 = vpop.f32.mrf.mxu0
    %7499 = vmatprep.mubr.bf16.mxu0 %v2574
    %7500 = vmatmul.mubr.bf16.gmra.mxu0 %v2573
    %v7501 = vpop.f32.mrf.mxu0
    %v7502 = vadd.f32 %v7437, %v7501
    %v7503 = vpop.f32.mrf.mxu0
    %v7504 = vpop.f32.mrf.mxu0
    %v7505 = vadd.f32 %v7440, %v7504
    %v7506 = vpop.f32.mrf.mxu0
    %7507 = vmatprep.mubr.bf16.mxu0 %v2648
    %7508 = vmatmul.mubr.bf16.gmra.mxu0 %v2647
    %v7509 = vpop.f32.mrf.mxu0
    %v7510 = vadd.f32 %v7445, %v7509
    %v7511 = vpop.f32.mrf.mxu0
    %v7512 = vpop.f32.mrf.mxu0
    %v7513 = vadd.f32 %v7448, %v7512
    %v7514 = vpop.f32.mrf.mxu0
    %7515 = vdwg.mxu0
    %7516 = vmatprep.subr.bf16.mxu0 0
    %7517 = vmatpush1.bf16.msra.mxu0 %v5604
    %7518 = vmatprep.subr.bf16.mxu0 0
    %7519 = vmatpush1.bf16.msra.mxu0 %v5603
    %7520 = vmatprep.subr.bf16.mxu0 0
    %7521 = vmatpush1.bf16.msra.mxu0 %v5602
    %7522 = vmatprep.subr.bf16.mxu0 0
    %7523 = vmatpush1.bf16.msra.mxu0 %v5601
    %7524 = vmatprep.subr.bf16.mxu0 0
    %7525 = vmatpush1.bf16.msra.mxu0 %v5600
    %7526 = vmatprep.subr.bf16.mxu0 0
    %7527 = vmatpush1.bf16.msra.mxu0 %v5599
    %7528 = vmatprep.subr.bf16.mxu0 0
    %7529 = vmatpush1.bf16.msra.mxu0 %v5598
    %7530 = vmatprep.subr.bf16.mxu0 0
    %7531 = vmatpush1.bf16.msra.mxu0 %v5597
    %7532 = vmatprep.subr.bf16.mxu0 0
    %7533 = vmatpush2.bf16.msra.mxu0 %v5612
    %7534 = vmatprep.subr.bf16.mxu0 0
    %7535 = vmatpush2.bf16.msra.mxu0 %v5611
    %7536 = vmatprep.subr.bf16.mxu0 0
    %7537 = vmatpush2.bf16.msra.mxu0 %v5610
    %7538 = vmatprep.subr.bf16.mxu0 0
    %7539 = vmatpush2.bf16.msra.mxu0 %v5609
    %7540 = vmatprep.subr.bf16.mxu0 0
    %7541 = vmatpush2.bf16.msra.mxu0 %v5608
    %7542 = vmatprep.subr.bf16.mxu0 0
    %7543 = vmatpush2.bf16.msra.mxu0 %v5607
    %7544 = vmatprep.subr.bf16.mxu0 0
    %7545 = vmatpush2.bf16.msra.mxu0 %v5606
    %7546 = vmatprep.subr.bf16.mxu0 0
    %7547 = vmatpush2.bf16.msra.mxu0 %v5605
    %7548 = vmatprep.mubr.bf16.mxu0 %v2428
    %7549 = vmatmul.mubr.bf16.gmra.mxu0 %v2427
    %v7550 = vpop.f32.mrf.mxu0
    %v7551 = vadd.f32 %v7486, %v7550
    %v7552 = vpop.f32.mrf.mxu0
    %v7553 = vpop.f32.mrf.mxu0
    %v7554 = vadd.f32 %v7489, %v7553
    %v7555 = vpop.f32.mrf.mxu0
    %7556 = vmatprep.mubr.bf16.mxu0 %v2502
    %7557 = vmatmul.mubr.bf16.gmra.mxu0 %v2501
    %v7558 = vpop.f32.mrf.mxu0
    %v7559 = vadd.f32 %v7494, %v7558
    %v7560 = vpop.f32.mrf.mxu0
    %v7561 = vpop.f32.mrf.mxu0
    %v7562 = vadd.f32 %v7497, %v7561
    %v7563 = vpop.f32.mrf.mxu0
    %7564 = vmatprep.mubr.bf16.mxu0 %v2576
    %7565 = vmatmul.mubr.bf16.gmra.mxu0 %v2575
    %v7566 = vpop.f32.mrf.mxu0
    %v7567 = vadd.f32 %v7502, %v7566
    %v7568 = vpop.f32.mrf.mxu0
    %v7569 = vpop.f32.mrf.mxu0
    %v7570 = vadd.f32 %v7505, %v7569
    %v7571 = vpop.f32.mrf.mxu0
    %7572 = vmatprep.mubr.bf16.mxu0 %v2650
    %7573 = vmatmul.mubr.bf16.gmra.mxu0 %v2649
    %v7574 = vpop.f32.mrf.mxu0
    %v7575 = vadd.f32 %v7510, %v7574
    %v7576 = vpop.f32.mrf.mxu0
    %v7577 = vpop.f32.mrf.mxu0
    %v7578 = vadd.f32 %v7513, %v7577
    %v7579 = vpop.f32.mrf.mxu0
    %7580 = vdwg.mxu0
    %7581 = vmatprep.subr.bf16.mxu0 0
    %7582 = vmatpush1.bf16.msra.mxu0 %v5620
    %7583 = vmatprep.subr.bf16.mxu0 0
    %7584 = vmatpush1.bf16.msra.mxu0 %v5619
    %7585 = vmatprep.subr.bf16.mxu0 0
    %7586 = vmatpush1.bf16.msra.mxu0 %v5618
    %7587 = vmatprep.subr.bf16.mxu0 0
    %7588 = vmatpush1.bf16.msra.mxu0 %v5617
    %7589 = vmatprep.subr.bf16.mxu0 0
    %7590 = vmatpush1.bf16.msra.mxu0 %v5616
    %7591 = vmatprep.subr.bf16.mxu0 0
    %7592 = vmatpush1.bf16.msra.mxu0 %v5615
    %7593 = vmatprep.subr.bf16.mxu0 0
    %7594 = vmatpush1.bf16.msra.mxu0 %v5614
    %7595 = vmatprep.subr.bf16.mxu0 0
    %7596 = vmatpush1.bf16.msra.mxu0 %v5613
    %7597 = vmatprep.subr.bf16.mxu0 0
    %7598 = vmatpush2.bf16.msra.mxu0 %v5628
    %7599 = vmatprep.subr.bf16.mxu0 0
    %7600 = vmatpush2.bf16.msra.mxu0 %v5627
    %7601 = vmatprep.subr.bf16.mxu0 0
    %7602 = vmatpush2.bf16.msra.mxu0 %v5626
    %7603 = vmatprep.subr.bf16.mxu0 0
    %7604 = vmatpush2.bf16.msra.mxu0 %v5625
    %7605 = vmatprep.subr.bf16.mxu0 0
    %7606 = vmatpush2.bf16.msra.mxu0 %v5624
    %7607 = vmatprep.subr.bf16.mxu0 0
    %7608 = vmatpush2.bf16.msra.mxu0 %v5623
    %7609 = vmatprep.subr.bf16.mxu0 0
    %7610 = vmatpush2.bf16.msra.mxu0 %v5622
    %7611 = vmatprep.subr.bf16.mxu0 0
    %7612 = vmatpush2.bf16.msra.mxu0 %v5621
    %7613 = vmatprep.mubr.bf16.mxu0 %v2430
    %7614 = vmatmul.mubr.bf16.gmra.mxu0 %v2429
    %v7615 = vpop.f32.mrf.mxu0
    %v7616 = vadd.f32 %v7551, %v7615
    %v7617 = vpop.f32.mrf.mxu0
    %v7618 = vpop.f32.mrf.mxu0
    %v7619 = vadd.f32 %v7554, %v7618
    %v7620 = vpop.f32.mrf.mxu0
    %7621 = vmatprep.mubr.bf16.mxu0 %v2504
    %7622 = vmatmul.mubr.bf16.gmra.mxu0 %v2503
    %v7623 = vpop.f32.mrf.mxu0
    %v7624 = vadd.f32 %v7559, %v7623
    %v7625 = vpop.f32.mrf.mxu0
    %v7626 = vpop.f32.mrf.mxu0
    %v7627 = vadd.f32 %v7562, %v7626
    %v7628 = vpop.f32.mrf.mxu0
    %7629 = vmatprep.mubr.bf16.mxu0 %v2578
    %7630 = vmatmul.mubr.bf16.gmra.mxu0 %v2577
    %v7631 = vpop.f32.mrf.mxu0
    %v7632 = vadd.f32 %v7567, %v7631
    %v7633 = vpop.f32.mrf.mxu0
    %v7634 = vpop.f32.mrf.mxu0
    %v7635 = vadd.f32 %v7570, %v7634
    %v7636 = vpop.f32.mrf.mxu0
    %7637 = vmatprep.mubr.bf16.mxu0 %v2652
    %7638 = vmatmul.mubr.bf16.gmra.mxu0 %v2651
    %v7639 = vpop.f32.mrf.mxu0
    %v7640 = vadd.f32 %v7575, %v7639
    %v7641 = vpop.f32.mrf.mxu0
    %v7642 = vpop.f32.mrf.mxu0
    %v7643 = vadd.f32 %v7578, %v7642
    %v7644 = vpop.f32.mrf.mxu0
    %7645 = vdwg.mxu0
    %7646 = vmatprep.subr.bf16.mxu0 0
    %7647 = vmatpush1.bf16.msra.mxu0 %v5636
    %7648 = vmatprep.subr.bf16.mxu0 0
    %7649 = vmatpush1.bf16.msra.mxu0 %v5635
    %7650 = vmatprep.subr.bf16.mxu0 0
    %7651 = vmatpush1.bf16.msra.mxu0 %v5634
    %7652 = vmatprep.subr.bf16.mxu0 0
    %7653 = vmatpush1.bf16.msra.mxu0 %v5633
    %7654 = vmatprep.subr.bf16.mxu0 0
    %7655 = vmatpush1.bf16.msra.mxu0 %v5632
    %7656 = vmatprep.subr.bf16.mxu0 0
    %7657 = vmatpush1.bf16.msra.mxu0 %v5631
    %7658 = vmatprep.subr.bf16.mxu0 0
    %7659 = vmatpush1.bf16.msra.mxu0 %v5630
    %7660 = vmatprep.subr.bf16.mxu0 0
    %7661 = vmatpush1.bf16.msra.mxu0 %v5629
    %7662 = vmatprep.subr.bf16.mxu0 0
    %7663 = vmatpush2.bf16.msra.mxu0 %v5644
    %7664 = vmatprep.subr.bf16.mxu0 0
    %7665 = vmatpush2.bf16.msra.mxu0 %v5643
    %7666 = vmatprep.subr.bf16.mxu0 0
    %7667 = vmatpush2.bf16.msra.mxu0 %v5642
    %7668 = vmatprep.subr.bf16.mxu0 0
    %7669 = vmatpush2.bf16.msra.mxu0 %v5641
    %7670 = vmatprep.subr.bf16.mxu0 0
    %7671 = vmatpush2.bf16.msra.mxu0 %v5640
    %7672 = vmatprep.subr.bf16.mxu0 0
    %7673 = vmatpush2.bf16.msra.mxu0 %v5639
    %7674 = vmatprep.subr.bf16.mxu0 0
    %7675 = vmatpush2.bf16.msra.mxu0 %v5638
    %7676 = vmatprep.subr.bf16.mxu0 0
    %7677 = vmatpush2.bf16.msra.mxu0 %v5637
    %7678 = vmatprep.mubr.bf16.mxu0 %v2432
    %7679 = vmatmul.mubr.bf16.gmra.mxu0 %v2431
    %v7680 = vpop.f32.mrf.mxu0
    %v7681 = vadd.f32 %v7616, %v7680
    %v7682 = vpop.f32.mrf.mxu0
    %v7683 = vpop.f32.mrf.mxu0
    %v7684 = vadd.f32 %v7619, %v7683
    %v7685 = vpop.f32.mrf.mxu0
    %7686 = vmatprep.mubr.bf16.mxu0 %v2506
    %7687 = vmatmul.mubr.bf16.gmra.mxu0 %v2505
    %v7688 = vpop.f32.mrf.mxu0
    %v7689 = vadd.f32 %v7624, %v7688
    %v7690 = vpop.f32.mrf.mxu0
    %v7691 = vpop.f32.mrf.mxu0
    %v7692 = vadd.f32 %v7627, %v7691
    %v7693 = vpop.f32.mrf.mxu0
    %7694 = vmatprep.mubr.bf16.mxu0 %v2580
    %7695 = vmatmul.mubr.bf16.gmra.mxu0 %v2579
    %v7696 = vpop.f32.mrf.mxu0
    %v7697 = vadd.f32 %v7632, %v7696
    %v7698 = vpop.f32.mrf.mxu0
    %v7699 = vpop.f32.mrf.mxu0
    %v7700 = vadd.f32 %v7635, %v7699
    %v7701 = vpop.f32.mrf.mxu0
    %7702 = vmatprep.mubr.bf16.mxu0 %v2654
    %7703 = vmatmul.mubr.bf16.gmra.mxu0 %v2653
    %v7704 = vpop.f32.mrf.mxu0
    %v7705 = vadd.f32 %v7640, %v7704
    %v7706 = vpop.f32.mrf.mxu0
    %v7707 = vpop.f32.mrf.mxu0
    %v7708 = vadd.f32 %v7643, %v7707
    %v7709 = vpop.f32.mrf.mxu0
    %7710 = vdwg.mxu0
    %7711 = vmatprep.subr.bf16.mxu0 0
    %7712 = vmatpush1.bf16.msra.mxu0 %v5652
    %7713 = vmatprep.subr.bf16.mxu0 0
    %7714 = vmatpush1.bf16.msra.mxu0 %v5651
    %7715 = vmatprep.subr.bf16.mxu0 0
    %7716 = vmatpush1.bf16.msra.mxu0 %v5650
    %7717 = vmatprep.subr.bf16.mxu0 0
    %7718 = vmatpush1.bf16.msra.mxu0 %v5649
    %7719 = vmatprep.subr.bf16.mxu0 0
    %7720 = vmatpush1.bf16.msra.mxu0 %v5648
    %7721 = vmatprep.subr.bf16.mxu0 0
    %7722 = vmatpush1.bf16.msra.mxu0 %v5647
    %7723 = vmatprep.subr.bf16.mxu0 0
    %7724 = vmatpush1.bf16.msra.mxu0 %v5646
    %7725 = vmatprep.subr.bf16.mxu0 0
    %7726 = vmatpush1.bf16.msra.mxu0 %v5645
    %7727 = vmatprep.subr.bf16.mxu0 0
    %7728 = vmatpush2.bf16.msra.mxu0 %v5660
    %7729 = vmatprep.subr.bf16.mxu0 0
    %7730 = vmatpush2.bf16.msra.mxu0 %v5659
    %7731 = vmatprep.subr.bf16.mxu0 0
    %7732 = vmatpush2.bf16.msra.mxu0 %v5658
    %7733 = vmatprep.subr.bf16.mxu0 0
    %7734 = vmatpush2.bf16.msra.mxu0 %v5657
    %7735 = vmatprep.subr.bf16.mxu0 0
    %7736 = vmatpush2.bf16.msra.mxu0 %v5656
    %7737 = vmatprep.subr.bf16.mxu0 0
    %7738 = vmatpush2.bf16.msra.mxu0 %v5655
    %7739 = vmatprep.subr.bf16.mxu0 0
    %7740 = vmatpush2.bf16.msra.mxu0 %v5654
    %7741 = vmatprep.subr.bf16.mxu0 0
    %7742 = vmatpush2.bf16.msra.mxu0 %v5653
    %7743 = vmatprep.mubr.bf16.mxu0 %v2434
    %7744 = vmatmul.mubr.bf16.gmra.mxu0 %v2433
    %v7745 = vpop.f32.mrf.mxu0
    %v7746 = vadd.f32 %v7681, %v7745
    %v7747 = vpop.f32.mrf.mxu0
    %v7748 = vpop.f32.mrf.mxu0
    %v7749 = vadd.f32 %v7684, %v7748
    %v7750 = vpop.f32.mrf.mxu0
    %7751 = vmatprep.mubr.bf16.mxu0 %v2508
    %7752 = vmatmul.mubr.bf16.gmra.mxu0 %v2507
    %v7753 = vpop.f32.mrf.mxu0
    %v7754 = vadd.f32 %v7689, %v7753
    %v7755 = vpop.f32.mrf.mxu0
    %v7756 = vpop.f32.mrf.mxu0
    %v7757 = vadd.f32 %v7692, %v7756
    %v7758 = vpop.f32.mrf.mxu0
    %7759 = vmatprep.mubr.bf16.mxu0 %v2582
    %7760 = vmatmul.mubr.bf16.gmra.mxu0 %v2581
    %v7761 = vpop.f32.mrf.mxu0
    %v7762 = vadd.f32 %v7697, %v7761
    %v7763 = vpop.f32.mrf.mxu0
    %v7764 = vpop.f32.mrf.mxu0
    %v7765 = vadd.f32 %v7700, %v7764
    %v7766 = vpop.f32.mrf.mxu0
    %7767 = vmatprep.mubr.bf16.mxu0 %v2656
    %7768 = vmatmul.mubr.bf16.gmra.mxu0 %v2655
    %v7769 = vpop.f32.mrf.mxu0
    %v7770 = vadd.f32 %v7705, %v7769
    %v7771 = vpop.f32.mrf.mxu0
    %v7772 = vpop.f32.mrf.mxu0
    %v7773 = vadd.f32 %v7708, %v7772
    %v7774 = vpop.f32.mrf.mxu0
    %7775 = vdwg.mxu0
    %7776 = vmatprep.subr.bf16.mxu0 0
    %7777 = vmatpush1.bf16.msra.mxu0 %v5668
    %7778 = vmatprep.subr.bf16.mxu0 0
    %7779 = vmatpush1.bf16.msra.mxu0 %v5667
    %7780 = vmatprep.subr.bf16.mxu0 0
    %7781 = vmatpush1.bf16.msra.mxu0 %v5666
    %7782 = vmatprep.subr.bf16.mxu0 0
    %7783 = vmatpush1.bf16.msra.mxu0 %v5665
    %7784 = vmatprep.subr.bf16.mxu0 0
    %7785 = vmatpush1.bf16.msra.mxu0 %v5664
    %7786 = vmatprep.subr.bf16.mxu0 0
    %7787 = vmatpush1.bf16.msra.mxu0 %v5663
    %7788 = vmatprep.subr.bf16.mxu0 0
    %7789 = vmatpush1.bf16.msra.mxu0 %v5662
    %7790 = vmatprep.subr.bf16.mxu0 0
    %7791 = vmatpush1.bf16.msra.mxu0 %v5661
    %7792 = vmatprep.subr.bf16.mxu0 0
    %7793 = vmatpush2.bf16.msra.mxu0 %v5676
    %7794 = vmatprep.subr.bf16.mxu0 0
    %7795 = vmatpush2.bf16.msra.mxu0 %v5675
    %7796 = vmatprep.subr.bf16.mxu0 0
    %7797 = vmatpush2.bf16.msra.mxu0 %v5674
    %7798 = vmatprep.subr.bf16.mxu0 0
    %7799 = vmatpush2.bf16.msra.mxu0 %v5673
    %7800 = vmatprep.subr.bf16.mxu0 0
    %7801 = vmatpush2.bf16.msra.mxu0 %v5672
    %7802 = vmatprep.subr.bf16.mxu0 0
    %7803 = vmatpush2.bf16.msra.mxu0 %v5671
    %7804 = vmatprep.subr.bf16.mxu0 0
    %7805 = vmatpush2.bf16.msra.mxu0 %v5670
    %7806 = vmatprep.subr.bf16.mxu0 0
    %7807 = vmatpush2.bf16.msra.mxu0 %v5669
    %7808 = vmatprep.mubr.bf16.mxu0 %v2436
    %7809 = vmatmul.mubr.bf16.gmra.mxu0 %v2435
    %v7810 = vpop.f32.mrf.mxu0
    %v7811 = vadd.f32 %v7746, %v7810
    %v7812 = vpop.f32.mrf.mxu0
    %v7813 = vpop.f32.mrf.mxu0
    %v7814 = vadd.f32 %v7749, %v7813
    %v7815 = vpop.f32.mrf.mxu0
    %7816 = vmatprep.mubr.bf16.mxu0 %v2510
    %7817 = vmatmul.mubr.bf16.gmra.mxu0 %v2509
    %v7818 = vpop.f32.mrf.mxu0
    %v7819 = vadd.f32 %v7754, %v7818
    %v7820 = vpop.f32.mrf.mxu0
    %v7821 = vpop.f32.mrf.mxu0
    %v7822 = vadd.f32 %v7757, %v7821
    %v7823 = vpop.f32.mrf.mxu0
    %7824 = vmatprep.mubr.bf16.mxu0 %v2584
    %7825 = vmatmul.mubr.bf16.gmra.mxu0 %v2583
    %v7826 = vpop.f32.mrf.mxu0
    %v7827 = vadd.f32 %v7762, %v7826
    %v7828 = vpop.f32.mrf.mxu0
    %v7829 = vpop.f32.mrf.mxu0
    %v7830 = vadd.f32 %v7765, %v7829
    %v7831 = vpop.f32.mrf.mxu0
    %7832 = vmatprep.mubr.bf16.mxu0 %v2658
    %7833 = vmatmul.mubr.bf16.gmra.mxu0 %v2657
    %v7834 = vpop.f32.mrf.mxu0
    %v7835 = vadd.f32 %v7770, %v7834
    %v7836 = vpop.f32.mrf.mxu0
    %v7837 = vpop.f32.mrf.mxu0
    %v7838 = vadd.f32 %v7773, %v7837
    %v7839 = vpop.f32.mrf.mxu0
    %7840 = vdwg.mxu0
    %7841 = vmatprep.subr.bf16.mxu0 0
    %7842 = vmatpush1.bf16.msra.mxu0 %v5684
    %7843 = vmatprep.subr.bf16.mxu0 0
    %7844 = vmatpush1.bf16.msra.mxu0 %v5683
    %7845 = vmatprep.subr.bf16.mxu0 0
    %7846 = vmatpush1.bf16.msra.mxu0 %v5682
    %7847 = vmatprep.subr.bf16.mxu0 0
    %7848 = vmatpush1.bf16.msra.mxu0 %v5681
    %7849 = vmatprep.subr.bf16.mxu0 0
    %7850 = vmatpush1.bf16.msra.mxu0 %v5680
    %7851 = vmatprep.subr.bf16.mxu0 0
    %7852 = vmatpush1.bf16.msra.mxu0 %v5679
    %7853 = vmatprep.subr.bf16.mxu0 0
    %7854 = vmatpush1.bf16.msra.mxu0 %v5678
    %7855 = vmatprep.subr.bf16.mxu0 0
    %7856 = vmatpush1.bf16.msra.mxu0 %v5677
    %7857 = vmatprep.subr.bf16.mxu0 0
    %7858 = vmatpush2.bf16.msra.mxu0 %v5692
    %7859 = vmatprep.subr.bf16.mxu0 0
    %7860 = vmatpush2.bf16.msra.mxu0 %v5691
    %7861 = vmatprep.subr.bf16.mxu0 0
    %7862 = vmatpush2.bf16.msra.mxu0 %v5690
    %7863 = vmatprep.subr.bf16.mxu0 0
    %7864 = vmatpush2.bf16.msra.mxu0 %v5689
    %7865 = vmatprep.subr.bf16.mxu0 0
    %7866 = vmatpush2.bf16.msra.mxu0 %v5688
    %7867 = vmatprep.subr.bf16.mxu0 0
    %7868 = vmatpush2.bf16.msra.mxu0 %v5687
    %7869 = vmatprep.subr.bf16.mxu0 0
    %7870 = vmatpush2.bf16.msra.mxu0 %v5686
    %7871 = vmatprep.subr.bf16.mxu0 0
    %7872 = vmatpush2.bf16.msra.mxu0 %v5685
    %7873 = vmatprep.mubr.bf16.mxu0 %v2438
    %7874 = vmatmul.mubr.bf16.gmra.mxu0 %v2437
    %v7875 = vpop.f32.mrf.mxu0
    %v7876 = vadd.f32 %v7811, %v7875
    %v7877 = vpop.f32.mrf.mxu0
    %v7878 = vpop.f32.mrf.mxu0
    %v7879 = vadd.f32 %v7814, %v7878
    %v7880 = vpop.f32.mrf.mxu0
    %7881 = vmatprep.mubr.bf16.mxu0 %v2512
    %7882 = vmatmul.mubr.bf16.gmra.mxu0 %v2511
    %v7883 = vpop.f32.mrf.mxu0
    %v7884 = vadd.f32 %v7819, %v7883
    %v7885 = vpop.f32.mrf.mxu0
    %v7886 = vpop.f32.mrf.mxu0
    %v7887 = vadd.f32 %v7822, %v7886
    %v7888 = vpop.f32.mrf.mxu0
    %7889 = vmatprep.mubr.bf16.mxu0 %v2586
    %7890 = vmatmul.mubr.bf16.gmra.mxu0 %v2585
    %v7891 = vpop.f32.mrf.mxu0
    %v7892 = vadd.f32 %v7827, %v7891
    %v7893 = vpop.f32.mrf.mxu0
    %v7894 = vpop.f32.mrf.mxu0
    %v7895 = vadd.f32 %v7830, %v7894
    %v7896 = vpop.f32.mrf.mxu0
    %7897 = vmatprep.mubr.bf16.mxu0 %v2660
    %7898 = vmatmul.mubr.bf16.gmra.mxu0 %v2659
    %v7899 = vpop.f32.mrf.mxu0
    %v7900 = vadd.f32 %v7835, %v7899
    %v7901 = vpop.f32.mrf.mxu0
    %v7902 = vpop.f32.mrf.mxu0
    %v7903 = vadd.f32 %v7838, %v7902
    %v7904 = vpop.f32.mrf.mxu0
    %7905 = vdwg.mxu0
    %7906 = vmatprep.subr.bf16.mxu0 0
    %7907 = vmatpush1.bf16.msra.mxu0 %v5700
    %7908 = vmatprep.subr.bf16.mxu0 0
    %7909 = vmatpush1.bf16.msra.mxu0 %v5699
    %7910 = vmatprep.subr.bf16.mxu0 0
    %7911 = vmatpush1.bf16.msra.mxu0 %v5698
    %7912 = vmatprep.subr.bf16.mxu0 0
    %7913 = vmatpush1.bf16.msra.mxu0 %v5697
    %7914 = vmatprep.subr.bf16.mxu0 0
    %7915 = vmatpush1.bf16.msra.mxu0 %v5696
    %7916 = vmatprep.subr.bf16.mxu0 0
    %7917 = vmatpush1.bf16.msra.mxu0 %v5695
    %7918 = vmatprep.subr.bf16.mxu0 0
    %7919 = vmatpush1.bf16.msra.mxu0 %v5694
    %7920 = vmatprep.subr.bf16.mxu0 0
    %7921 = vmatpush1.bf16.msra.mxu0 %v5693
    %7922 = vmatprep.subr.bf16.mxu0 0
    %7923 = vmatpush2.bf16.msra.mxu0 %v5708
    %7924 = vmatprep.subr.bf16.mxu0 0
    %7925 = vmatpush2.bf16.msra.mxu0 %v5707
    %7926 = vmatprep.subr.bf16.mxu0 0
    %7927 = vmatpush2.bf16.msra.mxu0 %v5706
    %7928 = vmatprep.subr.bf16.mxu0 0
    %7929 = vmatpush2.bf16.msra.mxu0 %v5705
    %7930 = vmatprep.subr.bf16.mxu0 0
    %7931 = vmatpush2.bf16.msra.mxu0 %v5704
    %7932 = vmatprep.subr.bf16.mxu0 0
    %7933 = vmatpush2.bf16.msra.mxu0 %v5703
    %7934 = vmatprep.subr.bf16.mxu0 0
    %7935 = vmatpush2.bf16.msra.mxu0 %v5702
    %7936 = vmatprep.subr.bf16.mxu0 0
    %7937 = vmatpush2.bf16.msra.mxu0 %v5701
    %7938 = vmatprep.mubr.bf16.mxu0 %v2440
    %7939 = vmatmul.mubr.bf16.gmra.mxu0 %v2439
    %v7940 = vpop.f32.mrf.mxu0
    %v7941 = vadd.f32 %v7876, %v7940
    %v7942 = vpop.f32.mrf.mxu0
    %v7943 = vpop.f32.mrf.mxu0
    %v7944 = vadd.f32 %v7879, %v7943
    %v7945 = vpop.f32.mrf.mxu0
    %7946 = vmatprep.mubr.bf16.mxu0 %v2514
    %7947 = vmatmul.mubr.bf16.gmra.mxu0 %v2513
    %v7948 = vpop.f32.mrf.mxu0
    %v7949 = vadd.f32 %v7884, %v7948
    %v7950 = vpop.f32.mrf.mxu0
    %v7951 = vpop.f32.mrf.mxu0
    %v7952 = vadd.f32 %v7887, %v7951
    %v7953 = vpop.f32.mrf.mxu0
    %7954 = vmatprep.mubr.bf16.mxu0 %v2588
    %7955 = vmatmul.mubr.bf16.gmra.mxu0 %v2587
    %v7956 = vpop.f32.mrf.mxu0
    %v7957 = vadd.f32 %v7892, %v7956
    %v7958 = vpop.f32.mrf.mxu0
    %v7959 = vpop.f32.mrf.mxu0
    %v7960 = vadd.f32 %v7895, %v7959
    %v7961 = vpop.f32.mrf.mxu0
    %7962 = vmatprep.mubr.bf16.mxu0 %v2662
    %7963 = vmatmul.mubr.bf16.gmra.mxu0 %v2661
    %v7964 = vpop.f32.mrf.mxu0
    %v7965 = vadd.f32 %v7900, %v7964
    %v7966 = vpop.f32.mrf.mxu0
    %v7967 = vpop.f32.mrf.mxu0
    %v7968 = vadd.f32 %v7903, %v7967
    %v7969 = vpop.f32.mrf.mxu0
    %7970 = vdwg.mxu0
    %7971 = vmatprep.subr.bf16.mxu0 0
    %7972 = vmatpush1.bf16.msra.mxu0 %v5716
    %7973 = vmatprep.subr.bf16.mxu0 0
    %7974 = vmatpush1.bf16.msra.mxu0 %v5715
    %7975 = vmatprep.subr.bf16.mxu0 0
    %7976 = vmatpush1.bf16.msra.mxu0 %v5714
    %7977 = vmatprep.subr.bf16.mxu0 0
    %7978 = vmatpush1.bf16.msra.mxu0 %v5713
    %7979 = vmatprep.subr.bf16.mxu0 0
    %7980 = vmatpush1.bf16.msra.mxu0 %v5712
    %7981 = vmatprep.subr.bf16.mxu0 0
    %7982 = vmatpush1.bf16.msra.mxu0 %v5711
    %7983 = vmatprep.subr.bf16.mxu0 0
    %7984 = vmatpush1.bf16.msra.mxu0 %v5710
    %7985 = vmatprep.subr.bf16.mxu0 0
    %7986 = vmatpush1.bf16.msra.mxu0 %v5709
    %7987 = vmatprep.subr.bf16.mxu0 0
    %7988 = vmatpush2.bf16.msra.mxu0 %v5724
    %7989 = vmatprep.subr.bf16.mxu0 0
    %7990 = vmatpush2.bf16.msra.mxu0 %v5723
    %7991 = vmatprep.subr.bf16.mxu0 0
    %7992 = vmatpush2.bf16.msra.mxu0 %v5722
    %7993 = vmatprep.subr.bf16.mxu0 0
    %7994 = vmatpush2.bf16.msra.mxu0 %v5721
    %7995 = vmatprep.subr.bf16.mxu0 0
    %7996 = vmatpush2.bf16.msra.mxu0 %v5720
    %7997 = vmatprep.subr.bf16.mxu0 0
    %7998 = vmatpush2.bf16.msra.mxu0 %v5719
    %7999 = vmatprep.subr.bf16.mxu0 0
    %8000 = vmatpush2.bf16.msra.mxu0 %v5718
    %8001 = vmatprep.subr.bf16.mxu0 0
    %8002 = vmatpush2.bf16.msra.mxu0 %v5717
    %8003 = vmatprep.mubr.bf16.mxu0 %v2442
    %8004 = vmatmul.mubr.bf16.gmra.mxu0 %v2441
    %v8005 = vpop.f32.mrf.mxu0
    %v8006 = vadd.f32 %v7941, %v8005
    %v8007 = vpop.f32.mrf.mxu0
    %v8008 = vpop.f32.mrf.mxu0
    %v8009 = vadd.f32 %v7944, %v8008
    %v8010 = vpop.f32.mrf.mxu0
    %8011 = vmatprep.mubr.bf16.mxu0 %v2516
    %8012 = vmatmul.mubr.bf16.gmra.mxu0 %v2515
    %v8013 = vpop.f32.mrf.mxu0
    %v8014 = vadd.f32 %v7949, %v8013
    %v8015 = vpop.f32.mrf.mxu0
    %v8016 = vpop.f32.mrf.mxu0
    %v8017 = vadd.f32 %v7952, %v8016
    %v8018 = vpop.f32.mrf.mxu0
    %8019 = vmatprep.mubr.bf16.mxu0 %v2590
    %8020 = vmatmul.mubr.bf16.gmra.mxu0 %v2589
    %v8021 = vpop.f32.mrf.mxu0
    %v8022 = vadd.f32 %v7957, %v8021
    %v8023 = vpop.f32.mrf.mxu0
    %v8024 = vpop.f32.mrf.mxu0
    %v8025 = vadd.f32 %v7960, %v8024
    %v8026 = vpop.f32.mrf.mxu0
    %8027 = vmatprep.mubr.bf16.mxu0 %v2664
    %8028 = vmatmul.mubr.bf16.gmra.mxu0 %v2663
    %v8029 = vpop.f32.mrf.mxu0
    %v8030 = vadd.f32 %v7965, %v8029
    %v8031 = vpop.f32.mrf.mxu0
    %v8032 = vpop.f32.mrf.mxu0
    %v8033 = vadd.f32 %v7968, %v8032
    %v8034 = vpop.f32.mrf.mxu0
    %8035 = vdwg.mxu0
    %8036 = vmatprep.subr.bf16.mxu0 0
    %8037 = vmatpush1.bf16.msra.mxu0 %v5732
    %8038 = vmatprep.subr.bf16.mxu0 0
    %8039 = vmatpush1.bf16.msra.mxu0 %v5731
    %8040 = vmatprep.subr.bf16.mxu0 0
    %8041 = vmatpush1.bf16.msra.mxu0 %v5730
    %8042 = vmatprep.subr.bf16.mxu0 0
    %8043 = vmatpush1.bf16.msra.mxu0 %v5729
    %8044 = vmatprep.subr.bf16.mxu0 0
    %8045 = vmatpush1.bf16.msra.mxu0 %v5728
    %8046 = vmatprep.subr.bf16.mxu0 0
    %8047 = vmatpush1.bf16.msra.mxu0 %v5727
    %8048 = vmatprep.subr.bf16.mxu0 0
    %8049 = vmatpush1.bf16.msra.mxu0 %v5726
    %8050 = vmatprep.subr.bf16.mxu0 0
    %8051 = vmatpush1.bf16.msra.mxu0 %v5725
    %8052 = vmatprep.subr.bf16.mxu0 0
    %8053 = vmatpush2.bf16.msra.mxu0 %v5740
    %8054 = vmatprep.subr.bf16.mxu0 0
    %8055 = vmatpush2.bf16.msra.mxu0 %v5739
    %8056 = vmatprep.subr.bf16.mxu0 0
    %8057 = vmatpush2.bf16.msra.mxu0 %v5738
    %8058 = vmatprep.subr.bf16.mxu0 0
    %8059 = vmatpush2.bf16.msra.mxu0 %v5737
    %8060 = vmatprep.subr.bf16.mxu0 0
    %8061 = vmatpush2.bf16.msra.mxu0 %v5736
    %8062 = vmatprep.subr.bf16.mxu0 0
    %8063 = vmatpush2.bf16.msra.mxu0 %v5735
    %8064 = vmatprep.subr.bf16.mxu0 0
    %8065 = vmatpush2.bf16.msra.mxu0 %v5734
    %8066 = vmatprep.subr.bf16.mxu0 0
    %8067 = vmatpush2.bf16.msra.mxu0 %v5733
    %8068 = vmatprep.mubr.bf16.mxu0 %v2444
    %8069 = vmatmul.mubr.bf16.gmra.mxu0 %v2443
    %v8070 = vpop.f32.mrf.mxu0
    %v8071 = vadd.f32 %v8006, %v8070
    %v8072 = vpop.f32.mrf.mxu0
    %v8073 = vpop.f32.mrf.mxu0
    %v8074 = vadd.f32 %v8009, %v8073
    %v8075 = vpop.f32.mrf.mxu0
    %8076 = vmatprep.mubr.bf16.mxu0 %v2518
    %8077 = vmatmul.mubr.bf16.gmra.mxu0 %v2517
    %v8078 = vpop.f32.mrf.mxu0
    %v8079 = vadd.f32 %v8014, %v8078
    %v8080 = vpop.f32.mrf.mxu0
    %v8081 = vpop.f32.mrf.mxu0
    %v8082 = vadd.f32 %v8017, %v8081
    %v8083 = vpop.f32.mrf.mxu0
    %8084 = vmatprep.mubr.bf16.mxu0 %v2592
    %8085 = vmatmul.mubr.bf16.gmra.mxu0 %v2591
    %v8086 = vpop.f32.mrf.mxu0
    %v8087 = vadd.f32 %v8022, %v8086
    %v8088 = vpop.f32.mrf.mxu0
    %v8089 = vpop.f32.mrf.mxu0
    %v8090 = vadd.f32 %v8025, %v8089
    %v8091 = vpop.f32.mrf.mxu0
    %8092 = vmatprep.mubr.bf16.mxu0 %v2666
    %8093 = vmatmul.mubr.bf16.gmra.mxu0 %v2665
    %v8094 = vpop.f32.mrf.mxu0
    %v8095 = vadd.f32 %v8030, %v8094
    %v8096 = vpop.f32.mrf.mxu0
    %v8097 = vpop.f32.mrf.mxu0
    %v8098 = vadd.f32 %v8033, %v8097
    %v8099 = vpop.f32.mrf.mxu0
    %8100 = vdwg.mxu0
    %8101 = vmatprep.subr.bf16.mxu0 0
    %8102 = vmatpush1.bf16.msra.mxu0 %v5748
    %8103 = vmatprep.subr.bf16.mxu0 0
    %8104 = vmatpush1.bf16.msra.mxu0 %v5747
    %8105 = vmatprep.subr.bf16.mxu0 0
    %8106 = vmatpush1.bf16.msra.mxu0 %v5746
    %8107 = vmatprep.subr.bf16.mxu0 0
    %8108 = vmatpush1.bf16.msra.mxu0 %v5745
    %8109 = vmatprep.subr.bf16.mxu0 0
    %8110 = vmatpush1.bf16.msra.mxu0 %v5744
    %8111 = vmatprep.subr.bf16.mxu0 0
    %8112 = vmatpush1.bf16.msra.mxu0 %v5743
    %8113 = vmatprep.subr.bf16.mxu0 0
    %8114 = vmatpush1.bf16.msra.mxu0 %v5742
    %8115 = vmatprep.subr.bf16.mxu0 0
    %8116 = vmatpush1.bf16.msra.mxu0 %v5741
    %8117 = vmatprep.subr.bf16.mxu0 0
    %8118 = vmatpush2.bf16.msra.mxu0 %v5756
    %8119 = vmatprep.subr.bf16.mxu0 0
    %8120 = vmatpush2.bf16.msra.mxu0 %v5755
    %8121 = vmatprep.subr.bf16.mxu0 0
    %8122 = vmatpush2.bf16.msra.mxu0 %v5754
    %8123 = vmatprep.subr.bf16.mxu0 0
    %8124 = vmatpush2.bf16.msra.mxu0 %v5753
    %8125 = vmatprep.subr.bf16.mxu0 0
    %8126 = vmatpush2.bf16.msra.mxu0 %v5752
    %8127 = vmatprep.subr.bf16.mxu0 0
    %8128 = vmatpush2.bf16.msra.mxu0 %v5751
    %8129 = vmatprep.subr.bf16.mxu0 0
    %8130 = vmatpush2.bf16.msra.mxu0 %v5750
    %8131 = vmatprep.subr.bf16.mxu0 0
    %8132 = vmatpush2.bf16.msra.mxu0 %v5749
    %8133 = vmatprep.mubr.bf16.mxu0 %v2446
    %8134 = vmatmul.mubr.bf16.gmra.mxu0 %v2445
    %v8135 = vpop.f32.mrf.mxu0
    %v8136 = vadd.f32 %v8071, %v8135
    %v8137 = vpop.f32.mrf.mxu0
    %v8138 = vpop.f32.mrf.mxu0
    %v8139 = vadd.f32 %v8074, %v8138
    %v8140 = vpop.f32.mrf.mxu0
    %8141 = vmatprep.mubr.bf16.mxu0 %v2520
    %8142 = vmatmul.mubr.bf16.gmra.mxu0 %v2519
    %v8143 = vpop.f32.mrf.mxu0
    %v8144 = vadd.f32 %v8079, %v8143
    %v8145 = vpop.f32.mrf.mxu0
    %v8146 = vpop.f32.mrf.mxu0
    %v8147 = vadd.f32 %v8082, %v8146
    %v8148 = vpop.f32.mrf.mxu0
    %8149 = vmatprep.mubr.bf16.mxu0 %v2594
    %8150 = vmatmul.mubr.bf16.gmra.mxu0 %v2593
    %v8151 = vpop.f32.mrf.mxu0
    %v8152 = vadd.f32 %v8087, %v8151
    %v8153 = vpop.f32.mrf.mxu0
    %v8154 = vpop.f32.mrf.mxu0
    %v8155 = vadd.f32 %v8090, %v8154
    %v8156 = vpop.f32.mrf.mxu0
    %8157 = vmatprep.mubr.bf16.mxu0 %v2668
    %8158 = vmatmul.mubr.bf16.gmra.mxu0 %v2667
    %v8159 = vpop.f32.mrf.mxu0
    %v8160 = vadd.f32 %v8095, %v8159
    %v8161 = vpop.f32.mrf.mxu0
    %v8162 = vpop.f32.mrf.mxu0
    %v8163 = vadd.f32 %v8098, %v8162
    %v8164 = vpop.f32.mrf.mxu0
    %8165 = vdwg.mxu0
    %8166 = vmatprep.subr.bf16.mxu0 0
    %8167 = vmatpush1.bf16.msra.mxu0 %v5764
    %8168 = vmatprep.subr.bf16.mxu0 0
    %8169 = vmatpush1.bf16.msra.mxu0 %v5763
    %8170 = vmatprep.subr.bf16.mxu0 0
    %8171 = vmatpush1.bf16.msra.mxu0 %v5762
    %8172 = vmatprep.subr.bf16.mxu0 0
    %8173 = vmatpush1.bf16.msra.mxu0 %v5761
    %8174 = vmatprep.subr.bf16.mxu0 0
    %8175 = vmatpush1.bf16.msra.mxu0 %v5760
    %8176 = vmatprep.subr.bf16.mxu0 0
    %8177 = vmatpush1.bf16.msra.mxu0 %v5759
    %8178 = vmatprep.subr.bf16.mxu0 0
    %8179 = vmatpush1.bf16.msra.mxu0 %v5758
    %8180 = vmatprep.subr.bf16.mxu0 0
    %8181 = vmatpush1.bf16.msra.mxu0 %v5757
    %8182 = vmatprep.subr.bf16.mxu0 0
    %8183 = vmatpush2.bf16.msra.mxu0 %v5772
    %8184 = vmatprep.subr.bf16.mxu0 0
    %8185 = vmatpush2.bf16.msra.mxu0 %v5771
    %8186 = vmatprep.subr.bf16.mxu0 0
    %8187 = vmatpush2.bf16.msra.mxu0 %v5770
    %8188 = vmatprep.subr.bf16.mxu0 0
    %8189 = vmatpush2.bf16.msra.mxu0 %v5769
    %8190 = vmatprep.subr.bf16.mxu0 0
    %8191 = vmatpush2.bf16.msra.mxu0 %v5768
    %8192 = vmatprep.subr.bf16.mxu0 0
    %8193 = vmatpush2.bf16.msra.mxu0 %v5767
    %8194 = vmatprep.subr.bf16.mxu0 0
    %8195 = vmatpush2.bf16.msra.mxu0 %v5766
    %8196 = vmatprep.subr.bf16.mxu0 0
    %8197 = vmatpush2.bf16.msra.mxu0 %v5765
    %8198 = vmatprep.mubr.bf16.mxu0 %v2448
    %8199 = vmatmul.mubr.bf16.gmra.mxu0 %v2447
    %v8200 = vpop.f32.mrf.mxu0
    %v8201 = vadd.f32 %v8136, %v8200
    %v8202 = vpop.f32.mrf.mxu0
    %v8203 = vpop.f32.mrf.mxu0
    %v8204 = vadd.f32 %v8139, %v8203
    %v8205 = vpop.f32.mrf.mxu0
    %8206 = vmatprep.mubr.bf16.mxu0 %v2522
    %8207 = vmatmul.mubr.bf16.gmra.mxu0 %v2521
    %v8208 = vpop.f32.mrf.mxu0
    %v8209 = vadd.f32 %v8144, %v8208
    %v8210 = vpop.f32.mrf.mxu0
    %v8211 = vpop.f32.mrf.mxu0
    %v8212 = vadd.f32 %v8147, %v8211
    %v8213 = vpop.f32.mrf.mxu0
    %8214 = vmatprep.mubr.bf16.mxu0 %v2596
    %8215 = vmatmul.mubr.bf16.gmra.mxu0 %v2595
    %v8216 = vpop.f32.mrf.mxu0
    %v8217 = vadd.f32 %v8152, %v8216
    %v8218 = vpop.f32.mrf.mxu0
    %v8219 = vpop.f32.mrf.mxu0
    %v8220 = vadd.f32 %v8155, %v8219
    %v8221 = vpop.f32.mrf.mxu0
    %8222 = vmatprep.mubr.bf16.mxu0 %v2670
    %8223 = vmatmul.mubr.bf16.gmra.mxu0 %v2669
    %v8224 = vpop.f32.mrf.mxu0
    %v8225 = vadd.f32 %v8160, %v8224
    %v8226 = vpop.f32.mrf.mxu0
    %v8227 = vpop.f32.mrf.mxu0
    %v8228 = vadd.f32 %v8163, %v8227
    %v8229 = vpop.f32.mrf.mxu0
    %8230 = vdwg.mxu0
    %8231 = vmatprep.subr.bf16.mxu0 0
    %8232 = vmatpush1.bf16.msra.mxu0 %v5780
    %8233 = vmatprep.subr.bf16.mxu0 0
    %8234 = vmatpush1.bf16.msra.mxu0 %v5779
    %8235 = vmatprep.subr.bf16.mxu0 0
    %8236 = vmatpush1.bf16.msra.mxu0 %v5778
    %8237 = vmatprep.subr.bf16.mxu0 0
    %8238 = vmatpush1.bf16.msra.mxu0 %v5777
    %8239 = vmatprep.subr.bf16.mxu0 0
    %8240 = vmatpush1.bf16.msra.mxu0 %v5776
    %8241 = vmatprep.subr.bf16.mxu0 0
    %8242 = vmatpush1.bf16.msra.mxu0 %v5775
    %8243 = vmatprep.subr.bf16.mxu0 0
    %8244 = vmatpush1.bf16.msra.mxu0 %v5774
    %8245 = vmatprep.subr.bf16.mxu0 0
    %8246 = vmatpush1.bf16.msra.mxu0 %v5773
    %8247 = vmatprep.subr.bf16.mxu0 0
    %8248 = vmatpush2.bf16.msra.mxu0 %v5788
    %8249 = vmatprep.subr.bf16.mxu0 0
    %8250 = vmatpush2.bf16.msra.mxu0 %v5787
    %8251 = vmatprep.subr.bf16.mxu0 0
    %8252 = vmatpush2.bf16.msra.mxu0 %v5786
    %8253 = vmatprep.subr.bf16.mxu0 0
    %8254 = vmatpush2.bf16.msra.mxu0 %v5785
    %8255 = vmatprep.subr.bf16.mxu0 0
    %8256 = vmatpush2.bf16.msra.mxu0 %v5784
    %8257 = vmatprep.subr.bf16.mxu0 0
    %8258 = vmatpush2.bf16.msra.mxu0 %v5783
    %8259 = vmatprep.subr.bf16.mxu0 0
    %8260 = vmatpush2.bf16.msra.mxu0 %v5782
    %8261 = vmatprep.subr.bf16.mxu0 0
    %8262 = vmatpush2.bf16.msra.mxu0 %v5781
    %8263 = vmatprep.mubr.bf16.mxu0 %v2450
    %8264 = vmatmul.mubr.bf16.gmra.mxu0 %v2449
    %v8265 = vpop.f32.mrf.mxu0
    %v8266 = vadd.f32 %v8201, %v8265
    %v8267 = vpop.f32.mrf.mxu0
    %v8268 = vpop.f32.mrf.mxu0
    %v8269 = vadd.f32 %v8204, %v8268
    %v8270 = vpop.f32.mrf.mxu0
    %8271 = vmatprep.mubr.bf16.mxu0 %v2524
    %8272 = vmatmul.mubr.bf16.gmra.mxu0 %v2523
    %v8273 = vpop.f32.mrf.mxu0
    %v8274 = vadd.f32 %v8209, %v8273
    %v8275 = vpop.f32.mrf.mxu0
    %v8276 = vpop.f32.mrf.mxu0
    %v8277 = vadd.f32 %v8212, %v8276
    %v8278 = vpop.f32.mrf.mxu0
    %8279 = vmatprep.mubr.bf16.mxu0 %v2598
    %8280 = vmatmul.mubr.bf16.gmra.mxu0 %v2597
    %v8281 = vpop.f32.mrf.mxu0
    %v8282 = vadd.f32 %v8217, %v8281
    %v8283 = vpop.f32.mrf.mxu0
    %v8284 = vpop.f32.mrf.mxu0
    %v8285 = vadd.f32 %v8220, %v8284
    %v8286 = vpop.f32.mrf.mxu0
    %8287 = vmatprep.mubr.bf16.mxu0 %v2672
    %8288 = vmatmul.mubr.bf16.gmra.mxu0 %v2671
    %v8289 = vpop.f32.mrf.mxu0
    %v8290 = vadd.f32 %v8225, %v8289
    %v8291 = vpop.f32.mrf.mxu0
    %v8292 = vpop.f32.mrf.mxu0
    %v8293 = vadd.f32 %v8228, %v8292
    %v8294 = vpop.f32.mrf.mxu0
    %8295 = vdwg.mxu0
    %8296 = vmatprep.subr.bf16.mxu0 0
    %8297 = vmatpush1.bf16.msra.mxu0 %v5796
    %8298 = vmatprep.subr.bf16.mxu0 0
    %8299 = vmatpush1.bf16.msra.mxu0 %v5795
    %8300 = vmatprep.subr.bf16.mxu0 0
    %8301 = vmatpush1.bf16.msra.mxu0 %v5794
    %8302 = vmatprep.subr.bf16.mxu0 0
    %8303 = vmatpush1.bf16.msra.mxu0 %v5793
    %8304 = vmatprep.subr.bf16.mxu0 0
    %8305 = vmatpush1.bf16.msra.mxu0 %v5792
    %8306 = vmatprep.subr.bf16.mxu0 0
    %8307 = vmatpush1.bf16.msra.mxu0 %v5791
    %8308 = vmatprep.subr.bf16.mxu0 0
    %8309 = vmatpush1.bf16.msra.mxu0 %v5790
    %8310 = vmatprep.subr.bf16.mxu0 0
    %8311 = vmatpush1.bf16.msra.mxu0 %v5789
    %8312 = vmatprep.subr.bf16.mxu0 0
    %8313 = vmatpush2.bf16.msra.mxu0 %v5804
    %8314 = vmatprep.subr.bf16.mxu0 0
    %8315 = vmatpush2.bf16.msra.mxu0 %v5803
    %8316 = vmatprep.subr.bf16.mxu0 0
    %8317 = vmatpush2.bf16.msra.mxu0 %v5802
    %8318 = vmatprep.subr.bf16.mxu0 0
    %8319 = vmatpush2.bf16.msra.mxu0 %v5801
    %8320 = vmatprep.subr.bf16.mxu0 0
    %8321 = vmatpush2.bf16.msra.mxu0 %v5800
    %8322 = vmatprep.subr.bf16.mxu0 0
    %8323 = vmatpush2.bf16.msra.mxu0 %v5799
    %8324 = vmatprep.subr.bf16.mxu0 0
    %8325 = vmatpush2.bf16.msra.mxu0 %v5798
    %8326 = vmatprep.subr.bf16.mxu0 0
    %8327 = vmatpush2.bf16.msra.mxu0 %v5797
    %8328 = vmatprep.mubr.bf16.mxu0 %v2452
    %8329 = vmatmul.mubr.bf16.gmra.mxu0 %v2451
    %v8330 = vpop.f32.mrf.mxu0
    %v8331 = vadd.f32 %v8266, %v8330
    %v8332 = vpop.f32.mrf.mxu0
    %v8333 = vpop.f32.mrf.mxu0
    %v8334 = vadd.f32 %v8269, %v8333
    %v8335 = vpop.f32.mrf.mxu0
    %8336 = vmatprep.mubr.bf16.mxu0 %v2526
    %8337 = vmatmul.mubr.bf16.gmra.mxu0 %v2525
    %v8338 = vpop.f32.mrf.mxu0
    %v8339 = vadd.f32 %v8274, %v8338
    %v8340 = vpop.f32.mrf.mxu0
    %v8341 = vpop.f32.mrf.mxu0
    %v8342 = vadd.f32 %v8277, %v8341
    %v8343 = vpop.f32.mrf.mxu0
    %8344 = vmatprep.mubr.bf16.mxu0 %v2600
    %8345 = vmatmul.mubr.bf16.gmra.mxu0 %v2599
    %v8346 = vpop.f32.mrf.mxu0
    %v8347 = vadd.f32 %v8282, %v8346
    %v8348 = vpop.f32.mrf.mxu0
    %v8349 = vpop.f32.mrf.mxu0
    %v8350 = vadd.f32 %v8285, %v8349
    %v8351 = vpop.f32.mrf.mxu0
    %8352 = vmatprep.mubr.bf16.mxu0 %v2674
    %8353 = vmatmul.mubr.bf16.gmra.mxu0 %v2673
    %v8354 = vpop.f32.mrf.mxu0
    %v8355 = vadd.f32 %v8290, %v8354
    %v8356 = vpop.f32.mrf.mxu0
    %v8357 = vpop.f32.mrf.mxu0
    %v8358 = vadd.f32 %v8293, %v8357
    %v8359 = vpop.f32.mrf.mxu0
    %8360 = vdwg.mxu0
    %8361 = vmatprep.subr.bf16.mxu0 0
    %8362 = vmatpush1.bf16.msra.mxu0 %v5812
    %8363 = vmatprep.subr.bf16.mxu0 0
    %8364 = vmatpush1.bf16.msra.mxu0 %v5811
    %8365 = vmatprep.subr.bf16.mxu0 0
    %8366 = vmatpush1.bf16.msra.mxu0 %v5810
    %8367 = vmatprep.subr.bf16.mxu0 0
    %8368 = vmatpush1.bf16.msra.mxu0 %v5809
    %8369 = vmatprep.subr.bf16.mxu0 0
    %8370 = vmatpush1.bf16.msra.mxu0 %v5808
    %8371 = vmatprep.subr.bf16.mxu0 0
    %8372 = vmatpush1.bf16.msra.mxu0 %v5807
    %8373 = vmatprep.subr.bf16.mxu0 0
    %8374 = vmatpush1.bf16.msra.mxu0 %v5806
    %8375 = vmatprep.subr.bf16.mxu0 0
    %8376 = vmatpush1.bf16.msra.mxu0 %v5805
    %8377 = vmatprep.subr.bf16.mxu0 0
    %8378 = vmatpush2.bf16.msra.mxu0 %v5820
    %8379 = vmatprep.subr.bf16.mxu0 0
    %8380 = vmatpush2.bf16.msra.mxu0 %v5819
    %8381 = vmatprep.subr.bf16.mxu0 0
    %8382 = vmatpush2.bf16.msra.mxu0 %v5818
    %8383 = vmatprep.subr.bf16.mxu0 0
    %8384 = vmatpush2.bf16.msra.mxu0 %v5817
    %8385 = vmatprep.subr.bf16.mxu0 0
    %8386 = vmatpush2.bf16.msra.mxu0 %v5816
    %8387 = vmatprep.subr.bf16.mxu0 0
    %8388 = vmatpush2.bf16.msra.mxu0 %v5815
    %8389 = vmatprep.subr.bf16.mxu0 0
    %8390 = vmatpush2.bf16.msra.mxu0 %v5814
    %8391 = vmatprep.subr.bf16.mxu0 0
    %8392 = vmatpush2.bf16.msra.mxu0 %v5813
    %8393 = vmatprep.mubr.bf16.mxu0 %v2454
    %8394 = vmatmul.mubr.bf16.gmra.mxu0 %v2453
    %v8395 = vpop.f32.mrf.mxu0
    %v8396 = vadd.f32 %v8331, %v8395
    %v8397 = vpop.f32.mrf.mxu0
    %v8398 = vpop.f32.mrf.mxu0
    %v8399 = vadd.f32 %v8334, %v8398
    %v8400 = vpop.f32.mrf.mxu0
    %8401 = vmatprep.mubr.bf16.mxu0 %v2528
    %8402 = vmatmul.mubr.bf16.gmra.mxu0 %v2527
    %v8403 = vpop.f32.mrf.mxu0
    %v8404 = vadd.f32 %v8339, %v8403
    %v8405 = vpop.f32.mrf.mxu0
    %v8406 = vpop.f32.mrf.mxu0
    %v8407 = vadd.f32 %v8342, %v8406
    %v8408 = vpop.f32.mrf.mxu0
    %8409 = vmatprep.mubr.bf16.mxu0 %v2602
    %8410 = vmatmul.mubr.bf16.gmra.mxu0 %v2601
    %v8411 = vpop.f32.mrf.mxu0
    %v8412 = vadd.f32 %v8347, %v8411
    %v8413 = vpop.f32.mrf.mxu0
    %v8414 = vpop.f32.mrf.mxu0
    %v8415 = vadd.f32 %v8350, %v8414
    %v8416 = vpop.f32.mrf.mxu0
    %8417 = vmatprep.mubr.bf16.mxu0 %v2676
    %8418 = vmatmul.mubr.bf16.gmra.mxu0 %v2675
    %v8419 = vpop.f32.mrf.mxu0
    %v8420 = vadd.f32 %v8355, %v8419
    %v8421 = vpop.f32.mrf.mxu0
    %v8422 = vpop.f32.mrf.mxu0
    %v8423 = vadd.f32 %v8358, %v8422
    %v8424 = vpop.f32.mrf.mxu0
    %8425 = vdwg.mxu0
    %8426 = vmatprep.subr.bf16.mxu0 0
    %8427 = vmatpush1.bf16.msra.mxu0 %v5828
    %8428 = vmatprep.subr.bf16.mxu0 0
    %8429 = vmatpush1.bf16.msra.mxu0 %v5827
    %8430 = vmatprep.subr.bf16.mxu0 0
    %8431 = vmatpush1.bf16.msra.mxu0 %v5826
    %8432 = vmatprep.subr.bf16.mxu0 0
    %8433 = vmatpush1.bf16.msra.mxu0 %v5825
    %8434 = vmatprep.subr.bf16.mxu0 0
    %8435 = vmatpush1.bf16.msra.mxu0 %v5824
    %8436 = vmatprep.subr.bf16.mxu0 0
    %8437 = vmatpush1.bf16.msra.mxu0 %v5823
    %8438 = vmatprep.subr.bf16.mxu0 0
    %8439 = vmatpush1.bf16.msra.mxu0 %v5822
    %8440 = vmatprep.subr.bf16.mxu0 0
    %8441 = vmatpush1.bf16.msra.mxu0 %v5821
    %8442 = vmatprep.subr.bf16.mxu0 0
    %8443 = vmatpush2.bf16.msra.mxu0 %v5836
    %8444 = vmatprep.subr.bf16.mxu0 0
    %8445 = vmatpush2.bf16.msra.mxu0 %v5835
    %8446 = vmatprep.subr.bf16.mxu0 0
    %8447 = vmatpush2.bf16.msra.mxu0 %v5834
    %8448 = vmatprep.subr.bf16.mxu0 0
    %8449 = vmatpush2.bf16.msra.mxu0 %v5833
    %8450 = vmatprep.subr.bf16.mxu0 0
    %8451 = vmatpush2.bf16.msra.mxu0 %v5832
    %8452 = vmatprep.subr.bf16.mxu0 0
    %8453 = vmatpush2.bf16.msra.mxu0 %v5831
    %8454 = vmatprep.subr.bf16.mxu0 0
    %8455 = vmatpush2.bf16.msra.mxu0 %v5830
    %8456 = vmatprep.subr.bf16.mxu0 0
    %8457 = vmatpush2.bf16.msra.mxu0 %v5829
    %8458 = vmatprep.mubr.bf16.mxu0 %v2456
    %8459 = vmatmul.mubr.bf16.gmra.mxu0 %v2455
    %v8460 = vpop.f32.mrf.mxu0
    %v8461 = vadd.f32 %v8396, %v8460
    %v8462 = vpop.f32.mrf.mxu0
    %v8463 = vpop.f32.mrf.mxu0
    %v8464 = vadd.f32 %v8399, %v8463
    %v8465 = vpop.f32.mrf.mxu0
    %8466 = vmatprep.mubr.bf16.mxu0 %v2530
    %8467 = vmatmul.mubr.bf16.gmra.mxu0 %v2529
    %v8468 = vpop.f32.mrf.mxu0
    %v8469 = vadd.f32 %v8404, %v8468
    %v8470 = vpop.f32.mrf.mxu0
    %v8471 = vpop.f32.mrf.mxu0
    %v8472 = vadd.f32 %v8407, %v8471
    %v8473 = vpop.f32.mrf.mxu0
    %8474 = vmatprep.mubr.bf16.mxu0 %v2604
    %8475 = vmatmul.mubr.bf16.gmra.mxu0 %v2603
    %v8476 = vpop.f32.mrf.mxu0
    %v8477 = vadd.f32 %v8412, %v8476
    %v8478 = vpop.f32.mrf.mxu0
    %v8479 = vpop.f32.mrf.mxu0
    %v8480 = vadd.f32 %v8415, %v8479
    %v8481 = vpop.f32.mrf.mxu0
    %8482 = vmatprep.mubr.bf16.mxu0 %v2678
    %8483 = vmatmul.mubr.bf16.gmra.mxu0 %v2677
    %v8484 = vpop.f32.mrf.mxu0
    %v8485 = vadd.f32 %v8420, %v8484
    %v8486 = vpop.f32.mrf.mxu0
    %v8487 = vpop.f32.mrf.mxu0
    %v8488 = vadd.f32 %v8423, %v8487
    %v8489 = vpop.f32.mrf.mxu0
    %8490 = vdwg.mxu0
    %8491 = vmatprep.subr.bf16.mxu0 0
    %8492 = vmatpush1.bf16.msra.mxu0 %v5844
    %8493 = vmatprep.subr.bf16.mxu0 0
    %8494 = vmatpush1.bf16.msra.mxu0 %v5843
    %8495 = vmatprep.subr.bf16.mxu0 0
    %8496 = vmatpush1.bf16.msra.mxu0 %v5842
    %8497 = vmatprep.subr.bf16.mxu0 0
    %8498 = vmatpush1.bf16.msra.mxu0 %v5841
    %8499 = vmatprep.subr.bf16.mxu0 0
    %8500 = vmatpush1.bf16.msra.mxu0 %v5840
    %8501 = vmatprep.subr.bf16.mxu0 0
    %8502 = vmatpush1.bf16.msra.mxu0 %v5839
    %8503 = vmatprep.subr.bf16.mxu0 0
    %8504 = vmatpush1.bf16.msra.mxu0 %v5838
    %8505 = vmatprep.subr.bf16.mxu0 0
    %8506 = vmatpush1.bf16.msra.mxu0 %v5837
    %8507 = vmatprep.subr.bf16.mxu0 0
    %8508 = vmatpush2.bf16.msra.mxu0 %v5852
    %8509 = vmatprep.subr.bf16.mxu0 0
    %8510 = vmatpush2.bf16.msra.mxu0 %v5851
    %8511 = vmatprep.subr.bf16.mxu0 0
    %8512 = vmatpush2.bf16.msra.mxu0 %v5850
    %8513 = vmatprep.subr.bf16.mxu0 0
    %8514 = vmatpush2.bf16.msra.mxu0 %v5849
    %8515 = vmatprep.subr.bf16.mxu0 0
    %8516 = vmatpush2.bf16.msra.mxu0 %v5848
    %8517 = vmatprep.subr.bf16.mxu0 0
    %8518 = vmatpush2.bf16.msra.mxu0 %v5847
    %8519 = vmatprep.subr.bf16.mxu0 0
    %8520 = vmatpush2.bf16.msra.mxu0 %v5846
    %8521 = vmatprep.subr.bf16.mxu0 0
    %8522 = vmatpush2.bf16.msra.mxu0 %v5845
    %8523 = vmatprep.mubr.bf16.mxu0 %v2458
    %8524 = vmatmul.mubr.bf16.gmra.mxu0 %v2457
    %v8525 = vpop.f32.mrf.mxu0
    %v8526 = vadd.f32 %v8461, %v8525
    %v8527 = vpop.f32.mrf.mxu0
    %v8528 = vpop.f32.mrf.mxu0
    %v8529 = vadd.f32 %v8464, %v8528
    %v8530 = vpop.f32.mrf.mxu0
    %8531 = vmatprep.mubr.bf16.mxu0 %v2532
    %8532 = vmatmul.mubr.bf16.gmra.mxu0 %v2531
    %v8533 = vpop.f32.mrf.mxu0
    %v8534 = vadd.f32 %v8469, %v8533
    %v8535 = vpop.f32.mrf.mxu0
    %v8536 = vpop.f32.mrf.mxu0
    %v8537 = vadd.f32 %v8472, %v8536
    %v8538 = vpop.f32.mrf.mxu0
    %8539 = vmatprep.mubr.bf16.mxu0 %v2606
    %8540 = vmatmul.mubr.bf16.gmra.mxu0 %v2605
    %v8541 = vpop.f32.mrf.mxu0
    %v8542 = vadd.f32 %v8477, %v8541
    %v8543 = vpop.f32.mrf.mxu0
    %v8544 = vpop.f32.mrf.mxu0
    %v8545 = vadd.f32 %v8480, %v8544
    %v8546 = vpop.f32.mrf.mxu0
    %8547 = vmatprep.mubr.bf16.mxu0 %v2680
    %8548 = vmatmul.mubr.bf16.gmra.mxu0 %v2679
    %v8549 = vpop.f32.mrf.mxu0
    %v8550 = vadd.f32 %v8485, %v8549
    %v8551 = vpop.f32.mrf.mxu0
    %v8552 = vpop.f32.mrf.mxu0
    %v8553 = vadd.f32 %v8488, %v8552
    %v8554 = vpop.f32.mrf.mxu0
    %8555 = vdwg.mxu0
    %8556 = vmatprep.subr.bf16.mxu0 0
    %8557 = vmatpush1.bf16.msra.mxu0 %v5860
    %8558 = vmatprep.subr.bf16.mxu0 0
    %8559 = vmatpush1.bf16.msra.mxu0 %v5859
    %8560 = vmatprep.subr.bf16.mxu0 0
    %8561 = vmatpush1.bf16.msra.mxu0 %v5858
    %8562 = vmatprep.subr.bf16.mxu0 0
    %8563 = vmatpush1.bf16.msra.mxu0 %v5857
    %8564 = vmatprep.subr.bf16.mxu0 0
    %8565 = vmatpush1.bf16.msra.mxu0 %v5856
    %8566 = vmatprep.subr.bf16.mxu0 0
    %8567 = vmatpush1.bf16.msra.mxu0 %v5855
    %8568 = vmatprep.subr.bf16.mxu0 0
    %8569 = vmatpush1.bf16.msra.mxu0 %v5854
    %8570 = vmatprep.subr.bf16.mxu0 0
    %8571 = vmatpush1.bf16.msra.mxu0 %v5853
    %8572 = vmatprep.subr.bf16.mxu0 0
    %8573 = vmatpush2.bf16.msra.mxu0 %v5868
    %8574 = vmatprep.subr.bf16.mxu0 0
    %8575 = vmatpush2.bf16.msra.mxu0 %v5867
    %8576 = vmatprep.subr.bf16.mxu0 0
    %8577 = vmatpush2.bf16.msra.mxu0 %v5866
    %8578 = vmatprep.subr.bf16.mxu0 0
    %8579 = vmatpush2.bf16.msra.mxu0 %v5865
    %8580 = vmatprep.subr.bf16.mxu0 0
    %8581 = vmatpush2.bf16.msra.mxu0 %v5864
    %8582 = vmatprep.subr.bf16.mxu0 0
    %8583 = vmatpush2.bf16.msra.mxu0 %v5863
    %8584 = vmatprep.subr.bf16.mxu0 0
    %8585 = vmatpush2.bf16.msra.mxu0 %v5862
    %8586 = vmatprep.subr.bf16.mxu0 0
    %8587 = vmatpush2.bf16.msra.mxu0 %v5861
    %8588 = vmatprep.mubr.bf16.mxu0 %v2460
    %8589 = vmatmul.mubr.bf16.gmra.mxu0 %v2459
    %v8590 = vpop.f32.mrf.mxu0
    %v8591 = vadd.f32 %v8526, %v8590
    %v8592 = vpop.f32.mrf.mxu0
    %v8593 = vpop.f32.mrf.mxu0
    %v8594 = vadd.f32 %v8529, %v8593
    %v8595 = vpop.f32.mrf.mxu0
    %8596 = vmatprep.mubr.bf16.mxu0 %v2534
    %8597 = vmatmul.mubr.bf16.gmra.mxu0 %v2533
    %v8598 = vpop.f32.mrf.mxu0
    %v8599 = vadd.f32 %v8534, %v8598
    %v8600 = vpop.f32.mrf.mxu0
    %v8601 = vpop.f32.mrf.mxu0
    %v8602 = vadd.f32 %v8537, %v8601
    %v8603 = vpop.f32.mrf.mxu0
    %8604 = vmatprep.mubr.bf16.mxu0 %v2608
    %8605 = vmatmul.mubr.bf16.gmra.mxu0 %v2607
    %v8606 = vpop.f32.mrf.mxu0
    %v8607 = vadd.f32 %v8542, %v8606
    %v8608 = vpop.f32.mrf.mxu0
    %v8609 = vpop.f32.mrf.mxu0
    %v8610 = vadd.f32 %v8545, %v8609
    %v8611 = vpop.f32.mrf.mxu0
    %8612 = vmatprep.mubr.bf16.mxu0 %v2682
    %8613 = vmatmul.mubr.bf16.gmra.mxu0 %v2681
    %v8614 = vpop.f32.mrf.mxu0
    %v8615 = vadd.f32 %v8550, %v8614
    %v8616 = vpop.f32.mrf.mxu0
    %v8617 = vpop.f32.mrf.mxu0
    %v8618 = vadd.f32 %v8553, %v8617
    %v8619 = vpop.f32.mrf.mxu0
    %8620 = vdwg.mxu0
    %8621 = vmatprep.subr.bf16.mxu0 0
    %8622 = vmatpush1.bf16.msra.mxu0 %v5876
    %8623 = vmatprep.subr.bf16.mxu0 0
    %8624 = vmatpush1.bf16.msra.mxu0 %v5875
    %8625 = vmatprep.subr.bf16.mxu0 0
    %8626 = vmatpush1.bf16.msra.mxu0 %v5874
    %8627 = vmatprep.subr.bf16.mxu0 0
    %8628 = vmatpush1.bf16.msra.mxu0 %v5873
    %8629 = vmatprep.subr.bf16.mxu0 0
    %8630 = vmatpush1.bf16.msra.mxu0 %v5872
    %8631 = vmatprep.subr.bf16.mxu0 0
    %8632 = vmatpush1.bf16.msra.mxu0 %v5871
    %8633 = vmatprep.subr.bf16.mxu0 0
    %8634 = vmatpush1.bf16.msra.mxu0 %v5870
    %8635 = vmatprep.subr.bf16.mxu0 0
    %8636 = vmatpush1.bf16.msra.mxu0 %v5869
    %8637 = vmatprep.subr.bf16.mxu0 0
    %8638 = vmatpush2.bf16.msra.mxu0 %v5884
    %8639 = vmatprep.subr.bf16.mxu0 0
    %8640 = vmatpush2.bf16.msra.mxu0 %v5883
    %8641 = vmatprep.subr.bf16.mxu0 0
    %8642 = vmatpush2.bf16.msra.mxu0 %v5882
    %8643 = vmatprep.subr.bf16.mxu0 0
    %8644 = vmatpush2.bf16.msra.mxu0 %v5881
    %8645 = vmatprep.subr.bf16.mxu0 0
    %8646 = vmatpush2.bf16.msra.mxu0 %v5880
    %8647 = vmatprep.subr.bf16.mxu0 0
    %8648 = vmatpush2.bf16.msra.mxu0 %v5879
    %8649 = vmatprep.subr.bf16.mxu0 0
    %8650 = vmatpush2.bf16.msra.mxu0 %v5878
    %8651 = vmatprep.subr.bf16.mxu0 0
    %8652 = vmatpush2.bf16.msra.mxu0 %v5877
    %8653 = vmatprep.mubr.bf16.mxu0 %v2462
    %8654 = vmatmul.mubr.bf16.gmra.mxu0 %v2461
    %v8655 = vpop.f32.mrf.mxu0
    %v8656 = vadd.f32 %v8591, %v8655
    %v8657 = vpop.f32.mrf.mxu0
    %v8658 = vpop.f32.mrf.mxu0
    %v8659 = vadd.f32 %v8594, %v8658
    %v8660 = vpop.f32.mrf.mxu0
    %8661 = vmatprep.mubr.bf16.mxu0 %v2536
    %8662 = vmatmul.mubr.bf16.gmra.mxu0 %v2535
    %v8663 = vpop.f32.mrf.mxu0
    %v8664 = vadd.f32 %v8599, %v8663
    %v8665 = vpop.f32.mrf.mxu0
    %v8666 = vpop.f32.mrf.mxu0
    %v8667 = vadd.f32 %v8602, %v8666
    %v8668 = vpop.f32.mrf.mxu0
    %8669 = vmatprep.mubr.bf16.mxu0 %v2610
    %8670 = vmatmul.mubr.bf16.gmra.mxu0 %v2609
    %v8671 = vpop.f32.mrf.mxu0
    %v8672 = vadd.f32 %v8607, %v8671
    %v8673 = vpop.f32.mrf.mxu0
    %v8674 = vpop.f32.mrf.mxu0
    %v8675 = vadd.f32 %v8610, %v8674
    %v8676 = vpop.f32.mrf.mxu0
    %8677 = vmatprep.mubr.bf16.mxu0 %v2684
    %8678 = vmatmul.mubr.bf16.gmra.mxu0 %v2683
    %v8679 = vpop.f32.mrf.mxu0
    %v8680 = vadd.f32 %v8615, %v8679
    %v8681 = vpop.f32.mrf.mxu0
    %v8682 = vpop.f32.mrf.mxu0
    %v8683 = vadd.f32 %v8618, %v8682
    %v8684 = vpop.f32.mrf.mxu0
    %8685 = vdwg.mxu0
    %8686 = vmatprep.subr.bf16.mxu0 0
    %8687 = vmatpush1.bf16.msra.mxu0 %v5892
    %8688 = vmatprep.subr.bf16.mxu0 0
    %8689 = vmatpush1.bf16.msra.mxu0 %v5891
    %8690 = vmatprep.subr.bf16.mxu0 0
    %8691 = vmatpush1.bf16.msra.mxu0 %v5890
    %8692 = vmatprep.subr.bf16.mxu0 0
    %8693 = vmatpush1.bf16.msra.mxu0 %v5889
    %8694 = vmatprep.subr.bf16.mxu0 0
    %8695 = vmatpush1.bf16.msra.mxu0 %v5888
    %8696 = vmatprep.subr.bf16.mxu0 0
    %8697 = vmatpush1.bf16.msra.mxu0 %v5887
    %8698 = vmatprep.subr.bf16.mxu0 0
    %8699 = vmatpush1.bf16.msra.mxu0 %v5886
    %8700 = vmatprep.subr.bf16.mxu0 0
    %8701 = vmatpush1.bf16.msra.mxu0 %v5885
    %8702 = vmatprep.subr.bf16.mxu0 0
    %8703 = vmatpush2.bf16.msra.mxu0 %v5900
    %8704 = vmatprep.subr.bf16.mxu0 0
    %8705 = vmatpush2.bf16.msra.mxu0 %v5899
    %8706 = vmatprep.subr.bf16.mxu0 0
    %8707 = vmatpush2.bf16.msra.mxu0 %v5898
    %8708 = vmatprep.subr.bf16.mxu0 0
    %8709 = vmatpush2.bf16.msra.mxu0 %v5897
    %8710 = vmatprep.subr.bf16.mxu0 0
    %8711 = vmatpush2.bf16.msra.mxu0 %v5896
    %8712 = vmatprep.subr.bf16.mxu0 0
    %8713 = vmatpush2.bf16.msra.mxu0 %v5895
    %8714 = vmatprep.subr.bf16.mxu0 0
    %8715 = vmatpush2.bf16.msra.mxu0 %v5894
    %8716 = vmatprep.subr.bf16.mxu0 0
    %8717 = vmatpush2.bf16.msra.mxu0 %v5893
    %8718 = vmatprep.mubr.bf16.mxu0 %v2464
    %8719 = vmatmul.mubr.bf16.gmra.mxu0 %v2463
    %v8720 = vpop.f32.mrf.mxu0
    %v8721 = vadd.f32 %v8656, %v8720
    %v8722 = vpop.f32.mrf.mxu0
    %v8723 = vpop.f32.mrf.mxu0
    %v8724 = vadd.f32 %v8659, %v8723
    %v8725 = vpop.f32.mrf.mxu0
    %8726 = vmatprep.mubr.bf16.mxu0 %v2538
    %8727 = vmatmul.mubr.bf16.gmra.mxu0 %v2537
    %v8728 = vpop.f32.mrf.mxu0
    %v8729 = vadd.f32 %v8664, %v8728
    %v8730 = vpop.f32.mrf.mxu0
    %v8731 = vpop.f32.mrf.mxu0
    %v8732 = vadd.f32 %v8667, %v8731
    %v8733 = vpop.f32.mrf.mxu0
    %8734 = vmatprep.mubr.bf16.mxu0 %v2612
    %8735 = vmatmul.mubr.bf16.gmra.mxu0 %v2611
    %v8736 = vpop.f32.mrf.mxu0
    %v8737 = vadd.f32 %v8672, %v8736
    %v8738 = vpop.f32.mrf.mxu0
    %v8739 = vpop.f32.mrf.mxu0
    %v8740 = vadd.f32 %v8675, %v8739
    %v8741 = vpop.f32.mrf.mxu0
    %8742 = vmatprep.mubr.bf16.mxu0 %v2686
    %8743 = vmatmul.mubr.bf16.gmra.mxu0 %v2685
    %v8744 = vpop.f32.mrf.mxu0
    %v8745 = vadd.f32 %v8680, %v8744
    %v8746 = vpop.f32.mrf.mxu0
    %v8747 = vpop.f32.mrf.mxu0
    %v8748 = vadd.f32 %v8683, %v8747
    %v8749 = vpop.f32.mrf.mxu0
    %8750 = vdwg.mxu0
    %8751 = vmatprep.subr.bf16.mxu0 0
    %8752 = vmatpush1.bf16.msra.mxu0 %v5908
    %8753 = vmatprep.subr.bf16.mxu0 0
    %8754 = vmatpush1.bf16.msra.mxu0 %v5907
    %8755 = vmatprep.subr.bf16.mxu0 0
    %8756 = vmatpush1.bf16.msra.mxu0 %v5906
    %8757 = vmatprep.subr.bf16.mxu0 0
    %8758 = vmatpush1.bf16.msra.mxu0 %v5905
    %8759 = vmatprep.subr.bf16.mxu0 0
    %8760 = vmatpush1.bf16.msra.mxu0 %v5904
    %8761 = vmatprep.subr.bf16.mxu0 0
    %8762 = vmatpush1.bf16.msra.mxu0 %v5903
    %8763 = vmatprep.subr.bf16.mxu0 0
    %8764 = vmatpush1.bf16.msra.mxu0 %v5902
    %8765 = vmatprep.subr.bf16.mxu0 0
    %8766 = vmatpush1.bf16.msra.mxu0 %v5901
    %8767 = vmatprep.subr.bf16.mxu0 0
    %8768 = vmatpush2.bf16.msra.mxu0 %v5916
    %8769 = vmatprep.subr.bf16.mxu0 0
    %8770 = vmatpush2.bf16.msra.mxu0 %v5915
    %8771 = vmatprep.subr.bf16.mxu0 0
    %8772 = vmatpush2.bf16.msra.mxu0 %v5914
    %8773 = vmatprep.subr.bf16.mxu0 0
    %8774 = vmatpush2.bf16.msra.mxu0 %v5913
    %8775 = vmatprep.subr.bf16.mxu0 0
    %8776 = vmatpush2.bf16.msra.mxu0 %v5912
    %8777 = vmatprep.subr.bf16.mxu0 0
    %8778 = vmatpush2.bf16.msra.mxu0 %v5911
    %8779 = vmatprep.subr.bf16.mxu0 0
    %8780 = vmatpush2.bf16.msra.mxu0 %v5910
    %8781 = vmatprep.subr.bf16.mxu0 0
    %8782 = vmatpush2.bf16.msra.mxu0 %v5909
    %8783 = vmatprep.mubr.bf16.mxu0 %v2466
    %8784 = vmatmul.mubr.bf16.gmra.mxu0 %v2465
    %v8785 = vpop.f32.mrf.mxu0
    %v8786 = vadd.f32 %v8721, %v8785
    %v8787 = vpop.f32.mrf.mxu0
    %v8788 = vpop.f32.mrf.mxu0
    %v8789 = vadd.f32 %v8724, %v8788
    %v8790 = vpop.f32.mrf.mxu0
    %8791 = vmatprep.mubr.bf16.mxu0 %v2540
    %8792 = vmatmul.mubr.bf16.gmra.mxu0 %v2539
    %v8793 = vpop.f32.mrf.mxu0
    %v8794 = vadd.f32 %v8729, %v8793
    %v8795 = vpop.f32.mrf.mxu0
    %v8796 = vpop.f32.mrf.mxu0
    %v8797 = vadd.f32 %v8732, %v8796
    %v8798 = vpop.f32.mrf.mxu0
    %8799 = vmatprep.mubr.bf16.mxu0 %v2614
    %8800 = vmatmul.mubr.bf16.gmra.mxu0 %v2613
    %v8801 = vpop.f32.mrf.mxu0
    %v8802 = vadd.f32 %v8737, %v8801
    %v8803 = vpop.f32.mrf.mxu0
    %v8804 = vpop.f32.mrf.mxu0
    %v8805 = vadd.f32 %v8740, %v8804
    %v8806 = vpop.f32.mrf.mxu0
    %8807 = vmatprep.mubr.bf16.mxu0 %v2688
    %8808 = vmatmul.mubr.bf16.gmra.mxu0 %v2687
    %v8809 = vpop.f32.mrf.mxu0
    %v8810 = vadd.f32 %v8745, %v8809
    %v8811 = vpop.f32.mrf.mxu0
    %v8812 = vpop.f32.mrf.mxu0
    %v8813 = vadd.f32 %v8748, %v8812
    %v8814 = vpop.f32.mrf.mxu0
    %8815 = vdwg.mxu0
    %8816 = vmatprep.subr.bf16.mxu0 0
    %8817 = vmatpush1.bf16.msra.mxu0 %v5924
    %8818 = vmatprep.subr.bf16.mxu0 0
    %8819 = vmatpush1.bf16.msra.mxu0 %v5923
    %8820 = vmatprep.subr.bf16.mxu0 0
    %8821 = vmatpush1.bf16.msra.mxu0 %v5922
    %8822 = vmatprep.subr.bf16.mxu0 0
    %8823 = vmatpush1.bf16.msra.mxu0 %v5921
    %8824 = vmatprep.subr.bf16.mxu0 0
    %8825 = vmatpush1.bf16.msra.mxu0 %v5920
    %8826 = vmatprep.subr.bf16.mxu0 0
    %8827 = vmatpush1.bf16.msra.mxu0 %v5919
    %8828 = vmatprep.subr.bf16.mxu0 0
    %8829 = vmatpush1.bf16.msra.mxu0 %v5918
    %8830 = vmatprep.subr.bf16.mxu0 0
    %8831 = vmatpush1.bf16.msra.mxu0 %v5917
    %8832 = vmatprep.subr.bf16.mxu0 0
    %8833 = vmatpush2.bf16.msra.mxu0 %v5932
    %8834 = vmatprep.subr.bf16.mxu0 0
    %8835 = vmatpush2.bf16.msra.mxu0 %v5931
    %8836 = vmatprep.subr.bf16.mxu0 0
    %8837 = vmatpush2.bf16.msra.mxu0 %v5930
    %8838 = vmatprep.subr.bf16.mxu0 0
    %8839 = vmatpush2.bf16.msra.mxu0 %v5929
    %8840 = vmatprep.subr.bf16.mxu0 0
    %8841 = vmatpush2.bf16.msra.mxu0 %v5928
    %8842 = vmatprep.subr.bf16.mxu0 0
    %8843 = vmatpush2.bf16.msra.mxu0 %v5927
    %8844 = vmatprep.subr.bf16.mxu0 0
    %8845 = vmatpush2.bf16.msra.mxu0 %v5926
    %8846 = vmatprep.subr.bf16.mxu0 0
    %8847 = vmatpush2.bf16.msra.mxu0 %v5925
    %8848 = vmatprep.mubr.bf16.mxu0 %v2468
    %8849 = vmatmul.mubr.bf16.gmra.mxu0 %v2467
    %v8850 = vpop.f32.mrf.mxu0
    %v8851 = vadd.f32 %v8786, %v8850
    %v8852 = vpop.f32.mrf.mxu0
    %v8853 = vpop.f32.mrf.mxu0
    %v8854 = vadd.f32 %v8789, %v8853
    %v8855 = vpop.f32.mrf.mxu0
    %8856 = vmatprep.mubr.bf16.mxu0 %v2542
    %8857 = vmatmul.mubr.bf16.gmra.mxu0 %v2541
    %v8858 = vpop.f32.mrf.mxu0
    %v8859 = vadd.f32 %v8794, %v8858
    %v8860 = vpop.f32.mrf.mxu0
    %v8861 = vpop.f32.mrf.mxu0
    %v8862 = vadd.f32 %v8797, %v8861
    %v8863 = vpop.f32.mrf.mxu0
    %8864 = vmatprep.mubr.bf16.mxu0 %v2616
    %8865 = vmatmul.mubr.bf16.gmra.mxu0 %v2615
    %v8866 = vpop.f32.mrf.mxu0
    %v8867 = vadd.f32 %v8802, %v8866
    %v8868 = vpop.f32.mrf.mxu0
    %v8869 = vpop.f32.mrf.mxu0
    %v8870 = vadd.f32 %v8805, %v8869
    %v8871 = vpop.f32.mrf.mxu0
    %8872 = vmatprep.mubr.bf16.mxu0 %v2690
    %8873 = vmatmul.mubr.bf16.gmra.mxu0 %v2689
    %v8874 = vpop.f32.mrf.mxu0
    %v8875 = vadd.f32 %v8810, %v8874
    %v8876 = vpop.f32.mrf.mxu0
    %v8877 = vpop.f32.mrf.mxu0
    %v8878 = vadd.f32 %v8813, %v8877
    %v8879 = vpop.f32.mrf.mxu0
    %8880 = vdwg.mxu0
    %8881 = vmatprep.subr.bf16.mxu0 0
    %8882 = vmatpush1.bf16.msra.mxu0 %v5940
    %8883 = vmatprep.subr.bf16.mxu0 0
    %8884 = vmatpush1.bf16.msra.mxu0 %v5939
    %8885 = vmatprep.subr.bf16.mxu0 0
    %8886 = vmatpush1.bf16.msra.mxu0 %v5938
    %8887 = vmatprep.subr.bf16.mxu0 0
    %8888 = vmatpush1.bf16.msra.mxu0 %v5937
    %8889 = vmatprep.subr.bf16.mxu0 0
    %8890 = vmatpush1.bf16.msra.mxu0 %v5936
    %8891 = vmatprep.subr.bf16.mxu0 0
    %8892 = vmatpush1.bf16.msra.mxu0 %v5935
    %8893 = vmatprep.subr.bf16.mxu0 0
    %8894 = vmatpush1.bf16.msra.mxu0 %v5934
    %8895 = vmatprep.subr.bf16.mxu0 0
    %8896 = vmatpush1.bf16.msra.mxu0 %v5933
    %8897 = vmatprep.subr.bf16.mxu0 0
    %8898 = vmatpush2.bf16.msra.mxu0 %v5948
    %8899 = vmatprep.subr.bf16.mxu0 0
    %8900 = vmatpush2.bf16.msra.mxu0 %v5947
    %8901 = vmatprep.subr.bf16.mxu0 0
    %8902 = vmatpush2.bf16.msra.mxu0 %v5946
    %8903 = vmatprep.subr.bf16.mxu0 0
    %8904 = vmatpush2.bf16.msra.mxu0 %v5945
    %8905 = vmatprep.subr.bf16.mxu0 0
    %8906 = vmatpush2.bf16.msra.mxu0 %v5944
    %8907 = vmatprep.subr.bf16.mxu0 0
    %8908 = vmatpush2.bf16.msra.mxu0 %v5943
    %8909 = vmatprep.subr.bf16.mxu0 0
    %8910 = vmatpush2.bf16.msra.mxu0 %v5942
    %8911 = vmatprep.subr.bf16.mxu0 0
    %8912 = vmatpush2.bf16.msra.mxu0 %v5941
    %8913 = vmatprep.mubr.bf16.mxu0 %v2470
    %8914 = vmatmul.mubr.bf16.gmra.mxu0 %v2469
    %v8915 = vpop.f32.mrf.mxu0
    %v8916 = vadd.f32 %v8851, %v8915
    %v8917 = vpop.f32.mrf.mxu0
    %v8918 = vpop.f32.mrf.mxu0
    %v8919 = vadd.f32 %v8854, %v8918
    %v8920 = vpop.f32.mrf.mxu0
    %8921 = vmatprep.mubr.bf16.mxu0 %v2544
    %8922 = vmatmul.mubr.bf16.gmra.mxu0 %v2543
    %v8923 = vpop.f32.mrf.mxu0
    %v8924 = vadd.f32 %v8859, %v8923
    %v8925 = vpop.f32.mrf.mxu0
    %v8926 = vpop.f32.mrf.mxu0
    %v8927 = vadd.f32 %v8862, %v8926
    %v8928 = vpop.f32.mrf.mxu0
    %8929 = vmatprep.mubr.bf16.mxu0 %v2618
    %8930 = vmatmul.mubr.bf16.gmra.mxu0 %v2617
    %v8931 = vpop.f32.mrf.mxu0
    %v8932 = vadd.f32 %v8867, %v8931
    %v8933 = vpop.f32.mrf.mxu0
    %v8934 = vpop.f32.mrf.mxu0
    %v8935 = vadd.f32 %v8870, %v8934
    %v8936 = vpop.f32.mrf.mxu0
    %8937 = vmatprep.mubr.bf16.mxu0 %v2692
    %8938 = vmatmul.mubr.bf16.gmra.mxu0 %v2691
    %v8939 = vpop.f32.mrf.mxu0
    %v8940 = vadd.f32 %v8875, %v8939
    %v8941 = vpop.f32.mrf.mxu0
    %v8942 = vpop.f32.mrf.mxu0
    %v8943 = vadd.f32 %v8878, %v8942
    %v8944 = vpop.f32.mrf.mxu0
    %8945 = vdwg.mxu0
    %v8946 = vmul.f32 %v8916, 0.5
    %v8947 = vmul.f32 %v8919, 0.5
    %v8948 = vmul.f32 %v8924, 0.5
    %v8949 = vmul.f32 %v8927, 0.5
    %v8950 = vmul.f32 %v8932, 0.5
    %v8951 = vmul.f32 %v8935, 0.5
    %v8952 = vmul.f32 %v8940, 0.5
    %v8953 = vmul.f32 %v8943, 0.5
    %v8954 = vtanh.pop %v8946
    %v8955 = vtanh.pop %v8947
    %v8956 = vtanh.pop %v8948
    %v8957 = vtanh.pop %v8949
    %v8958 = vtanh.pop %v8950
    %v8959 = vtanh.pop %v8951
    %v8960 = vtanh.pop %v8952
    %v8961 = vtanh.pop %v8953
    %v8962 = vadd.f32 %v8954, 1.0
    %v8963 = vadd.f32 %v8955, 1.0
    %v8964 = vadd.f32 %v8956, 1.0
    %v8965 = vadd.f32 %v8957, 1.0
    %v8966 = vadd.f32 %v8958, 1.0
    %v8967 = vadd.f32 %v8959, 1.0
    %v8968 = vadd.f32 %v8960, 1.0
    %v8969 = vadd.f32 %v8961, 1.0
    %v8970 = vmul.f32 %v8962, 0.5
    %v8971 = vmul.f32 %v8963, 0.5
    %v8972 = vmul.f32 %v8964, 0.5
    %v8973 = vmul.f32 %v8965, 0.5
    %v8974 = vmul.f32 %v8966, 0.5
    %v8975 = vmul.f32 %v8967, 0.5
    %v8976 = vmul.f32 %v8968, 0.5
    %v8977 = vmul.f32 %v8969, 0.5
    %v8978 = vmul.f32 %v8916, %v8970
    %v8979 = vmul.f32 %v8919, %v8971
    %v8980 = vmul.f32 %v8924, %v8972
    %v8981 = vmul.f32 %v8927, %v8973
    %v8982 = vmul.f32 %v8932, %v8974
    %v8983 = vmul.f32 %v8935, %v8975
    %v8984 = vmul.f32 %v8940, %v8976
    %v8985 = vmul.f32 %v8943, %v8977
    %v8986 = vmax.f32 %v8978, %v8979
    %v8987 = vmax.f32 %v8986, %v8980
    %v8988 = vmax.f32 %v8987, %v8981
    %v8989 = vmax.f32 %v8988, %v8982
    %v8990 = vmax.f32 %v8989, %v8983
    %v8991 = vmax.f32 %v8990, %v8984
    %v8992 = vmax.f32 %v8991, %v8985
    %v8994 = vrot.slane %v8992, 2
    %v8996 = vadd.f32 %v8992, %v8994
    %v8997 = vmul.f32 %v8996, 0.5
    %v8998 = vpack.c.bf16 %v8997, %v8997
    %v8999 = vld [vmem:[%s3] sm:$0xf]
    %v9000 = vld [vmem:[%s3 + $0x4] sm:$0xf]
    %v9001 = vld [vmem:[%s3 + $0x8] sm:$0xf]
    %v9002 = vld [vmem:[%s3 + $0xc] sm:$0xf]
    %v9003 = vld [vmem:[%s3 + $0x10] sm:$0xf]
    %v9004 = vld [vmem:[%s3 + $0x14] sm:$0xf]
    %v9005 = vld [vmem:[%s3 + $0x18] sm:$0xf]
    %v9006 = vld [vmem:[%s3 + $0x1c] sm:$0xf]
    %v9007 = vld [vmem:[%s3 + $0x20] sm:$0xf]
    %v9008 = vld [vmem:[%s3 + $0x24] sm:$0xf]
    %v9009 = vld [vmem:[%s3 + $0x28] sm:$0xf]
    %v9010 = vld [vmem:[%s3 + $0x2c] sm:$0xf]
    %v9011 = vld [vmem:[%s3 + $0x30] sm:$0xf]
    %v9012 = vld [vmem:[%s3 + $0x34] sm:$0xf]
    %v9013 = vld [vmem:[%s3 + $0x38] sm:$0xf]
    %v9014 = vld [vmem:[%s3 + $0x3c] sm:$0xf]
    %v9015 = vld [vmem:[%s4] sm:$0x1]
    %v9017 = vlaneseq
    %v9018 = vshrl.u32 %v9017, 7
    %v9019 = vsub.s32 0, %v9018
    %v9020 = vrot.slane %v9015, %v9019
    %v9038 = vunpack.c.l.b16 %v8999
    %v9039 = vunpack.c.l.b16 %v9000
    %v9040 = vunpack.c.l.b16 %v9001
    %v9041 = vunpack.c.l.b16 %v9002
    %v9042 = vunpack.c.l.b16 %v9003
    %v9043 = vunpack.c.l.b16 %v9004
    %v9044 = vunpack.c.l.b16 %v9005
    %v9045 = vunpack.c.l.b16 %v9006
    %v9046 = vunpack.c.l.b16 %v9007
    %v9047 = vunpack.c.l.b16 %v9008
    %v9048 = vunpack.c.l.b16 %v9009
    %v9049 = vunpack.c.l.b16 %v9010
    %v9050 = vunpack.c.l.b16 %v9011
    %v9051 = vunpack.c.l.b16 %v9012
    %v9052 = vunpack.c.l.b16 %v9013
    %v9053 = vunpack.c.l.b16 %v9014
    %v9054 = vpack.c.b16 %v9039, %v9038
    %v9055 = vpack.c.b16 %v9041, %v9040
    %v9056 = vpack.c.b16 %v9043, %v9042
    %v9057 = vpack.c.b16 %v9045, %v9044
    %v9058 = vpack.c.b16 %v9047, %v9046
    %v9059 = vpack.c.b16 %v9049, %v9048
    %v9060 = vpack.c.b16 %v9051, %v9050
    %v9061 = vpack.c.b16 %v9053, %v9052
    %9070 = vmatprep.subr.bf16.mxu0 0
    %9071 = vmatpush1.bf16.msra.mxu0 %v9061
    %9072 = vmatprep.subr.bf16.mxu0 0
    %9073 = vmatpush1.bf16.msra.mxu0 %v9060
    %9074 = vmatprep.subr.bf16.mxu0 0
    %9075 = vmatpush1.bf16.msra.mxu0 %v9059
    %9076 = vmatprep.subr.bf16.mxu0 0
    %9077 = vmatpush1.bf16.msra.mxu0 %v9058
    %9078 = vmatprep.subr.bf16.mxu0 0
    %9079 = vmatpush1.bf16.msra.mxu0 %v9057
    %9080 = vmatprep.subr.bf16.mxu0 0
    %9081 = vmatpush1.bf16.msra.mxu0 %v9056
    %9082 = vmatprep.subr.bf16.mxu0 0
    %9083 = vmatpush1.bf16.msra.mxu0 %v9055
    %9084 = vmatprep.subr.bf16.mxu0 0
    %9085 = vmatpush1.bf16.msra.mxu0 %v9054
    %9086 = vmatprep.subr.bf16.mxu0 0
    %9087 = vmatpush2.bf16.msra.mxu0 0
    %9088 = vmatprep.subr.bf16.mxu0 0
    %9089 = vmatpush2.bf16.msra.mxu0 0
    %9090 = vmatprep.subr.bf16.mxu0 0
    %9091 = vmatpush2.bf16.msra.mxu0 0
    %9092 = vmatprep.subr.bf16.mxu0 0
    %9093 = vmatpush2.bf16.msra.mxu0 0
    %9094 = vmatprep.subr.bf16.mxu0 0
    %9095 = vmatpush2.bf16.msra.mxu0 0
    %9096 = vmatprep.subr.bf16.mxu0 0
    %9097 = vmatpush2.bf16.msra.mxu0 0
    %9098 = vmatprep.subr.bf16.mxu0 0
    %9099 = vmatpush2.bf16.msra.mxu0 0
    %9100 = vmatprep.subr.bf16.mxu0 0
    %9101 = vmatpush2.bf16.msra.mxu0 0
    %9102 = vmatprep.mubr.bf16.mxu0 0
    %9103 = vmatmul.mubr.bf16.gmra.mxu0 %v8998
    %v9104 = vpop.f32.mrf.mxu0
    %v9105 = vadd.f32 %v9020, %v9104
    %v9106 = vpop.f32.mrf.mxu0
    %v9107 = vpop.f32.mrf.mxu0
    %v9108 = vpop.f32.mrf.mxu0
    %9109 = vdwg.mxu0
    %v9111 = vrot.slane %v9105, 2
    %v9113 = vmax.f32 %v9105, %v9111
    %v9114 = vrot.slane %v9105, 4
    %v9116 = vmax.f32 %v9113, %v9114
    %vm9117 = vcmask 74752
    %9118 = vst.msk [vmem:[#allocation2] sm:$0x3] %vm9117, %v9116
    // Predicated region
    $region22: #{convnet3d_forward.3} parent=1 // pred_check
      _
    $region23: #{convnet3d_forward.3} parent=1 // pred_check_branch
      %9120 = sbr.rel (0) target = $region25
    $region24: #{convnet3d_forward.3} parent=1 // pred_region
      %s9122 = ssub.s32 32, 32
      %9123 = vsyncadd [#allocation3], %s9122
      %s9125 = sshll.u32 [#allocation2], 4
      %s9126 = int_to_ptr.vmem [resolvable:$true] %s9125
      %9128 = dma.vmem_to_hbm [thread:$0]  %s9126, 32, %s5, [#allocation3]
    $region25: #{convnet3d_forward.3} parent=1 // pred_fallthru
      _
    // Predicated region
    $region26: #{convnet3d_forward.3} parent=1 // pred_check
      _
    $region27: #{convnet3d_forward.3} parent=1 // pred_check_branch
      %9130 = sbr.rel (0) target = $region29
    $region28: #{convnet3d_forward.3} parent=1 // pred_region
      %9131 = dma.done [#allocation3], 32
    $region29: #{convnet3d_forward.3} parent=1 // pred_fallthru
      _
    %9132 = vsyncpa [#allocation3], 1

</llo_original>
